<compile_context>
chip_gen: v5e
topology: v5e:2x2
jax: 0.10.0
libtpu: 0.0.40
codegen_flags: <defaults>
</compile_context>

<pallas_src>
import functools

import numpy as np
import jax
import jax.numpy as jnp
from jax.experimental import pallas as pl
from jax.experimental.pallas import tpu as pltpu

N_COUNTIES = 67
BN_EPS = 1e-5
C_MAX = 64                      # widest channel count in the encoder
CHANNELS = (4, 8, 16, 32, 64)   # per-level output channels
LAYER_NAMES = ("inc", "down1", "down2", "down3", "down4")

# Cast MXU operands to bfloat16 for 2x MXU throughput / half the operand bytes on
# v6e/v7x (review item).  Kept at float32 by default so the output tracks the f32
# PyTorch module closely; flip to jnp.bfloat16 if ~1e-3 relative error is acceptable.
MXU_DTYPE = jnp.float32


# ----------------------------------------------------------------------------
# In-kernel building blocks (all operate on lane-dense (C, hz*H*W) values)
# ----------------------------------------------------------------------------
def _conv_bn_relu(x, conv_idx, cin, cout, Hl, Wl, R, w_ref, g_ref, b_ref, m_ref,
                  pb_ref, mxu_dtype):
    """3x3 conv (padding=1, no bias) + per-county training-mode BN + ReLU.

    x: (cin, R) f32 value, columns ordered (t, h, w).  Returns (cout, R) f32.
    """
    pad = Wl + 1
    # Stage the activation in the zero-padded scratch so shifted tap windows can be
    # read as plain static slices (no im2col, no HBM roundtrip).
    pb_ref[0:cin, pad:pad + R] = x
    acc = jnp.zeros((cout, R), jnp.float32)
    for oh in (-1, 0, 1):
        if Hl == 1 and oh != 0:
            continue                          # tap reads only zero padding
        for ow in (-1, 0, 1):
            if Wl == 1 and ow != 0:
                continue
            kk = (oh + 1) * 3 + (ow + 1)      # matches weight packing (kh, kw)
            k = oh * Wl + ow                  # row-major column offset of the tap
            win = pb_ref[0:cin, pad + k:pad + k + R]            # (cin, R)
            if oh != 0 or ow != 0:
                win = win * m_ref[kk]         # (1, R) mask kills out-of-image taps
            wk = w_ref[conv_idx, kk, 0:cout, 0:cin]             # (cout, cin)
            acc = acc + jnp.dot(wk.astype(mxu_dtype), win.astype(mxu_dtype),
                                preferred_element_type=jnp.float32)
    # Training-mode BatchNorm over this county's hz*H*W samples (biased variance),
    # two-pass form in f32 (per review), then affine + ReLU.
    mean = jnp.mean(acc, axis=1, keepdims=True)
    var = jnp.mean(jnp.square(acc - mean), axis=1, keepdims=True)
    y = (acc - mean) * jax.lax.rsqrt(var + BN_EPS)
    y = y * g_ref[conv_idx, 0:cout, :] + b_ref[conv_idx, 0:cout, :]
    return jnp.maximum(y, 0.0)


def _maxpool2(y, q_ref):
    """2x2 / stride-2 max pool: four exact 0/1-selection matmuls + elementwise max."""
    taps = [jnp.dot(y, q_ref[i], preferred_element_type=jnp.float32)
            for i in range(4)]
    return jnp.maximum(jnp.maximum(taps[0], taps[1]),
                       jnp.maximum(taps[2], taps[3]))


def _encoder_kernel(x_ref, w_ref, g_ref, b_ref,
                    q1_ref, q2_ref, q3_ref, q4_ref,
                    m0_ref, m1_ref, m2_ref, m3_ref, m4_ref,
                    o_ref, pb_ref, *, hz, H, W, cin0, mxu_dtype):
    # Keep the padded staging scratch finite (its margins are read, then masked).
    pb_ref[...] = jnp.zeros(pb_ref.shape, pb_ref.dtype)

    q_refs = (None, q1_ref, q2_ref, q3_ref, q4_ref)
    m_refs = (m0_ref, m1_ref, m2_ref, m3_ref, m4_ref)

    x = x_ref[0].astype(jnp.float32)            # (cin0, hz*H*W), lane-dense
    cin = cin0
    conv_idx = 0
    for level in range(5):
        Hl, Wl = H >> level, W >> level
        R = hz * Hl * Wl
        cout = CHANNELS[level]
        if level > 0:
            x = _maxpool2(x, q_refs[level])     # (cin, R)
        for j in range(2):
            x = _conv_bn_relu(x, conv_idx, cin if j == 0 else cout, cout,
                              Hl, Wl, R, w_ref, g_ref, b_ref, m_refs[level],
                              pb_ref, mxu_dtype)
            conv_idx += 1
        cin = cout
    o_ref[0] = x.astype(o_ref.dtype)            # (64, hz*(H//16)*(W//16))


# ----------------------------------------------------------------------------
# Host-side constant tables (baked at trace time; tiny, stay resident in VMEM)
# ----------------------------------------------------------------------------
def _pool_select_matrices(hz, H, W):
    """Q: (4, hz*H*W, hz*(H//2)*(W//2)) 0/1 matrices; Q[i] selects pool tap i."""
    H2, W2 = H // 2, W // 2
    r_in, r_out = hz * H * W, hz * H2 * W2
    q = np.zeros((4, r_in, r_out), np.float32)
    for t in range(hz):
        for h2 in range(H2):
            for w2 in range(W2):
                ro = (t * H2 + h2) * W2 + w2
                for i, (dh, dw) in enumerate(((0, 0), (0, 1), (1, 0), (1, 1))):
                    ri = (t * H + 2 * h2 + dh) * W + (2 * w2 + dw)
                    q[i, ri, ro] = 1.0
    return jnp.asarray(q)


def _tap_masks(hz, H, W):
    """(9, 1, hz*H*W) {0,1} masks; mask[kk] zeroes taps falling outside the image."""
    hh, ww = np.meshgrid(np.arange(H), np.arange(W), indexing="ij")
    hh = np.tile(hh.reshape(-1), hz)
    ww = np.tile(ww.reshape(-1), hz)
    m = np.zeros((9, 1, hz * H * W), np.float32)
    for oh in (-1, 0, 1):
        for ow in (-1, 0, 1):
            kk = (oh + 1) * 3 + (ow + 1)
            ok = (hh + oh >= 0) & (hh + oh < H) & (ww + ow >= 0) & (ww + ow < W)
            m[kk, 0, :] = ok.astype(np.float32)
    return jnp.asarray(m)


def _pack_params(params):
    """Pack per-conv weights (OIHW) and BN affine into padded resident tables."""
    w_all = jnp.zeros((10, 9, C_MAX, C_MAX), MXU_DTYPE)
    g_all = jnp.zeros((10, C_MAX, 1), jnp.float32)
    b_all = jnp.zeros((10, C_MAX, 1), jnp.float32)
    idx = 0
    for name in LAYER_NAMES:
        for (w, gamma, beta) in params[name]:
            co, ci = w.shape[0], w.shape[1]
            wk = jnp.transpose(w, (2, 3, 0, 1)).reshape(9, co, ci)  # (kh*3+kw, O, I)
            w_all = w_all.at[idx, :, :co, :ci].set(wk.astype(MXU_DTYPE))
            g_all = g_all.at[idx, :co, 0].set(gamma)
            b_all = b_all.at[idx, :co, 0].set(beta)
            idx += 1
    return w_all, g_all, b_all


# ----------------------------------------------------------------------------
# Forward
# ----------------------------------------------------------------------------
@jax.jit
def contraction_forward(x_nchw, params):
    """x: (n_counties, horizon, Cin, H, W) -> (n_counties, horizon, 64*(H//16)*(W//16))."""
    nc, hz, cin, H, W = x_nchw.shape
    assert H % 16 == 0 and W % 16 == 0, "H, W must be divisible by 16"
    Hf, Wf = H // 16, W // 16
    R0, R4 = hz * H * W, hz * Hf * Wf

    w_all, g_all, b_all = _pack_params(params)
    qs = [_pool_select_matrices(hz, H >> l, W >> l) for l in range(4)]
    masks = [_tap_masks(hz, H >> l, W >> l) for l in range(5)]

    # Counties stay on the grid axis; activations go lane-dense: (county, C, t*H*W).
    x_cr = jnp.transpose(x_nchw, (0, 2, 1, 3, 4)).reshape(nc, cin, R0)

    kernel = functools.partial(_encoder_kernel, hz=hz, H=H, W=W, cin0=cin,
                               mxu_dtype=MXU_DTYPE)
    const3 = lambda i: (0, 0, 0)
    out = pl.pallas_call(
        kernel,
        out_shape=jax.ShapeDtypeStruct((nc, 64, R4), jnp.float32),
        grid=(nc,),
        in_specs=[
            pl.BlockSpec((1, cin, R0), lambda i: (i, 0, 0)),
            pl.BlockSpec(w_all.shape, lambda i: (0, 0, 0, 0)),
            pl.BlockSpec(g_all.shape, const3),
            pl.BlockSpec(b_all.shape, const3),
        ] + [pl.BlockSpec(q.shape, const3) for q in qs]
          + [pl.BlockSpec(m.shape, const3) for m in masks],
        out_specs=pl.BlockSpec((1, 64, R4), lambda i: (i, 0, 0)),
        scratch_shapes=[pltpu.VMEM((C_MAX, R0 + 2 * (W + 1)), jnp.float32)],
        compiler_params=pltpu.CompilerParams(
            dimension_semantics=("parallel",)),
    )(x_cr, w_all, g_all, b_all, *qs, *masks)

    # TODO(synk): the torch module also stashes intermediate x1..x4 per county in
    # self.feature_maps (side-state); only encoder_input is produced here.

    # (nc, 64, hz*Hf*Wf) -> per-(county, t) NCHW flatten order, like torch .view
    out = out.reshape(nc, 64, hz, Hf, Wf)
    return jnp.transpose(out, (0, 2, 1, 3, 4)).reshape(nc, hz, 64 * Hf * Wf)


# ----------------------------------------------------------------------------
# Synthetic parameters + pure-JAX reference (for the self-check)
# ----------------------------------------------------------------------------
def init_params(key, in_channels):
    """Synthetic init mirroring torch: Conv2d OIHW weights, BN gamma=1 / beta=0."""
    dims = [("inc", in_channels, 4), ("down1", 4, 8), ("down2", 8, 16),
            ("down3", 16, 32), ("down4", 32, 64)]
    params = {}
    for name, cin, cout in dims:
        layer = []
        for (ci, co) in ((cin, cout), (cout, cout)):
            key, sub = jax.random.split(key)
            w = jax.random.normal(sub, (co, ci, 3, 3), jnp.float32) / np.sqrt(9.0 * ci)
            layer.append((w, jnp.ones((co,), jnp.float32), jnp.zeros((co,), jnp.float32)))
        params[name] = layer
    return params


def _encoder_ref_single(xc, layers):
    """Reference for one county: xc (hz, Cin, H, W) -> (hz, 64*Hf*Wf)."""
    z = xc
    for li, layer in enumerate(layers):
        if li > 0:
            z = jax.lax.reduce_window(z, -jnp.inf, jax.lax.max,
                                      (1, 1, 2, 2), (1, 1, 2, 2), "VALID")
        for (w, gamma, beta) in layer:
            z = jax.lax.conv_general_dilated(
                z, w, (1, 1), "SAME",
                dimension_numbers=("NCHW", "OIHW", "NCHW"),
                precision=jax.lax.Precision.HIGHEST)
            mean = jnp.mean(z, axis=(0, 2, 3), keepdims=True)
            var = jnp.mean((z - mean) ** 2, axis=(0, 2, 3), keepdims=True)
            z = (z - mean) * jax.lax.rsqrt(var + BN_EPS)
            z = z * gamma.reshape(1, -1, 1, 1) + beta.reshape(1, -1, 1, 1)
            z = jnp.maximum(z, 0.0)
    return z.reshape(z.shape[0], -1)


@jax.jit
def reference_forward(x_nchw, params):
    layers = [params[n] for n in LAYER_NAMES]
    return jax.vmap(lambda xc: _encoder_ref_single(xc, layers))(x_nchw)


if __name__ == "__main__":
    key = jax.random.PRNGKey(0)
    horizon = 2
    in_channels = 3
    H = W = 16  # must be divisible by 16 (four 2x downsamples)

    k_in, k_par = jax.random.split(key)
    x = jax.random.normal(k_in, (N_COUNTIES, horizon, in_channels, H, W), jnp.float32)
    params = init_params(k_par, in_channels)

    out = jax.block_until_ready(contraction_forward(x, params))

    expected = (N_COUNTIES, horizon, 64 * (H // 16) * (W // 16))
    assert out.shape == expected, (out.shape, expected)
    assert bool(jnp.all(jnp.isfinite(out)))

    # Cross-check against a pure-JAX (lax.conv / reduce_window) reference.
    ref = jax.block_until_ready(reference_forward(x, params))
    max_err = float(jnp.max(jnp.abs(out - ref)))
    assert max_err < 5e-2, f"mismatch vs reference: max abs err {max_err}"

    print("KERNEL_OK")
</pallas_src>

<mosaic_0001>
module attributes {stable_mosaic.version = 11 : i64} {
  func.func @_encoder_kernel(%arg0: i32, %arg1: memref<1x3x512xf32, #tpu.memory_space<vmem>>, %arg2: memref<10x9x64x64xf32, #tpu.memory_space<vmem>>, %arg3: memref<10x64x1xf32, #tpu.memory_space<vmem>>, %arg4: memref<10x64x1xf32, #tpu.memory_space<vmem>>, %arg5: memref<4x512x128xf32, #tpu.memory_space<vmem>>, %arg6: memref<4x128x32xf32, #tpu.memory_space<vmem>>, %arg7: memref<4x32x8xf32, #tpu.memory_space<vmem>>, %arg8: memref<4x8x2xf32, #tpu.memory_space<vmem>>, %arg9: memref<9x1x512xf32, #tpu.memory_space<vmem>>, %arg10: memref<9x1x128xf32, #tpu.memory_space<vmem>>, %arg11: memref<9x1x32xf32, #tpu.memory_space<vmem>>, %arg12: memref<9x1x8xf32, #tpu.memory_space<vmem>>, %arg13: memref<9x1x2xf32, #tpu.memory_space<vmem>>, %arg14: memref<1x64x2xf32, #tpu.memory_space<vmem>>, %arg15: memref<64x546xf32, #tpu.memory_space<vmem>>) attributes {dimension_semantics = [#tpu.dimension_semantics<parallel>], iteration_bounds = array<i64: 67>, scalar_prefetch = 0 : i64, scratch_operands = 1 : i64, tpu.core_type = #tpu.core_type<tc>, window_params = [{transform_indices = @transform_0, window_bounds = array<i64: 1, 3, 512>}, {pipeline_mode = #tpu.pipeline_mode<synchronous>, transform_indices = @transform_1, window_bounds = array<i64: 10, 9, 64, 64>}, {pipeline_mode = #tpu.pipeline_mode<synchronous>, transform_indices = @transform_2, window_bounds = array<i64: 10, 64, 1>}, {pipeline_mode = #tpu.pipeline_mode<synchronous>, transform_indices = @transform_3, window_bounds = array<i64: 10, 64, 1>}, {pipeline_mode = #tpu.pipeline_mode<synchronous>, transform_indices = @transform_4, window_bounds = array<i64: 4, 512, 128>}, {pipeline_mode = #tpu.pipeline_mode<synchronous>, transform_indices = @transform_5, window_bounds = array<i64: 4, 128, 32>}, {pipeline_mode = #tpu.pipeline_mode<synchronous>, transform_indices = @transform_6, window_bounds = array<i64: 4, 32, 8>}, {pipeline_mode = #tpu.pipeline_mode<synchronous>, transform_indices = @transform_7, window_bounds = array<i64: 4, 8, 2>}, {pipeline_mode = #tpu.pipeline_mode<synchronous>, transform_indices = @transform_8, window_bounds = array<i64: 9, 1, 512>}, {pipeline_mode = #tpu.pipeline_mode<synchronous>, transform_indices = @transform_9, window_bounds = array<i64: 9, 1, 128>}, {pipeline_mode = #tpu.pipeline_mode<synchronous>, transform_indices = @transform_10, window_bounds = array<i64: 9, 1, 32>}, {pipeline_mode = #tpu.pipeline_mode<synchronous>, transform_indices = @transform_11, window_bounds = array<i64: 9, 1, 8>}, {pipeline_mode = #tpu.pipeline_mode<synchronous>, transform_indices = @transform_12, window_bounds = array<i64: 9, 1, 2>}, {transform_indices = @transform_13, window_bounds = array<i64: 1, 64, 2>}]} {
    %cst = arith.constant 0.000000e+00 : f32
    %0 = vector.broadcast %cst : f32 to vector<64x546xf32>
    %c0 = arith.constant 0 : index
    %c0_0 = arith.constant 0 : index
    %1 = vector.load %arg15[%c0, %c0_0] : memref<64x546xf32, #tpu.memory_space<vmem>>, vector<64x546xf32>
    tpu.vector_store %arg15[%c0, %c0_0], %0 {strides = array<i32>} : memref<64x546xf32, #tpu.memory_space<vmem>>, vector<64x546xf32>,
    %c0_1 = arith.constant 0 : index
    %c0_2 = arith.constant 0 : index
    %c0_3 = arith.constant 0 : index
    %2 = vector.load %arg1[%c0_1, %c0_2, %c0_3] : memref<1x3x512xf32, #tpu.memory_space<vmem>>, vector<1x3x512xf32>
    %3 = vector.shape_cast %2 : vector<1x3x512xf32> to vector<3x512xf32>
    %c0_4 = arith.constant 0 : index
    %c17 = arith.constant 17 : index
    %4 = vector.load %arg15[%c0_4, %c17] : memref<64x546xf32, #tpu.memory_space<vmem>>, vector<3x512xf32>
    tpu.vector_store %arg15[%c0_4, %c17], %3 {strides = array<i32>} : memref<64x546xf32, #tpu.memory_space<vmem>>, vector<3x512xf32>,
    %cst_5 = arith.constant 0.000000e+00 : f32
    %5 = vector.broadcast %cst_5 : f32 to vector<4x512xf32>
    %c0_6 = arith.constant 0 : index
    %c0_7 = arith.constant 0 : index
    %6 = vector.load %arg15[%c0_6, %c0_7] : memref<64x546xf32, #tpu.memory_space<vmem>>, vector<3x512xf32>
    %c0_8 = arith.constant 0 : index
    %c0_9 = arith.constant 0 : index
    %c0_10 = arith.constant 0 : index
    %7 = vector.load %arg9[%c0_8, %c0_9, %c0_10] : memref<9x1x512xf32, #tpu.memory_space<vmem>>, vector<1x1x512xf32>
    %8 = vector.shape_cast %7 : vector<1x1x512xf32> to vector<1x512xf32>
    %9 = vector.broadcast %8 : vector<1x512xf32> to vector<3x512xf32>
    %10 = arith.mulf %6, %9 : vector<3x512xf32>
    %c0_11 = arith.constant 0 : index
    %c0_12 = arith.constant 0 : index
    %c0_13 = arith.constant 0 : index
    %c0_14 = arith.constant 0 : index
    %11 = vector.load %arg2[%c0_11, %c0_12, %c0_13, %c0_14] : memref<10x9x64x64xf32, #tpu.memory_space<vmem>>, vector<1x1x4x3xf32>
    %12 = vector.shape_cast %11 : vector<1x1x4x3xf32> to vector<4x3xf32>
    %cst_15 = arith.constant dense<0.000000e+00> : vector<4x512xf32>
    %13 = tpu.matmul %12, %10, %cst_15 {dimension_numbers = #tpu.dot_dimension_numbers<[1], [0], [0], [1], [0, 0, 1, 1], [], []>} : vector<4x3xf32>, vector<3x512xf32>, vector<4x512xf32> -> vector<4x512xf32>
    %14 = arith.addf %5, %13 : vector<4x512xf32>
    %c0_16 = arith.constant 0 : index
    %c1 = arith.constant 1 : index
    %15 = vector.load %arg15[%c0_16, %c1] : memref<64x546xf32, #tpu.memory_space<vmem>>, vector<3x512xf32>
    %c1_17 = arith.constant 1 : index
    %c0_18 = arith.constant 0 : index
    %c0_19 = arith.constant 0 : index
    %16 = vector.load %arg9[%c1_17, %c0_18, %c0_19] : memref<9x1x512xf32, #tpu.memory_space<vmem>>, vector<1x1x512xf32>
    %17 = vector.shape_cast %16 : vector<1x1x512xf32> to vector<1x512xf32>
    %18 = vector.broadcast %17 : vector<1x512xf32> to vector<3x512xf32>
    %19 = arith.mulf %15, %18 : vector<3x512xf32>
    %c0_20 = arith.constant 0 : index
    %c1_21 = arith.constant 1 : index
    %c0_22 = arith.constant 0 : index
    %c0_23 = arith.constant 0 : index
    %20 = vector.load %arg2[%c0_20, %c1_21, %c0_22, %c0_23] : memref<10x9x64x64xf32, #tpu.memory_space<vmem>>, vector<1x1x4x3xf32>
    %21 = vector.shape_cast %20 : vector<1x1x4x3xf32> to vector<4x3xf32>
    %cst_24 = arith.constant dense<0.000000e+00> : vector<4x512xf32>
    %22 = tpu.matmul %21, %19, %cst_24 {dimension_numbers = #tpu.dot_dimension_numbers<[1], [0], [0], [1], [0, 0, 1, 1], [], []>} : vector<4x3xf32>, vector<3x512xf32>, vector<4x512xf32> -> vector<4x512xf32>
    %23 = arith.addf %14, %22 : vector<4x512xf32>
    %c0_25 = arith.constant 0 : index
    %c2 = arith.constant 2 : index
    %24 = vector.load %arg15[%c0_25, %c2] : memref<64x546xf32, #tpu.memory_space<vmem>>, vector<3x512xf32>
    %c2_26 = arith.constant 2 : index
    %c0_27 = arith.constant 0 : index
    %c0_28 = arith.constant 0 : index
    %25 = vector.load %arg9[%c2_26, %c0_27, %c0_28] : memref<9x1x512xf32, #tpu.memory_space<vmem>>, vector<1x1x512xf32>
    %26 = vector.shape_cast %25 : vector<1x1x512xf32> to vector<1x512xf32>
    %27 = vector.broadcast %26 : vector<1x512xf32> to vector<3x512xf32>
    %28 = arith.mulf %24, %27 : vector<3x512xf32>
    %c0_29 = arith.constant 0 : index
    %c2_30 = arith.constant 2 : index
    %c0_31 = arith.constant 0 : index
    %c0_32 = arith.constant 0 : index
    %29 = vector.load %arg2[%c0_29, %c2_30, %c0_31, %c0_32] : memref<10x9x64x64xf32, #tpu.memory_space<vmem>>, vector<1x1x4x3xf32>
    %30 = vector.shape_cast %29 : vector<1x1x4x3xf32> to vector<4x3xf32>
    %cst_33 = arith.constant dense<0.000000e+00> : vector<4x512xf32>
    %31 = tpu.matmul %30, %28, %cst_33 {dimension_numbers = #tpu.dot_dimension_numbers<[1], [0], [0], [1], [0, 0, 1, 1], [], []>} : vector<4x3xf32>, vector<3x512xf32>, vector<4x512xf32> -> vector<4x512xf32>
    %32 = arith.addf %23, %31 : vector<4x512xf32>
    %c0_34 = arith.constant 0 : index
    %c16 = arith.constant 16 : index
    %33 = vector.load %arg15[%c0_34, %c16] : memref<64x546xf32, #tpu.memory_space<vmem>>, vector<3x512xf32>
    %c3 = arith.constant 3 : index
    %c0_35 = arith.constant 0 : index
    %c0_36 = arith.constant 0 : index
    %34 = vector.load %arg9[%c3, %c0_35, %c0_36] : memref<9x1x512xf32, #tpu.memory_space<vmem>>, vector<1x1x512xf32>
    %35 = vector.shape_cast %34 : vector<1x1x512xf32> to vector<1x512xf32>
    %36 = vector.broadcast %35 : vector<1x512xf32> to vector<3x512xf32>
    %37 = arith.mulf %33, %36 : vector<3x512xf32>
    %c0_37 = arith.constant 0 : index
    %c3_38 = arith.constant 3 : index
    %c0_39 = arith.constant 0 : index
    %c0_40 = arith.constant 0 : index
    %38 = vector.load %arg2[%c0_37, %c3_38, %c0_39, %c0_40] : memref<10x9x64x64xf32, #tpu.memory_space<vmem>>, vector<1x1x4x3xf32>
    %39 = vector.shape_cast %38 : vector<1x1x4x3xf32> to vector<4x3xf32>
    %cst_41 = arith.constant dense<0.000000e+00> : vector<4x512xf32>
    %40 = tpu.matmul %39, %37, %cst_41 {dimension_numbers = #tpu.dot_dimension_numbers<[1], [0], [0], [1], [0, 0, 1, 1], [], []>} : vector<4x3xf32>, vector<3x512xf32>, vector<4x512xf32> -> vector<4x512xf32>
    %41 = arith.addf %32, %40 : vector<4x512xf32>
    %c0_42 = arith.constant 0 : index
    %c17_43 = arith.constant 17 : index
    %42 = vector.load %arg15[%c0_42, %c17_43] : memref<64x546xf32, #tpu.memory_space<vmem>>, vector<3x512xf32>
    %c0_44 = arith.constant 0 : index
    %c4 = arith.constant 4 : index
    %c0_45 = arith.constant 0 : index
    %c0_46 = arith.constant 0 : index
    %43 = vector.load %arg2[%c0_44, %c4, %c0_45, %c0_46] : memref<10x9x64x64xf32, #tpu.memory_space<vmem>>, vector<1x1x4x3xf32>
    %44 = vector.shape_cast %43 : vector<1x1x4x3xf32> to vector<4x3xf32>
    %cst_47 = arith.constant dense<0.000000e+00> : vector<4x512xf32>
    %45 = tpu.matmul %44, %42, %cst_47 {dimension_numbers = #tpu.dot_dimension_numbers<[1], [0], [0], [1], [0, 0, 1, 1], [], []>} : vector<4x3xf32>, vector<3x512xf32>, vector<4x512xf32> -> vector<4x512xf32>
    %46 = arith.addf %41, %45 : vector<4x512xf32>
    %c0_48 = arith.constant 0 : index
    %c18 = arith.constant 18 : index
    %47 = vector.load %arg15[%c0_48, %c18] : memref<64x546xf32, #tpu.memory_space<vmem>>, vector<3x512xf32>
    %c5 = arith.constant 5 : index
    %c0_49 = arith.constant 0 : index
    %c0_50 = arith.constant 0 : index
    %48 = vector.load %arg9[%c5, %c0_49, %c0_50] : memref<9x1x512xf32, #tpu.memory_space<vmem>>, vector<1x1x512xf32>
    %49 = vector.shape_cast %48 : vector<1x1x512xf32> to vector<1x512xf32>
    %50 = vector.broadcast %49 : vector<1x512xf32> to vector<3x512xf32>
    %51 = arith.mulf %47, %50 : vector<3x512xf32>
    %c0_51 = arith.constant 0 : index
    %c5_52 = arith.constant 5 : index
    %c0_53 = arith.constant 0 : index
    %c0_54 = arith.constant 0 : index
    %52 = vector.load %arg2[%c0_51, %c5_52, %c0_53, %c0_54] : memref<10x9x64x64xf32, #tpu.memory_space<vmem>>, vector<1x1x4x3xf32>
    %53 = vector.shape_cast %52 : vector<1x1x4x3xf32> to vector<4x3xf32>
    %cst_55 = arith.constant dense<0.000000e+00> : vector<4x512xf32>
    %54 = tpu.matmul %53, %51, %cst_55 {dimension_numbers = #tpu.dot_dimension_numbers<[1], [0], [0], [1], [0, 0, 1, 1], [], []>} : vector<4x3xf32>, vector<3x512xf32>, vector<4x512xf32> -> vector<4x512xf32>
    %55 = arith.addf %46, %54 : vector<4x512xf32>
    %c0_56 = arith.constant 0 : index
    %c32 = arith.constant 32 : index
    %56 = vector.load %arg15[%c0_56, %c32] : memref<64x546xf32, #tpu.memory_space<vmem>>, vector<3x512xf32>
    %c6 = arith.constant 6 : index
    %c0_57 = arith.constant 0 : index
    %c0_58 = arith.constant 0 : index
    %57 = vector.load %arg9[%c6, %c0_57, %c0_58] : memref<9x1x512xf32, #tpu.memory_space<vmem>>, vector<1x1x512xf32>
    %58 = vector.shape_cast %57 : vector<1x1x512xf32> to vector<1x512xf32>
    %59 = vector.broadcast %58 : vector<1x512xf32> to vector<3x512xf32>
    %60 = arith.mulf %56, %59 : vector<3x512xf32>
    %c0_59 = arith.constant 0 : index
    %c6_60 = arith.constant 6 : index
    %c0_61 = arith.constant 0 : index
    %c0_62 = arith.constant 0 : index
    %61 = vector.load %arg2[%c0_59, %c6_60, %c0_61, %c0_62] : memref<10x9x64x64xf32, #tpu.memory_space<vmem>>, vector<1x1x4x3xf32>
    %62 = vector.shape_cast %61 : vector<1x1x4x3xf32> to vector<4x3xf32>
    %cst_63 = arith.constant dense<0.000000e+00> : vector<4x512xf32>
    %63 = tpu.matmul %62, %60, %cst_63 {dimension_numbers = #tpu.dot_dimension_numbers<[1], [0], [0], [1], [0, 0, 1, 1], [], []>} : vector<4x3xf32>, vector<3x512xf32>, vector<4x512xf32> -> vector<4x512xf32>
    %64 = arith.addf %55, %63 : vector<4x512xf32>
    %c0_64 = arith.constant 0 : index
    %c33 = arith.constant 33 : index
    %65 = vector.load %arg15[%c0_64, %c33] : memref<64x546xf32, #tpu.memory_space<vmem>>, vector<3x512xf32>
    %c7 = arith.constant 7 : index
    %c0_65 = arith.constant 0 : index
    %c0_66 = arith.constant 0 : index
    %66 = vector.load %arg9[%c7, %c0_65, %c0_66] : memref<9x1x512xf32, #tpu.memory_space<vmem>>, vector<1x1x512xf32>
    %67 = vector.shape_cast %66 : vector<1x1x512xf32> to vector<1x512xf32>
    %68 = vector.broadcast %67 : vector<1x512xf32> to vector<3x512xf32>
    %69 = arith.mulf %65, %68 : vector<3x512xf32>
    %c0_67 = arith.constant 0 : index
    %c7_68 = arith.constant 7 : index
    %c0_69 = arith.constant 0 : index
    %c0_70 = arith.constant 0 : index
    %70 = vector.load %arg2[%c0_67, %c7_68, %c0_69, %c0_70] : memref<10x9x64x64xf32, #tpu.memory_space<vmem>>, vector<1x1x4x3xf32>
    %71 = vector.shape_cast %70 : vector<1x1x4x3xf32> to vector<4x3xf32>
    %cst_71 = arith.constant dense<0.000000e+00> : vector<4x512xf32>
    %72 = tpu.matmul %71, %69, %cst_71 {dimension_numbers = #tpu.dot_dimension_numbers<[1], [0], [0], [1], [0, 0, 1, 1], [], []>} : vector<4x3xf32>, vector<3x512xf32>, vector<4x512xf32> -> vector<4x512xf32>
    %73 = arith.addf %64, %72 : vector<4x512xf32>
    %c0_72 = arith.constant 0 : index
    %c34 = arith.constant 34 : index
    %74 = vector.load %arg15[%c0_72, %c34] : memref<64x546xf32, #tpu.memory_space<vmem>>, vector<3x512xf32>
    %c8 = arith.constant 8 : index
    %c0_73 = arith.constant 0 : index
    %c0_74 = arith.constant 0 : index
    %75 = vector.load %arg9[%c8, %c0_73, %c0_74] : memref<9x1x512xf32, #tpu.memory_space<vmem>>, vector<1x1x512xf32>
    %76 = vector.shape_cast %75 : vector<1x1x512xf32> to vector<1x512xf32>
    %77 = vector.broadcast %76 : vector<1x512xf32> to vector<3x512xf32>
    %78 = arith.mulf %74, %77 : vector<3x512xf32>
    %c0_75 = arith.constant 0 : index
    %c8_76 = arith.constant 8 : index
    %c0_77 = arith.constant 0 : index
    %c0_78 = arith.constant 0 : index
    %79 = vector.load %arg2[%c0_75, %c8_76, %c0_77, %c0_78] : memref<10x9x64x64xf32, #tpu.memory_space<vmem>>, vector<1x1x4x3xf32>
    %80 = vector.shape_cast %79 : vector<1x1x4x3xf32> to vector<4x3xf32>
    %cst_79 = arith.constant dense<0.000000e+00> : vector<4x512xf32>
    %81 = tpu.matmul %80, %78, %cst_79 {dimension_numbers = #tpu.dot_dimension_numbers<[1], [0], [0], [1], [0, 0, 1, 1], [], []>} : vector<4x3xf32>, vector<3x512xf32>, vector<4x512xf32> -> vector<4x512xf32>
    %82 = arith.addf %73, %81 : vector<4x512xf32>
    %cst_80 = arith.constant dense<0.000000e+00> : vector<4xf32>
    %83 = vector.multi_reduction <add>, %82, %cst_80 [1] : vector<4x512xf32> to vector<4xf32>
    %84 = vector.shape_cast %83 : vector<4xf32> to vector<4x1xf32>
    %cst_81 = arith.constant 5.120000e+02 : f32
    %85 = vector.broadcast %cst_81 : f32 to vector<4x1xf32>
    %86 = arith.divf %84, %85 : vector<4x1xf32>
    %87 = vector.broadcast %86 : vector<4x1xf32> to vector<4x512xf32>
    %88 = arith.subf %82, %87 : vector<4x512xf32>
    %89 = arith.mulf %88, %88 : vector<4x512xf32>
    %cst_82 = arith.constant dense<0.000000e+00> : vector<4xf32>
    %90 = vector.multi_reduction <add>, %89, %cst_82 [1] : vector<4x512xf32> to vector<4xf32>
    %91 = vector.shape_cast %90 : vector<4xf32> to vector<4x1xf32>
    %cst_83 = arith.constant 5.120000e+02 : f32
    %92 = vector.broadcast %cst_83 : f32 to vector<4x1xf32>
    %93 = arith.divf %91, %92 : vector<4x1xf32>
    %94 = vector.broadcast %86 : vector<4x1xf32> to vector<4x512xf32>
    %95 = arith.subf %82, %94 : vector<4x512xf32>
    %cst_84 = arith.constant 9.99999974E-6 : f32
    %96 = vector.broadcast %cst_84 : f32 to vector<4x1xf32>
    %97 = arith.addf %93, %96 : vector<4x1xf32>
    %98 = math.rsqrt %97 : vector<4x1xf32>
    %99 = vector.broadcast %98 : vector<4x1xf32> to vector<4x512xf32>
    %100 = arith.mulf %95, %99 : vector<4x512xf32>
    %c0_85 = arith.constant 0 : index
    %c0_86 = arith.constant 0 : index
    %c0_87 = arith.constant 0 : index
    %101 = vector.load %arg3[%c0_85, %c0_86, %c0_87] : memref<10x64x1xf32, #tpu.memory_space<vmem>>, vector<1x4x1xf32>
    %102 = vector.shape_cast %101 : vector<1x4x1xf32> to vector<4x1xf32>
    %103 = vector.broadcast %102 : vector<4x1xf32> to vector<4x512xf32>
    %104 = arith.mulf %100, %103 : vector<4x512xf32>
    %c0_88 = arith.constant 0 : index
    %c0_89 = arith.constant 0 : index
    %c0_90 = arith.constant 0 : index
    %105 = vector.load %arg4[%c0_88, %c0_89, %c0_90] : memref<10x64x1xf32, #tpu.memory_space<vmem>>, vector<1x4x1xf32>
    %106 = vector.shape_cast %105 : vector<1x4x1xf32> to vector<4x1xf32>
    %107 = vector.broadcast %106 : vector<4x1xf32> to vector<4x512xf32>
    %108 = arith.addf %104, %107 : vector<4x512xf32>
    %cst_91 = arith.constant 0.000000e+00 : f32
    %109 = vector.broadcast %cst_91 : f32 to vector<4x512xf32>
    %110 = arith.maximumf %108, %109 : vector<4x512xf32>
    %c0_92 = arith.constant 0 : index
    %c17_93 = arith.constant 17 : index
    %111 = vector.load %arg15[%c0_92, %c17_93] : memref<64x546xf32, #tpu.memory_space<vmem>>, vector<4x512xf32>
    tpu.vector_store %arg15[%c0_92, %c17_93], %110 {strides = array<i32>} : memref<64x546xf32, #tpu.memory_space<vmem>>, vector<4x512xf32>,
    %cst_94 = arith.constant 0.000000e+00 : f32
    %112 = vector.broadcast %cst_94 : f32 to vector<4x512xf32>
    %c0_95 = arith.constant 0 : index
    %c0_96 = arith.constant 0 : index
    %113 = vector.load %arg15[%c0_95, %c0_96] : memref<64x546xf32, #tpu.memory_space<vmem>>, vector<4x512xf32>
    %c0_97 = arith.constant 0 : index
    %c0_98 = arith.constant 0 : index
    %c0_99 = arith.constant 0 : index
    %114 = vector.load %arg9[%c0_97, %c0_98, %c0_99] : memref<9x1x512xf32, #tpu.memory_space<vmem>>, vector<1x1x512xf32>
    %115 = vector.shape_cast %114 : vector<1x1x512xf32> to vector<1x512xf32>
    %116 = vector.broadcast %115 : vector<1x512xf32> to vector<4x512xf32>
    %117 = arith.mulf %113, %116 : vector<4x512xf32>
    %c1_100 = arith.constant 1 : index
    %c0_101 = arith.constant 0 : index
    %c0_102 = arith.constant 0 : index
    %c0_103 = arith.constant 0 : index
    %118 = vector.load %arg2[%c1_100, %c0_101, %c0_102, %c0_103] : memref<10x9x64x64xf32, #tpu.memory_space<vmem>>, vector<1x1x4x4xf32>
    %119 = vector.shape_cast %118 : vector<1x1x4x4xf32> to vector<4x4xf32>
    %cst_104 = arith.constant dense<0.000000e+00> : vector<4x512xf32>
    %120 = tpu.matmul %119, %117, %cst_104 {dimension_numbers = #tpu.dot_dimension_numbers<[1], [0], [0], [1], [0, 0, 1, 1], [], []>} : vector<4x4xf32>, vector<4x512xf32>, vector<4x512xf32> -> vector<4x512xf32>
    %121 = arith.addf %112, %120 : vector<4x512xf32>
    %c0_105 = arith.constant 0 : index
    %c1_106 = arith.constant 1 : index
    %122 = vector.load %arg15[%c0_105, %c1_106] : memref<64x546xf32, #tpu.memory_space<vmem>>, vector<4x512xf32>
    %c1_107 = arith.constant 1 : index
    %c0_108 = arith.constant 0 : index
    %c0_109 = arith.constant 0 : index
    %123 = vector.load %arg9[%c1_107, %c0_108, %c0_109] : memref<9x1x512xf32, #tpu.memory_space<vmem>>, vector<1x1x512xf32>
    %124 = vector.shape_cast %123 : vector<1x1x512xf32> to vector<1x512xf32>
    %125 = vector.broadcast %124 : vector<1x512xf32> to vector<4x512xf32>
    %126 = arith.mulf %122, %125 : vector<4x512xf32>
    %c1_110 = arith.constant 1 : index
    %c1_111 = arith.constant 1 : index
    %c0_112 = arith.constant 0 : index
    %c0_113 = arith.constant 0 : index
    %127 = vector.load %arg2[%c1_110, %c1_111, %c0_112, %c0_113] : memref<10x9x64x64xf32, #tpu.memory_space<vmem>>, vector<1x1x4x4xf32>
    %128 = vector.shape_cast %127 : vector<1x1x4x4xf32> to vector<4x4xf32>
    %cst_114 = arith.constant dense<0.000000e+00> : vector<4x512xf32>
    %129 = tpu.matmul %128, %126, %cst_114 {dimension_numbers = #tpu.dot_dimension_numbers<[1], [0], [0], [1], [0, 0, 1, 1], [], []>} : vector<4x4xf32>, vector<4x512xf32>, vector<4x512xf32> -> vector<4x512xf32>
    %130 = arith.addf %121, %129 : vector<4x512xf32>
    %c0_115 = arith.constant 0 : index
    %c2_116 = arith.constant 2 : index
    %131 = vector.load %arg15[%c0_115, %c2_116] : memref<64x546xf32, #tpu.memory_space<vmem>>, vector<4x512xf32>
    %c2_117 = arith.constant 2 : index
    %c0_118 = arith.constant 0 : index
    %c0_119 = arith.constant 0 : index
    %132 = vector.load %arg9[%c2_117, %c0_118, %c0_119] : memref<9x1x512xf32, #tpu.memory_space<vmem>>, vector<1x1x512xf32>
    %133 = vector.shape_cast %132 : vector<1x1x512xf32> to vector<1x512xf32>
    %134 = vector.broadcast %133 : vector<1x512xf32> to vector<4x512xf32>
    %135 = arith.mulf %131, %134 : vector<4x512xf32>
    %c1_120 = arith.constant 1 : index
    %c2_121 = arith.constant 2 : index
    %c0_122 = arith.constant 0 : index
    %c0_123 = arith.constant 0 : index
    %136 = vector.load %arg2[%c1_120, %c2_121, %c0_122, %c0_123] : memref<10x9x64x64xf32, #tpu.memory_space<vmem>>, vector<1x1x4x4xf32>
    %137 = vector.shape_cast %136 : vector<1x1x4x4xf32> to vector<4x4xf32>
    %cst_124 = arith.constant dense<0.000000e+00> : vector<4x512xf32>
    %138 = tpu.matmul %137, %135, %cst_124 {dimension_numbers = #tpu.dot_dimension_numbers<[1], [0], [0], [1], [0, 0, 1, 1], [], []>} : vector<4x4xf32>, vector<4x512xf32>, vector<4x512xf32> -> vector<4x512xf32>
    %139 = arith.addf %130, %138 : vector<4x512xf32>
    %c0_125 = arith.constant 0 : index
    %c16_126 = arith.constant 16 : index
    %140 = vector.load %arg15[%c0_125, %c16_126] : memref<64x546xf32, #tpu.memory_space<vmem>>, vector<4x512xf32>
    %c3_127 = arith.constant 3 : index
    %c0_128 = arith.constant 0 : index
    %c0_129 = arith.constant 0 : index
    %141 = vector.load %arg9[%c3_127, %c0_128, %c0_129] : memref<9x1x512xf32, #tpu.memory_space<vmem>>, vector<1x1x512xf32>
    %142 = vector.shape_cast %141 : vector<1x1x512xf32> to vector<1x512xf32>
    %143 = vector.broadcast %142 : vector<1x512xf32> to vector<4x512xf32>
    %144 = arith.mulf %140, %143 : vector<4x512xf32>
    %c1_130 = arith.constant 1 : index
    %c3_131 = arith.constant 3 : index
    %c0_132 = arith.constant 0 : index
    %c0_133 = arith.constant 0 : index
    %145 = vector.load %arg2[%c1_130, %c3_131, %c0_132, %c0_133] : memref<10x9x64x64xf32, #tpu.memory_space<vmem>>, vector<1x1x4x4xf32>
    %146 = vector.shape_cast %145 : vector<1x1x4x4xf32> to vector<4x4xf32>
    %cst_134 = arith.constant dense<0.000000e+00> : vector<4x512xf32>
    %147 = tpu.matmul %146, %144, %cst_134 {dimension_numbers = #tpu.dot_dimension_numbers<[1], [0], [0], [1], [0, 0, 1, 1], [], []>} : vector<4x4xf32>, vector<4x512xf32>, vector<4x512xf32> -> vector<4x512xf32>
    %148 = arith.addf %139, %147 : vector<4x512xf32>
    %c0_135 = arith.constant 0 : index
    %c17_136 = arith.constant 17 : index
    %149 = vector.load %arg15[%c0_135, %c17_136] : memref<64x546xf32, #tpu.memory_space<vmem>>, vector<4x512xf32>
    %c1_137 = arith.constant 1 : index
    %c4_138 = arith.constant 4 : index
    %c0_139 = arith.constant 0 : index
    %c0_140 = arith.constant 0 : index
    %150 = vector.load %arg2[%c1_137, %c4_138, %c0_139, %c0_140] : memref<10x9x64x64xf32, #tpu.memory_space<vmem>>, vector<1x1x4x4xf32>
    %151 = vector.shape_cast %150 : vector<1x1x4x4xf32> to vector<4x4xf32>
    %cst_141 = arith.constant dense<0.000000e+00> : vector<4x512xf32>
    %152 = tpu.matmul %151, %149, %cst_141 {dimension_numbers = #tpu.dot_dimension_numbers<[1], [0], [0], [1], [0, 0, 1, 1], [], []>} : vector<4x4xf32>, vector<4x512xf32>, vector<4x512xf32> -> vector<4x512xf32>
    %153 = arith.addf %148, %152 : vector<4x512xf32>
    %c0_142 = arith.constant 0 : index
    %c18_143 = arith.constant 18 : index
    %154 = vector.load %arg15[%c0_142, %c18_143] : memref<64x546xf32, #tpu.memory_space<vmem>>, vector<4x512xf32>
    %c5_144 = arith.constant 5 : index
    %c0_145 = arith.constant 0 : index
    %c0_146 = arith.constant 0 : index
    %155 = vector.load %arg9[%c5_144, %c0_145, %c0_146] : memref<9x1x512xf32, #tpu.memory_space<vmem>>, vector<1x1x512xf32>
    %156 = vector.shape_cast %155 : vector<1x1x512xf32> to vector<1x512xf32>
    %157 = vector.broadcast %156 : vector<1x512xf32> to vector<4x512xf32>
    %158 = arith.mulf %154, %157 : vector<4x512xf32>
    %c1_147 = arith.constant 1 : index
    %c5_148 = arith.constant 5 : index
    %c0_149 = arith.constant 0 : index
    %c0_150 = arith.constant 0 : index
    %159 = vector.load %arg2[%c1_147, %c5_148, %c0_149, %c0_150] : memref<10x9x64x64xf32, #tpu.memory_space<vmem>>, vector<1x1x4x4xf32>
    %160 = vector.shape_cast %159 : vector<1x1x4x4xf32> to vector<4x4xf32>
    %cst_151 = arith.constant dense<0.000000e+00> : vector<4x512xf32>
    %161 = tpu.matmul %160, %158, %cst_151 {dimension_numbers = #tpu.dot_dimension_numbers<[1], [0], [0], [1], [0, 0, 1, 1], [], []>} : vector<4x4xf32>, vector<4x512xf32>, vector<4x512xf32> -> vector<4x512xf32>
    %162 = arith.addf %153, %161 : vector<4x512xf32>
    %c0_152 = arith.constant 0 : index
    %c32_153 = arith.constant 32 : index
    %163 = vector.load %arg15[%c0_152, %c32_153] : memref<64x546xf32, #tpu.memory_space<vmem>>, vector<4x512xf32>
    %c6_154 = arith.constant 6 : index
    %c0_155 = arith.constant 0 : index
    %c0_156 = arith.constant 0 : index
    %164 = vector.load %arg9[%c6_154, %c0_155, %c0_156] : memref<9x1x512xf32, #tpu.memory_space<vmem>>, vector<1x1x512xf32>
    %165 = vector.shape_cast %164 : vector<1x1x512xf32> to vector<1x512xf32>
    %166 = vector.broadcast %165 : vector<1x512xf32> to vector<4x512xf32>
    %167 = arith.mulf %163, %166 : vector<4x512xf32>
    %c1_157 = arith.constant 1 : index
    %c6_158 = arith.constant 6 : index
    %c0_159 = arith.constant 0 : index
    %c0_160 = arith.constant 0 : index
    %168 = vector.load %arg2[%c1_157, %c6_158, %c0_159, %c0_160] : memref<10x9x64x64xf32, #tpu.memory_space<vmem>>, vector<1x1x4x4xf32>
    %169 = vector.shape_cast %168 : vector<1x1x4x4xf32> to vector<4x4xf32>
    %cst_161 = arith.constant dense<0.000000e+00> : vector<4x512xf32>
    %170 = tpu.matmul %169, %167, %cst_161 {dimension_numbers = #tpu.dot_dimension_numbers<[1], [0], [0], [1], [0, 0, 1, 1], [], []>} : vector<4x4xf32>, vector<4x512xf32>, vector<4x512xf32> -> vector<4x512xf32>
    %171 = arith.addf %162, %170 : vector<4x512xf32>
    %c0_162 = arith.constant 0 : index
    %c33_163 = arith.constant 33 : index
    %172 = vector.load %arg15[%c0_162, %c33_163] : memref<64x546xf32, #tpu.memory_space<vmem>>, vector<4x512xf32>
    %c7_164 = arith.constant 7 : index
    %c0_165 = arith.constant 0 : index
    %c0_166 = arith.constant 0 : index
    %173 = vector.load %arg9[%c7_164, %c0_165, %c0_166] : memref<9x1x512xf32, #tpu.memory_space<vmem>>, vector<1x1x512xf32>
    %174 = vector.shape_cast %173 : vector<1x1x512xf32> to vector<1x512xf32>
    %175 = vector.broadcast %174 : vector<1x512xf32> to vector<4x512xf32>
    %176 = arith.mulf %172, %175 : vector<4x512xf32>
    %c1_167 = arith.constant 1 : index
    %c7_168 = arith.constant 7 : index
    %c0_169 = arith.constant 0 : index
    %c0_170 = arith.constant 0 : index
    %177 = vector.load %arg2[%c1_167, %c7_168, %c0_169, %c0_170] : memref<10x9x64x64xf32, #tpu.memory_space<vmem>>, vector<1x1x4x4xf32>
    %178 = vector.shape_cast %177 : vector<1x1x4x4xf32> to vector<4x4xf32>
    %cst_171 = arith.constant dense<0.000000e+00> : vector<4x512xf32>
    %179 = tpu.matmul %178, %176, %cst_171 {dimension_numbers = #tpu.dot_dimension_numbers<[1], [0], [0], [1], [0, 0, 1, 1], [], []>} : vector<4x4xf32>, vector<4x512xf32>, vector<4x512xf32> -> vector<4x512xf32>
    %180 = arith.addf %171, %179 : vector<4x512xf32>
    %c0_172 = arith.constant 0 : index
    %c34_173 = arith.constant 34 : index
    %181 = vector.load %arg15[%c0_172, %c34_173] : memref<64x546xf32, #tpu.memory_space<vmem>>, vector<4x512xf32>
    %c8_174 = arith.constant 8 : index
    %c0_175 = arith.constant 0 : index
    %c0_176 = arith.constant 0 : index
    %182 = vector.load %arg9[%c8_174, %c0_175, %c0_176] : memref<9x1x512xf32, #tpu.memory_space<vmem>>, vector<1x1x512xf32>
    %183 = vector.shape_cast %182 : vector<1x1x512xf32> to vector<1x512xf32>
    %184 = vector.broadcast %183 : vector<1x512xf32> to vector<4x512xf32>
    %185 = arith.mulf %181, %184 : vector<4x512xf32>
    %c1_177 = arith.constant 1 : index
    %c8_178 = arith.constant 8 : index
    %c0_179 = arith.constant 0 : index
    %c0_180 = arith.constant 0 : index
    %186 = vector.load %arg2[%c1_177, %c8_178, %c0_179, %c0_180] : memref<10x9x64x64xf32, #tpu.memory_space<vmem>>, vector<1x1x4x4xf32>
    %187 = vector.shape_cast %186 : vector<1x1x4x4xf32> to vector<4x4xf32>
    %cst_181 = arith.constant dense<0.000000e+00> : vector<4x512xf32>
    %188 = tpu.matmul %187, %185, %cst_181 {dimension_numbers = #tpu.dot_dimension_numbers<[1], [0], [0], [1], [0, 0, 1, 1], [], []>} : vector<4x4xf32>, vector<4x512xf32>, vector<4x512xf32> -> vector<4x512xf32>
    %189 = arith.addf %180, %188 : vector<4x512xf32>
    %cst_182 = arith.constant dense<0.000000e+00> : vector<4xf32>
    %190 = vector.multi_reduction <add>, %189, %cst_182 [1] : vector<4x512xf32> to vector<4xf32>
    %191 = vector.shape_cast %190 : vector<4xf32> to vector<4x1xf32>
    %cst_183 = arith.constant 5.120000e+02 : f32
    %192 = vector.broadcast %cst_183 : f32 to vector<4x1xf32>
    %193 = arith.divf %191, %192 : vector<4x1xf32>
    %194 = vector.broadcast %193 : vector<4x1xf32> to vector<4x512xf32>
    %195 = arith.subf %189, %194 : vector<4x512xf32>
    %196 = arith.mulf %195, %195 : vector<4x512xf32>
    %cst_184 = arith.constant dense<0.000000e+00> : vector<4xf32>
    %197 = vector.multi_reduction <add>, %196, %cst_184 [1] : vector<4x512xf32> to vector<4xf32>
    %198 = vector.shape_cast %197 : vector<4xf32> to vector<4x1xf32>
    %cst_185 = arith.constant 5.120000e+02 : f32
    %199 = vector.broadcast %cst_185 : f32 to vector<4x1xf32>
    %200 = arith.divf %198, %199 : vector<4x1xf32>
    %201 = vector.broadcast %193 : vector<4x1xf32> to vector<4x512xf32>
    %202 = arith.subf %189, %201 : vector<4x512xf32>
    %cst_186 = arith.constant 9.99999974E-6 : f32
    %203 = vector.broadcast %cst_186 : f32 to vector<4x1xf32>
    %204 = arith.addf %200, %203 : vector<4x1xf32>
    %205 = math.rsqrt %204 : vector<4x1xf32>
    %206 = vector.broadcast %205 : vector<4x1xf32> to vector<4x512xf32>
    %207 = arith.mulf %202, %206 : vector<4x512xf32>
    %c1_187 = arith.constant 1 : index
    %c0_188 = arith.constant 0 : index
    %c0_189 = arith.constant 0 : index
    %208 = vector.load %arg3[%c1_187, %c0_188, %c0_189] : memref<10x64x1xf32, #tpu.memory_space<vmem>>, vector<1x4x1xf32>
    %209 = vector.shape_cast %208 : vector<1x4x1xf32> to vector<4x1xf32>
    %210 = vector.broadcast %209 : vector<4x1xf32> to vector<4x512xf32>
    %211 = arith.mulf %207, %210 : vector<4x512xf32>
    %c1_190 = arith.constant 1 : index
    %c0_191 = arith.constant 0 : index
    %c0_192 = arith.constant 0 : index
    %212 = vector.load %arg4[%c1_190, %c0_191, %c0_192] : memref<10x64x1xf32, #tpu.memory_space<vmem>>, vector<1x4x1xf32>
    %213 = vector.shape_cast %212 : vector<1x4x1xf32> to vector<4x1xf32>
    %214 = vector.broadcast %213 : vector<4x1xf32> to vector<4x512xf32>
    %215 = arith.addf %211, %214 : vector<4x512xf32>
    %cst_193 = arith.constant 0.000000e+00 : f32
    %216 = vector.broadcast %cst_193 : f32 to vector<4x512xf32>
    %217 = arith.maximumf %215, %216 : vector<4x512xf32>
    %c0_194 = arith.constant 0 : index
    %c0_195 = arith.constant 0 : index
    %c0_196 = arith.constant 0 : index
    %218 = vector.load %arg5[%c0_194, %c0_195, %c0_196] : memref<4x512x128xf32, #tpu.memory_space<vmem>>, vector<1x512x128xf32>
    %219 = vector.shape_cast %218 : vector<1x512x128xf32> to vector<512x128xf32>
    %cst_197 = arith.constant dense<0.000000e+00> : vector<4x128xf32>
    %220 = tpu.matmul %217, %219, %cst_197 {dimension_numbers = #tpu.dot_dimension_numbers<[1], [0], [0], [1], [0, 0, 1, 1], [], []>} : vector<4x512xf32>, vector<512x128xf32>, vector<4x128xf32> -> vector<4x128xf32>
    %c1_198 = arith.constant 1 : index
    %c0_199 = arith.constant 0 : index
    %c0_200 = arith.constant 0 : index
    %221 = vector.load %arg5[%c1_198, %c0_199, %c0_200] : memref<4x512x128xf32, #tpu.memory_space<vmem>>, vector<1x512x128xf32>
    %222 = vector.shape_cast %221 : vector<1x512x128xf32> to vector<512x128xf32>
    %cst_201 = arith.constant dense<0.000000e+00> : vector<4x128xf32>
    %223 = tpu.matmul %217, %222, %cst_201 {dimension_numbers = #tpu.dot_dimension_numbers<[1], [0], [0], [1], [0, 0, 1, 1], [], []>} : vector<4x512xf32>, vector<512x128xf32>, vector<4x128xf32> -> vector<4x128xf32>
    %c2_202 = arith.constant 2 : index
    %c0_203 = arith.constant 0 : index
    %c0_204 = arith.constant 0 : index
    %224 = vector.load %arg5[%c2_202, %c0_203, %c0_204] : memref<4x512x128xf32, #tpu.memory_space<vmem>>, vector<1x512x128xf32>
    %225 = vector.shape_cast %224 : vector<1x512x128xf32> to vector<512x128xf32>
    %cst_205 = arith.constant dense<0.000000e+00> : vector<4x128xf32>
    %226 = tpu.matmul %217, %225, %cst_205 {dimension_numbers = #tpu.dot_dimension_numbers<[1], [0], [0], [1], [0, 0, 1, 1], [], []>} : vector<4x512xf32>, vector<512x128xf32>, vector<4x128xf32> -> vector<4x128xf32>
    %c3_206 = arith.constant 3 : index
    %c0_207 = arith.constant 0 : index
    %c0_208 = arith.constant 0 : index
    %227 = vector.load %arg5[%c3_206, %c0_207, %c0_208] : memref<4x512x128xf32, #tpu.memory_space<vmem>>, vector<1x512x128xf32>
    %228 = vector.shape_cast %227 : vector<1x512x128xf32> to vector<512x128xf32>
    %cst_209 = arith.constant dense<0.000000e+00> : vector<4x128xf32>
    %229 = tpu.matmul %217, %228, %cst_209 {dimension_numbers = #tpu.dot_dimension_numbers<[1], [0], [0], [1], [0, 0, 1, 1], [], []>} : vector<4x512xf32>, vector<512x128xf32>, vector<4x128xf32> -> vector<4x128xf32>
    %230 = arith.maximumf %220, %223 : vector<4x128xf32>
    %231 = arith.maximumf %226, %229 : vector<4x128xf32>
    %232 = arith.maximumf %230, %231 : vector<4x128xf32>
    %c0_210 = arith.constant 0 : index
    %c9 = arith.constant 9 : index
    %233 = vector.load %arg15[%c0_210, %c9] : memref<64x546xf32, #tpu.memory_space<vmem>>, vector<4x128xf32>
    tpu.vector_store %arg15[%c0_210, %c9], %232 {strides = array<i32>} : memref<64x546xf32, #tpu.memory_space<vmem>>, vector<4x128xf32>,
    %cst_211 = arith.constant 0.000000e+00 : f32
    %234 = vector.broadcast %cst_211 : f32 to vector<8x128xf32>
    %c0_212 = arith.constant 0 : index
    %c0_213 = arith.constant 0 : index
    %235 = vector.load %arg15[%c0_212, %c0_213] : memref<64x546xf32, #tpu.memory_space<vmem>>, vector<4x128xf32>
    %c0_214 = arith.constant 0 : index
    %c0_215 = arith.constant 0 : index
    %c0_216 = arith.constant 0 : index
    %236 = vector.load %arg10[%c0_214, %c0_215, %c0_216] : memref<9x1x128xf32, #tpu.memory_space<vmem>>, vector<1x1x128xf32>
    %237 = vector.shape_cast %236 : vector<1x1x128xf32> to vector<1x128xf32>
    %238 = vector.broadcast %237 : vector<1x128xf32> to vector<4x128xf32>
    %239 = arith.mulf %235, %238 : vector<4x128xf32>
    %c2_217 = arith.constant 2 : index
    %c0_218 = arith.constant 0 : index
    %c0_219 = arith.constant 0 : index
    %c0_220 = arith.constant 0 : index
    %240 = vector.load %arg2[%c2_217, %c0_218, %c0_219, %c0_220] : memref<10x9x64x64xf32, #tpu.memory_space<vmem>>, vector<1x1x8x4xf32>
    %241 = vector.shape_cast %240 : vector<1x1x8x4xf32> to vector<8x4xf32>
    %cst_221 = arith.constant dense<0.000000e+00> : vector<8x128xf32>
    %242 = tpu.matmul %241, %239, %cst_221 {dimension_numbers = #tpu.dot_dimension_numbers<[1], [0], [0], [1], [0, 0, 1, 1], [], []>} : vector<8x4xf32>, vector<4x128xf32>, vector<8x128xf32> -> vector<8x128xf32>
    %243 = arith.addf %234, %242 : vector<8x128xf32>
    %c0_222 = arith.constant 0 : index
    %c1_223 = arith.constant 1 : index
    %244 = vector.load %arg15[%c0_222, %c1_223] : memref<64x546xf32, #tpu.memory_space<vmem>>, vector<4x128xf32>
    %c1_224 = arith.constant 1 : index
    %c0_225 = arith.constant 0 : index
    %c0_226 = arith.constant 0 : index
    %245 = vector.load %arg10[%c1_224, %c0_225, %c0_226] : memref<9x1x128xf32, #tpu.memory_space<vmem>>, vector<1x1x128xf32>
    %246 = vector.shape_cast %245 : vector<1x1x128xf32> to vector<1x128xf32>
    %247 = vector.broadcast %246 : vector<1x128xf32> to vector<4x128xf32>
    %248 = arith.mulf %244, %247 : vector<4x128xf32>
    %c2_227 = arith.constant 2 : index
    %c1_228 = arith.constant 1 : index
    %c0_229 = arith.constant 0 : index
    %c0_230 = arith.constant 0 : index
    %249 = vector.load %arg2[%c2_227, %c1_228, %c0_229, %c0_230] : memref<10x9x64x64xf32, #tpu.memory_space<vmem>>, vector<1x1x8x4xf32>
    %250 = vector.shape_cast %249 : vector<1x1x8x4xf32> to vector<8x4xf32>
    %cst_231 = arith.constant dense<0.000000e+00> : vector<8x128xf32>
    %251 = tpu.matmul %250, %248, %cst_231 {dimension_numbers = #tpu.dot_dimension_numbers<[1], [0], [0], [1], [0, 0, 1, 1], [], []>} : vector<8x4xf32>, vector<4x128xf32>, vector<8x128xf32> -> vector<8x128xf32>
    %252 = arith.addf %243, %251 : vector<8x128xf32>
    %c0_232 = arith.constant 0 : index
    %c2_233 = arith.constant 2 : index
    %253 = vector.load %arg15[%c0_232, %c2_233] : memref<64x546xf32, #tpu.memory_space<vmem>>, vector<4x128xf32>
    %c2_234 = arith.constant 2 : index
    %c0_235 = arith.constant 0 : index
    %c0_236 = arith.constant 0 : index
    %254 = vector.load %arg10[%c2_234, %c0_235, %c0_236] : memref<9x1x128xf32, #tpu.memory_space<vmem>>, vector<1x1x128xf32>
    %255 = vector.shape_cast %254 : vector<1x1x128xf32> to vector<1x128xf32>
    %256 = vector.broadcast %255 : vector<1x128xf32> to vector<4x128xf32>
    %257 = arith.mulf %253, %256 : vector<4x128xf32>
    %c2_237 = arith.constant 2 : index
    %c2_238 = arith.constant 2 : index
    %c0_239 = arith.constant 0 : index
    %c0_240 = arith.constant 0 : index
    %258 = vector.load %arg2[%c2_237, %c2_238, %c0_239, %c0_240] : memref<10x9x64x64xf32, #tpu.memory_space<vmem>>, vector<1x1x8x4xf32>
    %259 = vector.shape_cast %258 : vector<1x1x8x4xf32> to vector<8x4xf32>
    %cst_241 = arith.constant dense<0.000000e+00> : vector<8x128xf32>
    %260 = tpu.matmul %259, %257, %cst_241 {dimension_numbers = #tpu.dot_dimension_numbers<[1], [0], [0], [1], [0, 0, 1, 1], [], []>} : vector<8x4xf32>, vector<4x128xf32>, vector<8x128xf32> -> vector<8x128xf32>
    %261 = arith.addf %252, %260 : vector<8x128xf32>
    %c0_242 = arith.constant 0 : index
    %c8_243 = arith.constant 8 : index
    %262 = vector.load %arg15[%c0_242, %c8_243] : memref<64x546xf32, #tpu.memory_space<vmem>>, vector<4x128xf32>
    %c3_244 = arith.constant 3 : index
    %c0_245 = arith.constant 0 : index
    %c0_246 = arith.constant 0 : index
    %263 = vector.load %arg10[%c3_244, %c0_245, %c0_246] : memref<9x1x128xf32, #tpu.memory_space<vmem>>, vector<1x1x128xf32>
    %264 = vector.shape_cast %263 : vector<1x1x128xf32> to vector<1x128xf32>
    %265 = vector.broadcast %264 : vector<1x128xf32> to vector<4x128xf32>
    %266 = arith.mulf %262, %265 : vector<4x128xf32>
    %c2_247 = arith.constant 2 : index
    %c3_248 = arith.constant 3 : index
    %c0_249 = arith.constant 0 : index
    %c0_250 = arith.constant 0 : index
    %267 = vector.load %arg2[%c2_247, %c3_248, %c0_249, %c0_250] : memref<10x9x64x64xf32, #tpu.memory_space<vmem>>, vector<1x1x8x4xf32>
    %268 = vector.shape_cast %267 : vector<1x1x8x4xf32> to vector<8x4xf32>
    %cst_251 = arith.constant dense<0.000000e+00> : vector<8x128xf32>
    %269 = tpu.matmul %268, %266, %cst_251 {dimension_numbers = #tpu.dot_dimension_numbers<[1], [0], [0], [1], [0, 0, 1, 1], [], []>} : vector<8x4xf32>, vector<4x128xf32>, vector<8x128xf32> -> vector<8x128xf32>
    %270 = arith.addf %261, %269 : vector<8x128xf32>
    %c0_252 = arith.constant 0 : index
    %c9_253 = arith.constant 9 : index
    %271 = vector.load %arg15[%c0_252, %c9_253] : memref<64x546xf32, #tpu.memory_space<vmem>>, vector<4x128xf32>
    %c2_254 = arith.constant 2 : index
    %c4_255 = arith.constant 4 : index
    %c0_256 = arith.constant 0 : index
    %c0_257 = arith.constant 0 : index
    %272 = vector.load %arg2[%c2_254, %c4_255, %c0_256, %c0_257] : memref<10x9x64x64xf32, #tpu.memory_space<vmem>>, vector<1x1x8x4xf32>
    %273 = vector.shape_cast %272 : vector<1x1x8x4xf32> to vector<8x4xf32>
    %cst_258 = arith.constant dense<0.000000e+00> : vector<8x128xf32>
    %274 = tpu.matmul %273, %271, %cst_258 {dimension_numbers = #tpu.dot_dimension_numbers<[1], [0], [0], [1], [0, 0, 1, 1], [], []>} : vector<8x4xf32>, vector<4x128xf32>, vector<8x128xf32> -> vector<8x128xf32>
    %275 = arith.addf %270, %274 : vector<8x128xf32>
    %c0_259 = arith.constant 0 : index
    %c10 = arith.constant 10 : index
    %276 = vector.load %arg15[%c0_259, %c10] : memref<64x546xf32, #tpu.memory_space<vmem>>, vector<4x128xf32>
    %c5_260 = arith.constant 5 : index
    %c0_261 = arith.constant 0 : index
    %c0_262 = arith.constant 0 : index
    %277 = vector.load %arg10[%c5_260, %c0_261, %c0_262] : memref<9x1x128xf32, #tpu.memory_space<vmem>>, vector<1x1x128xf32>
    %278 = vector.shape_cast %277 : vector<1x1x128xf32> to vector<1x128xf32>
    %279 = vector.broadcast %278 : vector<1x128xf32> to vector<4x128xf32>
    %280 = arith.mulf %276, %279 : vector<4x128xf32>
    %c2_263 = arith.constant 2 : index
    %c5_264 = arith.constant 5 : index
    %c0_265 = arith.constant 0 : index
    %c0_266 = arith.constant 0 : index
    %281 = vector.load %arg2[%c2_263, %c5_264, %c0_265, %c0_266] : memref<10x9x64x64xf32, #tpu.memory_space<vmem>>, vector<1x1x8x4xf32>
    %282 = vector.shape_cast %281 : vector<1x1x8x4xf32> to vector<8x4xf32>
    %cst_267 = arith.constant dense<0.000000e+00> : vector<8x128xf32>
    %283 = tpu.matmul %282, %280, %cst_267 {dimension_numbers = #tpu.dot_dimension_numbers<[1], [0], [0], [1], [0, 0, 1, 1], [], []>} : vector<8x4xf32>, vector<4x128xf32>, vector<8x128xf32> -> vector<8x128xf32>
    %284 = arith.addf %275, %283 : vector<8x128xf32>
    %c0_268 = arith.constant 0 : index
    %c16_269 = arith.constant 16 : index
    %285 = vector.load %arg15[%c0_268, %c16_269] : memref<64x546xf32, #tpu.memory_space<vmem>>, vector<4x128xf32>
    %c6_270 = arith.constant 6 : index
    %c0_271 = arith.constant 0 : index
    %c0_272 = arith.constant 0 : index
    %286 = vector.load %arg10[%c6_270, %c0_271, %c0_272] : memref<9x1x128xf32, #tpu.memory_space<vmem>>, vector<1x1x128xf32>
    %287 = vector.shape_cast %286 : vector<1x1x128xf32> to vector<1x128xf32>
    %288 = vector.broadcast %287 : vector<1x128xf32> to vector<4x128xf32>
    %289 = arith.mulf %285, %288 : vector<4x128xf32>
    %c2_273 = arith.constant 2 : index
    %c6_274 = arith.constant 6 : index
    %c0_275 = arith.constant 0 : index
    %c0_276 = arith.constant 0 : index
    %290 = vector.load %arg2[%c2_273, %c6_274, %c0_275, %c0_276] : memref<10x9x64x64xf32, #tpu.memory_space<vmem>>, vector<1x1x8x4xf32>
    %291 = vector.shape_cast %290 : vector<1x1x8x4xf32> to vector<8x4xf32>
    %cst_277 = arith.constant dense<0.000000e+00> : vector<8x128xf32>
    %292 = tpu.matmul %291, %289, %cst_277 {dimension_numbers = #tpu.dot_dimension_numbers<[1], [0], [0], [1], [0, 0, 1, 1], [], []>} : vector<8x4xf32>, vector<4x128xf32>, vector<8x128xf32> -> vector<8x128xf32>
    %293 = arith.addf %284, %292 : vector<8x128xf32>
    %c0_278 = arith.constant 0 : index
    %c17_279 = arith.constant 17 : index
    %294 = vector.load %arg15[%c0_278, %c17_279] : memref<64x546xf32, #tpu.memory_space<vmem>>, vector<4x128xf32>
    %c7_280 = arith.constant 7 : index
    %c0_281 = arith.constant 0 : index
    %c0_282 = arith.constant 0 : index
    %295 = vector.load %arg10[%c7_280, %c0_281, %c0_282] : memref<9x1x128xf32, #tpu.memory_space<vmem>>, vector<1x1x128xf32>
    %296 = vector.shape_cast %295 : vector<1x1x128xf32> to vector<1x128xf32>
    %297 = vector.broadcast %296 : vector<1x128xf32> to vector<4x128xf32>
    %298 = arith.mulf %294, %297 : vector<4x128xf32>
    %c2_283 = arith.constant 2 : index
    %c7_284 = arith.constant 7 : index
    %c0_285 = arith.constant 0 : index
    %c0_286 = arith.constant 0 : index
    %299 = vector.load %arg2[%c2_283, %c7_284, %c0_285, %c0_286] : memref<10x9x64x64xf32, #tpu.memory_space<vmem>>, vector<1x1x8x4xf32>
    %300 = vector.shape_cast %299 : vector<1x1x8x4xf32> to vector<8x4xf32>
    %cst_287 = arith.constant dense<0.000000e+00> : vector<8x128xf32>
    %301 = tpu.matmul %300, %298, %cst_287 {dimension_numbers = #tpu.dot_dimension_numbers<[1], [0], [0], [1], [0, 0, 1, 1], [], []>} : vector<8x4xf32>, vector<4x128xf32>, vector<8x128xf32> -> vector<8x128xf32>
    %302 = arith.addf %293, %301 : vector<8x128xf32>
    %c0_288 = arith.constant 0 : index
    %c18_289 = arith.constant 18 : index
    %303 = vector.load %arg15[%c0_288, %c18_289] : memref<64x546xf32, #tpu.memory_space<vmem>>, vector<4x128xf32>
    %c8_290 = arith.constant 8 : index
    %c0_291 = arith.constant 0 : index
    %c0_292 = arith.constant 0 : index
    %304 = vector.load %arg10[%c8_290, %c0_291, %c0_292] : memref<9x1x128xf32, #tpu.memory_space<vmem>>, vector<1x1x128xf32>
    %305 = vector.shape_cast %304 : vector<1x1x128xf32> to vector<1x128xf32>
    %306 = vector.broadcast %305 : vector<1x128xf32> to vector<4x128xf32>
    %307 = arith.mulf %303, %306 : vector<4x128xf32>
    %c2_293 = arith.constant 2 : index
    %c8_294 = arith.constant 8 : index
    %c0_295 = arith.constant 0 : index
    %c0_296 = arith.constant 0 : index
    %308 = vector.load %arg2[%c2_293, %c8_294, %c0_295, %c0_296] : memref<10x9x64x64xf32, #tpu.memory_space<vmem>>, vector<1x1x8x4xf32>
    %309 = vector.shape_cast %308 : vector<1x1x8x4xf32> to vector<8x4xf32>
    %cst_297 = arith.constant dense<0.000000e+00> : vector<8x128xf32>
    %310 = tpu.matmul %309, %307, %cst_297 {dimension_numbers = #tpu.dot_dimension_numbers<[1], [0], [0], [1], [0, 0, 1, 1], [], []>} : vector<8x4xf32>, vector<4x128xf32>, vector<8x128xf32> -> vector<8x128xf32>
    %311 = arith.addf %302, %310 : vector<8x128xf32>
    %cst_298 = arith.constant dense<0.000000e+00> : vector<8xf32>
    %312 = vector.multi_reduction <add>, %311, %cst_298 [1] : vector<8x128xf32> to vector<8xf32>
    %313 = vector.shape_cast %312 : vector<8xf32> to vector<8x1xf32>
    %cst_299 = arith.constant 1.280000e+02 : f32
    %314 = vector.broadcast %cst_299 : f32 to vector<8x1xf32>
    %315 = arith.divf %313, %314 : vector<8x1xf32>
    %316 = vector.broadcast %315 : vector<8x1xf32> to vector<8x128xf32>
    %317 = arith.subf %311, %316 : vector<8x128xf32>
    %318 = arith.mulf %317, %317 : vector<8x128xf32>
    %cst_300 = arith.constant dense<0.000000e+00> : vector<8xf32>
    %319 = vector.multi_reduction <add>, %318, %cst_300 [1] : vector<8x128xf32> to vector<8xf32>
    %320 = vector.shape_cast %319 : vector<8xf32> to vector<8x1xf32>
    %cst_301 = arith.constant 1.280000e+02 : f32
    %321 = vector.broadcast %cst_301 : f32 to vector<8x1xf32>
    %322 = arith.divf %320, %321 : vector<8x1xf32>
    %323 = vector.broadcast %315 : vector<8x1xf32> to vector<8x128xf32>
    %324 = arith.subf %311, %323 : vector<8x128xf32>
    %cst_302 = arith.constant 9.99999974E-6 : f32
    %325 = vector.broadcast %cst_302 : f32 to vector<8x1xf32>
    %326 = arith.addf %322, %325 : vector<8x1xf32>
    %327 = math.rsqrt %326 : vector<8x1xf32>
    %328 = vector.broadcast %327 : vector<8x1xf32> to vector<8x128xf32>
    %329 = arith.mulf %324, %328 : vector<8x128xf32>
    %c2_303 = arith.constant 2 : index
    %c0_304 = arith.constant 0 : index
    %c0_305 = arith.constant 0 : index
    %330 = vector.load %arg3[%c2_303, %c0_304, %c0_305] : memref<10x64x1xf32, #tpu.memory_space<vmem>>, vector<1x8x1xf32>
    %331 = vector.shape_cast %330 : vector<1x8x1xf32> to vector<8x1xf32>
    %332 = vector.broadcast %331 : vector<8x1xf32> to vector<8x128xf32>
    %333 = arith.mulf %329, %332 : vector<8x128xf32>
    %c2_306 = arith.constant 2 : index
    %c0_307 = arith.constant 0 : index
    %c0_308 = arith.constant 0 : index
    %334 = vector.load %arg4[%c2_306, %c0_307, %c0_308] : memref<10x64x1xf32, #tpu.memory_space<vmem>>, vector<1x8x1xf32>
    %335 = vector.shape_cast %334 : vector<1x8x1xf32> to vector<8x1xf32>
    %336 = vector.broadcast %335 : vector<8x1xf32> to vector<8x128xf32>
    %337 = arith.addf %333, %336 : vector<8x128xf32>
    %cst_309 = arith.constant 0.000000e+00 : f32
    %338 = vector.broadcast %cst_309 : f32 to vector<8x128xf32>
    %339 = arith.maximumf %337, %338 : vector<8x128xf32>
    %c0_310 = arith.constant 0 : index
    %c9_311 = arith.constant 9 : index
    %340 = vector.load %arg15[%c0_310, %c9_311] : memref<64x546xf32, #tpu.memory_space<vmem>>, vector<8x128xf32>
    tpu.vector_store %arg15[%c0_310, %c9_311], %339 {strides = array<i32>} : memref<64x546xf32, #tpu.memory_space<vmem>>, vector<8x128xf32>,
    %cst_312 = arith.constant 0.000000e+00 : f32
    %341 = vector.broadcast %cst_312 : f32 to vector<8x128xf32>
    %c0_313 = arith.constant 0 : index
    %c0_314 = arith.constant 0 : index
    %342 = vector.load %arg15[%c0_313, %c0_314] : memref<64x546xf32, #tpu.memory_space<vmem>>, vector<8x128xf32>
    %c0_315 = arith.constant 0 : index
    %c0_316 = arith.constant 0 : index
    %c0_317 = arith.constant 0 : index
    %343 = vector.load %arg10[%c0_315, %c0_316, %c0_317] : memref<9x1x128xf32, #tpu.memory_space<vmem>>, vector<1x1x128xf32>
    %344 = vector.shape_cast %343 : vector<1x1x128xf32> to vector<1x128xf32>
    %345 = vector.broadcast %344 : vector<1x128xf32> to vector<8x128xf32>
    %346 = arith.mulf %342, %345 : vector<8x128xf32>
    %c3_318 = arith.constant 3 : index
    %c0_319 = arith.constant 0 : index
    %c0_320 = arith.constant 0 : index
    %c0_321 = arith.constant 0 : index
    %347 = vector.load %arg2[%c3_318, %c0_319, %c0_320, %c0_321] : memref<10x9x64x64xf32, #tpu.memory_space<vmem>>, vector<1x1x8x8xf32>
    %348 = vector.shape_cast %347 : vector<1x1x8x8xf32> to vector<8x8xf32>
    %cst_322 = arith.constant dense<0.000000e+00> : vector<8x128xf32>
    %349 = tpu.matmul %348, %346, %cst_322 {dimension_numbers = #tpu.dot_dimension_numbers<[1], [0], [0], [1], [0, 0, 1, 1], [], []>} : vector<8x8xf32>, vector<8x128xf32>, vector<8x128xf32> -> vector<8x128xf32>
    %350 = arith.addf %341, %349 : vector<8x128xf32>
    %c0_323 = arith.constant 0 : index
    %c1_324 = arith.constant 1 : index
    %351 = vector.load %arg15[%c0_323, %c1_324] : memref<64x546xf32, #tpu.memory_space<vmem>>, vector<8x128xf32>
    %c1_325 = arith.constant 1 : index
    %c0_326 = arith.constant 0 : index
    %c0_327 = arith.constant 0 : index
    %352 = vector.load %arg10[%c1_325, %c0_326, %c0_327] : memref<9x1x128xf32, #tpu.memory_space<vmem>>, vector<1x1x128xf32>
    %353 = vector.shape_cast %352 : vector<1x1x128xf32> to vector<1x128xf32>
    %354 = vector.broadcast %353 : vector<1x128xf32> to vector<8x128xf32>
    %355 = arith.mulf %351, %354 : vector<8x128xf32>
    %c3_328 = arith.constant 3 : index
    %c1_329 = arith.constant 1 : index
    %c0_330 = arith.constant 0 : index
    %c0_331 = arith.constant 0 : index
    %356 = vector.load %arg2[%c3_328, %c1_329, %c0_330, %c0_331] : memref<10x9x64x64xf32, #tpu.memory_space<vmem>>, vector<1x1x8x8xf32>
    %357 = vector.shape_cast %356 : vector<1x1x8x8xf32> to vector<8x8xf32>
    %cst_332 = arith.constant dense<0.000000e+00> : vector<8x128xf32>
    %358 = tpu.matmul %357, %355, %cst_332 {dimension_numbers = #tpu.dot_dimension_numbers<[1], [0], [0], [1], [0, 0, 1, 1], [], []>} : vector<8x8xf32>, vector<8x128xf32>, vector<8x128xf32> -> vector<8x128xf32>
    %359 = arith.addf %350, %358 : vector<8x128xf32>
    %c0_333 = arith.constant 0 : index
    %c2_334 = arith.constant 2 : index
    %360 = vector.load %arg15[%c0_333, %c2_334] : memref<64x546xf32, #tpu.memory_space<vmem>>, vector<8x128xf32>
    %c2_335 = arith.constant 2 : index
    %c0_336 = arith.constant 0 : index
    %c0_337 = arith.constant 0 : index
    %361 = vector.load %arg10[%c2_335, %c0_336, %c0_337] : memref<9x1x128xf32, #tpu.memory_space<vmem>>, vector<1x1x128xf32>
    %362 = vector.shape_cast %361 : vector<1x1x128xf32> to vector<1x128xf32>
    %363 = vector.broadcast %362 : vector<1x128xf32> to vector<8x128xf32>
    %364 = arith.mulf %360, %363 : vector<8x128xf32>
    %c3_338 = arith.constant 3 : index
    %c2_339 = arith.constant 2 : index
    %c0_340 = arith.constant 0 : index
    %c0_341 = arith.constant 0 : index
    %365 = vector.load %arg2[%c3_338, %c2_339, %c0_340, %c0_341] : memref<10x9x64x64xf32, #tpu.memory_space<vmem>>, vector<1x1x8x8xf32>
    %366 = vector.shape_cast %365 : vector<1x1x8x8xf32> to vector<8x8xf32>
    %cst_342 = arith.constant dense<0.000000e+00> : vector<8x128xf32>
    %367 = tpu.matmul %366, %364, %cst_342 {dimension_numbers = #tpu.dot_dimension_numbers<[1], [0], [0], [1], [0, 0, 1, 1], [], []>} : vector<8x8xf32>, vector<8x128xf32>, vector<8x128xf32> -> vector<8x128xf32>
    %368 = arith.addf %359, %367 : vector<8x128xf32>
    %c0_343 = arith.constant 0 : index
    %c8_344 = arith.constant 8 : index
    %369 = vector.load %arg15[%c0_343, %c8_344] : memref<64x546xf32, #tpu.memory_space<vmem>>, vector<8x128xf32>
    %c3_345 = arith.constant 3 : index
    %c0_346 = arith.constant 0 : index
    %c0_347 = arith.constant 0 : index
    %370 = vector.load %arg10[%c3_345, %c0_346, %c0_347] : memref<9x1x128xf32, #tpu.memory_space<vmem>>, vector<1x1x128xf32>
    %371 = vector.shape_cast %370 : vector<1x1x128xf32> to vector<1x128xf32>
    %372 = vector.broadcast %371 : vector<1x128xf32> to vector<8x128xf32>
    %373 = arith.mulf %369, %372 : vector<8x128xf32>
    %c3_348 = arith.constant 3 : index
    %c3_349 = arith.constant 3 : index
    %c0_350 = arith.constant 0 : index
    %c0_351 = arith.constant 0 : index
    %374 = vector.load %arg2[%c3_348, %c3_349, %c0_350, %c0_351] : memref<10x9x64x64xf32, #tpu.memory_space<vmem>>, vector<1x1x8x8xf32>
    %375 = vector.shape_cast %374 : vector<1x1x8x8xf32> to vector<8x8xf32>
    %cst_352 = arith.constant dense<0.000000e+00> : vector<8x128xf32>
    %376 = tpu.matmul %375, %373, %cst_352 {dimension_numbers = #tpu.dot_dimension_numbers<[1], [0], [0], [1], [0, 0, 1, 1], [], []>} : vector<8x8xf32>, vector<8x128xf32>, vector<8x128xf32> -> vector<8x128xf32>
    %377 = arith.addf %368, %376 : vector<8x128xf32>
    %c0_353 = arith.constant 0 : index
    %c9_354 = arith.constant 9 : index
    %378 = vector.load %arg15[%c0_353, %c9_354] : memref<64x546xf32, #tpu.memory_space<vmem>>, vector<8x128xf32>
    %c3_355 = arith.constant 3 : index
    %c4_356 = arith.constant 4 : index
    %c0_357 = arith.constant 0 : index
    %c0_358 = arith.constant 0 : index
    %379 = vector.load %arg2[%c3_355, %c4_356, %c0_357, %c0_358] : memref<10x9x64x64xf32, #tpu.memory_space<vmem>>, vector<1x1x8x8xf32>
    %380 = vector.shape_cast %379 : vector<1x1x8x8xf32> to vector<8x8xf32>
    %cst_359 = arith.constant dense<0.000000e+00> : vector<8x128xf32>
    %381 = tpu.matmul %380, %378, %cst_359 {dimension_numbers = #tpu.dot_dimension_numbers<[1], [0], [0], [1], [0, 0, 1, 1], [], []>} : vector<8x8xf32>, vector<8x128xf32>, vector<8x128xf32> -> vector<8x128xf32>
    %382 = arith.addf %377, %381 : vector<8x128xf32>
    %c0_360 = arith.constant 0 : index
    %c10_361 = arith.constant 10 : index
    %383 = vector.load %arg15[%c0_360, %c10_361] : memref<64x546xf32, #tpu.memory_space<vmem>>, vector<8x128xf32>
    %c5_362 = arith.constant 5 : index
    %c0_363 = arith.constant 0 : index
    %c0_364 = arith.constant 0 : index
    %384 = vector.load %arg10[%c5_362, %c0_363, %c0_364] : memref<9x1x128xf32, #tpu.memory_space<vmem>>, vector<1x1x128xf32>
    %385 = vector.shape_cast %384 : vector<1x1x128xf32> to vector<1x128xf32>
    %386 = vector.broadcast %385 : vector<1x128xf32> to vector<8x128xf32>
    %387 = arith.mulf %383, %386 : vector<8x128xf32>
    %c3_365 = arith.constant 3 : index
    %c5_366 = arith.constant 5 : index
    %c0_367 = arith.constant 0 : index
    %c0_368 = arith.constant 0 : index
    %388 = vector.load %arg2[%c3_365, %c5_366, %c0_367, %c0_368] : memref<10x9x64x64xf32, #tpu.memory_space<vmem>>, vector<1x1x8x8xf32>
    %389 = vector.shape_cast %388 : vector<1x1x8x8xf32> to vector<8x8xf32>
    %cst_369 = arith.constant dense<0.000000e+00> : vector<8x128xf32>
    %390 = tpu.matmul %389, %387, %cst_369 {dimension_numbers = #tpu.dot_dimension_numbers<[1], [0], [0], [1], [0, 0, 1, 1], [], []>} : vector<8x8xf32>, vector<8x128xf32>, vector<8x128xf32> -> vector<8x128xf32>
    %391 = arith.addf %382, %390 : vector<8x128xf32>
    %c0_370 = arith.constant 0 : index
    %c16_371 = arith.constant 16 : index
    %392 = vector.load %arg15[%c0_370, %c16_371] : memref<64x546xf32, #tpu.memory_space<vmem>>, vector<8x128xf32>
    %c6_372 = arith.constant 6 : index
    %c0_373 = arith.constant 0 : index
    %c0_374 = arith.constant 0 : index
    %393 = vector.load %arg10[%c6_372, %c0_373, %c0_374] : memref<9x1x128xf32, #tpu.memory_space<vmem>>, vector<1x1x128xf32>
    %394 = vector.shape_cast %393 : vector<1x1x128xf32> to vector<1x128xf32>
    %395 = vector.broadcast %394 : vector<1x128xf32> to vector<8x128xf32>
    %396 = arith.mulf %392, %395 : vector<8x128xf32>
    %c3_375 = arith.constant 3 : index
    %c6_376 = arith.constant 6 : index
    %c0_377 = arith.constant 0 : index
    %c0_378 = arith.constant 0 : index
    %397 = vector.load %arg2[%c3_375, %c6_376, %c0_377, %c0_378] : memref<10x9x64x64xf32, #tpu.memory_space<vmem>>, vector<1x1x8x8xf32>
    %398 = vector.shape_cast %397 : vector<1x1x8x8xf32> to vector<8x8xf32>
    %cst_379 = arith.constant dense<0.000000e+00> : vector<8x128xf32>
    %399 = tpu.matmul %398, %396, %cst_379 {dimension_numbers = #tpu.dot_dimension_numbers<[1], [0], [0], [1], [0, 0, 1, 1], [], []>} : vector<8x8xf32>, vector<8x128xf32>, vector<8x128xf32> -> vector<8x128xf32>
    %400 = arith.addf %391, %399 : vector<8x128xf32>
    %c0_380 = arith.constant 0 : index
    %c17_381 = arith.constant 17 : index
    %401 = vector.load %arg15[%c0_380, %c17_381] : memref<64x546xf32, #tpu.memory_space<vmem>>, vector<8x128xf32>
    %c7_382 = arith.constant 7 : index
    %c0_383 = arith.constant 0 : index
    %c0_384 = arith.constant 0 : index
    %402 = vector.load %arg10[%c7_382, %c0_383, %c0_384] : memref<9x1x128xf32, #tpu.memory_space<vmem>>, vector<1x1x128xf32>
    %403 = vector.shape_cast %402 : vector<1x1x128xf32> to vector<1x128xf32>
    %404 = vector.broadcast %403 : vector<1x128xf32> to vector<8x128xf32>
    %405 = arith.mulf %401, %404 : vector<8x128xf32>
    %c3_385 = arith.constant 3 : index
    %c7_386 = arith.constant 7 : index
    %c0_387 = arith.constant 0 : index
    %c0_388 = arith.constant 0 : index
    %406 = vector.load %arg2[%c3_385, %c7_386, %c0_387, %c0_388] : memref<10x9x64x64xf32, #tpu.memory_space<vmem>>, vector<1x1x8x8xf32>
    %407 = vector.shape_cast %406 : vector<1x1x8x8xf32> to vector<8x8xf32>
    %cst_389 = arith.constant dense<0.000000e+00> : vector<8x128xf32>
    %408 = tpu.matmul %407, %405, %cst_389 {dimension_numbers = #tpu.dot_dimension_numbers<[1], [0], [0], [1], [0, 0, 1, 1], [], []>} : vector<8x8xf32>, vector<8x128xf32>, vector<8x128xf32> -> vector<8x128xf32>
    %409 = arith.addf %400, %408 : vector<8x128xf32>
    %c0_390 = arith.constant 0 : index
    %c18_391 = arith.constant 18 : index
    %410 = vector.load %arg15[%c0_390, %c18_391] : memref<64x546xf32, #tpu.memory_space<vmem>>, vector<8x128xf32>
    %c8_392 = arith.constant 8 : index
    %c0_393 = arith.constant 0 : index
    %c0_394 = arith.constant 0 : index
    %411 = vector.load %arg10[%c8_392, %c0_393, %c0_394] : memref<9x1x128xf32, #tpu.memory_space<vmem>>, vector<1x1x128xf32>
    %412 = vector.shape_cast %411 : vector<1x1x128xf32> to vector<1x128xf32>
    %413 = vector.broadcast %412 : vector<1x128xf32> to vector<8x128xf32>
    %414 = arith.mulf %410, %413 : vector<8x128xf32>
    %c3_395 = arith.constant 3 : index
    %c8_396 = arith.constant 8 : index
    %c0_397 = arith.constant 0 : index
    %c0_398 = arith.constant 0 : index
    %415 = vector.load %arg2[%c3_395, %c8_396, %c0_397, %c0_398] : memref<10x9x64x64xf32, #tpu.memory_space<vmem>>, vector<1x1x8x8xf32>
    %416 = vector.shape_cast %415 : vector<1x1x8x8xf32> to vector<8x8xf32>
    %cst_399 = arith.constant dense<0.000000e+00> : vector<8x128xf32>
    %417 = tpu.matmul %416, %414, %cst_399 {dimension_numbers = #tpu.dot_dimension_numbers<[1], [0], [0], [1], [0, 0, 1, 1], [], []>} : vector<8x8xf32>, vector<8x128xf32>, vector<8x128xf32> -> vector<8x128xf32>
    %418 = arith.addf %409, %417 : vector<8x128xf32>
    %cst_400 = arith.constant dense<0.000000e+00> : vector<8xf32>
    %419 = vector.multi_reduction <add>, %418, %cst_400 [1] : vector<8x128xf32> to vector<8xf32>
    %420 = vector.shape_cast %419 : vector<8xf32> to vector<8x1xf32>
    %cst_401 = arith.constant 1.280000e+02 : f32
    %421 = vector.broadcast %cst_401 : f32 to vector<8x1xf32>
    %422 = arith.divf %420, %421 : vector<8x1xf32>
    %423 = vector.broadcast %422 : vector<8x1xf32> to vector<8x128xf32>
    %424 = arith.subf %418, %423 : vector<8x128xf32>
    %425 = arith.mulf %424, %424 : vector<8x128xf32>
    %cst_402 = arith.constant dense<0.000000e+00> : vector<8xf32>
    %426 = vector.multi_reduction <add>, %425, %cst_402 [1] : vector<8x128xf32> to vector<8xf32>
    %427 = vector.shape_cast %426 : vector<8xf32> to vector<8x1xf32>
    %cst_403 = arith.constant 1.280000e+02 : f32
    %428 = vector.broadcast %cst_403 : f32 to vector<8x1xf32>
    %429 = arith.divf %427, %428 : vector<8x1xf32>
    %430 = vector.broadcast %422 : vector<8x1xf32> to vector<8x128xf32>
    %431 = arith.subf %418, %430 : vector<8x128xf32>
    %cst_404 = arith.constant 9.99999974E-6 : f32
    %432 = vector.broadcast %cst_404 : f32 to vector<8x1xf32>
    %433 = arith.addf %429, %432 : vector<8x1xf32>
    %434 = math.rsqrt %433 : vector<8x1xf32>
    %435 = vector.broadcast %434 : vector<8x1xf32> to vector<8x128xf32>
    %436 = arith.mulf %431, %435 : vector<8x128xf32>
    %c3_405 = arith.constant 3 : index
    %c0_406 = arith.constant 0 : index
    %c0_407 = arith.constant 0 : index
    %437 = vector.load %arg3[%c3_405, %c0_406, %c0_407] : memref<10x64x1xf32, #tpu.memory_space<vmem>>, vector<1x8x1xf32>
    %438 = vector.shape_cast %437 : vector<1x8x1xf32> to vector<8x1xf32>
    %439 = vector.broadcast %438 : vector<8x1xf32> to vector<8x128xf32>
    %440 = arith.mulf %436, %439 : vector<8x128xf32>
    %c3_408 = arith.constant 3 : index
    %c0_409 = arith.constant 0 : index
    %c0_410 = arith.constant 0 : index
    %441 = vector.load %arg4[%c3_408, %c0_409, %c0_410] : memref<10x64x1xf32, #tpu.memory_space<vmem>>, vector<1x8x1xf32>
    %442 = vector.shape_cast %441 : vector<1x8x1xf32> to vector<8x1xf32>
    %443 = vector.broadcast %442 : vector<8x1xf32> to vector<8x128xf32>
    %444 = arith.addf %440, %443 : vector<8x128xf32>
    %cst_411 = arith.constant 0.000000e+00 : f32
    %445 = vector.broadcast %cst_411 : f32 to vector<8x128xf32>
    %446 = arith.maximumf %444, %445 : vector<8x128xf32>
    %c0_412 = arith.constant 0 : index
    %c0_413 = arith.constant 0 : index
    %c0_414 = arith.constant 0 : index
    %447 = vector.load %arg6[%c0_412, %c0_413, %c0_414] : memref<4x128x32xf32, #tpu.memory_space<vmem>>, vector<1x128x32xf32>
    %448 = vector.shape_cast %447 : vector<1x128x32xf32> to vector<128x32xf32>
    %cst_415 = arith.constant dense<0.000000e+00> : vector<8x32xf32>
    %449 = tpu.matmul %446, %448, %cst_415 {dimension_numbers = #tpu.dot_dimension_numbers<[1], [0], [0], [1], [0, 0, 1, 1], [], []>} : vector<8x128xf32>, vector<128x32xf32>, vector<8x32xf32> -> vector<8x32xf32>
    %c1_416 = arith.constant 1 : index
    %c0_417 = arith.constant 0 : index
    %c0_418 = arith.constant 0 : index
    %450 = vector.load %arg6[%c1_416, %c0_417, %c0_418] : memref<4x128x32xf32, #tpu.memory_space<vmem>>, vector<1x128x32xf32>
    %451 = vector.shape_cast %450 : vector<1x128x32xf32> to vector<128x32xf32>
    %cst_419 = arith.constant dense<0.000000e+00> : vector<8x32xf32>
    %452 = tpu.matmul %446, %451, %cst_419 {dimension_numbers = #tpu.dot_dimension_numbers<[1], [0], [0], [1], [0, 0, 1, 1], [], []>} : vector<8x128xf32>, vector<128x32xf32>, vector<8x32xf32> -> vector<8x32xf32>
    %c2_420 = arith.constant 2 : index
    %c0_421 = arith.constant 0 : index
    %c0_422 = arith.constant 0 : index
    %453 = vector.load %arg6[%c2_420, %c0_421, %c0_422] : memref<4x128x32xf32, #tpu.memory_space<vmem>>, vector<1x128x32xf32>
    %454 = vector.shape_cast %453 : vector<1x128x32xf32> to vector<128x32xf32>
    %cst_423 = arith.constant dense<0.000000e+00> : vector<8x32xf32>
    %455 = tpu.matmul %446, %454, %cst_423 {dimension_numbers = #tpu.dot_dimension_numbers<[1], [0], [0], [1], [0, 0, 1, 1], [], []>} : vector<8x128xf32>, vector<128x32xf32>, vector<8x32xf32> -> vector<8x32xf32>
    %c3_424 = arith.constant 3 : index
    %c0_425 = arith.constant 0 : index
    %c0_426 = arith.constant 0 : index
    %456 = vector.load %arg6[%c3_424, %c0_425, %c0_426] : memref<4x128x32xf32, #tpu.memory_space<vmem>>, vector<1x128x32xf32>
    %457 = vector.shape_cast %456 : vector<1x128x32xf32> to vector<128x32xf32>
    %cst_427 = arith.constant dense<0.000000e+00> : vector<8x32xf32>
    %458 = tpu.matmul %446, %457, %cst_427 {dimension_numbers = #tpu.dot_dimension_numbers<[1], [0], [0], [1], [0, 0, 1, 1], [], []>} : vector<8x128xf32>, vector<128x32xf32>, vector<8x32xf32> -> vector<8x32xf32>
    %459 = arith.maximumf %449, %452 : vector<8x32xf32>
    %460 = arith.maximumf %455, %458 : vector<8x32xf32>
    %461 = arith.maximumf %459, %460 : vector<8x32xf32>
    %c0_428 = arith.constant 0 : index
    %c5_429 = arith.constant 5 : index
    %462 = vector.load %arg15[%c0_428, %c5_429] : memref<64x546xf32, #tpu.memory_space<vmem>>, vector<8x32xf32>
    tpu.vector_store %arg15[%c0_428, %c5_429], %461 {strides = array<i32>} : memref<64x546xf32, #tpu.memory_space<vmem>>, vector<8x32xf32>,
    %cst_430 = arith.constant 0.000000e+00 : f32
    %463 = vector.broadcast %cst_430 : f32 to vector<16x32xf32>
    %c0_431 = arith.constant 0 : index
    %c0_432 = arith.constant 0 : index
    %464 = vector.load %arg15[%c0_431, %c0_432] : memref<64x546xf32, #tpu.memory_space<vmem>>, vector<8x32xf32>
    %c0_433 = arith.constant 0 : index
    %c0_434 = arith.constant 0 : index
    %c0_435 = arith.constant 0 : index
    %465 = vector.load %arg11[%c0_433, %c0_434, %c0_435] : memref<9x1x32xf32, #tpu.memory_space<vmem>>, vector<1x1x32xf32>
    %466 = vector.shape_cast %465 : vector<1x1x32xf32> to vector<1x32xf32>
    %467 = vector.broadcast %466 : vector<1x32xf32> to vector<8x32xf32>
    %468 = arith.mulf %464, %467 : vector<8x32xf32>
    %c4_436 = arith.constant 4 : index
    %c0_437 = arith.constant 0 : index
    %c0_438 = arith.constant 0 : index
    %c0_439 = arith.constant 0 : index
    %469 = vector.load %arg2[%c4_436, %c0_437, %c0_438, %c0_439] : memref<10x9x64x64xf32, #tpu.memory_space<vmem>>, vector<1x1x16x8xf32>
    %470 = vector.shape_cast %469 : vector<1x1x16x8xf32> to vector<16x8xf32>
    %cst_440 = arith.constant dense<0.000000e+00> : vector<16x32xf32>
    %471 = tpu.matmul %470, %468, %cst_440 {dimension_numbers = #tpu.dot_dimension_numbers<[1], [0], [0], [1], [0, 0, 1, 1], [], []>} : vector<16x8xf32>, vector<8x32xf32>, vector<16x32xf32> -> vector<16x32xf32>
    %472 = arith.addf %463, %471 : vector<16x32xf32>
    %c0_441 = arith.constant 0 : index
    %c1_442 = arith.constant 1 : index
    %473 = vector.load %arg15[%c0_441, %c1_442] : memref<64x546xf32, #tpu.memory_space<vmem>>, vector<8x32xf32>
    %c1_443 = arith.constant 1 : index
    %c0_444 = arith.constant 0 : index
    %c0_445 = arith.constant 0 : index
    %474 = vector.load %arg11[%c1_443, %c0_444, %c0_445] : memref<9x1x32xf32, #tpu.memory_space<vmem>>, vector<1x1x32xf32>
    %475 = vector.shape_cast %474 : vector<1x1x32xf32> to vector<1x32xf32>
    %476 = vector.broadcast %475 : vector<1x32xf32> to vector<8x32xf32>
    %477 = arith.mulf %473, %476 : vector<8x32xf32>
    %c4_446 = arith.constant 4 : index
    %c1_447 = arith.constant 1 : index
    %c0_448 = arith.constant 0 : index
    %c0_449 = arith.constant 0 : index
    %478 = vector.load %arg2[%c4_446, %c1_447, %c0_448, %c0_449] : memref<10x9x64x64xf32, #tpu.memory_space<vmem>>, vector<1x1x16x8xf32>
    %479 = vector.shape_cast %478 : vector<1x1x16x8xf32> to vector<16x8xf32>
    %cst_450 = arith.constant dense<0.000000e+00> : vector<16x32xf32>
    %480 = tpu.matmul %479, %477, %cst_450 {dimension_numbers = #tpu.dot_dimension_numbers<[1], [0], [0], [1], [0, 0, 1, 1], [], []>} : vector<16x8xf32>, vector<8x32xf32>, vector<16x32xf32> -> vector<16x32xf32>
    %481 = arith.addf %472, %480 : vector<16x32xf32>
    %c0_451 = arith.constant 0 : index
    %c2_452 = arith.constant 2 : index
    %482 = vector.load %arg15[%c0_451, %c2_452] : memref<64x546xf32, #tpu.memory_space<vmem>>, vector<8x32xf32>
    %c2_453 = arith.constant 2 : index
    %c0_454 = arith.constant 0 : index
    %c0_455 = arith.constant 0 : index
    %483 = vector.load %arg11[%c2_453, %c0_454, %c0_455] : memref<9x1x32xf32, #tpu.memory_space<vmem>>, vector<1x1x32xf32>
    %484 = vector.shape_cast %483 : vector<1x1x32xf32> to vector<1x32xf32>
    %485 = vector.broadcast %484 : vector<1x32xf32> to vector<8x32xf32>
    %486 = arith.mulf %482, %485 : vector<8x32xf32>
    %c4_456 = arith.constant 4 : index
    %c2_457 = arith.constant 2 : index
    %c0_458 = arith.constant 0 : index
    %c0_459 = arith.constant 0 : index
    %487 = vector.load %arg2[%c4_456, %c2_457, %c0_458, %c0_459] : memref<10x9x64x64xf32, #tpu.memory_space<vmem>>, vector<1x1x16x8xf32>
    %488 = vector.shape_cast %487 : vector<1x1x16x8xf32> to vector<16x8xf32>
    %cst_460 = arith.constant dense<0.000000e+00> : vector<16x32xf32>
    %489 = tpu.matmul %488, %486, %cst_460 {dimension_numbers = #tpu.dot_dimension_numbers<[1], [0], [0], [1], [0, 0, 1, 1], [], []>} : vector<16x8xf32>, vector<8x32xf32>, vector<16x32xf32> -> vector<16x32xf32>
    %490 = arith.addf %481, %489 : vector<16x32xf32>
    %c0_461 = arith.constant 0 : index
    %c4_462 = arith.constant 4 : index
    %491 = vector.load %arg15[%c0_461, %c4_462] : memref<64x546xf32, #tpu.memory_space<vmem>>, vector<8x32xf32>
    %c3_463 = arith.constant 3 : index
    %c0_464 = arith.constant 0 : index
    %c0_465 = arith.constant 0 : index
    %492 = vector.load %arg11[%c3_463, %c0_464, %c0_465] : memref<9x1x32xf32, #tpu.memory_space<vmem>>, vector<1x1x32xf32>
    %493 = vector.shape_cast %492 : vector<1x1x32xf32> to vector<1x32xf32>
    %494 = vector.broadcast %493 : vector<1x32xf32> to vector<8x32xf32>
    %495 = arith.mulf %491, %494 : vector<8x32xf32>
    %c4_466 = arith.constant 4 : index
    %c3_467 = arith.constant 3 : index
    %c0_468 = arith.constant 0 : index
    %c0_469 = arith.constant 0 : index
    %496 = vector.load %arg2[%c4_466, %c3_467, %c0_468, %c0_469] : memref<10x9x64x64xf32, #tpu.memory_space<vmem>>, vector<1x1x16x8xf32>
    %497 = vector.shape_cast %496 : vector<1x1x16x8xf32> to vector<16x8xf32>
    %cst_470 = arith.constant dense<0.000000e+00> : vector<16x32xf32>
    %498 = tpu.matmul %497, %495, %cst_470 {dimension_numbers = #tpu.dot_dimension_numbers<[1], [0], [0], [1], [0, 0, 1, 1], [], []>} : vector<16x8xf32>, vector<8x32xf32>, vector<16x32xf32> -> vector<16x32xf32>
    %499 = arith.addf %490, %498 : vector<16x32xf32>
    %c0_471 = arith.constant 0 : index
    %c5_472 = arith.constant 5 : index
    %500 = vector.load %arg15[%c0_471, %c5_472] : memref<64x546xf32, #tpu.memory_space<vmem>>, vector<8x32xf32>
    %c4_473 = arith.constant 4 : index
    %c4_474 = arith.constant 4 : index
    %c0_475 = arith.constant 0 : index
    %c0_476 = arith.constant 0 : index
    %501 = vector.load %arg2[%c4_473, %c4_474, %c0_475, %c0_476] : memref<10x9x64x64xf32, #tpu.memory_space<vmem>>, vector<1x1x16x8xf32>
    %502 = vector.shape_cast %501 : vector<1x1x16x8xf32> to vector<16x8xf32>
    %cst_477 = arith.constant dense<0.000000e+00> : vector<16x32xf32>
    %503 = tpu.matmul %502, %500, %cst_477 {dimension_numbers = #tpu.dot_dimension_numbers<[1], [0], [0], [1], [0, 0, 1, 1], [], []>} : vector<16x8xf32>, vector<8x32xf32>, vector<16x32xf32> -> vector<16x32xf32>
    %504 = arith.addf %499, %503 : vector<16x32xf32>
    %c0_478 = arith.constant 0 : index
    %c6_479 = arith.constant 6 : index
    %505 = vector.load %arg15[%c0_478, %c6_479] : memref<64x546xf32, #tpu.memory_space<vmem>>, vector<8x32xf32>
    %c5_480 = arith.constant 5 : index
    %c0_481 = arith.constant 0 : index
    %c0_482 = arith.constant 0 : index
    %506 = vector.load %arg11[%c5_480, %c0_481, %c0_482] : memref<9x1x32xf32, #tpu.memory_space<vmem>>, vector<1x1x32xf32>
    %507 = vector.shape_cast %506 : vector<1x1x32xf32> to vector<1x32xf32>
    %508 = vector.broadcast %507 : vector<1x32xf32> to vector<8x32xf32>
    %509 = arith.mulf %505, %508 : vector<8x32xf32>
    %c4_483 = arith.constant 4 : index
    %c5_484 = arith.constant 5 : index
    %c0_485 = arith.constant 0 : index
    %c0_486 = arith.constant 0 : index
    %510 = vector.load %arg2[%c4_483, %c5_484, %c0_485, %c0_486] : memref<10x9x64x64xf32, #tpu.memory_space<vmem>>, vector<1x1x16x8xf32>
    %511 = vector.shape_cast %510 : vector<1x1x16x8xf32> to vector<16x8xf32>
    %cst_487 = arith.constant dense<0.000000e+00> : vector<16x32xf32>
    %512 = tpu.matmul %511, %509, %cst_487 {dimension_numbers = #tpu.dot_dimension_numbers<[1], [0], [0], [1], [0, 0, 1, 1], [], []>} : vector<16x8xf32>, vector<8x32xf32>, vector<16x32xf32> -> vector<16x32xf32>
    %513 = arith.addf %504, %512 : vector<16x32xf32>
    %c0_488 = arith.constant 0 : index
    %c8_489 = arith.constant 8 : index
    %514 = vector.load %arg15[%c0_488, %c8_489] : memref<64x546xf32, #tpu.memory_space<vmem>>, vector<8x32xf32>
    %c6_490 = arith.constant 6 : index
    %c0_491 = arith.constant 0 : index
    %c0_492 = arith.constant 0 : index
    %515 = vector.load %arg11[%c6_490, %c0_491, %c0_492] : memref<9x1x32xf32, #tpu.memory_space<vmem>>, vector<1x1x32xf32>
    %516 = vector.shape_cast %515 : vector<1x1x32xf32> to vector<1x32xf32>
    %517 = vector.broadcast %516 : vector<1x32xf32> to vector<8x32xf32>
    %518 = arith.mulf %514, %517 : vector<8x32xf32>
    %c4_493 = arith.constant 4 : index
    %c6_494 = arith.constant 6 : index
    %c0_495 = arith.constant 0 : index
    %c0_496 = arith.constant 0 : index
    %519 = vector.load %arg2[%c4_493, %c6_494, %c0_495, %c0_496] : memref<10x9x64x64xf32, #tpu.memory_space<vmem>>, vector<1x1x16x8xf32>
    %520 = vector.shape_cast %519 : vector<1x1x16x8xf32> to vector<16x8xf32>
    %cst_497 = arith.constant dense<0.000000e+00> : vector<16x32xf32>
    %521 = tpu.matmul %520, %518, %cst_497 {dimension_numbers = #tpu.dot_dimension_numbers<[1], [0], [0], [1], [0, 0, 1, 1], [], []>} : vector<16x8xf32>, vector<8x32xf32>, vector<16x32xf32> -> vector<16x32xf32>
    %522 = arith.addf %513, %521 : vector<16x32xf32>
    %c0_498 = arith.constant 0 : index
    %c9_499 = arith.constant 9 : index
    %523 = vector.load %arg15[%c0_498, %c9_499] : memref<64x546xf32, #tpu.memory_space<vmem>>, vector<8x32xf32>
    %c7_500 = arith.constant 7 : index
    %c0_501 = arith.constant 0 : index
    %c0_502 = arith.constant 0 : index
    %524 = vector.load %arg11[%c7_500, %c0_501, %c0_502] : memref<9x1x32xf32, #tpu.memory_space<vmem>>, vector<1x1x32xf32>
    %525 = vector.shape_cast %524 : vector<1x1x32xf32> to vector<1x32xf32>
    %526 = vector.broadcast %525 : vector<1x32xf32> to vector<8x32xf32>
    %527 = arith.mulf %523, %526 : vector<8x32xf32>
    %c4_503 = arith.constant 4 : index
    %c7_504 = arith.constant 7 : index
    %c0_505 = arith.constant 0 : index
    %c0_506 = arith.constant 0 : index
    %528 = vector.load %arg2[%c4_503, %c7_504, %c0_505, %c0_506] : memref<10x9x64x64xf32, #tpu.memory_space<vmem>>, vector<1x1x16x8xf32>
    %529 = vector.shape_cast %528 : vector<1x1x16x8xf32> to vector<16x8xf32>
    %cst_507 = arith.constant dense<0.000000e+00> : vector<16x32xf32>
    %530 = tpu.matmul %529, %527, %cst_507 {dimension_numbers = #tpu.dot_dimension_numbers<[1], [0], [0], [1], [0, 0, 1, 1], [], []>} : vector<16x8xf32>, vector<8x32xf32>, vector<16x32xf32> -> vector<16x32xf32>
    %531 = arith.addf %522, %530 : vector<16x32xf32>
    %c0_508 = arith.constant 0 : index
    %c10_509 = arith.constant 10 : index
    %532 = vector.load %arg15[%c0_508, %c10_509] : memref<64x546xf32, #tpu.memory_space<vmem>>, vector<8x32xf32>
    %c8_510 = arith.constant 8 : index
    %c0_511 = arith.constant 0 : index
    %c0_512 = arith.constant 0 : index
    %533 = vector.load %arg11[%c8_510, %c0_511, %c0_512] : memref<9x1x32xf32, #tpu.memory_space<vmem>>, vector<1x1x32xf32>
    %534 = vector.shape_cast %533 : vector<1x1x32xf32> to vector<1x32xf32>
    %535 = vector.broadcast %534 : vector<1x32xf32> to vector<8x32xf32>
    %536 = arith.mulf %532, %535 : vector<8x32xf32>
    %c4_513 = arith.constant 4 : index
    %c8_514 = arith.constant 8 : index
    %c0_515 = arith.constant 0 : index
    %c0_516 = arith.constant 0 : index
    %537 = vector.load %arg2[%c4_513, %c8_514, %c0_515, %c0_516] : memref<10x9x64x64xf32, #tpu.memory_space<vmem>>, vector<1x1x16x8xf32>
    %538 = vector.shape_cast %537 : vector<1x1x16x8xf32> to vector<16x8xf32>
    %cst_517 = arith.constant dense<0.000000e+00> : vector<16x32xf32>
    %539 = tpu.matmul %538, %536, %cst_517 {dimension_numbers = #tpu.dot_dimension_numbers<[1], [0], [0], [1], [0, 0, 1, 1], [], []>} : vector<16x8xf32>, vector<8x32xf32>, vector<16x32xf32> -> vector<16x32xf32>
    %540 = arith.addf %531, %539 : vector<16x32xf32>
    %cst_518 = arith.constant dense<0.000000e+00> : vector<16xf32>
    %541 = vector.multi_reduction <add>, %540, %cst_518 [1] : vector<16x32xf32> to vector<16xf32>
    %542 = vector.shape_cast %541 : vector<16xf32> to vector<16x1xf32>
    %cst_519 = arith.constant 3.200000e+01 : f32
    %543 = vector.broadcast %cst_519 : f32 to vector<16x1xf32>
    %544 = arith.divf %542, %543 : vector<16x1xf32>
    %545 = vector.broadcast %544 : vector<16x1xf32> to vector<16x32xf32>
    %546 = arith.subf %540, %545 : vector<16x32xf32>
    %547 = arith.mulf %546, %546 : vector<16x32xf32>
    %cst_520 = arith.constant dense<0.000000e+00> : vector<16xf32>
    %548 = vector.multi_reduction <add>, %547, %cst_520 [1] : vector<16x32xf32> to vector<16xf32>
    %549 = vector.shape_cast %548 : vector<16xf32> to vector<16x1xf32>
    %cst_521 = arith.constant 3.200000e+01 : f32
    %550 = vector.broadcast %cst_521 : f32 to vector<16x1xf32>
    %551 = arith.divf %549, %550 : vector<16x1xf32>
    %552 = vector.broadcast %544 : vector<16x1xf32> to vector<16x32xf32>
    %553 = arith.subf %540, %552 : vector<16x32xf32>
    %cst_522 = arith.constant 9.99999974E-6 : f32
    %554 = vector.broadcast %cst_522 : f32 to vector<16x1xf32>
    %555 = arith.addf %551, %554 : vector<16x1xf32>
    %556 = math.rsqrt %555 : vector<16x1xf32>
    %557 = vector.broadcast %556 : vector<16x1xf32> to vector<16x32xf32>
    %558 = arith.mulf %553, %557 : vector<16x32xf32>
    %c4_523 = arith.constant 4 : index
    %c0_524 = arith.constant 0 : index
    %c0_525 = arith.constant 0 : index
    %559 = vector.load %arg3[%c4_523, %c0_524, %c0_525] : memref<10x64x1xf32, #tpu.memory_space<vmem>>, vector<1x16x1xf32>
    %560 = vector.shape_cast %559 : vector<1x16x1xf32> to vector<16x1xf32>
    %561 = vector.broadcast %560 : vector<16x1xf32> to vector<16x32xf32>
    %562 = arith.mulf %558, %561 : vector<16x32xf32>
    %c4_526 = arith.constant 4 : index
    %c0_527 = arith.constant 0 : index
    %c0_528 = arith.constant 0 : index
    %563 = vector.load %arg4[%c4_526, %c0_527, %c0_528] : memref<10x64x1xf32, #tpu.memory_space<vmem>>, vector<1x16x1xf32>
    %564 = vector.shape_cast %563 : vector<1x16x1xf32> to vector<16x1xf32>
    %565 = vector.broadcast %564 : vector<16x1xf32> to vector<16x32xf32>
    %566 = arith.addf %562, %565 : vector<16x32xf32>
    %cst_529 = arith.constant 0.000000e+00 : f32
    %567 = vector.broadcast %cst_529 : f32 to vector<16x32xf32>
    %568 = arith.maximumf %566, %567 : vector<16x32xf32>
    %c0_530 = arith.constant 0 : index
    %c5_531 = arith.constant 5 : index
    %569 = vector.load %arg15[%c0_530, %c5_531] : memref<64x546xf32, #tpu.memory_space<vmem>>, vector<16x32xf32>
    tpu.vector_store %arg15[%c0_530, %c5_531], %568 {strides = array<i32>} : memref<64x546xf32, #tpu.memory_space<vmem>>, vector<16x32xf32>,
    %cst_532 = arith.constant 0.000000e+00 : f32
    %570 = vector.broadcast %cst_532 : f32 to vector<16x32xf32>
    %c0_533 = arith.constant 0 : index
    %c0_534 = arith.constant 0 : index
    %571 = vector.load %arg15[%c0_533, %c0_534] : memref<64x546xf32, #tpu.memory_space<vmem>>, vector<16x32xf32>
    %c0_535 = arith.constant 0 : index
    %c0_536 = arith.constant 0 : index
    %c0_537 = arith.constant 0 : index
    %572 = vector.load %arg11[%c0_535, %c0_536, %c0_537] : memref<9x1x32xf32, #tpu.memory_space<vmem>>, vector<1x1x32xf32>
    %573 = vector.shape_cast %572 : vector<1x1x32xf32> to vector<1x32xf32>
    %574 = vector.broadcast %573 : vector<1x32xf32> to vector<16x32xf32>
    %575 = arith.mulf %571, %574 : vector<16x32xf32>
    %c5_538 = arith.constant 5 : index
    %c0_539 = arith.constant 0 : index
    %c0_540 = arith.constant 0 : index
    %c0_541 = arith.constant 0 : index
    %576 = vector.load %arg2[%c5_538, %c0_539, %c0_540, %c0_541] : memref<10x9x64x64xf32, #tpu.memory_space<vmem>>, vector<1x1x16x16xf32>
    %577 = vector.shape_cast %576 : vector<1x1x16x16xf32> to vector<16x16xf32>
    %cst_542 = arith.constant dense<0.000000e+00> : vector<16x32xf32>
    %578 = tpu.matmul %577, %575, %cst_542 {dimension_numbers = #tpu.dot_dimension_numbers<[1], [0], [0], [1], [0, 0, 1, 1], [], []>} : vector<16x16xf32>, vector<16x32xf32>, vector<16x32xf32> -> vector<16x32xf32>
    %579 = arith.addf %570, %578 : vector<16x32xf32>
    %c0_543 = arith.constant 0 : index
    %c1_544 = arith.constant 1 : index
    %580 = vector.load %arg15[%c0_543, %c1_544] : memref<64x546xf32, #tpu.memory_space<vmem>>, vector<16x32xf32>
    %c1_545 = arith.constant 1 : index
    %c0_546 = arith.constant 0 : index
    %c0_547 = arith.constant 0 : index
    %581 = vector.load %arg11[%c1_545, %c0_546, %c0_547] : memref<9x1x32xf32, #tpu.memory_space<vmem>>, vector<1x1x32xf32>
    %582 = vector.shape_cast %581 : vector<1x1x32xf32> to vector<1x32xf32>
    %583 = vector.broadcast %582 : vector<1x32xf32> to vector<16x32xf32>
    %584 = arith.mulf %580, %583 : vector<16x32xf32>
    %c5_548 = arith.constant 5 : index
    %c1_549 = arith.constant 1 : index
    %c0_550 = arith.constant 0 : index
    %c0_551 = arith.constant 0 : index
    %585 = vector.load %arg2[%c5_548, %c1_549, %c0_550, %c0_551] : memref<10x9x64x64xf32, #tpu.memory_space<vmem>>, vector<1x1x16x16xf32>
    %586 = vector.shape_cast %585 : vector<1x1x16x16xf32> to vector<16x16xf32>
    %cst_552 = arith.constant dense<0.000000e+00> : vector<16x32xf32>
    %587 = tpu.matmul %586, %584, %cst_552 {dimension_numbers = #tpu.dot_dimension_numbers<[1], [0], [0], [1], [0, 0, 1, 1], [], []>} : vector<16x16xf32>, vector<16x32xf32>, vector<16x32xf32> -> vector<16x32xf32>
    %588 = arith.addf %579, %587 : vector<16x32xf32>
    %c0_553 = arith.constant 0 : index
    %c2_554 = arith.constant 2 : index
    %589 = vector.load %arg15[%c0_553, %c2_554] : memref<64x546xf32, #tpu.memory_space<vmem>>, vector<16x32xf32>
    %c2_555 = arith.constant 2 : index
    %c0_556 = arith.constant 0 : index
    %c0_557 = arith.constant 0 : index
    %590 = vector.load %arg11[%c2_555, %c0_556, %c0_557] : memref<9x1x32xf32, #tpu.memory_space<vmem>>, vector<1x1x32xf32>
    %591 = vector.shape_cast %590 : vector<1x1x32xf32> to vector<1x32xf32>
    %592 = vector.broadcast %591 : vector<1x32xf32> to vector<16x32xf32>
    %593 = arith.mulf %589, %592 : vector<16x32xf32>
    %c5_558 = arith.constant 5 : index
    %c2_559 = arith.constant 2 : index
    %c0_560 = arith.constant 0 : index
    %c0_561 = arith.constant 0 : index
    %594 = vector.load %arg2[%c5_558, %c2_559, %c0_560, %c0_561] : memref<10x9x64x64xf32, #tpu.memory_space<vmem>>, vector<1x1x16x16xf32>
    %595 = vector.shape_cast %594 : vector<1x1x16x16xf32> to vector<16x16xf32>
    %cst_562 = arith.constant dense<0.000000e+00> : vector<16x32xf32>
    %596 = tpu.matmul %595, %593, %cst_562 {dimension_numbers = #tpu.dot_dimension_numbers<[1], [0], [0], [1], [0, 0, 1, 1], [], []>} : vector<16x16xf32>, vector<16x32xf32>, vector<16x32xf32> -> vector<16x32xf32>
    %597 = arith.addf %588, %596 : vector<16x32xf32>
    %c0_563 = arith.constant 0 : index
    %c4_564 = arith.constant 4 : index
    %598 = vector.load %arg15[%c0_563, %c4_564] : memref<64x546xf32, #tpu.memory_space<vmem>>, vector<16x32xf32>
    %c3_565 = arith.constant 3 : index
    %c0_566 = arith.constant 0 : index
    %c0_567 = arith.constant 0 : index
    %599 = vector.load %arg11[%c3_565, %c0_566, %c0_567] : memref<9x1x32xf32, #tpu.memory_space<vmem>>, vector<1x1x32xf32>
    %600 = vector.shape_cast %599 : vector<1x1x32xf32> to vector<1x32xf32>
    %601 = vector.broadcast %600 : vector<1x32xf32> to vector<16x32xf32>
    %602 = arith.mulf %598, %601 : vector<16x32xf32>
    %c5_568 = arith.constant 5 : index
    %c3_569 = arith.constant 3 : index
    %c0_570 = arith.constant 0 : index
    %c0_571 = arith.constant 0 : index
    %603 = vector.load %arg2[%c5_568, %c3_569, %c0_570, %c0_571] : memref<10x9x64x64xf32, #tpu.memory_space<vmem>>, vector<1x1x16x16xf32>
    %604 = vector.shape_cast %603 : vector<1x1x16x16xf32> to vector<16x16xf32>
    %cst_572 = arith.constant dense<0.000000e+00> : vector<16x32xf32>
    %605 = tpu.matmul %604, %602, %cst_572 {dimension_numbers = #tpu.dot_dimension_numbers<[1], [0], [0], [1], [0, 0, 1, 1], [], []>} : vector<16x16xf32>, vector<16x32xf32>, vector<16x32xf32> -> vector<16x32xf32>
    %606 = arith.addf %597, %605 : vector<16x32xf32>
    %c0_573 = arith.constant 0 : index
    %c5_574 = arith.constant 5 : index
    %607 = vector.load %arg15[%c0_573, %c5_574] : memref<64x546xf32, #tpu.memory_space<vmem>>, vector<16x32xf32>
    %c5_575 = arith.constant 5 : index
    %c4_576 = arith.constant 4 : index
    %c0_577 = arith.constant 0 : index
    %c0_578 = arith.constant 0 : index
    %608 = vector.load %arg2[%c5_575, %c4_576, %c0_577, %c0_578] : memref<10x9x64x64xf32, #tpu.memory_space<vmem>>, vector<1x1x16x16xf32>
    %609 = vector.shape_cast %608 : vector<1x1x16x16xf32> to vector<16x16xf32>
    %cst_579 = arith.constant dense<0.000000e+00> : vector<16x32xf32>
    %610 = tpu.matmul %609, %607, %cst_579 {dimension_numbers = #tpu.dot_dimension_numbers<[1], [0], [0], [1], [0, 0, 1, 1], [], []>} : vector<16x16xf32>, vector<16x32xf32>, vector<16x32xf32> -> vector<16x32xf32>
    %611 = arith.addf %606, %610 : vector<16x32xf32>
    %c0_580 = arith.constant 0 : index
    %c6_581 = arith.constant 6 : index
    %612 = vector.load %arg15[%c0_580, %c6_581] : memref<64x546xf32, #tpu.memory_space<vmem>>, vector<16x32xf32>
    %c5_582 = arith.constant 5 : index
    %c0_583 = arith.constant 0 : index
    %c0_584 = arith.constant 0 : index
    %613 = vector.load %arg11[%c5_582, %c0_583, %c0_584] : memref<9x1x32xf32, #tpu.memory_space<vmem>>, vector<1x1x32xf32>
    %614 = vector.shape_cast %613 : vector<1x1x32xf32> to vector<1x32xf32>
    %615 = vector.broadcast %614 : vector<1x32xf32> to vector<16x32xf32>
    %616 = arith.mulf %612, %615 : vector<16x32xf32>
    %c5_585 = arith.constant 5 : index
    %c5_586 = arith.constant 5 : index
    %c0_587 = arith.constant 0 : index
    %c0_588 = arith.constant 0 : index
    %617 = vector.load %arg2[%c5_585, %c5_586, %c0_587, %c0_588] : memref<10x9x64x64xf32, #tpu.memory_space<vmem>>, vector<1x1x16x16xf32>
    %618 = vector.shape_cast %617 : vector<1x1x16x16xf32> to vector<16x16xf32>
    %cst_589 = arith.constant dense<0.000000e+00> : vector<16x32xf32>
    %619 = tpu.matmul %618, %616, %cst_589 {dimension_numbers = #tpu.dot_dimension_numbers<[1], [0], [0], [1], [0, 0, 1, 1], [], []>} : vector<16x16xf32>, vector<16x32xf32>, vector<16x32xf32> -> vector<16x32xf32>
    %620 = arith.addf %611, %619 : vector<16x32xf32>
    %c0_590 = arith.constant 0 : index
    %c8_591 = arith.constant 8 : index
    %621 = vector.load %arg15[%c0_590, %c8_591] : memref<64x546xf32, #tpu.memory_space<vmem>>, vector<16x32xf32>
    %c6_592 = arith.constant 6 : index
    %c0_593 = arith.constant 0 : index
    %c0_594 = arith.constant 0 : index
    %622 = vector.load %arg11[%c6_592, %c0_593, %c0_594] : memref<9x1x32xf32, #tpu.memory_space<vmem>>, vector<1x1x32xf32>
    %623 = vector.shape_cast %622 : vector<1x1x32xf32> to vector<1x32xf32>
    %624 = vector.broadcast %623 : vector<1x32xf32> to vector<16x32xf32>
    %625 = arith.mulf %621, %624 : vector<16x32xf32>
    %c5_595 = arith.constant 5 : index
    %c6_596 = arith.constant 6 : index
    %c0_597 = arith.constant 0 : index
    %c0_598 = arith.constant 0 : index
    %626 = vector.load %arg2[%c5_595, %c6_596, %c0_597, %c0_598] : memref<10x9x64x64xf32, #tpu.memory_space<vmem>>, vector<1x1x16x16xf32>
    %627 = vector.shape_cast %626 : vector<1x1x16x16xf32> to vector<16x16xf32>
    %cst_599 = arith.constant dense<0.000000e+00> : vector<16x32xf32>
    %628 = tpu.matmul %627, %625, %cst_599 {dimension_numbers = #tpu.dot_dimension_numbers<[1], [0], [0], [1], [0, 0, 1, 1], [], []>} : vector<16x16xf32>, vector<16x32xf32>, vector<16x32xf32> -> vector<16x32xf32>
    %629 = arith.addf %620, %628 : vector<16x32xf32>
    %c0_600 = arith.constant 0 : index
    %c9_601 = arith.constant 9 : index
    %630 = vector.load %arg15[%c0_600, %c9_601] : memref<64x546xf32, #tpu.memory_space<vmem>>, vector<16x32xf32>
    %c7_602 = arith.constant 7 : index
    %c0_603 = arith.constant 0 : index
    %c0_604 = arith.constant 0 : index
    %631 = vector.load %arg11[%c7_602, %c0_603, %c0_604] : memref<9x1x32xf32, #tpu.memory_space<vmem>>, vector<1x1x32xf32>
    %632 = vector.shape_cast %631 : vector<1x1x32xf32> to vector<1x32xf32>
    %633 = vector.broadcast %632 : vector<1x32xf32> to vector<16x32xf32>
    %634 = arith.mulf %630, %633 : vector<16x32xf32>
    %c5_605 = arith.constant 5 : index
    %c7_606 = arith.constant 7 : index
    %c0_607 = arith.constant 0 : index
    %c0_608 = arith.constant 0 : index
    %635 = vector.load %arg2[%c5_605, %c7_606, %c0_607, %c0_608] : memref<10x9x64x64xf32, #tpu.memory_space<vmem>>, vector<1x1x16x16xf32>
    %636 = vector.shape_cast %635 : vector<1x1x16x16xf32> to vector<16x16xf32>
    %cst_609 = arith.constant dense<0.000000e+00> : vector<16x32xf32>
    %637 = tpu.matmul %636, %634, %cst_609 {dimension_numbers = #tpu.dot_dimension_numbers<[1], [0], [0], [1], [0, 0, 1, 1], [], []>} : vector<16x16xf32>, vector<16x32xf32>, vector<16x32xf32> -> vector<16x32xf32>
    %638 = arith.addf %629, %637 : vector<16x32xf32>
    %c0_610 = arith.constant 0 : index
    %c10_611 = arith.constant 10 : index
    %639 = vector.load %arg15[%c0_610, %c10_611] : memref<64x546xf32, #tpu.memory_space<vmem>>, vector<16x32xf32>
    %c8_612 = arith.constant 8 : index
    %c0_613 = arith.constant 0 : index
    %c0_614 = arith.constant 0 : index
    %640 = vector.load %arg11[%c8_612, %c0_613, %c0_614] : memref<9x1x32xf32, #tpu.memory_space<vmem>>, vector<1x1x32xf32>
    %641 = vector.shape_cast %640 : vector<1x1x32xf32> to vector<1x32xf32>
    %642 = vector.broadcast %641 : vector<1x32xf32> to vector<16x32xf32>
    %643 = arith.mulf %639, %642 : vector<16x32xf32>
    %c5_615 = arith.constant 5 : index
    %c8_616 = arith.constant 8 : index
    %c0_617 = arith.constant 0 : index
    %c0_618 = arith.constant 0 : index
    %644 = vector.load %arg2[%c5_615, %c8_616, %c0_617, %c0_618] : memref<10x9x64x64xf32, #tpu.memory_space<vmem>>, vector<1x1x16x16xf32>
    %645 = vector.shape_cast %644 : vector<1x1x16x16xf32> to vector<16x16xf32>
    %cst_619 = arith.constant dense<0.000000e+00> : vector<16x32xf32>
    %646 = tpu.matmul %645, %643, %cst_619 {dimension_numbers = #tpu.dot_dimension_numbers<[1], [0], [0], [1], [0, 0, 1, 1], [], []>} : vector<16x16xf32>, vector<16x32xf32>, vector<16x32xf32> -> vector<16x32xf32>
    %647 = arith.addf %638, %646 : vector<16x32xf32>
    %cst_620 = arith.constant dense<0.000000e+00> : vector<16xf32>
    %648 = vector.multi_reduction <add>, %647, %cst_620 [1] : vector<16x32xf32> to vector<16xf32>
    %649 = vector.shape_cast %648 : vector<16xf32> to vector<16x1xf32>
    %cst_621 = arith.constant 3.200000e+01 : f32
    %650 = vector.broadcast %cst_621 : f32 to vector<16x1xf32>
    %651 = arith.divf %649, %650 : vector<16x1xf32>
    %652 = vector.broadcast %651 : vector<16x1xf32> to vector<16x32xf32>
    %653 = arith.subf %647, %652 : vector<16x32xf32>
    %654 = arith.mulf %653, %653 : vector<16x32xf32>
    %cst_622 = arith.constant dense<0.000000e+00> : vector<16xf32>
    %655 = vector.multi_reduction <add>, %654, %cst_622 [1] : vector<16x32xf32> to vector<16xf32>
    %656 = vector.shape_cast %655 : vector<16xf32> to vector<16x1xf32>
    %cst_623 = arith.constant 3.200000e+01 : f32
    %657 = vector.broadcast %cst_623 : f32 to vector<16x1xf32>
    %658 = arith.divf %656, %657 : vector<16x1xf32>
    %659 = vector.broadcast %651 : vector<16x1xf32> to vector<16x32xf32>
    %660 = arith.subf %647, %659 : vector<16x32xf32>
    %cst_624 = arith.constant 9.99999974E-6 : f32
    %661 = vector.broadcast %cst_624 : f32 to vector<16x1xf32>
    %662 = arith.addf %658, %661 : vector<16x1xf32>
    %663 = math.rsqrt %662 : vector<16x1xf32>
    %664 = vector.broadcast %663 : vector<16x1xf32> to vector<16x32xf32>
    %665 = arith.mulf %660, %664 : vector<16x32xf32>
    %c5_625 = arith.constant 5 : index
    %c0_626 = arith.constant 0 : index
    %c0_627 = arith.constant 0 : index
    %666 = vector.load %arg3[%c5_625, %c0_626, %c0_627] : memref<10x64x1xf32, #tpu.memory_space<vmem>>, vector<1x16x1xf32>
    %667 = vector.shape_cast %666 : vector<1x16x1xf32> to vector<16x1xf32>
    %668 = vector.broadcast %667 : vector<16x1xf32> to vector<16x32xf32>
    %669 = arith.mulf %665, %668 : vector<16x32xf32>
    %c5_628 = arith.constant 5 : index
    %c0_629 = arith.constant 0 : index
    %c0_630 = arith.constant 0 : index
    %670 = vector.load %arg4[%c5_628, %c0_629, %c0_630] : memref<10x64x1xf32, #tpu.memory_space<vmem>>, vector<1x16x1xf32>
    %671 = vector.shape_cast %670 : vector<1x16x1xf32> to vector<16x1xf32>
    %672 = vector.broadcast %671 : vector<16x1xf32> to vector<16x32xf32>
    %673 = arith.addf %669, %672 : vector<16x32xf32>
    %cst_631 = arith.constant 0.000000e+00 : f32
    %674 = vector.broadcast %cst_631 : f32 to vector<16x32xf32>
    %675 = arith.maximumf %673, %674 : vector<16x32xf32>
    %c0_632 = arith.constant 0 : index
    %c0_633 = arith.constant 0 : index
    %c0_634 = arith.constant 0 : index
    %676 = vector.load %arg7[%c0_632, %c0_633, %c0_634] : memref<4x32x8xf32, #tpu.memory_space<vmem>>, vector<1x32x8xf32>
    %677 = vector.shape_cast %676 : vector<1x32x8xf32> to vector<32x8xf32>
    %cst_635 = arith.constant dense<0.000000e+00> : vector<16x8xf32>
    %678 = tpu.matmul %675, %677, %cst_635 {dimension_numbers = #tpu.dot_dimension_numbers<[1], [0], [0], [1], [0, 0, 1, 1], [], []>} : vector<16x32xf32>, vector<32x8xf32>, vector<16x8xf32> -> vector<16x8xf32>
    %c1_636 = arith.constant 1 : index
    %c0_637 = arith.constant 0 : index
    %c0_638 = arith.constant 0 : index
    %679 = vector.load %arg7[%c1_636, %c0_637, %c0_638] : memref<4x32x8xf32, #tpu.memory_space<vmem>>, vector<1x32x8xf32>
    %680 = vector.shape_cast %679 : vector<1x32x8xf32> to vector<32x8xf32>
    %cst_639 = arith.constant dense<0.000000e+00> : vector<16x8xf32>
    %681 = tpu.matmul %675, %680, %cst_639 {dimension_numbers = #tpu.dot_dimension_numbers<[1], [0], [0], [1], [0, 0, 1, 1], [], []>} : vector<16x32xf32>, vector<32x8xf32>, vector<16x8xf32> -> vector<16x8xf32>
    %c2_640 = arith.constant 2 : index
    %c0_641 = arith.constant 0 : index
    %c0_642 = arith.constant 0 : index
    %682 = vector.load %arg7[%c2_640, %c0_641, %c0_642] : memref<4x32x8xf32, #tpu.memory_space<vmem>>, vector<1x32x8xf32>
    %683 = vector.shape_cast %682 : vector<1x32x8xf32> to vector<32x8xf32>
    %cst_643 = arith.constant dense<0.000000e+00> : vector<16x8xf32>
    %684 = tpu.matmul %675, %683, %cst_643 {dimension_numbers = #tpu.dot_dimension_numbers<[1], [0], [0], [1], [0, 0, 1, 1], [], []>} : vector<16x32xf32>, vector<32x8xf32>, vector<16x8xf32> -> vector<16x8xf32>
    %c3_644 = arith.constant 3 : index
    %c0_645 = arith.constant 0 : index
    %c0_646 = arith.constant 0 : index
    %685 = vector.load %arg7[%c3_644, %c0_645, %c0_646] : memref<4x32x8xf32, #tpu.memory_space<vmem>>, vector<1x32x8xf32>
    %686 = vector.shape_cast %685 : vector<1x32x8xf32> to vector<32x8xf32>
    %cst_647 = arith.constant dense<0.000000e+00> : vector<16x8xf32>
    %687 = tpu.matmul %675, %686, %cst_647 {dimension_numbers = #tpu.dot_dimension_numbers<[1], [0], [0], [1], [0, 0, 1, 1], [], []>} : vector<16x32xf32>, vector<32x8xf32>, vector<16x8xf32> -> vector<16x8xf32>
    %688 = arith.maximumf %678, %681 : vector<16x8xf32>
    %689 = arith.maximumf %684, %687 : vector<16x8xf32>
    %690 = arith.maximumf %688, %689 : vector<16x8xf32>
    %c0_648 = arith.constant 0 : index
    %c3_649 = arith.constant 3 : index
    %691 = vector.load %arg15[%c0_648, %c3_649] : memref<64x546xf32, #tpu.memory_space<vmem>>, vector<16x8xf32>
    tpu.vector_store %arg15[%c0_648, %c3_649], %690 {strides = array<i32>} : memref<64x546xf32, #tpu.memory_space<vmem>>, vector<16x8xf32>,
    %cst_650 = arith.constant 0.000000e+00 : f32
    %692 = vector.broadcast %cst_650 : f32 to vector<32x8xf32>
    %c0_651 = arith.constant 0 : index
    %c0_652 = arith.constant 0 : index
    %693 = vector.load %arg15[%c0_651, %c0_652] : memref<64x546xf32, #tpu.memory_space<vmem>>, vector<16x8xf32>
    %c0_653 = arith.constant 0 : index
    %c0_654 = arith.constant 0 : index
    %c0_655 = arith.constant 0 : index
    %694 = vector.load %arg12[%c0_653, %c0_654, %c0_655] : memref<9x1x8xf32, #tpu.memory_space<vmem>>, vector<1x1x8xf32>
    %695 = vector.shape_cast %694 : vector<1x1x8xf32> to vector<1x8xf32>
    %696 = vector.broadcast %695 : vector<1x8xf32> to vector<16x8xf32>
    %697 = arith.mulf %693, %696 : vector<16x8xf32>
    %c6_656 = arith.constant 6 : index
    %c0_657 = arith.constant 0 : index
    %c0_658 = arith.constant 0 : index
    %c0_659 = arith.constant 0 : index
    %698 = vector.load %arg2[%c6_656, %c0_657, %c0_658, %c0_659] : memref<10x9x64x64xf32, #tpu.memory_space<vmem>>, vector<1x1x32x16xf32>
    %699 = vector.shape_cast %698 : vector<1x1x32x16xf32> to vector<32x16xf32>
    %cst_660 = arith.constant dense<0.000000e+00> : vector<32x8xf32>
    %700 = tpu.matmul %699, %697, %cst_660 {dimension_numbers = #tpu.dot_dimension_numbers<[1], [0], [0], [1], [0, 0, 1, 1], [], []>} : vector<32x16xf32>, vector<16x8xf32>, vector<32x8xf32> -> vector<32x8xf32>
    %701 = arith.addf %692, %700 : vector<32x8xf32>
    %c0_661 = arith.constant 0 : index
    %c1_662 = arith.constant 1 : index
    %702 = vector.load %arg15[%c0_661, %c1_662] : memref<64x546xf32, #tpu.memory_space<vmem>>, vector<16x8xf32>
    %c1_663 = arith.constant 1 : index
    %c0_664 = arith.constant 0 : index
    %c0_665 = arith.constant 0 : index
    %703 = vector.load %arg12[%c1_663, %c0_664, %c0_665] : memref<9x1x8xf32, #tpu.memory_space<vmem>>, vector<1x1x8xf32>
    %704 = vector.shape_cast %703 : vector<1x1x8xf32> to vector<1x8xf32>
    %705 = vector.broadcast %704 : vector<1x8xf32> to vector<16x8xf32>
    %706 = arith.mulf %702, %705 : vector<16x8xf32>
    %c6_666 = arith.constant 6 : index
    %c1_667 = arith.constant 1 : index
    %c0_668 = arith.constant 0 : index
    %c0_669 = arith.constant 0 : index
    %707 = vector.load %arg2[%c6_666, %c1_667, %c0_668, %c0_669] : memref<10x9x64x64xf32, #tpu.memory_space<vmem>>, vector<1x1x32x16xf32>
    %708 = vector.shape_cast %707 : vector<1x1x32x16xf32> to vector<32x16xf32>
    %cst_670 = arith.constant dense<0.000000e+00> : vector<32x8xf32>
    %709 = tpu.matmul %708, %706, %cst_670 {dimension_numbers = #tpu.dot_dimension_numbers<[1], [0], [0], [1], [0, 0, 1, 1], [], []>} : vector<32x16xf32>, vector<16x8xf32>, vector<32x8xf32> -> vector<32x8xf32>
    %710 = arith.addf %701, %709 : vector<32x8xf32>
    %c0_671 = arith.constant 0 : index
    %c2_672 = arith.constant 2 : index
    %711 = vector.load %arg15[%c0_671, %c2_672] : memref<64x546xf32, #tpu.memory_space<vmem>>, vector<16x8xf32>
    %c2_673 = arith.constant 2 : index
    %c0_674 = arith.constant 0 : index
    %c0_675 = arith.constant 0 : index
    %712 = vector.load %arg12[%c2_673, %c0_674, %c0_675] : memref<9x1x8xf32, #tpu.memory_space<vmem>>, vector<1x1x8xf32>
    %713 = vector.shape_cast %712 : vector<1x1x8xf32> to vector<1x8xf32>
    %714 = vector.broadcast %713 : vector<1x8xf32> to vector<16x8xf32>
    %715 = arith.mulf %711, %714 : vector<16x8xf32>
    %c6_676 = arith.constant 6 : index
    %c2_677 = arith.constant 2 : index
    %c0_678 = arith.constant 0 : index
    %c0_679 = arith.constant 0 : index
    %716 = vector.load %arg2[%c6_676, %c2_677, %c0_678, %c0_679] : memref<10x9x64x64xf32, #tpu.memory_space<vmem>>, vector<1x1x32x16xf32>
    %717 = vector.shape_cast %716 : vector<1x1x32x16xf32> to vector<32x16xf32>
    %cst_680 = arith.constant dense<0.000000e+00> : vector<32x8xf32>
    %718 = tpu.matmul %717, %715, %cst_680 {dimension_numbers = #tpu.dot_dimension_numbers<[1], [0], [0], [1], [0, 0, 1, 1], [], []>} : vector<32x16xf32>, vector<16x8xf32>, vector<32x8xf32> -> vector<32x8xf32>
    %719 = arith.addf %710, %718 : vector<32x8xf32>
    %c0_681 = arith.constant 0 : index
    %c2_682 = arith.constant 2 : index
    %720 = vector.load %arg15[%c0_681, %c2_682] : memref<64x546xf32, #tpu.memory_space<vmem>>, vector<16x8xf32>
    %c3_683 = arith.constant 3 : index
    %c0_684 = arith.constant 0 : index
    %c0_685 = arith.constant 0 : index
    %721 = vector.load %arg12[%c3_683, %c0_684, %c0_685] : memref<9x1x8xf32, #tpu.memory_space<vmem>>, vector<1x1x8xf32>
    %722 = vector.shape_cast %721 : vector<1x1x8xf32> to vector<1x8xf32>
    %723 = vector.broadcast %722 : vector<1x8xf32> to vector<16x8xf32>
    %724 = arith.mulf %720, %723 : vector<16x8xf32>
    %c6_686 = arith.constant 6 : index
    %c3_687 = arith.constant 3 : index
    %c0_688 = arith.constant 0 : index
    %c0_689 = arith.constant 0 : index
    %725 = vector.load %arg2[%c6_686, %c3_687, %c0_688, %c0_689] : memref<10x9x64x64xf32, #tpu.memory_space<vmem>>, vector<1x1x32x16xf32>
    %726 = vector.shape_cast %725 : vector<1x1x32x16xf32> to vector<32x16xf32>
    %cst_690 = arith.constant dense<0.000000e+00> : vector<32x8xf32>
    %727 = tpu.matmul %726, %724, %cst_690 {dimension_numbers = #tpu.dot_dimension_numbers<[1], [0], [0], [1], [0, 0, 1, 1], [], []>} : vector<32x16xf32>, vector<16x8xf32>, vector<32x8xf32> -> vector<32x8xf32>
    %728 = arith.addf %719, %727 : vector<32x8xf32>
    %c0_691 = arith.constant 0 : index
    %c3_692 = arith.constant 3 : index
    %729 = vector.load %arg15[%c0_691, %c3_692] : memref<64x546xf32, #tpu.memory_space<vmem>>, vector<16x8xf32>
    %c6_693 = arith.constant 6 : index
    %c4_694 = arith.constant 4 : index
    %c0_695 = arith.constant 0 : index
    %c0_696 = arith.constant 0 : index
    %730 = vector.load %arg2[%c6_693, %c4_694, %c0_695, %c0_696] : memref<10x9x64x64xf32, #tpu.memory_space<vmem>>, vector<1x1x32x16xf32>
    %731 = vector.shape_cast %730 : vector<1x1x32x16xf32> to vector<32x16xf32>
    %cst_697 = arith.constant dense<0.000000e+00> : vector<32x8xf32>
    %732 = tpu.matmul %731, %729, %cst_697 {dimension_numbers = #tpu.dot_dimension_numbers<[1], [0], [0], [1], [0, 0, 1, 1], [], []>} : vector<32x16xf32>, vector<16x8xf32>, vector<32x8xf32> -> vector<32x8xf32>
    %733 = arith.addf %728, %732 : vector<32x8xf32>
    %c0_698 = arith.constant 0 : index
    %c4_699 = arith.constant 4 : index
    %734 = vector.load %arg15[%c0_698, %c4_699] : memref<64x546xf32, #tpu.memory_space<vmem>>, vector<16x8xf32>
    %c5_700 = arith.constant 5 : index
    %c0_701 = arith.constant 0 : index
    %c0_702 = arith.constant 0 : index
    %735 = vector.load %arg12[%c5_700, %c0_701, %c0_702] : memref<9x1x8xf32, #tpu.memory_space<vmem>>, vector<1x1x8xf32>
    %736 = vector.shape_cast %735 : vector<1x1x8xf32> to vector<1x8xf32>
    %737 = vector.broadcast %736 : vector<1x8xf32> to vector<16x8xf32>
    %738 = arith.mulf %734, %737 : vector<16x8xf32>
    %c6_703 = arith.constant 6 : index
    %c5_704 = arith.constant 5 : index
    %c0_705 = arith.constant 0 : index
    %c0_706 = arith.constant 0 : index
    %739 = vector.load %arg2[%c6_703, %c5_704, %c0_705, %c0_706] : memref<10x9x64x64xf32, #tpu.memory_space<vmem>>, vector<1x1x32x16xf32>
    %740 = vector.shape_cast %739 : vector<1x1x32x16xf32> to vector<32x16xf32>
    %cst_707 = arith.constant dense<0.000000e+00> : vector<32x8xf32>
    %741 = tpu.matmul %740, %738, %cst_707 {dimension_numbers = #tpu.dot_dimension_numbers<[1], [0], [0], [1], [0, 0, 1, 1], [], []>} : vector<32x16xf32>, vector<16x8xf32>, vector<32x8xf32> -> vector<32x8xf32>
    %742 = arith.addf %733, %741 : vector<32x8xf32>
    %c0_708 = arith.constant 0 : index
    %c4_709 = arith.constant 4 : index
    %743 = vector.load %arg15[%c0_708, %c4_709] : memref<64x546xf32, #tpu.memory_space<vmem>>, vector<16x8xf32>
    %c6_710 = arith.constant 6 : index
    %c0_711 = arith.constant 0 : index
    %c0_712 = arith.constant 0 : index
    %744 = vector.load %arg12[%c6_710, %c0_711, %c0_712] : memref<9x1x8xf32, #tpu.memory_space<vmem>>, vector<1x1x8xf32>
    %745 = vector.shape_cast %744 : vector<1x1x8xf32> to vector<1x8xf32>
    %746 = vector.broadcast %745 : vector<1x8xf32> to vector<16x8xf32>
    %747 = arith.mulf %743, %746 : vector<16x8xf32>
    %c6_713 = arith.constant 6 : index
    %c6_714 = arith.constant 6 : index
    %c0_715 = arith.constant 0 : index
    %c0_716 = arith.constant 0 : index
    %748 = vector.load %arg2[%c6_713, %c6_714, %c0_715, %c0_716] : memref<10x9x64x64xf32, #tpu.memory_space<vmem>>, vector<1x1x32x16xf32>
    %749 = vector.shape_cast %748 : vector<1x1x32x16xf32> to vector<32x16xf32>
    %cst_717 = arith.constant dense<0.000000e+00> : vector<32x8xf32>
    %750 = tpu.matmul %749, %747, %cst_717 {dimension_numbers = #tpu.dot_dimension_numbers<[1], [0], [0], [1], [0, 0, 1, 1], [], []>} : vector<32x16xf32>, vector<16x8xf32>, vector<32x8xf32> -> vector<32x8xf32>
    %751 = arith.addf %742, %750 : vector<32x8xf32>
    %c0_718 = arith.constant 0 : index
    %c5_719 = arith.constant 5 : index
    %752 = vector.load %arg15[%c0_718, %c5_719] : memref<64x546xf32, #tpu.memory_space<vmem>>, vector<16x8xf32>
    %c7_720 = arith.constant 7 : index
    %c0_721 = arith.constant 0 : index
    %c0_722 = arith.constant 0 : index
    %753 = vector.load %arg12[%c7_720, %c0_721, %c0_722] : memref<9x1x8xf32, #tpu.memory_space<vmem>>, vector<1x1x8xf32>
    %754 = vector.shape_cast %753 : vector<1x1x8xf32> to vector<1x8xf32>
    %755 = vector.broadcast %754 : vector<1x8xf32> to vector<16x8xf32>
    %756 = arith.mulf %752, %755 : vector<16x8xf32>
    %c6_723 = arith.constant 6 : index
    %c7_724 = arith.constant 7 : index
    %c0_725 = arith.constant 0 : index
    %c0_726 = arith.constant 0 : index
    %757 = vector.load %arg2[%c6_723, %c7_724, %c0_725, %c0_726] : memref<10x9x64x64xf32, #tpu.memory_space<vmem>>, vector<1x1x32x16xf32>
    %758 = vector.shape_cast %757 : vector<1x1x32x16xf32> to vector<32x16xf32>
    %cst_727 = arith.constant dense<0.000000e+00> : vector<32x8xf32>
    %759 = tpu.matmul %758, %756, %cst_727 {dimension_numbers = #tpu.dot_dimension_numbers<[1], [0], [0], [1], [0, 0, 1, 1], [], []>} : vector<32x16xf32>, vector<16x8xf32>, vector<32x8xf32> -> vector<32x8xf32>
    %760 = arith.addf %751, %759 : vector<32x8xf32>
    %c0_728 = arith.constant 0 : index
    %c6_729 = arith.constant 6 : index
    %761 = vector.load %arg15[%c0_728, %c6_729] : memref<64x546xf32, #tpu.memory_space<vmem>>, vector<16x8xf32>
    %c8_730 = arith.constant 8 : index
    %c0_731 = arith.constant 0 : index
    %c0_732 = arith.constant 0 : index
    %762 = vector.load %arg12[%c8_730, %c0_731, %c0_732] : memref<9x1x8xf32, #tpu.memory_space<vmem>>, vector<1x1x8xf32>
    %763 = vector.shape_cast %762 : vector<1x1x8xf32> to vector<1x8xf32>
    %764 = vector.broadcast %763 : vector<1x8xf32> to vector<16x8xf32>
    %765 = arith.mulf %761, %764 : vector<16x8xf32>
    %c6_733 = arith.constant 6 : index
    %c8_734 = arith.constant 8 : index
    %c0_735 = arith.constant 0 : index
    %c0_736 = arith.constant 0 : index
    %766 = vector.load %arg2[%c6_733, %c8_734, %c0_735, %c0_736] : memref<10x9x64x64xf32, #tpu.memory_space<vmem>>, vector<1x1x32x16xf32>
    %767 = vector.shape_cast %766 : vector<1x1x32x16xf32> to vector<32x16xf32>
    %cst_737 = arith.constant dense<0.000000e+00> : vector<32x8xf32>
    %768 = tpu.matmul %767, %765, %cst_737 {dimension_numbers = #tpu.dot_dimension_numbers<[1], [0], [0], [1], [0, 0, 1, 1], [], []>} : vector<32x16xf32>, vector<16x8xf32>, vector<32x8xf32> -> vector<32x8xf32>
    %769 = arith.addf %760, %768 : vector<32x8xf32>
    %cst_738 = arith.constant dense<0.000000e+00> : vector<32xf32>
    %770 = vector.multi_reduction <add>, %769, %cst_738 [1] : vector<32x8xf32> to vector<32xf32>
    %771 = vector.shape_cast %770 : vector<32xf32> to vector<32x1xf32>
    %cst_739 = arith.constant 8.000000e+00 : f32
    %772 = vector.broadcast %cst_739 : f32 to vector<32x1xf32>
    %773 = arith.divf %771, %772 : vector<32x1xf32>
    %774 = vector.broadcast %773 : vector<32x1xf32> to vector<32x8xf32>
    %775 = arith.subf %769, %774 : vector<32x8xf32>
    %776 = arith.mulf %775, %775 : vector<32x8xf32>
    %cst_740 = arith.constant dense<0.000000e+00> : vector<32xf32>
    %777 = vector.multi_reduction <add>, %776, %cst_740 [1] : vector<32x8xf32> to vector<32xf32>
    %778 = vector.shape_cast %777 : vector<32xf32> to vector<32x1xf32>
    %cst_741 = arith.constant 8.000000e+00 : f32
    %779 = vector.broadcast %cst_741 : f32 to vector<32x1xf32>
    %780 = arith.divf %778, %779 : vector<32x1xf32>
    %781 = vector.broadcast %773 : vector<32x1xf32> to vector<32x8xf32>
    %782 = arith.subf %769, %781 : vector<32x8xf32>
    %cst_742 = arith.constant 9.99999974E-6 : f32
    %783 = vector.broadcast %cst_742 : f32 to vector<32x1xf32>
    %784 = arith.addf %780, %783 : vector<32x1xf32>
    %785 = math.rsqrt %784 : vector<32x1xf32>
    %786 = vector.broadcast %785 : vector<32x1xf32> to vector<32x8xf32>
    %787 = arith.mulf %782, %786 : vector<32x8xf32>
    %c6_743 = arith.constant 6 : index
    %c0_744 = arith.constant 0 : index
    %c0_745 = arith.constant 0 : index
    %788 = vector.load %arg3[%c6_743, %c0_744, %c0_745] : memref<10x64x1xf32, #tpu.memory_space<vmem>>, vector<1x32x1xf32>
    %789 = vector.shape_cast %788 : vector<1x32x1xf32> to vector<32x1xf32>
    %790 = vector.broadcast %789 : vector<32x1xf32> to vector<32x8xf32>
    %791 = arith.mulf %787, %790 : vector<32x8xf32>
    %c6_746 = arith.constant 6 : index
    %c0_747 = arith.constant 0 : index
    %c0_748 = arith.constant 0 : index
    %792 = vector.load %arg4[%c6_746, %c0_747, %c0_748] : memref<10x64x1xf32, #tpu.memory_space<vmem>>, vector<1x32x1xf32>
    %793 = vector.shape_cast %792 : vector<1x32x1xf32> to vector<32x1xf32>
    %794 = vector.broadcast %793 : vector<32x1xf32> to vector<32x8xf32>
    %795 = arith.addf %791, %794 : vector<32x8xf32>
    %cst_749 = arith.constant 0.000000e+00 : f32
    %796 = vector.broadcast %cst_749 : f32 to vector<32x8xf32>
    %797 = arith.maximumf %795, %796 : vector<32x8xf32>
    %c0_750 = arith.constant 0 : index
    %c3_751 = arith.constant 3 : index
    %798 = vector.load %arg15[%c0_750, %c3_751] : memref<64x546xf32, #tpu.memory_space<vmem>>, vector<32x8xf32>
    tpu.vector_store %arg15[%c0_750, %c3_751], %797 {strides = array<i32>} : memref<64x546xf32, #tpu.memory_space<vmem>>, vector<32x8xf32>,
    %cst_752 = arith.constant 0.000000e+00 : f32
    %799 = vector.broadcast %cst_752 : f32 to vector<32x8xf32>
    %c0_753 = arith.constant 0 : index
    %c0_754 = arith.constant 0 : index
    %800 = vector.load %arg15[%c0_753, %c0_754] : memref<64x546xf32, #tpu.memory_space<vmem>>, vector<32x8xf32>
    %c0_755 = arith.constant 0 : index
    %c0_756 = arith.constant 0 : index
    %c0_757 = arith.constant 0 : index
    %801 = vector.load %arg12[%c0_755, %c0_756, %c0_757] : memref<9x1x8xf32, #tpu.memory_space<vmem>>, vector<1x1x8xf32>
    %802 = vector.shape_cast %801 : vector<1x1x8xf32> to vector<1x8xf32>
    %803 = vector.broadcast %802 : vector<1x8xf32> to vector<32x8xf32>
    %804 = arith.mulf %800, %803 : vector<32x8xf32>
    %c7_758 = arith.constant 7 : index
    %c0_759 = arith.constant 0 : index
    %c0_760 = arith.constant 0 : index
    %c0_761 = arith.constant 0 : index
    %805 = vector.load %arg2[%c7_758, %c0_759, %c0_760, %c0_761] : memref<10x9x64x64xf32, #tpu.memory_space<vmem>>, vector<1x1x32x32xf32>
    %806 = vector.shape_cast %805 : vector<1x1x32x32xf32> to vector<32x32xf32>
    %cst_762 = arith.constant dense<0.000000e+00> : vector<32x8xf32>
    %807 = tpu.matmul %806, %804, %cst_762 {dimension_numbers = #tpu.dot_dimension_numbers<[1], [0], [0], [1], [0, 0, 1, 1], [], []>} : vector<32x32xf32>, vector<32x8xf32>, vector<32x8xf32> -> vector<32x8xf32>
    %808 = arith.addf %799, %807 : vector<32x8xf32>
    %c0_763 = arith.constant 0 : index
    %c1_764 = arith.constant 1 : index
    %809 = vector.load %arg15[%c0_763, %c1_764] : memref<64x546xf32, #tpu.memory_space<vmem>>, vector<32x8xf32>
    %c1_765 = arith.constant 1 : index
    %c0_766 = arith.constant 0 : index
    %c0_767 = arith.constant 0 : index
    %810 = vector.load %arg12[%c1_765, %c0_766, %c0_767] : memref<9x1x8xf32, #tpu.memory_space<vmem>>, vector<1x1x8xf32>
    %811 = vector.shape_cast %810 : vector<1x1x8xf32> to vector<1x8xf32>
    %812 = vector.broadcast %811 : vector<1x8xf32> to vector<32x8xf32>
    %813 = arith.mulf %809, %812 : vector<32x8xf32>
    %c7_768 = arith.constant 7 : index
    %c1_769 = arith.constant 1 : index
    %c0_770 = arith.constant 0 : index
    %c0_771 = arith.constant 0 : index
    %814 = vector.load %arg2[%c7_768, %c1_769, %c0_770, %c0_771] : memref<10x9x64x64xf32, #tpu.memory_space<vmem>>, vector<1x1x32x32xf32>
    %815 = vector.shape_cast %814 : vector<1x1x32x32xf32> to vector<32x32xf32>
    %cst_772 = arith.constant dense<0.000000e+00> : vector<32x8xf32>
    %816 = tpu.matmul %815, %813, %cst_772 {dimension_numbers = #tpu.dot_dimension_numbers<[1], [0], [0], [1], [0, 0, 1, 1], [], []>} : vector<32x32xf32>, vector<32x8xf32>, vector<32x8xf32> -> vector<32x8xf32>
    %817 = arith.addf %808, %816 : vector<32x8xf32>
    %c0_773 = arith.constant 0 : index
    %c2_774 = arith.constant 2 : index
    %818 = vector.load %arg15[%c0_773, %c2_774] : memref<64x546xf32, #tpu.memory_space<vmem>>, vector<32x8xf32>
    %c2_775 = arith.constant 2 : index
    %c0_776 = arith.constant 0 : index
    %c0_777 = arith.constant 0 : index
    %819 = vector.load %arg12[%c2_775, %c0_776, %c0_777] : memref<9x1x8xf32, #tpu.memory_space<vmem>>, vector<1x1x8xf32>
    %820 = vector.shape_cast %819 : vector<1x1x8xf32> to vector<1x8xf32>
    %821 = vector.broadcast %820 : vector<1x8xf32> to vector<32x8xf32>
    %822 = arith.mulf %818, %821 : vector<32x8xf32>
    %c7_778 = arith.constant 7 : index
    %c2_779 = arith.constant 2 : index
    %c0_780 = arith.constant 0 : index
    %c0_781 = arith.constant 0 : index
    %823 = vector.load %arg2[%c7_778, %c2_779, %c0_780, %c0_781] : memref<10x9x64x64xf32, #tpu.memory_space<vmem>>, vector<1x1x32x32xf32>
    %824 = vector.shape_cast %823 : vector<1x1x32x32xf32> to vector<32x32xf32>
    %cst_782 = arith.constant dense<0.000000e+00> : vector<32x8xf32>
    %825 = tpu.matmul %824, %822, %cst_782 {dimension_numbers = #tpu.dot_dimension_numbers<[1], [0], [0], [1], [0, 0, 1, 1], [], []>} : vector<32x32xf32>, vector<32x8xf32>, vector<32x8xf32> -> vector<32x8xf32>
    %826 = arith.addf %817, %825 : vector<32x8xf32>
    %c0_783 = arith.constant 0 : index
    %c2_784 = arith.constant 2 : index
    %827 = vector.load %arg15[%c0_783, %c2_784] : memref<64x546xf32, #tpu.memory_space<vmem>>, vector<32x8xf32>
    %c3_785 = arith.constant 3 : index
    %c0_786 = arith.constant 0 : index
    %c0_787 = arith.constant 0 : index
    %828 = vector.load %arg12[%c3_785, %c0_786, %c0_787] : memref<9x1x8xf32, #tpu.memory_space<vmem>>, vector<1x1x8xf32>
    %829 = vector.shape_cast %828 : vector<1x1x8xf32> to vector<1x8xf32>
    %830 = vector.broadcast %829 : vector<1x8xf32> to vector<32x8xf32>
    %831 = arith.mulf %827, %830 : vector<32x8xf32>
    %c7_788 = arith.constant 7 : index
    %c3_789 = arith.constant 3 : index
    %c0_790 = arith.constant 0 : index
    %c0_791 = arith.constant 0 : index
    %832 = vector.load %arg2[%c7_788, %c3_789, %c0_790, %c0_791] : memref<10x9x64x64xf32, #tpu.memory_space<vmem>>, vector<1x1x32x32xf32>
    %833 = vector.shape_cast %832 : vector<1x1x32x32xf32> to vector<32x32xf32>
    %cst_792 = arith.constant dense<0.000000e+00> : vector<32x8xf32>
    %834 = tpu.matmul %833, %831, %cst_792 {dimension_numbers = #tpu.dot_dimension_numbers<[1], [0], [0], [1], [0, 0, 1, 1], [], []>} : vector<32x32xf32>, vector<32x8xf32>, vector<32x8xf32> -> vector<32x8xf32>
    %835 = arith.addf %826, %834 : vector<32x8xf32>
    %c0_793 = arith.constant 0 : index
    %c3_794 = arith.constant 3 : index
    %836 = vector.load %arg15[%c0_793, %c3_794] : memref<64x546xf32, #tpu.memory_space<vmem>>, vector<32x8xf32>
    %c7_795 = arith.constant 7 : index
    %c4_796 = arith.constant 4 : index
    %c0_797 = arith.constant 0 : index
    %c0_798 = arith.constant 0 : index
    %837 = vector.load %arg2[%c7_795, %c4_796, %c0_797, %c0_798] : memref<10x9x64x64xf32, #tpu.memory_space<vmem>>, vector<1x1x32x32xf32>
    %838 = vector.shape_cast %837 : vector<1x1x32x32xf32> to vector<32x32xf32>
    %cst_799 = arith.constant dense<0.000000e+00> : vector<32x8xf32>
    %839 = tpu.matmul %838, %836, %cst_799 {dimension_numbers = #tpu.dot_dimension_numbers<[1], [0], [0], [1], [0, 0, 1, 1], [], []>} : vector<32x32xf32>, vector<32x8xf32>, vector<32x8xf32> -> vector<32x8xf32>
    %840 = arith.addf %835, %839 : vector<32x8xf32>
    %c0_800 = arith.constant 0 : index
    %c4_801 = arith.constant 4 : index
    %841 = vector.load %arg15[%c0_800, %c4_801] : memref<64x546xf32, #tpu.memory_space<vmem>>, vector<32x8xf32>
    %c5_802 = arith.constant 5 : index
    %c0_803 = arith.constant 0 : index
    %c0_804 = arith.constant 0 : index
    %842 = vector.load %arg12[%c5_802, %c0_803, %c0_804] : memref<9x1x8xf32, #tpu.memory_space<vmem>>, vector<1x1x8xf32>
    %843 = vector.shape_cast %842 : vector<1x1x8xf32> to vector<1x8xf32>
    %844 = vector.broadcast %843 : vector<1x8xf32> to vector<32x8xf32>
    %845 = arith.mulf %841, %844 : vector<32x8xf32>
    %c7_805 = arith.constant 7 : index
    %c5_806 = arith.constant 5 : index
    %c0_807 = arith.constant 0 : index
    %c0_808 = arith.constant 0 : index
    %846 = vector.load %arg2[%c7_805, %c5_806, %c0_807, %c0_808] : memref<10x9x64x64xf32, #tpu.memory_space<vmem>>, vector<1x1x32x32xf32>
    %847 = vector.shape_cast %846 : vector<1x1x32x32xf32> to vector<32x32xf32>
    %cst_809 = arith.constant dense<0.000000e+00> : vector<32x8xf32>
    %848 = tpu.matmul %847, %845, %cst_809 {dimension_numbers = #tpu.dot_dimension_numbers<[1], [0], [0], [1], [0, 0, 1, 1], [], []>} : vector<32x32xf32>, vector<32x8xf32>, vector<32x8xf32> -> vector<32x8xf32>
    %849 = arith.addf %840, %848 : vector<32x8xf32>
    %c0_810 = arith.constant 0 : index
    %c4_811 = arith.constant 4 : index
    %850 = vector.load %arg15[%c0_810, %c4_811] : memref<64x546xf32, #tpu.memory_space<vmem>>, vector<32x8xf32>
    %c6_812 = arith.constant 6 : index
    %c0_813 = arith.constant 0 : index
    %c0_814 = arith.constant 0 : index
    %851 = vector.load %arg12[%c6_812, %c0_813, %c0_814] : memref<9x1x8xf32, #tpu.memory_space<vmem>>, vector<1x1x8xf32>
    %852 = vector.shape_cast %851 : vector<1x1x8xf32> to vector<1x8xf32>
    %853 = vector.broadcast %852 : vector<1x8xf32> to vector<32x8xf32>
    %854 = arith.mulf %850, %853 : vector<32x8xf32>
    %c7_815 = arith.constant 7 : index
    %c6_816 = arith.constant 6 : index
    %c0_817 = arith.constant 0 : index
    %c0_818 = arith.constant 0 : index
    %855 = vector.load %arg2[%c7_815, %c6_816, %c0_817, %c0_818] : memref<10x9x64x64xf32, #tpu.memory_space<vmem>>, vector<1x1x32x32xf32>
    %856 = vector.shape_cast %855 : vector<1x1x32x32xf32> to vector<32x32xf32>
    %cst_819 = arith.constant dense<0.000000e+00> : vector<32x8xf32>
    %857 = tpu.matmul %856, %854, %cst_819 {dimension_numbers = #tpu.dot_dimension_numbers<[1], [0], [0], [1], [0, 0, 1, 1], [], []>} : vector<32x32xf32>, vector<32x8xf32>, vector<32x8xf32> -> vector<32x8xf32>
    %858 = arith.addf %849, %857 : vector<32x8xf32>
    %c0_820 = arith.constant 0 : index
    %c5_821 = arith.constant 5 : index
    %859 = vector.load %arg15[%c0_820, %c5_821] : memref<64x546xf32, #tpu.memory_space<vmem>>, vector<32x8xf32>
    %c7_822 = arith.constant 7 : index
    %c0_823 = arith.constant 0 : index
    %c0_824 = arith.constant 0 : index
    %860 = vector.load %arg12[%c7_822, %c0_823, %c0_824] : memref<9x1x8xf32, #tpu.memory_space<vmem>>, vector<1x1x8xf32>
    %861 = vector.shape_cast %860 : vector<1x1x8xf32> to vector<1x8xf32>
    %862 = vector.broadcast %861 : vector<1x8xf32> to vector<32x8xf32>
    %863 = arith.mulf %859, %862 : vector<32x8xf32>
    %c7_825 = arith.constant 7 : index
    %c7_826 = arith.constant 7 : index
    %c0_827 = arith.constant 0 : index
    %c0_828 = arith.constant 0 : index
    %864 = vector.load %arg2[%c7_825, %c7_826, %c0_827, %c0_828] : memref<10x9x64x64xf32, #tpu.memory_space<vmem>>, vector<1x1x32x32xf32>
    %865 = vector.shape_cast %864 : vector<1x1x32x32xf32> to vector<32x32xf32>
    %cst_829 = arith.constant dense<0.000000e+00> : vector<32x8xf32>
    %866 = tpu.matmul %865, %863, %cst_829 {dimension_numbers = #tpu.dot_dimension_numbers<[1], [0], [0], [1], [0, 0, 1, 1], [], []>} : vector<32x32xf32>, vector<32x8xf32>, vector<32x8xf32> -> vector<32x8xf32>
    %867 = arith.addf %858, %866 : vector<32x8xf32>
    %c0_830 = arith.constant 0 : index
    %c6_831 = arith.constant 6 : index
    %868 = vector.load %arg15[%c0_830, %c6_831] : memref<64x546xf32, #tpu.memory_space<vmem>>, vector<32x8xf32>
    %c8_832 = arith.constant 8 : index
    %c0_833 = arith.constant 0 : index
    %c0_834 = arith.constant 0 : index
    %869 = vector.load %arg12[%c8_832, %c0_833, %c0_834] : memref<9x1x8xf32, #tpu.memory_space<vmem>>, vector<1x1x8xf32>
    %870 = vector.shape_cast %869 : vector<1x1x8xf32> to vector<1x8xf32>
    %871 = vector.broadcast %870 : vector<1x8xf32> to vector<32x8xf32>
    %872 = arith.mulf %868, %871 : vector<32x8xf32>
    %c7_835 = arith.constant 7 : index
    %c8_836 = arith.constant 8 : index
    %c0_837 = arith.constant 0 : index
    %c0_838 = arith.constant 0 : index
    %873 = vector.load %arg2[%c7_835, %c8_836, %c0_837, %c0_838] : memref<10x9x64x64xf32, #tpu.memory_space<vmem>>, vector<1x1x32x32xf32>
    %874 = vector.shape_cast %873 : vector<1x1x32x32xf32> to vector<32x32xf32>
    %cst_839 = arith.constant dense<0.000000e+00> : vector<32x8xf32>
    %875 = tpu.matmul %874, %872, %cst_839 {dimension_numbers = #tpu.dot_dimension_numbers<[1], [0], [0], [1], [0, 0, 1, 1], [], []>} : vector<32x32xf32>, vector<32x8xf32>, vector<32x8xf32> -> vector<32x8xf32>
    %876 = arith.addf %867, %875 : vector<32x8xf32>
    %cst_840 = arith.constant dense<0.000000e+00> : vector<32xf32>
    %877 = vector.multi_reduction <add>, %876, %cst_840 [1] : vector<32x8xf32> to vector<32xf32>
    %878 = vector.shape_cast %877 : vector<32xf32> to vector<32x1xf32>
    %cst_841 = arith.constant 8.000000e+00 : f32
    %879 = vector.broadcast %cst_841 : f32 to vector<32x1xf32>
    %880 = arith.divf %878, %879 : vector<32x1xf32>
    %881 = vector.broadcast %880 : vector<32x1xf32> to vector<32x8xf32>
    %882 = arith.subf %876, %881 : vector<32x8xf32>
    %883 = arith.mulf %882, %882 : vector<32x8xf32>
    %cst_842 = arith.constant dense<0.000000e+00> : vector<32xf32>
    %884 = vector.multi_reduction <add>, %883, %cst_842 [1] : vector<32x8xf32> to vector<32xf32>
    %885 = vector.shape_cast %884 : vector<32xf32> to vector<32x1xf32>
    %cst_843 = arith.constant 8.000000e+00 : f32
    %886 = vector.broadcast %cst_843 : f32 to vector<32x1xf32>
    %887 = arith.divf %885, %886 : vector<32x1xf32>
    %888 = vector.broadcast %880 : vector<32x1xf32> to vector<32x8xf32>
    %889 = arith.subf %876, %888 : vector<32x8xf32>
    %cst_844 = arith.constant 9.99999974E-6 : f32
    %890 = vector.broadcast %cst_844 : f32 to vector<32x1xf32>
    %891 = arith.addf %887, %890 : vector<32x1xf32>
    %892 = math.rsqrt %891 : vector<32x1xf32>
    %893 = vector.broadcast %892 : vector<32x1xf32> to vector<32x8xf32>
    %894 = arith.mulf %889, %893 : vector<32x8xf32>
    %c7_845 = arith.constant 7 : index
    %c0_846 = arith.constant 0 : index
    %c0_847 = arith.constant 0 : index
    %895 = vector.load %arg3[%c7_845, %c0_846, %c0_847] : memref<10x64x1xf32, #tpu.memory_space<vmem>>, vector<1x32x1xf32>
    %896 = vector.shape_cast %895 : vector<1x32x1xf32> to vector<32x1xf32>
    %897 = vector.broadcast %896 : vector<32x1xf32> to vector<32x8xf32>
    %898 = arith.mulf %894, %897 : vector<32x8xf32>
    %c7_848 = arith.constant 7 : index
    %c0_849 = arith.constant 0 : index
    %c0_850 = arith.constant 0 : index
    %899 = vector.load %arg4[%c7_848, %c0_849, %c0_850] : memref<10x64x1xf32, #tpu.memory_space<vmem>>, vector<1x32x1xf32>
    %900 = vector.shape_cast %899 : vector<1x32x1xf32> to vector<32x1xf32>
    %901 = vector.broadcast %900 : vector<32x1xf32> to vector<32x8xf32>
    %902 = arith.addf %898, %901 : vector<32x8xf32>
    %cst_851 = arith.constant 0.000000e+00 : f32
    %903 = vector.broadcast %cst_851 : f32 to vector<32x8xf32>
    %904 = arith.maximumf %902, %903 : vector<32x8xf32>
    %c0_852 = arith.constant 0 : index
    %c0_853 = arith.constant 0 : index
    %c0_854 = arith.constant 0 : index
    %905 = vector.load %arg8[%c0_852, %c0_853, %c0_854] : memref<4x8x2xf32, #tpu.memory_space<vmem>>, vector<1x8x2xf32>
    %906 = vector.shape_cast %905 : vector<1x8x2xf32> to vector<8x2xf32>
    %cst_855 = arith.constant dense<0.000000e+00> : vector<32x2xf32>
    %907 = tpu.matmul %904, %906, %cst_855 {dimension_numbers = #tpu.dot_dimension_numbers<[1], [0], [0], [1], [0, 0, 1, 1], [], []>} : vector<32x8xf32>, vector<8x2xf32>, vector<32x2xf32> -> vector<32x2xf32>
    %c1_856 = arith.constant 1 : index
    %c0_857 = arith.constant 0 : index
    %c0_858 = arith.constant 0 : index
    %908 = vector.load %arg8[%c1_856, %c0_857, %c0_858] : memref<4x8x2xf32, #tpu.memory_space<vmem>>, vector<1x8x2xf32>
    %909 = vector.shape_cast %908 : vector<1x8x2xf32> to vector<8x2xf32>
    %cst_859 = arith.constant dense<0.000000e+00> : vector<32x2xf32>
    %910 = tpu.matmul %904, %909, %cst_859 {dimension_numbers = #tpu.dot_dimension_numbers<[1], [0], [0], [1], [0, 0, 1, 1], [], []>} : vector<32x8xf32>, vector<8x2xf32>, vector<32x2xf32> -> vector<32x2xf32>
    %c2_860 = arith.constant 2 : index
    %c0_861 = arith.constant 0 : index
    %c0_862 = arith.constant 0 : index
    %911 = vector.load %arg8[%c2_860, %c0_861, %c0_862] : memref<4x8x2xf32, #tpu.memory_space<vmem>>, vector<1x8x2xf32>
    %912 = vector.shape_cast %911 : vector<1x8x2xf32> to vector<8x2xf32>
    %cst_863 = arith.constant dense<0.000000e+00> : vector<32x2xf32>
    %913 = tpu.matmul %904, %912, %cst_863 {dimension_numbers = #tpu.dot_dimension_numbers<[1], [0], [0], [1], [0, 0, 1, 1], [], []>} : vector<32x8xf32>, vector<8x2xf32>, vector<32x2xf32> -> vector<32x2xf32>
    %c3_864 = arith.constant 3 : index
    %c0_865 = arith.constant 0 : index
    %c0_866 = arith.constant 0 : index
    %914 = vector.load %arg8[%c3_864, %c0_865, %c0_866] : memref<4x8x2xf32, #tpu.memory_space<vmem>>, vector<1x8x2xf32>
    %915 = vector.shape_cast %914 : vector<1x8x2xf32> to vector<8x2xf32>
    %cst_867 = arith.constant dense<0.000000e+00> : vector<32x2xf32>
    %916 = tpu.matmul %904, %915, %cst_867 {dimension_numbers = #tpu.dot_dimension_numbers<[1], [0], [0], [1], [0, 0, 1, 1], [], []>} : vector<32x8xf32>, vector<8x2xf32>, vector<32x2xf32> -> vector<32x2xf32>
    %917 = arith.maximumf %907, %910 : vector<32x2xf32>
    %918 = arith.maximumf %913, %916 : vector<32x2xf32>
    %919 = arith.maximumf %917, %918 : vector<32x2xf32>
    %c0_868 = arith.constant 0 : index
    %c2_869 = arith.constant 2 : index
    %920 = vector.load %arg15[%c0_868, %c2_869] : memref<64x546xf32, #tpu.memory_space<vmem>>, vector<32x2xf32>
    tpu.vector_store %arg15[%c0_868, %c2_869], %919 {strides = array<i32>} : memref<64x546xf32, #tpu.memory_space<vmem>>, vector<32x2xf32>,
    %cst_870 = arith.constant 0.000000e+00 : f32
    %921 = vector.broadcast %cst_870 : f32 to vector<64x2xf32>
    %c0_871 = arith.constant 0 : index
    %c2_872 = arith.constant 2 : index
    %922 = vector.load %arg15[%c0_871, %c2_872] : memref<64x546xf32, #tpu.memory_space<vmem>>, vector<32x2xf32>
    %c8_873 = arith.constant 8 : index
    %c4_874 = arith.constant 4 : index
    %c0_875 = arith.constant 0 : index
    %c0_876 = arith.constant 0 : index
    %923 = vector.load %arg2[%c8_873, %c4_874, %c0_875, %c0_876] : memref<10x9x64x64xf32, #tpu.memory_space<vmem>>, vector<1x1x64x32xf32>
    %924 = vector.shape_cast %923 : vector<1x1x64x32xf32> to vector<64x32xf32>
    %cst_877 = arith.constant dense<0.000000e+00> : vector<64x2xf32>
    %925 = tpu.matmul %924, %922, %cst_877 {dimension_numbers = #tpu.dot_dimension_numbers<[1], [0], [0], [1], [0, 0, 1, 1], [], []>} : vector<64x32xf32>, vector<32x2xf32>, vector<64x2xf32> -> vector<64x2xf32>
    %926 = arith.addf %921, %925 : vector<64x2xf32>
    %cst_878 = arith.constant dense<0.000000e+00> : vector<64xf32>
    %927 = vector.multi_reduction <add>, %926, %cst_878 [1] : vector<64x2xf32> to vector<64xf32>
    %928 = vector.shape_cast %927 : vector<64xf32> to vector<64x1xf32>
    %cst_879 = arith.constant 2.000000e+00 : f32
    %929 = vector.broadcast %cst_879 : f32 to vector<64x1xf32>
    %930 = arith.divf %928, %929 : vector<64x1xf32>
    %931 = vector.broadcast %930 : vector<64x1xf32> to vector<64x2xf32>
    %932 = arith.subf %926, %931 : vector<64x2xf32>
    %933 = arith.mulf %932, %932 : vector<64x2xf32>
    %cst_880 = arith.constant dense<0.000000e+00> : vector<64xf32>
    %934 = vector.multi_reduction <add>, %933, %cst_880 [1] : vector<64x2xf32> to vector<64xf32>
    %935 = vector.shape_cast %934 : vector<64xf32> to vector<64x1xf32>
    %cst_881 = arith.constant 2.000000e+00 : f32
    %936 = vector.broadcast %cst_881 : f32 to vector<64x1xf32>
    %937 = arith.divf %935, %936 : vector<64x1xf32>
    %938 = vector.broadcast %930 : vector<64x1xf32> to vector<64x2xf32>
    %939 = arith.subf %926, %938 : vector<64x2xf32>
    %cst_882 = arith.constant 9.99999974E-6 : f32
    %940 = vector.broadcast %cst_882 : f32 to vector<64x1xf32>
    %941 = arith.addf %937, %940 : vector<64x1xf32>
    %942 = math.rsqrt %941 : vector<64x1xf32>
    %943 = vector.broadcast %942 : vector<64x1xf32> to vector<64x2xf32>
    %944 = arith.mulf %939, %943 : vector<64x2xf32>
    %c8_883 = arith.constant 8 : index
    %c0_884 = arith.constant 0 : index
    %c0_885 = arith.constant 0 : index
    %945 = vector.load %arg3[%c8_883, %c0_884, %c0_885] : memref<10x64x1xf32, #tpu.memory_space<vmem>>, vector<1x64x1xf32>
    %946 = vector.shape_cast %945 : vector<1x64x1xf32> to vector<64x1xf32>
    %947 = vector.broadcast %946 : vector<64x1xf32> to vector<64x2xf32>
    %948 = arith.mulf %944, %947 : vector<64x2xf32>
    %c8_886 = arith.constant 8 : index
    %c0_887 = arith.constant 0 : index
    %c0_888 = arith.constant 0 : index
    %949 = vector.load %arg4[%c8_886, %c0_887, %c0_888] : memref<10x64x1xf32, #tpu.memory_space<vmem>>, vector<1x64x1xf32>
    %950 = vector.shape_cast %949 : vector<1x64x1xf32> to vector<64x1xf32>
    %951 = vector.broadcast %950 : vector<64x1xf32> to vector<64x2xf32>
    %952 = arith.addf %948, %951 : vector<64x2xf32>
    %cst_889 = arith.constant 0.000000e+00 : f32
    %953 = vector.broadcast %cst_889 : f32 to vector<64x2xf32>
    %954 = arith.maximumf %952, %953 : vector<64x2xf32>
    %c0_890 = arith.constant 0 : index
    %c2_891 = arith.constant 2 : index
    %955 = vector.load %arg15[%c0_890, %c2_891] : memref<64x546xf32, #tpu.memory_space<vmem>>, vector<64x2xf32>
    tpu.vector_store %arg15[%c0_890, %c2_891], %954 {strides = array<i32>} : memref<64x546xf32, #tpu.memory_space<vmem>>, vector<64x2xf32>,
    %cst_892 = arith.constant 0.000000e+00 : f32
    %956 = vector.broadcast %cst_892 : f32 to vector<64x2xf32>
    %c0_893 = arith.constant 0 : index
    %c2_894 = arith.constant 2 : index
    %957 = vector.load %arg15[%c0_893, %c2_894] : memref<64x546xf32, #tpu.memory_space<vmem>>, vector<64x2xf32>
    %c9_895 = arith.constant 9 : index
    %c4_896 = arith.constant 4 : index
    %c0_897 = arith.constant 0 : index
    %c0_898 = arith.constant 0 : index
    %958 = vector.load %arg2[%c9_895, %c4_896, %c0_897, %c0_898] : memref<10x9x64x64xf32, #tpu.memory_space<vmem>>, vector<1x1x64x64xf32>
    %959 = vector.shape_cast %958 : vector<1x1x64x64xf32> to vector<64x64xf32>
    %cst_899 = arith.constant dense<0.000000e+00> : vector<64x2xf32>
    %960 = tpu.matmul %959, %957, %cst_899 {dimension_numbers = #tpu.dot_dimension_numbers<[1], [0], [0], [1], [0, 0, 1, 1], [], []>} : vector<64x64xf32>, vector<64x2xf32>, vector<64x2xf32> -> vector<64x2xf32>
    %961 = arith.addf %956, %960 : vector<64x2xf32>
    %cst_900 = arith.constant dense<0.000000e+00> : vector<64xf32>
    %962 = vector.multi_reduction <add>, %961, %cst_900 [1] : vector<64x2xf32> to vector<64xf32>
    %963 = vector.shape_cast %962 : vector<64xf32> to vector<64x1xf32>
    %cst_901 = arith.constant 2.000000e+00 : f32
    %964 = vector.broadcast %cst_901 : f32 to vector<64x1xf32>
    %965 = arith.divf %963, %964 : vector<64x1xf32>
    %966 = vector.broadcast %965 : vector<64x1xf32> to vector<64x2xf32>
    %967 = arith.subf %961, %966 : vector<64x2xf32>
    %968 = arith.mulf %967, %967 : vector<64x2xf32>
    %cst_902 = arith.constant dense<0.000000e+00> : vector<64xf32>
    %969 = vector.multi_reduction <add>, %968, %cst_902 [1] : vector<64x2xf32> to vector<64xf32>
    %970 = vector.shape_cast %969 : vector<64xf32> to vector<64x1xf32>
    %cst_903 = arith.constant 2.000000e+00 : f32
    %971 = vector.broadcast %cst_903 : f32 to vector<64x1xf32>
    %972 = arith.divf %970, %971 : vector<64x1xf32>
    %973 = vector.broadcast %965 : vector<64x1xf32> to vector<64x2xf32>
    %974 = arith.subf %961, %973 : vector<64x2xf32>
    %cst_904 = arith.constant 9.99999974E-6 : f32
    %975 = vector.broadcast %cst_904 : f32 to vector<64x1xf32>
    %976 = arith.addf %972, %975 : vector<64x1xf32>
    %977 = math.rsqrt %976 : vector<64x1xf32>
    %978 = vector.broadcast %977 : vector<64x1xf32> to vector<64x2xf32>
    %979 = arith.mulf %974, %978 : vector<64x2xf32>
    %c9_905 = arith.constant 9 : index
    %c0_906 = arith.constant 0 : index
    %c0_907 = arith.constant 0 : index
    %980 = vector.load %arg3[%c9_905, %c0_906, %c0_907] : memref<10x64x1xf32, #tpu.memory_space<vmem>>, vector<1x64x1xf32>
    %981 = vector.shape_cast %980 : vector<1x64x1xf32> to vector<64x1xf32>
    %982 = vector.broadcast %981 : vector<64x1xf32> to vector<64x2xf32>
    %983 = arith.mulf %979, %982 : vector<64x2xf32>
    %c9_908 = arith.constant 9 : index
    %c0_909 = arith.constant 0 : index
    %c0_910 = arith.constant 0 : index
    %984 = vector.load %arg4[%c9_908, %c0_909, %c0_910] : memref<10x64x1xf32, #tpu.memory_space<vmem>>, vector<1x64x1xf32>
    %985 = vector.shape_cast %984 : vector<1x64x1xf32> to vector<64x1xf32>
    %986 = vector.broadcast %985 : vector<64x1xf32> to vector<64x2xf32>
    %987 = arith.addf %983, %986 : vector<64x2xf32>
    %cst_911 = arith.constant 0.000000e+00 : f32
    %988 = vector.broadcast %cst_911 : f32 to vector<64x2xf32>
    %989 = arith.maximumf %987, %988 : vector<64x2xf32>
    %c0_912 = arith.constant 0 : index
    %c0_913 = arith.constant 0 : index
    %c0_914 = arith.constant 0 : index
    %990 = vector.load %arg14[%c0_912, %c0_913, %c0_914] : memref<1x64x2xf32, #tpu.memory_space<vmem>>, vector<1x64x2xf32>
    %991 = vector.shape_cast %990 : vector<1x64x2xf32> to vector<64x2xf32>
    %992 = vector.shape_cast %989 : vector<64x2xf32> to vector<1x64x2xf32>
    tpu.vector_store %arg14[%c0_912, %c0_913, %c0_914], %992 {strides = array<i32>} : memref<1x64x2xf32, #tpu.memory_space<vmem>>, vector<1x64x2xf32>,
    return
  }
  func.func @transform_0(%arg0: i32) -> (i32, i32, i32) {
    %c0_i32 = arith.constant 0 : i32
    %c0_i32_0 = arith.constant 0 : i32
    %c0_i32_1 = arith.constant 0 : i32
    return %arg0, %c0_i32, %c0_i32_0 : i32, i32, i32
  }
  func.func @transform_1(%arg0: i32) -> (i32, i32, i32, i32) {
    %c0_i32 = arith.constant 0 : i32
    %c0_i32_0 = arith.constant 0 : i32
    %c0_i32_1 = arith.constant 0 : i32
    %c0_i32_2 = arith.constant 0 : i32
    %c0_i32_3 = arith.constant 0 : i32
    return %c0_i32, %c0_i32_0, %c0_i32_1, %c0_i32_2 : i32, i32, i32, i32
  }
  func.func @transform_2(%arg0: i32) -> (i32, i32, i32) {
    %c0_i32 = arith.constant 0 : i32
    %c0_i32_0 = arith.constant 0 : i32
    %c0_i32_1 = arith.constant 0 : i32
    %c0_i32_2 = arith.constant 0 : i32
    return %c0_i32, %c0_i32_0, %c0_i32_1 : i32, i32, i32
  }
  func.func @transform_3(%arg0: i32) -> (i32, i32, i32) {
    %c0_i32 = arith.constant 0 : i32
    %c0_i32_0 = arith.constant 0 : i32
    %c0_i32_1 = arith.constant 0 : i32
    %c0_i32_2 = arith.constant 0 : i32
    return %c0_i32, %c0_i32_0, %c0_i32_1 : i32, i32, i32
  }
  func.func @transform_4(%arg0: i32) -> (i32, i32, i32) {
    %c0_i32 = arith.constant 0 : i32
    %c0_i32_0 = arith.constant 0 : i32
    %c0_i32_1 = arith.constant 0 : i32
    %c0_i32_2 = arith.constant 0 : i32
    return %c0_i32, %c0_i32_0, %c0_i32_1 : i32, i32, i32
  }
  func.func @transform_5(%arg0: i32) -> (i32, i32, i32) {
    %c0_i32 = arith.constant 0 : i32
    %c0_i32_0 = arith.constant 0 : i32
    %c0_i32_1 = arith.constant 0 : i32
    %c0_i32_2 = arith.constant 0 : i32
    return %c0_i32, %c0_i32_0, %c0_i32_1 : i32, i32, i32
  }
  func.func @transform_6(%arg0: i32) -> (i32, i32, i32) {
    %c0_i32 = arith.constant 0 : i32
    %c0_i32_0 = arith.constant 0 : i32
    %c0_i32_1 = arith.constant 0 : i32
    %c0_i32_2 = arith.constant 0 : i32
    return %c0_i32, %c0_i32_0, %c0_i32_1 : i32, i32, i32
  }
  func.func @transform_7(%arg0: i32) -> (i32, i32, i32) {
    %c0_i32 = arith.constant 0 : i32
    %c0_i32_0 = arith.constant 0 : i32
    %c0_i32_1 = arith.constant 0 : i32
    %c0_i32_2 = arith.constant 0 : i32
    return %c0_i32, %c0_i32_0, %c0_i32_1 : i32, i32, i32
  }
  func.func @transform_8(%arg0: i32) -> (i32, i32, i32) {
    %c0_i32 = arith.constant 0 : i32
    %c0_i32_0 = arith.constant 0 : i32
    %c0_i32_1 = arith.constant 0 : i32
    %c0_i32_2 = arith.constant 0 : i32
    return %c0_i32, %c0_i32_0, %c0_i32_1 : i32, i32, i32
  }
  func.func @transform_9(%arg0: i32) -> (i32, i32, i32) {
    %c0_i32 = arith.constant 0 : i32
    %c0_i32_0 = arith.constant 0 : i32
    %c0_i32_1 = arith.constant 0 : i32
    %c0_i32_2 = arith.constant 0 : i32
    return %c0_i32, %c0_i32_0, %c0_i32_1 : i32, i32, i32
  }
  func.func @transform_10(%arg0: i32) -> (i32, i32, i32) {
    %c0_i32 = arith.constant 0 : i32
    %c0_i32_0 = arith.constant 0 : i32
    %c0_i32_1 = arith.constant 0 : i32
    %c0_i32_2 = arith.constant 0 : i32
    return %c0_i32, %c0_i32_0, %c0_i32_1 : i32, i32, i32
  }
  func.func @transform_11(%arg0: i32) -> (i32, i32, i32) {
    %c0_i32 = arith.constant 0 : i32
    %c0_i32_0 = arith.constant 0 : i32
    %c0_i32_1 = arith.constant 0 : i32
    %c0_i32_2 = arith.constant 0 : i32
    return %c0_i32, %c0_i32_0, %c0_i32_1 : i32, i32, i32
  }
  func.func @transform_12(%arg0: i32) -> (i32, i32, i32) {
    %c0_i32 = arith.constant 0 : i32
    %c0_i32_0 = arith.constant 0 : i32
    %c0_i32_1 = arith.constant 0 : i32
    %c0_i32_2 = arith.constant 0 : i32
    return %c0_i32, %c0_i32_0, %c0_i32_1 : i32, i32, i32
  }
  func.func @transform_13(%arg0: i32) -> (i32, i32, i32) {
    %c0_i32 = arith.constant 0 : i32
    %c0_i32_0 = arith.constant 0 : i32
    %c0_i32_1 = arith.constant 0 : i32
    return %arg0, %c0_i32, %c0_i32_0 : i32, i32, i32
  }
}

</mosaic_0001>

<llo_original>
// kernel: contraction_forward.1
$region0: #{contraction_forward.1}
  #allocation0 [shape = 'u32[]', space=smem, size = 0x4, offset = 0x4, fixed_abs, tag = 'smem constant byte address 0x4 - core index']
  #allocation1 [shape = 'u32[72,128]{1,0:T(1,128)}', space=vmem, size = 0x9000, scoped, tag = 'internal scratch']
  #allocation2 [shape = 'f32[64,546]{1,0:T(8,128)}', space=vmem, size = 0x28000, scoped, tag = 'scratch operand']
  %s0 = inlined_call_operand.vmem [shape: f32[67,3,512], index: 0, kind: input, shape index: {}]
  %s1 = inlined_call_operand.vmem [shape: f32[10,9,64,64], index: 1, kind: input, shape index: {}]
  %s2 = inlined_call_operand.vmem [shape: f32[10,64,1], index: 2, kind: input, shape index: {}]
  %s3 = inlined_call_operand.vmem [shape: f32[10,64,1], index: 3, kind: input, shape index: {}]
  %s4 = inlined_call_operand.vmem [shape: f32[4,512,128], index: 4, kind: input, shape index: {}]
  %s5 = inlined_call_operand.vmem [shape: f32[4,128,32], index: 5, kind: input, shape index: {}]
  %s6 = inlined_call_operand.vmem [shape: f32[4,32,8], index: 6, kind: input, shape index: {}]
  %s7 = inlined_call_operand.vmem [shape: f32[4,8,2], index: 7, kind: input, shape index: {}]
  %s8 = inlined_call_operand.vmem [shape: f32[9,1,512], index: 8, kind: input, shape index: {}]
  %s9 = inlined_call_operand.vmem [shape: f32[9,1,128], index: 9, kind: input, shape index: {}]
  %s10 = inlined_call_operand.vmem [shape: f32[9,1,32], index: 10, kind: input, shape index: {}]
  %s11 = inlined_call_operand.vmem [shape: f32[9,1,8], index: 11, kind: input, shape index: {}]
  %s12 = inlined_call_operand.vmem [shape: f32[9,1,2], index: 12, kind: input, shape index: {}]
  %s13 = inlined_call_operand.vmem [shape: f32[67,64,2], index: 13, kind: output, shape index: {}]
  %s14 = sld [smem:[#allocation0]]
  $region85: #{contraction_forward.1} parent=0
    _
  %s16 = ssub.s32 1, %s14
  %s17 = scalar_select 0, %s16, %s14
  loop: start=0, step=1, limit=69
  $region2: #{contraction_forward.1} parent=0 // loop_pre_header
    _
  $region3: #{contraction_forward.1} parent=0 // loop_header
    %s19 = sphi 0, %s23
    %p20 = scmp.ge.s32.totalorder %s19, 69
    %s29 = sphi 0, %s31
    %s32 = sphi 0, %s29
    %s33 = sphi 0, %s32
    %s49 = sphi 0, %s33
    %s53 = sphi 0, %s53
    %s55 = sphi 0, %s53
    %s56 = sphi 0, %s55
    %s70 = sphi 0, %s56
    %s74 = sphi 0, %s74
    %s76 = sphi 0, %s74
    %s77 = sphi 0, %s76
    %s91 = sphi 0, %s77
    %s95 = sphi 0, %s95
    %s97 = sphi 0, %s95
    %s98 = sphi 0, %s97
    %s112 = sphi 0, %s98
    %s116 = sphi 0, %s116
    %s118 = sphi 0, %s116
    %s119 = sphi 0, %s118
    %s133 = sphi 0, %s119
    %s137 = sphi 0, %s137
    %s139 = sphi 0, %s137
    %s140 = sphi 0, %s139
    %s154 = sphi 0, %s140
    %s158 = sphi 0, %s158
    %s160 = sphi 0, %s158
    %s161 = sphi 0, %s160
    %s175 = sphi 0, %s161
    %s179 = sphi 0, %s179
    %s181 = sphi 0, %s179
    %s182 = sphi 0, %s181
    %s196 = sphi 0, %s182
    %s200 = sphi 0, %s200
    %s202 = sphi 0, %s200
    %s203 = sphi 0, %s202
    %s217 = sphi 0, %s203
    %s221 = sphi 0, %s221
    %s223 = sphi 0, %s221
    %s224 = sphi 0, %s223
    %s238 = sphi 0, %s224
    %s242 = sphi 0, %s242
    %s244 = sphi 0, %s242
    %s245 = sphi 0, %s244
    %s259 = sphi 0, %s245
    %s263 = sphi 0, %s263
    %s265 = sphi 0, %s263
    %s266 = sphi 0, %s265
    %s280 = sphi 0, %s266
    %s284 = sphi 0, %s284
    %s286 = sphi 0, %s284
    %s287 = sphi 0, %s286
    %s301 = sphi 0, %s287
    %s307 = sphi 0, %s309
    %s310 = sphi 0, %s307
    %s311 = sphi 0, %s310
    %s327 = sphi 0, %s311
  $region4: #{contraction_forward.1} parent=0 // loop_header_branch
    %22 = sbr.rel (%p20) target = $region8
  $region5: #{contraction_forward.1} parent=0 // loop_body
    %s24 = ssub.s32 %s19, 1
    %s25 = ssub.s32 %s19, 2
    %s26 = sadd.s32 %s19, 1
    %s27 = ssub.s32 %s19, %s26
    %p28 = scmp.eq.s32.totalorder %s27, 0
    %s30 = sadd.s32 %s29, 1
    %s31 = scalar_select %p28, %s29, %s30
    %p34 = pneg %p28
    %p35 = scmp.eq.s32.totalorder %s19, 66
    %p36 = por %p34, %p35
    %p37 = scmp.ne.s32.totalorder %s29, %s32
    %p38 = scmp.eq.s32.totalorder %s19, 0
    %p39 = por %p37, %p38
    %p40 = scmp.ne.s32.totalorder %s29, %s32
    %p41 = scmp.eq.s32.totalorder %s24, 66
    %p42 = por %p40, %p41
    %p43 = scmp.ne.s32.totalorder %s32, %s33
    %p44 = scmp.eq.s32.totalorder %s24, 0
    %p45 = por %p43, %p44
    %p46 = scmp.ne.s32.totalorder %s32, %s33
    %p47 = scmp.eq.s32.totalorder %s25, 66
    %p48 = por %p46, %p47
    %p50 = scmp.ne.s32.totalorder %s33, %s49
    %p51 = scmp.eq.s32.totalorder %s25, 0
    %p52 = por %p50, %p51
    %s54 = sadd.s32 %s53, 1
    %p57 = scmp.eq.s32.totalorder %s19, 66
    %p58 = scmp.ne.s32.totalorder %s53, %s55
    %p59 = scmp.eq.s32.totalorder %s19, 0
    %p60 = por %p58, %p59
    %p61 = scmp.ne.s32.totalorder %s53, %s55
    %p62 = scmp.eq.s32.totalorder %s24, 66
    %p63 = por %p61, %p62
    %p64 = scmp.ne.s32.totalorder %s55, %s56
    %p65 = scmp.eq.s32.totalorder %s24, 0
    %p66 = por %p64, %p65
    %p67 = scmp.ne.s32.totalorder %s55, %s56
    %p68 = scmp.eq.s32.totalorder %s25, 66
    %p69 = por %p67, %p68
    %p71 = scmp.ne.s32.totalorder %s56, %s70
    %p72 = scmp.eq.s32.totalorder %s25, 0
    %p73 = por %p71, %p72
    %s75 = sadd.s32 %s74, 1
    %p78 = scmp.eq.s32.totalorder %s19, 66
    %p79 = scmp.ne.s32.totalorder %s74, %s76
    %p80 = scmp.eq.s32.totalorder %s19, 0
    %p81 = por %p79, %p80
    %p82 = scmp.ne.s32.totalorder %s74, %s76
    %p83 = scmp.eq.s32.totalorder %s24, 66
    %p84 = por %p82, %p83
    %p85 = scmp.ne.s32.totalorder %s76, %s77
    %p86 = scmp.eq.s32.totalorder %s24, 0
    %p87 = por %p85, %p86
    %p88 = scmp.ne.s32.totalorder %s76, %s77
    %p89 = scmp.eq.s32.totalorder %s25, 66
    %p90 = por %p88, %p89
    %p92 = scmp.ne.s32.totalorder %s77, %s91
    %p93 = scmp.eq.s32.totalorder %s25, 0
    %p94 = por %p92, %p93
    %s96 = sadd.s32 %s95, 1
    %p99 = scmp.eq.s32.totalorder %s19, 66
    %p100 = scmp.ne.s32.totalorder %s95, %s97
    %p101 = scmp.eq.s32.totalorder %s19, 0
    %p102 = por %p100, %p101
    %p103 = scmp.ne.s32.totalorder %s95, %s97
    %p104 = scmp.eq.s32.totalorder %s24, 66
    %p105 = por %p103, %p104
    %p106 = scmp.ne.s32.totalorder %s97, %s98
    %p107 = scmp.eq.s32.totalorder %s24, 0
    %p108 = por %p106, %p107
    %p109 = scmp.ne.s32.totalorder %s97, %s98
    %p110 = scmp.eq.s32.totalorder %s25, 66
    %p111 = por %p109, %p110
    %p113 = scmp.ne.s32.totalorder %s98, %s112
    %p114 = scmp.eq.s32.totalorder %s25, 0
    %p115 = por %p113, %p114
    %s117 = sadd.s32 %s116, 1
    %p120 = scmp.eq.s32.totalorder %s19, 66
    %p121 = scmp.ne.s32.totalorder %s116, %s118
    %p122 = scmp.eq.s32.totalorder %s19, 0
    %p123 = por %p121, %p122
    %p124 = scmp.ne.s32.totalorder %s116, %s118
    %p125 = scmp.eq.s32.totalorder %s24, 66
    %p126 = por %p124, %p125
    %p127 = scmp.ne.s32.totalorder %s118, %s119
    %p128 = scmp.eq.s32.totalorder %s24, 0
    %p129 = por %p127, %p128
    %p130 = scmp.ne.s32.totalorder %s118, %s119
    %p131 = scmp.eq.s32.totalorder %s25, 66
    %p132 = por %p130, %p131
    %p134 = scmp.ne.s32.totalorder %s119, %s133
    %p135 = scmp.eq.s32.totalorder %s25, 0
    %p136 = por %p134, %p135
    %s138 = sadd.s32 %s137, 1
    %p141 = scmp.eq.s32.totalorder %s19, 66
    %p142 = scmp.ne.s32.totalorder %s137, %s139
    %p143 = scmp.eq.s32.totalorder %s19, 0
    %p144 = por %p142, %p143
    %p145 = scmp.ne.s32.totalorder %s137, %s139
    %p146 = scmp.eq.s32.totalorder %s24, 66
    %p147 = por %p145, %p146
    %p148 = scmp.ne.s32.totalorder %s139, %s140
    %p149 = scmp.eq.s32.totalorder %s24, 0
    %p150 = por %p148, %p149
    %p151 = scmp.ne.s32.totalorder %s139, %s140
    %p152 = scmp.eq.s32.totalorder %s25, 66
    %p153 = por %p151, %p152
    %p155 = scmp.ne.s32.totalorder %s140, %s154
    %p156 = scmp.eq.s32.totalorder %s25, 0
    %p157 = por %p155, %p156
    %s159 = sadd.s32 %s158, 1
    %p162 = scmp.eq.s32.totalorder %s19, 66
    %p163 = scmp.ne.s32.totalorder %s158, %s160
    %p164 = scmp.eq.s32.totalorder %s19, 0
    %p165 = por %p163, %p164
    %p166 = scmp.ne.s32.totalorder %s158, %s160
    %p167 = scmp.eq.s32.totalorder %s24, 66
    %p168 = por %p166, %p167
    %p169 = scmp.ne.s32.totalorder %s160, %s161
    %p170 = scmp.eq.s32.totalorder %s24, 0
    %p171 = por %p169, %p170
    %p172 = scmp.ne.s32.totalorder %s160, %s161
    %p173 = scmp.eq.s32.totalorder %s25, 66
    %p174 = por %p172, %p173
    %p176 = scmp.ne.s32.totalorder %s161, %s175
    %p177 = scmp.eq.s32.totalorder %s25, 0
    %p178 = por %p176, %p177
    %s180 = sadd.s32 %s179, 1
    %p183 = scmp.eq.s32.totalorder %s19, 66
    %p184 = scmp.ne.s32.totalorder %s179, %s181
    %p185 = scmp.eq.s32.totalorder %s19, 0
    %p186 = por %p184, %p185
    %p187 = scmp.ne.s32.totalorder %s179, %s181
    %p188 = scmp.eq.s32.totalorder %s24, 66
    %p189 = por %p187, %p188
    %p190 = scmp.ne.s32.totalorder %s181, %s182
    %p191 = scmp.eq.s32.totalorder %s24, 0
    %p192 = por %p190, %p191
    %p193 = scmp.ne.s32.totalorder %s181, %s182
    %p194 = scmp.eq.s32.totalorder %s25, 66
    %p195 = por %p193, %p194
    %p197 = scmp.ne.s32.totalorder %s182, %s196
    %p198 = scmp.eq.s32.totalorder %s25, 0
    %p199 = por %p197, %p198
    %s201 = sadd.s32 %s200, 1
    %p204 = scmp.eq.s32.totalorder %s19, 66
    %p205 = scmp.ne.s32.totalorder %s200, %s202
    %p206 = scmp.eq.s32.totalorder %s19, 0
    %p207 = por %p205, %p206
    %p208 = scmp.ne.s32.totalorder %s200, %s202
    %p209 = scmp.eq.s32.totalorder %s24, 66
    %p210 = por %p208, %p209
    %p211 = scmp.ne.s32.totalorder %s202, %s203
    %p212 = scmp.eq.s32.totalorder %s24, 0
    %p213 = por %p211, %p212
    %p214 = scmp.ne.s32.totalorder %s202, %s203
    %p215 = scmp.eq.s32.totalorder %s25, 66
    %p216 = por %p214, %p215
    %p218 = scmp.ne.s32.totalorder %s203, %s217
    %p219 = scmp.eq.s32.totalorder %s25, 0
    %p220 = por %p218, %p219
    %s222 = sadd.s32 %s221, 1
    %p225 = scmp.eq.s32.totalorder %s19, 66
    %p226 = scmp.ne.s32.totalorder %s221, %s223
    %p227 = scmp.eq.s32.totalorder %s19, 0
    %p228 = por %p226, %p227
    %p229 = scmp.ne.s32.totalorder %s221, %s223
    %p230 = scmp.eq.s32.totalorder %s24, 66
    %p231 = por %p229, %p230
    %p232 = scmp.ne.s32.totalorder %s223, %s224
    %p233 = scmp.eq.s32.totalorder %s24, 0
    %p234 = por %p232, %p233
    %p235 = scmp.ne.s32.totalorder %s223, %s224
    %p236 = scmp.eq.s32.totalorder %s25, 66
    %p237 = por %p235, %p236
    %p239 = scmp.ne.s32.totalorder %s224, %s238
    %p240 = scmp.eq.s32.totalorder %s25, 0
    %p241 = por %p239, %p240
    %s243 = sadd.s32 %s242, 1
    %p246 = scmp.eq.s32.totalorder %s19, 66
    %p247 = scmp.ne.s32.totalorder %s242, %s244
    %p248 = scmp.eq.s32.totalorder %s19, 0
    %p249 = por %p247, %p248
    %p250 = scmp.ne.s32.totalorder %s242, %s244
    %p251 = scmp.eq.s32.totalorder %s24, 66
    %p252 = por %p250, %p251
    %p253 = scmp.ne.s32.totalorder %s244, %s245
    %p254 = scmp.eq.s32.totalorder %s24, 0
    %p255 = por %p253, %p254
    %p256 = scmp.ne.s32.totalorder %s244, %s245
    %p257 = scmp.eq.s32.totalorder %s25, 66
    %p258 = por %p256, %p257
    %p260 = scmp.ne.s32.totalorder %s245, %s259
    %p261 = scmp.eq.s32.totalorder %s25, 0
    %p262 = por %p260, %p261
    %s264 = sadd.s32 %s263, 1
    %p267 = scmp.eq.s32.totalorder %s19, 66
    %p268 = scmp.ne.s32.totalorder %s263, %s265
    %p269 = scmp.eq.s32.totalorder %s19, 0
    %p270 = por %p268, %p269
    %p271 = scmp.ne.s32.totalorder %s263, %s265
    %p272 = scmp.eq.s32.totalorder %s24, 66
    %p273 = por %p271, %p272
    %p274 = scmp.ne.s32.totalorder %s265, %s266
    %p275 = scmp.eq.s32.totalorder %s24, 0
    %p276 = por %p274, %p275
    %p277 = scmp.ne.s32.totalorder %s265, %s266
    %p278 = scmp.eq.s32.totalorder %s25, 66
    %p279 = por %p277, %p278
    %p281 = scmp.ne.s32.totalorder %s266, %s280
    %p282 = scmp.eq.s32.totalorder %s25, 0
    %p283 = por %p281, %p282
    %s285 = sadd.s32 %s284, 1
    %p288 = scmp.eq.s32.totalorder %s19, 66
    %p289 = scmp.ne.s32.totalorder %s284, %s286
    %p290 = scmp.eq.s32.totalorder %s19, 0
    %p291 = por %p289, %p290
    %p292 = scmp.ne.s32.totalorder %s284, %s286
    %p293 = scmp.eq.s32.totalorder %s24, 66
    %p294 = por %p292, %p293
    %p295 = scmp.ne.s32.totalorder %s286, %s287
    %p296 = scmp.eq.s32.totalorder %s24, 0
    %p297 = por %p295, %p296
    %p298 = scmp.ne.s32.totalorder %s286, %s287
    %p299 = scmp.eq.s32.totalorder %s25, 66
    %p300 = por %p298, %p299
    %p302 = scmp.ne.s32.totalorder %s287, %s301
    %p303 = scmp.eq.s32.totalorder %s25, 0
    %p304 = por %p302, %p303
    %s305 = ssub.s32 %s19, %s26
    %p306 = scmp.eq.s32.totalorder %s305, 0
    %s308 = sadd.s32 %s307, 1
    %s309 = scalar_select %p306, %s307, %s308
    %p312 = pneg %p306
    %p313 = scmp.eq.s32.totalorder %s19, 66
    %p314 = por %p312, %p313
    %p315 = scmp.ne.s32.totalorder %s307, %s310
    %p316 = scmp.eq.s32.totalorder %s19, 0
    %p317 = por %p315, %p316
    %p318 = scmp.ne.s32.totalorder %s307, %s310
    %p319 = scmp.eq.s32.totalorder %s24, 66
    %p320 = por %p318, %p319
    %p321 = scmp.ne.s32.totalorder %s310, %s311
    %p322 = scmp.eq.s32.totalorder %s24, 0
    %p323 = por %p321, %p322
    %p324 = scmp.ne.s32.totalorder %s310, %s311
    %p325 = scmp.eq.s32.totalorder %s25, 66
    %p326 = por %p324, %p325
    %p328 = scmp.ne.s32.totalorder %s311, %s327
    %p329 = scmp.eq.s32.totalorder %s25, 0
    %p330 = por %p328, %p329
    %p331 = scmp.le.s32.totalorder 1, %s19
    %p332 = scmp.lt.s32.totalorder %s19, 68
    %p333 = pnand %p331, %p332
    %p334 = pneg %p333
    // Predicated region
    $region9: #{contraction_forward.1} parent=5 // pred_check
      _
    $region10: #{contraction_forward.1} parent=5 // pred_check_branch
      %336 = sbr.rel (%p333) target = $region12
    $region11: #{contraction_forward.1} parent=5 // pred_region
      %s337 = ssub.s32 %s19, 1
      // Predicated region
      $region13: #{contraction_forward.1} parent=11 // pred_check
        %p338 = pneg %p66
      $region14: #{contraction_forward.1} parent=11 // pred_check_branch
        %340 = sbr.rel (%p338) target = $region16
      $region15: #{contraction_forward.1} parent=11 // pred_region
        _
      $region16: #{contraction_forward.1} parent=11 // pred_fallthru
        _
      // Predicated region
      $region17: #{contraction_forward.1} parent=11 // pred_check
        %p341 = pneg %p87
      $region18: #{contraction_forward.1} parent=11 // pred_check_branch
        %343 = sbr.rel (%p341) target = $region20
      $region19: #{contraction_forward.1} parent=11 // pred_region
        _
      $region20: #{contraction_forward.1} parent=11 // pred_fallthru
        _
      // Predicated region
      $region21: #{contraction_forward.1} parent=11 // pred_check
        %p344 = pneg %p108
      $region22: #{contraction_forward.1} parent=11 // pred_check_branch
        %346 = sbr.rel (%p344) target = $region24
      $region23: #{contraction_forward.1} parent=11 // pred_region
        _
      $region24: #{contraction_forward.1} parent=11 // pred_fallthru
        _
      // Predicated region
      $region25: #{contraction_forward.1} parent=11 // pred_check
        %p347 = pneg %p129
      $region26: #{contraction_forward.1} parent=11 // pred_check_branch
        %349 = sbr.rel (%p347) target = $region28
      $region27: #{contraction_forward.1} parent=11 // pred_region
        _
      $region28: #{contraction_forward.1} parent=11 // pred_fallthru
        _
      // Predicated region
      $region29: #{contraction_forward.1} parent=11 // pred_check
        %p350 = pneg %p150
      $region30: #{contraction_forward.1} parent=11 // pred_check_branch
        %352 = sbr.rel (%p350) target = $region32
      $region31: #{contraction_forward.1} parent=11 // pred_region
        _
      $region32: #{contraction_forward.1} parent=11 // pred_fallthru
        _
      // Predicated region
      $region33: #{contraction_forward.1} parent=11 // pred_check
        %p353 = pneg %p171
      $region34: #{contraction_forward.1} parent=11 // pred_check_branch
        %355 = sbr.rel (%p353) target = $region36
      $region35: #{contraction_forward.1} parent=11 // pred_region
        _
      $region36: #{contraction_forward.1} parent=11 // pred_fallthru
        _
      // Predicated region
      $region37: #{contraction_forward.1} parent=11 // pred_check
        %p356 = pneg %p192
      $region38: #{contraction_forward.1} parent=11 // pred_check_branch
        %358 = sbr.rel (%p356) target = $region40
      $region39: #{contraction_forward.1} parent=11 // pred_region
        _
      $region40: #{contraction_forward.1} parent=11 // pred_fallthru
        _
      // Predicated region
      $region41: #{contraction_forward.1} parent=11 // pred_check
        %p359 = pneg %p213
      $region42: #{contraction_forward.1} parent=11 // pred_check_branch
        %361 = sbr.rel (%p359) target = $region44
      $region43: #{contraction_forward.1} parent=11 // pred_region
        _
      $region44: #{contraction_forward.1} parent=11 // pred_fallthru
        _
      // Predicated region
      $region45: #{contraction_forward.1} parent=11 // pred_check
        %p362 = pneg %p234
      $region46: #{contraction_forward.1} parent=11 // pred_check_branch
        %364 = sbr.rel (%p362) target = $region48
      $region47: #{contraction_forward.1} parent=11 // pred_region
        _
      $region48: #{contraction_forward.1} parent=11 // pred_fallthru
        _
      // Predicated region
      $region49: #{contraction_forward.1} parent=11 // pred_check
        %p365 = pneg %p255
      $region50: #{contraction_forward.1} parent=11 // pred_check_branch
        %367 = sbr.rel (%p365) target = $region52
      $region51: #{contraction_forward.1} parent=11 // pred_region
        _
      $region52: #{contraction_forward.1} parent=11 // pred_fallthru
        _
      // Predicated region
      $region53: #{contraction_forward.1} parent=11 // pred_check
        %p368 = pneg %p276
      $region54: #{contraction_forward.1} parent=11 // pred_check_branch
        %370 = sbr.rel (%p368) target = $region56
      $region55: #{contraction_forward.1} parent=11 // pred_region
        _
      $region56: #{contraction_forward.1} parent=11 // pred_fallthru
        _
      // Predicated region
      $region57: #{contraction_forward.1} parent=11 // pred_check
        %p371 = pneg %p297
      $region58: #{contraction_forward.1} parent=11 // pred_check_branch
        %373 = sbr.rel (%p371) target = $region60
      $region59: #{contraction_forward.1} parent=11 // pred_region
        _
      $region60: #{contraction_forward.1} parent=11 // pred_fallthru
        _
    $region12: #{contraction_forward.1} parent=5 // pred_fallthru
      _
    %p374 = scmp.lt.s32.totalorder %s19, 67
    // Predicated region
    $region61: #{contraction_forward.1} parent=5 // pred_check
      %p375 = pneg %p374
    $region62: #{contraction_forward.1} parent=5 // pred_check_branch
      %377 = sbr.rel (%p375) target = $region64
    $region63: #{contraction_forward.1} parent=5 // pred_region
      // Predicated region
      $region65: #{contraction_forward.1} parent=63 // pred_check
        %p378 = pneg %p39
      $region66: #{contraction_forward.1} parent=63 // pred_check_branch
        %380 = sbr.rel (%p378) target = $region68
      $region67: #{contraction_forward.1} parent=63 // pred_region
        %p381 = scmp.lt.s32.totalorder %s19, 66
        %s382 = scalar_select %p381, %s19, 66
        %s383 = smul.addr %s382, 4
        %s384 = smul.addr %s383, 4
        %s385 = scalar_lea.vmem %s0, %s384
      $region68: #{contraction_forward.1} parent=63 // pred_fallthru
        _
    $region64: #{contraction_forward.1} parent=5 // pred_fallthru
      _
    %p386 = scmp.le.s32.totalorder 1, %s19
    %p387 = scmp.lt.s32.totalorder %s19, 68
    %p388 = pnand %p386, %p387
    %p389 = pneg %p388
    // Predicated region
    $region69: #{contraction_forward.1} parent=5 // pred_check
      _
    $region70: #{contraction_forward.1} parent=5 // pred_check_branch
      %391 = sbr.rel (%p388) target = $region72
    $region71: #{contraction_forward.1} parent=5 // pred_region
      %s392 = ssub.s32 %s19, 1
      %p393 = scmp.lt.s32.totalorder %s24, 66
      %s394 = scalar_select %p393, %s24, 66
      %s395 = smul.addr %s394, 4
      %s396 = smul.addr %s395, 4
      %s397 = scalar_lea.vmem %s0, %s396
      %p398 = pneg %p45
      %p399 = pneg %p42
      %p400 = pneg %p66
      %p401 = pneg %p63
      %p402 = pneg %p87
      %p403 = pneg %p84
      %p404 = pneg %p108
      %p405 = pneg %p105
      %p406 = pneg %p129
      %p407 = pneg %p126
      %p408 = pneg %p150
      %p409 = pneg %p147
      %p410 = pneg %p171
      %p411 = pneg %p168
      %p412 = pneg %p192
      %p413 = pneg %p189
      %p414 = pneg %p213
      %p415 = pneg %p210
      %p416 = pneg %p234
      %p417 = pneg %p231
      %p418 = pneg %p255
      %p419 = pneg %p252
      %p420 = pneg %p276
      %p421 = pneg %p273
      %p422 = pneg %p297
      %p423 = pneg %p294
      %p424 = pneg %p323
      %p425 = pneg %p320
      %p426 = scmp.lt.s32.totalorder %s24, 66
      %s427 = scalar_select %p426, %s24, 66
      %s428 = smul.addr %s427, 8
      %s429 = smul.addr %s428, 8
      %s430 = scalar_lea.vmem %s13, %s429
      %p431 = scmp.lt.s32.totalorder %s24, 66
      %s432 = scalar_select %p431, %s24, 66
      %s433 = smul.addr %s432, 4
      %s434 = smul.addr %s433, 4
      %s435 = scalar_lea.vmem %s0, %s434
      %p436 = scmp.lt.s32.totalorder %s24, 66
      %s437 = scalar_select %p436, %s24, 66
      %s438 = smul.addr %s437, 8
      %s439 = smul.addr %s438, 8
      %s440 = scalar_lea.vmem %s13, %s439
      %441 = vst [vmem:[#allocation2] sm:$0xff] 0.0
      %442 = vst [vmem:[#allocation2 + $0x8] sm:$0xff] 0.0
      %443 = vst [vmem:[#allocation2 + $0x10] sm:$0xff] 0.0
      %444 = vst [vmem:[#allocation2 + $0x18] sm:$0xff] 0.0
      %vm445 = vcmask 277504
      %446 = vst.msk [vmem:[#allocation2 + $0x20] sm:$0xff] %vm445, 0.0
      %447 = vst [vmem:[#allocation2 + $0x28] sm:$0xff] 0.0
      %448 = vst [vmem:[#allocation2 + $0x30] sm:$0xff] 0.0
      %449 = vst [vmem:[#allocation2 + $0x38] sm:$0xff] 0.0
      %450 = vst [vmem:[#allocation2 + $0x40] sm:$0xff] 0.0
      %451 = vst.msk [vmem:[#allocation2 + $0x48] sm:$0xff] %vm445, 0.0
      %452 = vst [vmem:[#allocation2 + $0x50] sm:$0xff] 0.0
      %453 = vst [vmem:[#allocation2 + $0x58] sm:$0xff] 0.0
      %454 = vst [vmem:[#allocation2 + $0x60] sm:$0xff] 0.0
      %455 = vst [vmem:[#allocation2 + $0x68] sm:$0xff] 0.0
      %456 = vst.msk [vmem:[#allocation2 + $0x70] sm:$0xff] %vm445, 0.0
      %457 = vst [vmem:[#allocation2 + $0x78] sm:$0xff] 0.0
      %458 = vst [vmem:[#allocation2 + $0x80] sm:$0xff] 0.0
      %459 = vst [vmem:[#allocation2 + $0x88] sm:$0xff] 0.0
      %460 = vst [vmem:[#allocation2 + $0x90] sm:$0xff] 0.0
      %461 = vst.msk [vmem:[#allocation2 + $0x98] sm:$0xff] %vm445, 0.0
      %462 = vst [vmem:[#allocation2 + $0xa0] sm:$0xff] 0.0
      %463 = vst [vmem:[#allocation2 + $0xa8] sm:$0xff] 0.0
      %464 = vst [vmem:[#allocation2 + $0xb0] sm:$0xff] 0.0
      %465 = vst [vmem:[#allocation2 + $0xb8] sm:$0xff] 0.0
      %466 = vst.msk [vmem:[#allocation2 + $0xc0] sm:$0xff] %vm445, 0.0
      %467 = vst [vmem:[#allocation2 + $0xc8] sm:$0xff] 0.0
      %468 = vst [vmem:[#allocation2 + $0xd0] sm:$0xff] 0.0
      %469 = vst [vmem:[#allocation2 + $0xd8] sm:$0xff] 0.0
      %470 = vst [vmem:[#allocation2 + $0xe0] sm:$0xff] 0.0
      %471 = vst.msk [vmem:[#allocation2 + $0xe8] sm:$0xff] %vm445, 0.0
      %472 = vst [vmem:[#allocation2 + $0xf0] sm:$0xff] 0.0
      %473 = vst [vmem:[#allocation2 + $0xf8] sm:$0xff] 0.0
      %474 = vst [vmem:[#allocation2 + $0x100] sm:$0xff] 0.0
      %475 = vst [vmem:[#allocation2 + $0x108] sm:$0xff] 0.0
      %476 = vst.msk [vmem:[#allocation2 + $0x110] sm:$0xff] %vm445, 0.0
      %477 = vst [vmem:[#allocation2 + $0x118] sm:$0xff] 0.0
      %478 = vst [vmem:[#allocation2 + $0x120] sm:$0xff] 0.0
      %479 = vst [vmem:[#allocation2 + $0x128] sm:$0xff] 0.0
      %480 = vst [vmem:[#allocation2 + $0x130] sm:$0xff] 0.0
      %481 = vst.msk [vmem:[#allocation2 + $0x138] sm:$0xff] %vm445, 0.0
      %v482 = vld [vmem:[%s435] sm:$0x77]
      %v483 = vld [vmem:[%s435 + $0x8] sm:$0x77]
      %486 = vst [vmem:[#allocation1] ss:$2 sm:$0xff] %v482
      %s487 = scalar_lea.vmem [#allocation1], 16
      %488 = vst [vmem:[%s487] ss:$2 sm:$0xff] %v483
      %v489 = vld.sshfl [vmem:[#allocation1] sm:$0xff pattern:$0x75316420]
      %v490 = vld.sshfl [vmem:[#allocation1 + $0x8] sm:$0xff pattern:$0x75316420]
      %v491 = vld.sshfl [vmem:[#allocation1 + $0x10] sm:$0xff pattern:$0x75316420]
      %v492 = vld.sshfl [vmem:[#allocation1 + $0x18] sm:$0xff pattern:$0x75316420]
      %493 = vrot.lane.b32.xlu0 %v489, 17
      %v494 = vpop.permute.xlu0 %493
      %495 = vrot.lane.b32.xlu0 %v490, 17
      %v496 = vpop.permute.xlu0 %495
      %497 = vrot.lane.b32.xlu0 %v491, 17
      %v498 = vpop.permute.xlu0 %497
      %499 = vrot.lane.b32.xlu0 %v492, 17
      %v500 = vpop.permute.xlu0 %499
      %vm501 = vcmask 138240
      %v502 = vsel %vm501, %v494, %v496
      %v503 = vsel %vm501, %v496, %v498
      %v504 = vsel %vm501, %v498, %v500
      %vm510 = vcmask 1042568
      %511 = vst.msk [vmem:[#allocation2] sm:$0x7] %vm510, %v494
      %512 = vst [vmem:[#allocation2 + $0x8] sm:$0x7] %v502
      %513 = vst [vmem:[#allocation2 + $0x10] sm:$0x7] %v503
      %514 = vst [vmem:[#allocation2 + $0x18] sm:$0x7] %v504
      %vm515 = vcmask 133120
      %516 = vst.msk [vmem:[#allocation2 + $0x20] sm:$0x7] %vm515, %v500
      %v517 = vld [vmem:[#allocation2] sm:$0x7]
      %v518 = vld [vmem:[#allocation2 + $0x8] sm:$0x7]
      %v519 = vld [vmem:[#allocation2 + $0x10] sm:$0x7]
      %v520 = vld [vmem:[#allocation2 + $0x18] sm:$0x7]
      %v521 = vld [vmem:[%s8] sm:$0xf]
      %v523 = vperm.slane %v521, 0
      %v524 = vperm.slane %v521, 1
      %v525 = vperm.slane %v521, 2
      %v526 = vperm.slane %v521, 3
      %v531 = vmul.f32 %v517, %v523
      %v532 = vmul.f32 %v518, %v524
      %v533 = vmul.f32 %v519, %v525
      %v534 = vmul.f32 %v520, %v526
      %v535 = vld [vmem:[%s1] sm:$0xf]
      %v536 = vld [vmem:[#allocation2 + $0x20] sm:$0x7]
      %s537 = scalar_lea.vmem %s8, 4
      %v538 = vld [vmem:[%s537] sm:$0xf]
      %v540 = vperm.slane %v538, 0
      %v541 = vperm.slane %v538, 1
      %v542 = vperm.slane %v538, 2
      %v543 = vperm.slane %v538, 3
      %544 = vrot.lane.b32.xlu0 %v540, 1
      %v545 = vpop.permute.xlu0 %544
      %546 = vrot.lane.b32.xlu0 %v541, 1
      %v547 = vpop.permute.xlu0 %546
      %548 = vrot.lane.b32.xlu0 %v542, 1
      %v549 = vpop.permute.xlu0 %548
      %550 = vrot.lane.b32.xlu0 %v543, 1
      %v551 = vpop.permute.xlu0 %550
      %vm552 = vcmask 7168
      %v553 = vsel %vm552, %v545, %v547
      %v554 = vsel %vm552, %v547, %v549
      %v555 = vsel %vm552, %v549, %v551
      %v561 = vmul.f32 %v517, %v545
      %v562 = vmul.f32 %v518, %v553
      %v563 = vmul.f32 %v519, %v554
      %v564 = vmul.f32 %v520, %v555
      %v565 = vmul.f32 %v536, %v551
      %s566 = scalar_lea.vmem %s1, 64
      %v567 = vld [vmem:[%s566] sm:$0xf]
      %573 = vrot.lane.b32.xlu0 %v561, 127
      %v574 = vpop.permute.xlu0 %573
      %575 = vrot.lane.b32.xlu0 %v562, 127
      %v576 = vpop.permute.xlu0 %575
      %577 = vrot.lane.b32.xlu0 %v563, 127
      %v578 = vpop.permute.xlu0 %577
      %579 = vrot.lane.b32.xlu0 %v564, 127
      %v580 = vpop.permute.xlu0 %579
      %581 = vrot.lane.b32.xlu0 %v565, 127
      %v582 = vpop.permute.xlu0 %581
      %vm583 = vcmask 1039360
      %v584 = vsel %vm583, %v574, %v576
      %v585 = vsel %vm583, %v576, %v578
      %v586 = vsel %vm583, %v578, %v580
      %v587 = vsel %vm583, %v580, %v582
      %vm588 = vcmask 23552
      %v590 = vsel %vm588, %v567, 0
      %vm592 = vcmask 1042432
      %v593 = vsel %vm592, %v584, 0
      %v595 = vsel %vm592, %v585, 0
      %v597 = vsel %vm592, %v586, 0
      %v599 = vsel %vm592, %v587, 0
      %601 = vmatpush.msra.mxu0 0.0
      %602 = vmatpush.msra.mxu0 0.0
      %603 = vmatpush.msra.mxu0 0.0
      %604 = vmatpush.msra.mxu0 0.0
      %605 = vmatpush.msra.mxu0 0.0
      %606 = vmatpush.msra.mxu0 0.0
      %607 = vmatpush.msra.mxu0 0.0
      %608 = vmatpush.msra.mxu0 0.0
      %609 = vmatpush.msra.mxu0 0.0
      %610 = vmatpush.msra.mxu0 0.0
      %611 = vmatpush.msra.mxu0 0.0
      %612 = vmatpush.msra.mxu0 0.0
      %613 = vmatpush.msra.mxu0 0.0
      %614 = vmatpush.msra.mxu0 0.0
      %615 = vmatpush.msra.mxu0 0.0
      %616 = vmatpush.msra.mxu0 %v593
      %617 = vmatmul.f32.gmra.mxu0 %v590
      %v618 = vpop.f32.mrf.mxu0
      %v619 = vadd.f32 0.0, %v618
      %620 = vdwg.mxu0
      %621 = vmatpush.msra.mxu0 0.0
      %622 = vmatpush.msra.mxu0 0.0
      %623 = vmatpush.msra.mxu0 0.0
      %624 = vmatpush.msra.mxu0 0.0
      %625 = vmatpush.msra.mxu0 0.0
      %626 = vmatpush.msra.mxu0 0.0
      %627 = vmatpush.msra.mxu0 0.0
      %628 = vmatpush.msra.mxu0 0.0
      %629 = vmatpush.msra.mxu0 0.0
      %630 = vmatpush.msra.mxu0 0.0
      %631 = vmatpush.msra.mxu0 0.0
      %632 = vmatpush.msra.mxu0 0.0
      %633 = vmatpush.msra.mxu0 0.0
      %634 = vmatpush.msra.mxu0 0.0
      %635 = vmatpush.msra.mxu0 0.0
      %636 = vmatpush.msra.mxu0 %v595
      %637 = vmatmul.f32.gmra.mxu0 %v590
      %v638 = vpop.f32.mrf.mxu0
      %v639 = vadd.f32 0.0, %v638
      %640 = vdwg.mxu0
      %641 = vmatpush.msra.mxu0 0.0
      %642 = vmatpush.msra.mxu0 0.0
      %643 = vmatpush.msra.mxu0 0.0
      %644 = vmatpush.msra.mxu0 0.0
      %645 = vmatpush.msra.mxu0 0.0
      %646 = vmatpush.msra.mxu0 0.0
      %647 = vmatpush.msra.mxu0 0.0
      %648 = vmatpush.msra.mxu0 0.0
      %649 = vmatpush.msra.mxu0 0.0
      %650 = vmatpush.msra.mxu0 0.0
      %651 = vmatpush.msra.mxu0 0.0
      %652 = vmatpush.msra.mxu0 0.0
      %653 = vmatpush.msra.mxu0 0.0
      %654 = vmatpush.msra.mxu0 0.0
      %655 = vmatpush.msra.mxu0 0.0
      %656 = vmatpush.msra.mxu0 %v597
      %657 = vmatmul.f32.gmra.mxu0 %v590
      %v658 = vpop.f32.mrf.mxu0
      %v659 = vadd.f32 0.0, %v658
      %660 = vdwg.mxu0
      %661 = vmatpush.msra.mxu0 0.0
      %662 = vmatpush.msra.mxu0 0.0
      %663 = vmatpush.msra.mxu0 0.0
      %664 = vmatpush.msra.mxu0 0.0
      %665 = vmatpush.msra.mxu0 0.0
      %666 = vmatpush.msra.mxu0 0.0
      %667 = vmatpush.msra.mxu0 0.0
      %668 = vmatpush.msra.mxu0 0.0
      %669 = vmatpush.msra.mxu0 0.0
      %670 = vmatpush.msra.mxu0 0.0
      %671 = vmatpush.msra.mxu0 0.0
      %672 = vmatpush.msra.mxu0 0.0
      %673 = vmatpush.msra.mxu0 0.0
      %674 = vmatpush.msra.mxu0 0.0
      %675 = vmatpush.msra.mxu0 0.0
      %676 = vmatpush.msra.mxu0 %v599
      %677 = vmatmul.f32.gmra.mxu0 %v590
      %v678 = vpop.f32.mrf.mxu0
      %v679 = vadd.f32 0.0, %v678
      %680 = vdwg.mxu0
      %v682 = vsel %vm588, %v535, 0
      %v685 = vsel %vm592, %v531, 0
      %v688 = vsel %vm592, %v532, 0
      %v691 = vsel %vm592, %v533, 0
      %v694 = vsel %vm592, %v534, 0
      %696 = vmatpush.msra.mxu0 0.0
      %697 = vmatpush.msra.mxu0 0.0
      %698 = vmatpush.msra.mxu0 0.0
      %699 = vmatpush.msra.mxu0 0.0
      %700 = vmatpush.msra.mxu0 0.0
      %701 = vmatpush.msra.mxu0 0.0
      %702 = vmatpush.msra.mxu0 0.0
      %703 = vmatpush.msra.mxu0 0.0
      %704 = vmatpush.msra.mxu0 0.0
      %705 = vmatpush.msra.mxu0 0.0
      %706 = vmatpush.msra.mxu0 0.0
      %707 = vmatpush.msra.mxu0 0.0
      %708 = vmatpush.msra.mxu0 0.0
      %709 = vmatpush.msra.mxu0 0.0
      %710 = vmatpush.msra.mxu0 0.0
      %711 = vmatpush.msra.mxu0 %v685
      %712 = vmatmul.f32.gmra.mxu0 %v682
      %v713 = vpop.f32.mrf.mxu0
      %v714 = vadd.f32 %v619, %v713
      %715 = vdwg.mxu0
      %716 = vmatpush.msra.mxu0 0.0
      %717 = vmatpush.msra.mxu0 0.0
      %718 = vmatpush.msra.mxu0 0.0
      %719 = vmatpush.msra.mxu0 0.0
      %720 = vmatpush.msra.mxu0 0.0
      %721 = vmatpush.msra.mxu0 0.0
      %722 = vmatpush.msra.mxu0 0.0
      %723 = vmatpush.msra.mxu0 0.0
      %724 = vmatpush.msra.mxu0 0.0
      %725 = vmatpush.msra.mxu0 0.0
      %726 = vmatpush.msra.mxu0 0.0
      %727 = vmatpush.msra.mxu0 0.0
      %728 = vmatpush.msra.mxu0 0.0
      %729 = vmatpush.msra.mxu0 0.0
      %730 = vmatpush.msra.mxu0 0.0
      %731 = vmatpush.msra.mxu0 %v688
      %732 = vmatmul.f32.gmra.mxu0 %v682
      %v733 = vpop.f32.mrf.mxu0
      %v734 = vadd.f32 %v639, %v733
      %735 = vdwg.mxu0
      %736 = vmatpush.msra.mxu0 0.0
      %737 = vmatpush.msra.mxu0 0.0
      %738 = vmatpush.msra.mxu0 0.0
      %739 = vmatpush.msra.mxu0 0.0
      %740 = vmatpush.msra.mxu0 0.0
      %741 = vmatpush.msra.mxu0 0.0
      %742 = vmatpush.msra.mxu0 0.0
      %743 = vmatpush.msra.mxu0 0.0
      %744 = vmatpush.msra.mxu0 0.0
      %745 = vmatpush.msra.mxu0 0.0
      %746 = vmatpush.msra.mxu0 0.0
      %747 = vmatpush.msra.mxu0 0.0
      %748 = vmatpush.msra.mxu0 0.0
      %749 = vmatpush.msra.mxu0 0.0
      %750 = vmatpush.msra.mxu0 0.0
      %751 = vmatpush.msra.mxu0 %v691
      %752 = vmatmul.f32.gmra.mxu0 %v682
      %v753 = vpop.f32.mrf.mxu0
      %v754 = vadd.f32 %v659, %v753
      %755 = vdwg.mxu0
      %756 = vmatpush.msra.mxu0 0.0
      %757 = vmatpush.msra.mxu0 0.0
      %758 = vmatpush.msra.mxu0 0.0
      %759 = vmatpush.msra.mxu0 0.0
      %760 = vmatpush.msra.mxu0 0.0
      %761 = vmatpush.msra.mxu0 0.0
      %762 = vmatpush.msra.mxu0 0.0
      %763 = vmatpush.msra.mxu0 0.0
      %764 = vmatpush.msra.mxu0 0.0
      %765 = vmatpush.msra.mxu0 0.0
      %766 = vmatpush.msra.mxu0 0.0
      %767 = vmatpush.msra.mxu0 0.0
      %768 = vmatpush.msra.mxu0 0.0
      %769 = vmatpush.msra.mxu0 0.0
      %770 = vmatpush.msra.mxu0 0.0
      %771 = vmatpush.msra.mxu0 %v694
      %772 = vmatmul.f32.gmra.mxu0 %v682
      %v773 = vpop.f32.mrf.mxu0
      %v774 = vadd.f32 %v679, %v773
      %775 = vdwg.mxu0
      %s776 = scalar_lea.vmem %s8, 8
      %v777 = vld [vmem:[%s776] sm:$0xf]
      %v779 = vperm.slane %v777, 0
      %v780 = vperm.slane %v777, 1
      %v781 = vperm.slane %v777, 2
      %v782 = vperm.slane %v777, 3
      %783 = vrot.lane.b32.xlu0 %v779, 2
      %v784 = vpop.permute.xlu0 %783
      %785 = vrot.lane.b32.xlu0 %v780, 2
      %v786 = vpop.permute.xlu0 %785
      %787 = vrot.lane.b32.xlu0 %v781, 2
      %v788 = vpop.permute.xlu0 %787
      %789 = vrot.lane.b32.xlu0 %v782, 2
      %v790 = vpop.permute.xlu0 %789
      %vm791 = vcmask 15360
      %v792 = vsel %vm791, %v784, %v786
      %v793 = vsel %vm791, %v786, %v788
      %v794 = vsel %vm791, %v788, %v790
      %v800 = vmul.f32 %v517, %v784
      %v801 = vmul.f32 %v518, %v792
      %v802 = vmul.f32 %v519, %v793
      %v803 = vmul.f32 %v520, %v794
      %v804 = vmul.f32 %v536, %v790
      %s805 = scalar_lea.vmem %s1, 128
      %v806 = vld [vmem:[%s805] sm:$0xf]
      %812 = vrot.lane.b32.xlu0 %v800, 126
      %v813 = vpop.permute.xlu0 %812
      %814 = vrot.lane.b32.xlu0 %v801, 126
      %v815 = vpop.permute.xlu0 %814
      %816 = vrot.lane.b32.xlu0 %v802, 126
      %v817 = vpop.permute.xlu0 %816
      %818 = vrot.lane.b32.xlu0 %v803, 126
      %v819 = vpop.permute.xlu0 %818
      %820 = vrot.lane.b32.xlu0 %v804, 126
      %v821 = vpop.permute.xlu0 %820
      %vm822 = vcmask 1031168
      %v823 = vsel %vm822, %v813, %v815
      %v824 = vsel %vm822, %v815, %v817
      %v825 = vsel %vm822, %v817, %v819
      %v826 = vsel %vm822, %v819, %v821
      %v828 = vsel %vm588, %v806, 0
      %v830 = vsel %vm592, %v823, 0
      %v832 = vsel %vm592, %v824, 0
      %v834 = vsel %vm592, %v825, 0
      %v836 = vsel %vm592, %v826, 0
      %838 = vmatpush.msra.mxu0 0.0
      %839 = vmatpush.msra.mxu0 0.0
      %840 = vmatpush.msra.mxu0 0.0
      %841 = vmatpush.msra.mxu0 0.0
      %842 = vmatpush.msra.mxu0 0.0
      %843 = vmatpush.msra.mxu0 0.0
      %844 = vmatpush.msra.mxu0 0.0
      %845 = vmatpush.msra.mxu0 0.0
      %846 = vmatpush.msra.mxu0 0.0
      %847 = vmatpush.msra.mxu0 0.0
      %848 = vmatpush.msra.mxu0 0.0
      %849 = vmatpush.msra.mxu0 0.0
      %850 = vmatpush.msra.mxu0 0.0
      %851 = vmatpush.msra.mxu0 0.0
      %852 = vmatpush.msra.mxu0 0.0
      %853 = vmatpush.msra.mxu0 %v830
      %854 = vmatmul.f32.gmra.mxu0 %v828
      %v855 = vpop.f32.mrf.mxu0
      %v856 = vadd.f32 0.0, %v855
      %857 = vdwg.mxu0
      %858 = vmatpush.msra.mxu0 0.0
      %859 = vmatpush.msra.mxu0 0.0
      %860 = vmatpush.msra.mxu0 0.0
      %861 = vmatpush.msra.mxu0 0.0
      %862 = vmatpush.msra.mxu0 0.0
      %863 = vmatpush.msra.mxu0 0.0
      %864 = vmatpush.msra.mxu0 0.0
      %865 = vmatpush.msra.mxu0 0.0
      %866 = vmatpush.msra.mxu0 0.0
      %867 = vmatpush.msra.mxu0 0.0
      %868 = vmatpush.msra.mxu0 0.0
      %869 = vmatpush.msra.mxu0 0.0
      %870 = vmatpush.msra.mxu0 0.0
      %871 = vmatpush.msra.mxu0 0.0
      %872 = vmatpush.msra.mxu0 0.0
      %873 = vmatpush.msra.mxu0 %v832
      %874 = vmatmul.f32.gmra.mxu0 %v828
      %v875 = vpop.f32.mrf.mxu0
      %v876 = vadd.f32 0.0, %v875
      %877 = vdwg.mxu0
      %878 = vmatpush.msra.mxu0 0.0
      %879 = vmatpush.msra.mxu0 0.0
      %880 = vmatpush.msra.mxu0 0.0
      %881 = vmatpush.msra.mxu0 0.0
      %882 = vmatpush.msra.mxu0 0.0
      %883 = vmatpush.msra.mxu0 0.0
      %884 = vmatpush.msra.mxu0 0.0
      %885 = vmatpush.msra.mxu0 0.0
      %886 = vmatpush.msra.mxu0 0.0
      %887 = vmatpush.msra.mxu0 0.0
      %888 = vmatpush.msra.mxu0 0.0
      %889 = vmatpush.msra.mxu0 0.0
      %890 = vmatpush.msra.mxu0 0.0
      %891 = vmatpush.msra.mxu0 0.0
      %892 = vmatpush.msra.mxu0 0.0
      %893 = vmatpush.msra.mxu0 %v834
      %894 = vmatmul.f32.gmra.mxu0 %v828
      %v895 = vpop.f32.mrf.mxu0
      %v896 = vadd.f32 0.0, %v895
      %897 = vdwg.mxu0
      %898 = vmatpush.msra.mxu0 0.0
      %899 = vmatpush.msra.mxu0 0.0
      %900 = vmatpush.msra.mxu0 0.0
      %901 = vmatpush.msra.mxu0 0.0
      %902 = vmatpush.msra.mxu0 0.0
      %903 = vmatpush.msra.mxu0 0.0
      %904 = vmatpush.msra.mxu0 0.0
      %905 = vmatpush.msra.mxu0 0.0
      %906 = vmatpush.msra.mxu0 0.0
      %907 = vmatpush.msra.mxu0 0.0
      %908 = vmatpush.msra.mxu0 0.0
      %909 = vmatpush.msra.mxu0 0.0
      %910 = vmatpush.msra.mxu0 0.0
      %911 = vmatpush.msra.mxu0 0.0
      %912 = vmatpush.msra.mxu0 0.0
      %913 = vmatpush.msra.mxu0 %v836
      %914 = vmatmul.f32.gmra.mxu0 %v828
      %v915 = vpop.f32.mrf.mxu0
      %v916 = vadd.f32 0.0, %v915
      %917 = vdwg.mxu0
      %v918 = vadd.f32 %v714, %v856
      %v919 = vadd.f32 %v734, %v876
      %v920 = vadd.f32 %v754, %v896
      %v921 = vadd.f32 %v774, %v916
      %s922 = scalar_lea.vmem %s8, 12
      %v923 = vld [vmem:[%s922] sm:$0xf]
      %v925 = vperm.slane %v923, 0
      %v926 = vperm.slane %v923, 1
      %v927 = vperm.slane %v923, 2
      %v928 = vperm.slane %v923, 3
      %929 = vrot.lane.b32.xlu0 %v925, 16
      %v930 = vpop.permute.xlu0 %929
      %931 = vrot.lane.b32.xlu0 %v926, 16
      %v932 = vpop.permute.xlu0 %931
      %933 = vrot.lane.b32.xlu0 %v927, 16
      %v934 = vpop.permute.xlu0 %933
      %935 = vrot.lane.b32.xlu0 %v928, 16
      %v936 = vpop.permute.xlu0 %935
      %vm937 = vcmask 130048
      %v938 = vsel %vm937, %v930, %v932
      %v939 = vsel %vm937, %v932, %v934
      %v940 = vsel %vm937, %v934, %v936
      %v946 = vmul.f32 %v517, %v930
      %v947 = vmul.f32 %v518, %v938
      %v948 = vmul.f32 %v519, %v939
      %v949 = vmul.f32 %v520, %v940
      %v950 = vmul.f32 %v536, %v936
      %s951 = scalar_lea.vmem %s1, 192
      %v952 = vld [vmem:[%s951] sm:$0xf]
      %958 = vrot.lane.b32.xlu0 %v946, 112
      %v959 = vpop.permute.xlu0 %958
      %960 = vrot.lane.b32.xlu0 %v947, 112
      %v961 = vpop.permute.xlu0 %960
      %962 = vrot.lane.b32.xlu0 %v948, 112
      %v963 = vpop.permute.xlu0 %962
      %964 = vrot.lane.b32.xlu0 %v949, 112
      %v965 = vpop.permute.xlu0 %964
      %966 = vrot.lane.b32.xlu0 %v950, 112
      %v967 = vpop.permute.xlu0 %966
      %vm968 = vcmask 916480
      %v969 = vsel %vm968, %v959, %v961
      %v970 = vsel %vm968, %v961, %v963
      %v971 = vsel %vm968, %v963, %v965
      %v972 = vsel %vm968, %v965, %v967
      %v974 = vsel %vm588, %v952, 0
      %v976 = vsel %vm592, %v969, 0
      %v978 = vsel %vm592, %v970, 0
      %v980 = vsel %vm592, %v971, 0
      %v982 = vsel %vm592, %v972, 0
      %984 = vmatpush.msra.mxu0 0.0
      %985 = vmatpush.msra.mxu0 0.0
      %986 = vmatpush.msra.mxu0 0.0
      %987 = vmatpush.msra.mxu0 0.0
      %988 = vmatpush.msra.mxu0 0.0
      %989 = vmatpush.msra.mxu0 0.0
      %990 = vmatpush.msra.mxu0 0.0
      %991 = vmatpush.msra.mxu0 0.0
      %992 = vmatpush.msra.mxu0 0.0
      %993 = vmatpush.msra.mxu0 0.0
      %994 = vmatpush.msra.mxu0 0.0
      %995 = vmatpush.msra.mxu0 0.0
      %996 = vmatpush.msra.mxu0 0.0
      %997 = vmatpush.msra.mxu0 0.0
      %998 = vmatpush.msra.mxu0 0.0
      %999 = vmatpush.msra.mxu0 %v976
      %1000 = vmatmul.f32.gmra.mxu0 %v974
      %v1001 = vpop.f32.mrf.mxu0
      %v1002 = vadd.f32 0.0, %v1001
      %1003 = vdwg.mxu0
      %1004 = vmatpush.msra.mxu0 0.0
      %1005 = vmatpush.msra.mxu0 0.0
      %1006 = vmatpush.msra.mxu0 0.0
      %1007 = vmatpush.msra.mxu0 0.0
      %1008 = vmatpush.msra.mxu0 0.0
      %1009 = vmatpush.msra.mxu0 0.0
      %1010 = vmatpush.msra.mxu0 0.0
      %1011 = vmatpush.msra.mxu0 0.0
      %1012 = vmatpush.msra.mxu0 0.0
      %1013 = vmatpush.msra.mxu0 0.0
      %1014 = vmatpush.msra.mxu0 0.0
      %1015 = vmatpush.msra.mxu0 0.0
      %1016 = vmatpush.msra.mxu0 0.0
      %1017 = vmatpush.msra.mxu0 0.0
      %1018 = vmatpush.msra.mxu0 0.0
      %1019 = vmatpush.msra.mxu0 %v978
      %1020 = vmatmul.f32.gmra.mxu0 %v974
      %v1021 = vpop.f32.mrf.mxu0
      %v1022 = vadd.f32 0.0, %v1021
      %1023 = vdwg.mxu0
      %1024 = vmatpush.msra.mxu0 0.0
      %1025 = vmatpush.msra.mxu0 0.0
      %1026 = vmatpush.msra.mxu0 0.0
      %1027 = vmatpush.msra.mxu0 0.0
      %1028 = vmatpush.msra.mxu0 0.0
      %1029 = vmatpush.msra.mxu0 0.0
      %1030 = vmatpush.msra.mxu0 0.0
      %1031 = vmatpush.msra.mxu0 0.0
      %1032 = vmatpush.msra.mxu0 0.0
      %1033 = vmatpush.msra.mxu0 0.0
      %1034 = vmatpush.msra.mxu0 0.0
      %1035 = vmatpush.msra.mxu0 0.0
      %1036 = vmatpush.msra.mxu0 0.0
      %1037 = vmatpush.msra.mxu0 0.0
      %1038 = vmatpush.msra.mxu0 0.0
      %1039 = vmatpush.msra.mxu0 %v980
      %1040 = vmatmul.f32.gmra.mxu0 %v974
      %v1041 = vpop.f32.mrf.mxu0
      %v1042 = vadd.f32 0.0, %v1041
      %1043 = vdwg.mxu0
      %1044 = vmatpush.msra.mxu0 0.0
      %1045 = vmatpush.msra.mxu0 0.0
      %1046 = vmatpush.msra.mxu0 0.0
      %1047 = vmatpush.msra.mxu0 0.0
      %1048 = vmatpush.msra.mxu0 0.0
      %1049 = vmatpush.msra.mxu0 0.0
      %1050 = vmatpush.msra.mxu0 0.0
      %1051 = vmatpush.msra.mxu0 0.0
      %1052 = vmatpush.msra.mxu0 0.0
      %1053 = vmatpush.msra.mxu0 0.0
      %1054 = vmatpush.msra.mxu0 0.0
      %1055 = vmatpush.msra.mxu0 0.0
      %1056 = vmatpush.msra.mxu0 0.0
      %1057 = vmatpush.msra.mxu0 0.0
      %1058 = vmatpush.msra.mxu0 0.0
      %1059 = vmatpush.msra.mxu0 %v982
      %1060 = vmatmul.f32.gmra.mxu0 %v974
      %v1061 = vpop.f32.mrf.mxu0
      %v1062 = vadd.f32 0.0, %v1061
      %1063 = vdwg.mxu0
      %v1064 = vadd.f32 %v918, %v1002
      %v1065 = vadd.f32 %v919, %v1022
      %v1066 = vadd.f32 %v920, %v1042
      %v1067 = vadd.f32 %v921, %v1062
      %s1068 = scalar_lea.vmem %s1, 256
      %v1069 = vld [vmem:[%s1068] sm:$0xf]
      %1075 = vrot.lane.b32.xlu0 %v517, 111
      %v1076 = vpop.permute.xlu0 %1075
      %1077 = vrot.lane.b32.xlu0 %v518, 111
      %v1078 = vpop.permute.xlu0 %1077
      %1079 = vrot.lane.b32.xlu0 %v519, 111
      %v1080 = vpop.permute.xlu0 %1079
      %1081 = vrot.lane.b32.xlu0 %v520, 111
      %v1082 = vpop.permute.xlu0 %1081
      %1083 = vrot.lane.b32.xlu0 %v536, 111
      %v1084 = vpop.permute.xlu0 %1083
      %vm1085 = vcmask 908288
      %v1086 = vsel %vm1085, %v1076, %v1078
      %v1087 = vsel %vm1085, %v1078, %v1080
      %v1088 = vsel %vm1085, %v1080, %v1082
      %v1089 = vsel %vm1085, %v1082, %v1084
      %v1091 = vsel %vm588, %v1069, 0
      %v1093 = vsel %vm592, %v1086, 0
      %v1095 = vsel %vm592, %v1087, 0
      %v1097 = vsel %vm592, %v1088, 0
      %v1099 = vsel %vm592, %v1089, 0
      %1101 = vmatpush.msra.mxu0 0.0
      %1102 = vmatpush.msra.mxu0 0.0
      %1103 = vmatpush.msra.mxu0 0.0
      %1104 = vmatpush.msra.mxu0 0.0
      %1105 = vmatpush.msra.mxu0 0.0
      %1106 = vmatpush.msra.mxu0 0.0
      %1107 = vmatpush.msra.mxu0 0.0
      %1108 = vmatpush.msra.mxu0 0.0
      %1109 = vmatpush.msra.mxu0 0.0
      %1110 = vmatpush.msra.mxu0 0.0
      %1111 = vmatpush.msra.mxu0 0.0
      %1112 = vmatpush.msra.mxu0 0.0
      %1113 = vmatpush.msra.mxu0 0.0
      %1114 = vmatpush.msra.mxu0 0.0
      %1115 = vmatpush.msra.mxu0 0.0
      %1116 = vmatpush.msra.mxu0 %v1093
      %1117 = vmatmul.f32.gmra.mxu0 %v1091
      %v1118 = vpop.f32.mrf.mxu0
      %v1119 = vadd.f32 0.0, %v1118
      %1120 = vdwg.mxu0
      %1121 = vmatpush.msra.mxu0 0.0
      %1122 = vmatpush.msra.mxu0 0.0
      %1123 = vmatpush.msra.mxu0 0.0
      %1124 = vmatpush.msra.mxu0 0.0
      %1125 = vmatpush.msra.mxu0 0.0
      %1126 = vmatpush.msra.mxu0 0.0
      %1127 = vmatpush.msra.mxu0 0.0
      %1128 = vmatpush.msra.mxu0 0.0
      %1129 = vmatpush.msra.mxu0 0.0
      %1130 = vmatpush.msra.mxu0 0.0
      %1131 = vmatpush.msra.mxu0 0.0
      %1132 = vmatpush.msra.mxu0 0.0
      %1133 = vmatpush.msra.mxu0 0.0
      %1134 = vmatpush.msra.mxu0 0.0
      %1135 = vmatpush.msra.mxu0 0.0
      %1136 = vmatpush.msra.mxu0 %v1095
      %1137 = vmatmul.f32.gmra.mxu0 %v1091
      %v1138 = vpop.f32.mrf.mxu0
      %v1139 = vadd.f32 0.0, %v1138
      %1140 = vdwg.mxu0
      %1141 = vmatpush.msra.mxu0 0.0
      %1142 = vmatpush.msra.mxu0 0.0
      %1143 = vmatpush.msra.mxu0 0.0
      %1144 = vmatpush.msra.mxu0 0.0
      %1145 = vmatpush.msra.mxu0 0.0
      %1146 = vmatpush.msra.mxu0 0.0
      %1147 = vmatpush.msra.mxu0 0.0
      %1148 = vmatpush.msra.mxu0 0.0
      %1149 = vmatpush.msra.mxu0 0.0
      %1150 = vmatpush.msra.mxu0 0.0
      %1151 = vmatpush.msra.mxu0 0.0
      %1152 = vmatpush.msra.mxu0 0.0
      %1153 = vmatpush.msra.mxu0 0.0
      %1154 = vmatpush.msra.mxu0 0.0
      %1155 = vmatpush.msra.mxu0 0.0
      %1156 = vmatpush.msra.mxu0 %v1097
      %1157 = vmatmul.f32.gmra.mxu0 %v1091
      %v1158 = vpop.f32.mrf.mxu0
      %v1159 = vadd.f32 0.0, %v1158
      %1160 = vdwg.mxu0
      %1161 = vmatpush.msra.mxu0 0.0
      %1162 = vmatpush.msra.mxu0 0.0
      %1163 = vmatpush.msra.mxu0 0.0
      %1164 = vmatpush.msra.mxu0 0.0
      %1165 = vmatpush.msra.mxu0 0.0
      %1166 = vmatpush.msra.mxu0 0.0
      %1167 = vmatpush.msra.mxu0 0.0
      %1168 = vmatpush.msra.mxu0 0.0
      %1169 = vmatpush.msra.mxu0 0.0
      %1170 = vmatpush.msra.mxu0 0.0
      %1171 = vmatpush.msra.mxu0 0.0
      %1172 = vmatpush.msra.mxu0 0.0
      %1173 = vmatpush.msra.mxu0 0.0
      %1174 = vmatpush.msra.mxu0 0.0
      %1175 = vmatpush.msra.mxu0 0.0
      %1176 = vmatpush.msra.mxu0 %v1099
      %1177 = vmatmul.f32.gmra.mxu0 %v1091
      %v1178 = vpop.f32.mrf.mxu0
      %v1179 = vadd.f32 0.0, %v1178
      %1180 = vdwg.mxu0
      %v1181 = vadd.f32 %v1064, %v1119
      %v1182 = vadd.f32 %v1065, %v1139
      %v1183 = vadd.f32 %v1066, %v1159
      %v1184 = vadd.f32 %v1067, %v1179
      %s1185 = scalar_lea.vmem %s8, 20
      %v1186 = vld [vmem:[%s1185] sm:$0xf]
      %v1188 = vperm.slane %v1186, 0
      %v1189 = vperm.slane %v1186, 1
      %v1190 = vperm.slane %v1186, 2
      %v1191 = vperm.slane %v1186, 3
      %1192 = vrot.lane.b32.xlu0 %v1188, 18
      %v1193 = vpop.permute.xlu0 %1192
      %1194 = vrot.lane.b32.xlu0 %v1189, 18
      %v1195 = vpop.permute.xlu0 %1194
      %1196 = vrot.lane.b32.xlu0 %v1190, 18
      %v1197 = vpop.permute.xlu0 %1196
      %1198 = vrot.lane.b32.xlu0 %v1191, 18
      %v1199 = vpop.permute.xlu0 %1198
      %vm1200 = vcmask 146432
      %v1201 = vsel %vm1200, %v1193, %v1195
      %v1202 = vsel %vm1200, %v1195, %v1197
      %v1203 = vsel %vm1200, %v1197, %v1199
      %v1209 = vmul.f32 %v517, %v1193
      %v1210 = vmul.f32 %v518, %v1201
      %v1211 = vmul.f32 %v519, %v1202
      %v1212 = vmul.f32 %v520, %v1203
      %v1213 = vmul.f32 %v536, %v1199
      %s1214 = scalar_lea.vmem %s1, 320
      %v1215 = vld [vmem:[%s1214] sm:$0xf]
      %1221 = vrot.lane.b32.xlu0 %v1209, 110
      %v1222 = vpop.permute.xlu0 %1221
      %1223 = vrot.lane.b32.xlu0 %v1210, 110
      %v1224 = vpop.permute.xlu0 %1223
      %1225 = vrot.lane.b32.xlu0 %v1211, 110
      %v1226 = vpop.permute.xlu0 %1225
      %1227 = vrot.lane.b32.xlu0 %v1212, 110
      %v1228 = vpop.permute.xlu0 %1227
      %1229 = vrot.lane.b32.xlu0 %v1213, 110
      %v1230 = vpop.permute.xlu0 %1229
      %vm1231 = vcmask 900096
      %v1232 = vsel %vm1231, %v1222, %v1224
      %v1233 = vsel %vm1231, %v1224, %v1226
      %v1234 = vsel %vm1231, %v1226, %v1228
      %v1235 = vsel %vm1231, %v1228, %v1230
      %v1237 = vsel %vm588, %v1215, 0
      %v1239 = vsel %vm592, %v1232, 0
      %v1241 = vsel %vm592, %v1233, 0
      %v1243 = vsel %vm592, %v1234, 0
      %v1245 = vsel %vm592, %v1235, 0
      %1247 = vmatpush.msra.mxu0 0.0
      %1248 = vmatpush.msra.mxu0 0.0
      %1249 = vmatpush.msra.mxu0 0.0
      %1250 = vmatpush.msra.mxu0 0.0
      %1251 = vmatpush.msra.mxu0 0.0
      %1252 = vmatpush.msra.mxu0 0.0
      %1253 = vmatpush.msra.mxu0 0.0
      %1254 = vmatpush.msra.mxu0 0.0
      %1255 = vmatpush.msra.mxu0 0.0
      %1256 = vmatpush.msra.mxu0 0.0
      %1257 = vmatpush.msra.mxu0 0.0
      %1258 = vmatpush.msra.mxu0 0.0
      %1259 = vmatpush.msra.mxu0 0.0
      %1260 = vmatpush.msra.mxu0 0.0
      %1261 = vmatpush.msra.mxu0 0.0
      %1262 = vmatpush.msra.mxu0 %v1239
      %1263 = vmatmul.f32.gmra.mxu0 %v1237
      %v1264 = vpop.f32.mrf.mxu0
      %v1265 = vadd.f32 0.0, %v1264
      %1266 = vdwg.mxu0
      %1267 = vmatpush.msra.mxu0 0.0
      %1268 = vmatpush.msra.mxu0 0.0
      %1269 = vmatpush.msra.mxu0 0.0
      %1270 = vmatpush.msra.mxu0 0.0
      %1271 = vmatpush.msra.mxu0 0.0
      %1272 = vmatpush.msra.mxu0 0.0
      %1273 = vmatpush.msra.mxu0 0.0
      %1274 = vmatpush.msra.mxu0 0.0
      %1275 = vmatpush.msra.mxu0 0.0
      %1276 = vmatpush.msra.mxu0 0.0
      %1277 = vmatpush.msra.mxu0 0.0
      %1278 = vmatpush.msra.mxu0 0.0
      %1279 = vmatpush.msra.mxu0 0.0
      %1280 = vmatpush.msra.mxu0 0.0
      %1281 = vmatpush.msra.mxu0 0.0
      %1282 = vmatpush.msra.mxu0 %v1241
      %1283 = vmatmul.f32.gmra.mxu0 %v1237
      %v1284 = vpop.f32.mrf.mxu0
      %v1285 = vadd.f32 0.0, %v1284
      %1286 = vdwg.mxu0
      %1287 = vmatpush.msra.mxu0 0.0
      %1288 = vmatpush.msra.mxu0 0.0
      %1289 = vmatpush.msra.mxu0 0.0
      %1290 = vmatpush.msra.mxu0 0.0
      %1291 = vmatpush.msra.mxu0 0.0
      %1292 = vmatpush.msra.mxu0 0.0
      %1293 = vmatpush.msra.mxu0 0.0
      %1294 = vmatpush.msra.mxu0 0.0
      %1295 = vmatpush.msra.mxu0 0.0
      %1296 = vmatpush.msra.mxu0 0.0
      %1297 = vmatpush.msra.mxu0 0.0
      %1298 = vmatpush.msra.mxu0 0.0
      %1299 = vmatpush.msra.mxu0 0.0
      %1300 = vmatpush.msra.mxu0 0.0
      %1301 = vmatpush.msra.mxu0 0.0
      %1302 = vmatpush.msra.mxu0 %v1243
      %1303 = vmatmul.f32.gmra.mxu0 %v1237
      %v1304 = vpop.f32.mrf.mxu0
      %v1305 = vadd.f32 0.0, %v1304
      %1306 = vdwg.mxu0
      %1307 = vmatpush.msra.mxu0 0.0
      %1308 = vmatpush.msra.mxu0 0.0
      %1309 = vmatpush.msra.mxu0 0.0
      %1310 = vmatpush.msra.mxu0 0.0
      %1311 = vmatpush.msra.mxu0 0.0
      %1312 = vmatpush.msra.mxu0 0.0
      %1313 = vmatpush.msra.mxu0 0.0
      %1314 = vmatpush.msra.mxu0 0.0
      %1315 = vmatpush.msra.mxu0 0.0
      %1316 = vmatpush.msra.mxu0 0.0
      %1317 = vmatpush.msra.mxu0 0.0
      %1318 = vmatpush.msra.mxu0 0.0
      %1319 = vmatpush.msra.mxu0 0.0
      %1320 = vmatpush.msra.mxu0 0.0
      %1321 = vmatpush.msra.mxu0 0.0
      %1322 = vmatpush.msra.mxu0 %v1245
      %1323 = vmatmul.f32.gmra.mxu0 %v1237
      %v1324 = vpop.f32.mrf.mxu0
      %v1325 = vadd.f32 0.0, %v1324
      %1326 = vdwg.mxu0
      %v1327 = vadd.f32 %v1181, %v1265
      %v1328 = vadd.f32 %v1182, %v1285
      %v1329 = vadd.f32 %v1183, %v1305
      %v1330 = vadd.f32 %v1184, %v1325
      %s1331 = scalar_lea.vmem %s8, 24
      %v1332 = vld [vmem:[%s1331] sm:$0xf]
      %v1334 = vperm.slane %v1332, 0
      %v1335 = vperm.slane %v1332, 1
      %v1336 = vperm.slane %v1332, 2
      %v1337 = vperm.slane %v1332, 3
      %1338 = vrot.lane.b32.xlu0 %v1334, 32
      %v1339 = vpop.permute.xlu0 %1338
      %1340 = vrot.lane.b32.xlu0 %v1335, 32
      %v1341 = vpop.permute.xlu0 %1340
      %1342 = vrot.lane.b32.xlu0 %v1336, 32
      %v1343 = vpop.permute.xlu0 %1342
      %1344 = vrot.lane.b32.xlu0 %v1337, 32
      %v1345 = vpop.permute.xlu0 %1344
      %vm1346 = vcmask 261120
      %v1347 = vsel %vm1346, %v1339, %v1341
      %v1348 = vsel %vm1346, %v1341, %v1343
      %v1349 = vsel %vm1346, %v1343, %v1345
      %v1355 = vmul.f32 %v517, %v1339
      %v1356 = vmul.f32 %v518, %v1347
      %v1357 = vmul.f32 %v519, %v1348
      %v1358 = vmul.f32 %v520, %v1349
      %v1359 = vmul.f32 %v536, %v1345
      %s1360 = scalar_lea.vmem %s1, 384
      %v1361 = vld [vmem:[%s1360] sm:$0xf]
      %1367 = vrot.lane.b32.xlu0 %v1355, 96
      %v1368 = vpop.permute.xlu0 %1367
      %1369 = vrot.lane.b32.xlu0 %v1356, 96
      %v1370 = vpop.permute.xlu0 %1369
      %1371 = vrot.lane.b32.xlu0 %v1357, 96
      %v1372 = vpop.permute.xlu0 %1371
      %1373 = vrot.lane.b32.xlu0 %v1358, 96
      %v1374 = vpop.permute.xlu0 %1373
      %1375 = vrot.lane.b32.xlu0 %v1359, 96
      %v1376 = vpop.permute.xlu0 %1375
      %vm1377 = vcmask 785408
      %v1378 = vsel %vm1377, %v1368, %v1370
      %v1379 = vsel %vm1377, %v1370, %v1372
      %v1380 = vsel %vm1377, %v1372, %v1374
      %v1381 = vsel %vm1377, %v1374, %v1376
      %v1383 = vsel %vm588, %v1361, 0
      %v1385 = vsel %vm592, %v1378, 0
      %v1387 = vsel %vm592, %v1379, 0
      %v1389 = vsel %vm592, %v1380, 0
      %v1391 = vsel %vm592, %v1381, 0
      %1393 = vmatpush.msra.mxu0 0.0
      %1394 = vmatpush.msra.mxu0 0.0
      %1395 = vmatpush.msra.mxu0 0.0
      %1396 = vmatpush.msra.mxu0 0.0
      %1397 = vmatpush.msra.mxu0 0.0
      %1398 = vmatpush.msra.mxu0 0.0
      %1399 = vmatpush.msra.mxu0 0.0
      %1400 = vmatpush.msra.mxu0 0.0
      %1401 = vmatpush.msra.mxu0 0.0
      %1402 = vmatpush.msra.mxu0 0.0
      %1403 = vmatpush.msra.mxu0 0.0
      %1404 = vmatpush.msra.mxu0 0.0
      %1405 = vmatpush.msra.mxu0 0.0
      %1406 = vmatpush.msra.mxu0 0.0
      %1407 = vmatpush.msra.mxu0 0.0
      %1408 = vmatpush.msra.mxu0 %v1385
      %1409 = vmatmul.f32.gmra.mxu0 %v1383
      %v1410 = vpop.f32.mrf.mxu0
      %v1411 = vadd.f32 0.0, %v1410
      %1412 = vdwg.mxu0
      %1413 = vmatpush.msra.mxu0 0.0
      %1414 = vmatpush.msra.mxu0 0.0
      %1415 = vmatpush.msra.mxu0 0.0
      %1416 = vmatpush.msra.mxu0 0.0
      %1417 = vmatpush.msra.mxu0 0.0
      %1418 = vmatpush.msra.mxu0 0.0
      %1419 = vmatpush.msra.mxu0 0.0
      %1420 = vmatpush.msra.mxu0 0.0
      %1421 = vmatpush.msra.mxu0 0.0
      %1422 = vmatpush.msra.mxu0 0.0
      %1423 = vmatpush.msra.mxu0 0.0
      %1424 = vmatpush.msra.mxu0 0.0
      %1425 = vmatpush.msra.mxu0 0.0
      %1426 = vmatpush.msra.mxu0 0.0
      %1427 = vmatpush.msra.mxu0 0.0
      %1428 = vmatpush.msra.mxu0 %v1387
      %1429 = vmatmul.f32.gmra.mxu0 %v1383
      %v1430 = vpop.f32.mrf.mxu0
      %v1431 = vadd.f32 0.0, %v1430
      %1432 = vdwg.mxu0
      %1433 = vmatpush.msra.mxu0 0.0
      %1434 = vmatpush.msra.mxu0 0.0
      %1435 = vmatpush.msra.mxu0 0.0
      %1436 = vmatpush.msra.mxu0 0.0
      %1437 = vmatpush.msra.mxu0 0.0
      %1438 = vmatpush.msra.mxu0 0.0
      %1439 = vmatpush.msra.mxu0 0.0
      %1440 = vmatpush.msra.mxu0 0.0
      %1441 = vmatpush.msra.mxu0 0.0
      %1442 = vmatpush.msra.mxu0 0.0
      %1443 = vmatpush.msra.mxu0 0.0
      %1444 = vmatpush.msra.mxu0 0.0
      %1445 = vmatpush.msra.mxu0 0.0
      %1446 = vmatpush.msra.mxu0 0.0
      %1447 = vmatpush.msra.mxu0 0.0
      %1448 = vmatpush.msra.mxu0 %v1389
      %1449 = vmatmul.f32.gmra.mxu0 %v1383
      %v1450 = vpop.f32.mrf.mxu0
      %v1451 = vadd.f32 0.0, %v1450
      %1452 = vdwg.mxu0
      %1453 = vmatpush.msra.mxu0 0.0
      %1454 = vmatpush.msra.mxu0 0.0
      %1455 = vmatpush.msra.mxu0 0.0
      %1456 = vmatpush.msra.mxu0 0.0
      %1457 = vmatpush.msra.mxu0 0.0
      %1458 = vmatpush.msra.mxu0 0.0
      %1459 = vmatpush.msra.mxu0 0.0
      %1460 = vmatpush.msra.mxu0 0.0
      %1461 = vmatpush.msra.mxu0 0.0
      %1462 = vmatpush.msra.mxu0 0.0
      %1463 = vmatpush.msra.mxu0 0.0
      %1464 = vmatpush.msra.mxu0 0.0
      %1465 = vmatpush.msra.mxu0 0.0
      %1466 = vmatpush.msra.mxu0 0.0
      %1467 = vmatpush.msra.mxu0 0.0
      %1468 = vmatpush.msra.mxu0 %v1391
      %1469 = vmatmul.f32.gmra.mxu0 %v1383
      %v1470 = vpop.f32.mrf.mxu0
      %v1471 = vadd.f32 0.0, %v1470
      %1472 = vdwg.mxu0
      %v1473 = vadd.f32 %v1327, %v1411
      %v1474 = vadd.f32 %v1328, %v1431
      %v1475 = vadd.f32 %v1329, %v1451
      %v1476 = vadd.f32 %v1330, %v1471
      %s1477 = scalar_lea.vmem %s8, 28
      %v1478 = vld [vmem:[%s1477] sm:$0xf]
      %v1480 = vperm.slane %v1478, 0
      %v1481 = vperm.slane %v1478, 1
      %v1482 = vperm.slane %v1478, 2
      %v1483 = vperm.slane %v1478, 3
      %1484 = vrot.lane.b32.xlu0 %v1480, 33
      %v1485 = vpop.permute.xlu0 %1484
      %1486 = vrot.lane.b32.xlu0 %v1481, 33
      %v1487 = vpop.permute.xlu0 %1486
      %1488 = vrot.lane.b32.xlu0 %v1482, 33
      %v1489 = vpop.permute.xlu0 %1488
      %1490 = vrot.lane.b32.xlu0 %v1483, 33
      %v1491 = vpop.permute.xlu0 %1490
      %vm1492 = vcmask 269312
      %v1493 = vsel %vm1492, %v1485, %v1487
      %v1494 = vsel %vm1492, %v1487, %v1489
      %v1495 = vsel %vm1492, %v1489, %v1491
      %v1501 = vmul.f32 %v517, %v1485
      %v1502 = vmul.f32 %v518, %v1493
      %v1503 = vmul.f32 %v519, %v1494
      %v1504 = vmul.f32 %v520, %v1495
      %v1505 = vmul.f32 %v536, %v1491
      %s1506 = scalar_lea.vmem %s1, 448
      %v1507 = vld [vmem:[%s1506] sm:$0xf]
      %1513 = vrot.lane.b32.xlu0 %v1501, 95
      %v1514 = vpop.permute.xlu0 %1513
      %1515 = vrot.lane.b32.xlu0 %v1502, 95
      %v1516 = vpop.permute.xlu0 %1515
      %1517 = vrot.lane.b32.xlu0 %v1503, 95
      %v1518 = vpop.permute.xlu0 %1517
      %1519 = vrot.lane.b32.xlu0 %v1504, 95
      %v1520 = vpop.permute.xlu0 %1519
      %1521 = vrot.lane.b32.xlu0 %v1505, 95
      %v1522 = vpop.permute.xlu0 %1521
      %vm1523 = vcmask 777216
      %v1524 = vsel %vm1523, %v1514, %v1516
      %v1525 = vsel %vm1523, %v1516, %v1518
      %v1526 = vsel %vm1523, %v1518, %v1520
      %v1527 = vsel %vm1523, %v1520, %v1522
      %v1529 = vsel %vm588, %v1507, 0
      %v1531 = vsel %vm592, %v1524, 0
      %v1533 = vsel %vm592, %v1525, 0
      %v1535 = vsel %vm592, %v1526, 0
      %v1537 = vsel %vm592, %v1527, 0
      %1539 = vmatpush.msra.mxu0 0.0
      %1540 = vmatpush.msra.mxu0 0.0
      %1541 = vmatpush.msra.mxu0 0.0
      %1542 = vmatpush.msra.mxu0 0.0
      %1543 = vmatpush.msra.mxu0 0.0
      %1544 = vmatpush.msra.mxu0 0.0
      %1545 = vmatpush.msra.mxu0 0.0
      %1546 = vmatpush.msra.mxu0 0.0
      %1547 = vmatpush.msra.mxu0 0.0
      %1548 = vmatpush.msra.mxu0 0.0
      %1549 = vmatpush.msra.mxu0 0.0
      %1550 = vmatpush.msra.mxu0 0.0
      %1551 = vmatpush.msra.mxu0 0.0
      %1552 = vmatpush.msra.mxu0 0.0
      %1553 = vmatpush.msra.mxu0 0.0
      %1554 = vmatpush.msra.mxu0 %v1531
      %1555 = vmatmul.f32.gmra.mxu0 %v1529
      %v1556 = vpop.f32.mrf.mxu0
      %v1557 = vadd.f32 0.0, %v1556
      %1558 = vdwg.mxu0
      %1559 = vmatpush.msra.mxu0 0.0
      %1560 = vmatpush.msra.mxu0 0.0
      %1561 = vmatpush.msra.mxu0 0.0
      %1562 = vmatpush.msra.mxu0 0.0
      %1563 = vmatpush.msra.mxu0 0.0
      %1564 = vmatpush.msra.mxu0 0.0
      %1565 = vmatpush.msra.mxu0 0.0
      %1566 = vmatpush.msra.mxu0 0.0
      %1567 = vmatpush.msra.mxu0 0.0
      %1568 = vmatpush.msra.mxu0 0.0
      %1569 = vmatpush.msra.mxu0 0.0
      %1570 = vmatpush.msra.mxu0 0.0
      %1571 = vmatpush.msra.mxu0 0.0
      %1572 = vmatpush.msra.mxu0 0.0
      %1573 = vmatpush.msra.mxu0 0.0
      %1574 = vmatpush.msra.mxu0 %v1533
      %1575 = vmatmul.f32.gmra.mxu0 %v1529
      %v1576 = vpop.f32.mrf.mxu0
      %v1577 = vadd.f32 0.0, %v1576
      %1578 = vdwg.mxu0
      %1579 = vmatpush.msra.mxu0 0.0
      %1580 = vmatpush.msra.mxu0 0.0
      %1581 = vmatpush.msra.mxu0 0.0
      %1582 = vmatpush.msra.mxu0 0.0
      %1583 = vmatpush.msra.mxu0 0.0
      %1584 = vmatpush.msra.mxu0 0.0
      %1585 = vmatpush.msra.mxu0 0.0
      %1586 = vmatpush.msra.mxu0 0.0
      %1587 = vmatpush.msra.mxu0 0.0
      %1588 = vmatpush.msra.mxu0 0.0
      %1589 = vmatpush.msra.mxu0 0.0
      %1590 = vmatpush.msra.mxu0 0.0
      %1591 = vmatpush.msra.mxu0 0.0
      %1592 = vmatpush.msra.mxu0 0.0
      %1593 = vmatpush.msra.mxu0 0.0
      %1594 = vmatpush.msra.mxu0 %v1535
      %1595 = vmatmul.f32.gmra.mxu0 %v1529
      %v1596 = vpop.f32.mrf.mxu0
      %v1597 = vadd.f32 0.0, %v1596
      %1598 = vdwg.mxu0
      %1599 = vmatpush.msra.mxu0 0.0
      %1600 = vmatpush.msra.mxu0 0.0
      %1601 = vmatpush.msra.mxu0 0.0
      %1602 = vmatpush.msra.mxu0 0.0
      %1603 = vmatpush.msra.mxu0 0.0
      %1604 = vmatpush.msra.mxu0 0.0
      %1605 = vmatpush.msra.mxu0 0.0
      %1606 = vmatpush.msra.mxu0 0.0
      %1607 = vmatpush.msra.mxu0 0.0
      %1608 = vmatpush.msra.mxu0 0.0
      %1609 = vmatpush.msra.mxu0 0.0
      %1610 = vmatpush.msra.mxu0 0.0
      %1611 = vmatpush.msra.mxu0 0.0
      %1612 = vmatpush.msra.mxu0 0.0
      %1613 = vmatpush.msra.mxu0 0.0
      %1614 = vmatpush.msra.mxu0 %v1537
      %1615 = vmatmul.f32.gmra.mxu0 %v1529
      %v1616 = vpop.f32.mrf.mxu0
      %v1617 = vadd.f32 0.0, %v1616
      %1618 = vdwg.mxu0
      %v1619 = vadd.f32 %v1473, %v1557
      %v1620 = vadd.f32 %v1474, %v1577
      %v1621 = vadd.f32 %v1475, %v1597
      %v1622 = vadd.f32 %v1476, %v1617
      %s1623 = scalar_lea.vmem %s8, 32
      %v1624 = vld [vmem:[%s1623] sm:$0xf]
      %v1626 = vperm.slane %v1624, 0
      %v1627 = vperm.slane %v1624, 1
      %v1628 = vperm.slane %v1624, 2
      %v1629 = vperm.slane %v1624, 3
      %1630 = vrot.lane.b32.xlu0 %v1626, 34
      %v1631 = vpop.permute.xlu0 %1630
      %1632 = vrot.lane.b32.xlu0 %v1627, 34
      %v1633 = vpop.permute.xlu0 %1632
      %1634 = vrot.lane.b32.xlu0 %v1628, 34
      %v1635 = vpop.permute.xlu0 %1634
      %1636 = vrot.lane.b32.xlu0 %v1629, 34
      %v1637 = vpop.permute.xlu0 %1636
      %v1638 = vsel %vm445, %v1631, %v1633
      %v1639 = vsel %vm445, %v1633, %v1635
      %v1640 = vsel %vm445, %v1635, %v1637
      %v1646 = vmul.f32 %v517, %v1631
      %v1647 = vmul.f32 %v518, %v1638
      %v1648 = vmul.f32 %v519, %v1639
      %v1649 = vmul.f32 %v520, %v1640
      %v1650 = vmul.f32 %v536, %v1637
      %s1651 = scalar_lea.vmem %s1, 512
      %v1652 = vld [vmem:[%s1651] sm:$0xf]
      %1658 = vrot.lane.b32.xlu0 %v1646, 94
      %v1659 = vpop.permute.xlu0 %1658
      %1660 = vrot.lane.b32.xlu0 %v1647, 94
      %v1661 = vpop.permute.xlu0 %1660
      %1662 = vrot.lane.b32.xlu0 %v1648, 94
      %v1663 = vpop.permute.xlu0 %1662
      %1664 = vrot.lane.b32.xlu0 %v1649, 94
      %v1665 = vpop.permute.xlu0 %1664
      %1666 = vrot.lane.b32.xlu0 %v1650, 94
      %v1667 = vpop.permute.xlu0 %1666
      %vm1668 = vcmask 769024
      %v1669 = vsel %vm1668, %v1659, %v1661
      %v1670 = vsel %vm1668, %v1661, %v1663
      %v1671 = vsel %vm1668, %v1663, %v1665
      %v1672 = vsel %vm1668, %v1665, %v1667
      %v1674 = vsel %vm588, %v1652, 0
      %v1676 = vsel %vm592, %v1669, 0
      %v1678 = vsel %vm592, %v1670, 0
      %v1680 = vsel %vm592, %v1671, 0
      %v1682 = vsel %vm592, %v1672, 0
      %1684 = vmatpush.msra.mxu0 0.0
      %1685 = vmatpush.msra.mxu0 0.0
      %1686 = vmatpush.msra.mxu0 0.0
      %1687 = vmatpush.msra.mxu0 0.0
      %1688 = vmatpush.msra.mxu0 0.0
      %1689 = vmatpush.msra.mxu0 0.0
      %1690 = vmatpush.msra.mxu0 0.0
      %1691 = vmatpush.msra.mxu0 0.0
      %1692 = vmatpush.msra.mxu0 0.0
      %1693 = vmatpush.msra.mxu0 0.0
      %1694 = vmatpush.msra.mxu0 0.0
      %1695 = vmatpush.msra.mxu0 0.0
      %1696 = vmatpush.msra.mxu0 0.0
      %1697 = vmatpush.msra.mxu0 0.0
      %1698 = vmatpush.msra.mxu0 0.0
      %1699 = vmatpush.msra.mxu0 %v1676
      %1700 = vmatmul.f32.gmra.mxu0 %v1674
      %v1701 = vpop.f32.mrf.mxu0
      %v1702 = vadd.f32 0.0, %v1701
      %1703 = vdwg.mxu0
      %1704 = vmatpush.msra.mxu0 0.0
      %1705 = vmatpush.msra.mxu0 0.0
      %1706 = vmatpush.msra.mxu0 0.0
      %1707 = vmatpush.msra.mxu0 0.0
      %1708 = vmatpush.msra.mxu0 0.0
      %1709 = vmatpush.msra.mxu0 0.0
      %1710 = vmatpush.msra.mxu0 0.0
      %1711 = vmatpush.msra.mxu0 0.0
      %1712 = vmatpush.msra.mxu0 0.0
      %1713 = vmatpush.msra.mxu0 0.0
      %1714 = vmatpush.msra.mxu0 0.0
      %1715 = vmatpush.msra.mxu0 0.0
      %1716 = vmatpush.msra.mxu0 0.0
      %1717 = vmatpush.msra.mxu0 0.0
      %1718 = vmatpush.msra.mxu0 0.0
      %1719 = vmatpush.msra.mxu0 %v1678
      %1720 = vmatmul.f32.gmra.mxu0 %v1674
      %v1721 = vpop.f32.mrf.mxu0
      %v1722 = vadd.f32 0.0, %v1721
      %1723 = vdwg.mxu0
      %1724 = vmatpush.msra.mxu0 0.0
      %1725 = vmatpush.msra.mxu0 0.0
      %1726 = vmatpush.msra.mxu0 0.0
      %1727 = vmatpush.msra.mxu0 0.0
      %1728 = vmatpush.msra.mxu0 0.0
      %1729 = vmatpush.msra.mxu0 0.0
      %1730 = vmatpush.msra.mxu0 0.0
      %1731 = vmatpush.msra.mxu0 0.0
      %1732 = vmatpush.msra.mxu0 0.0
      %1733 = vmatpush.msra.mxu0 0.0
      %1734 = vmatpush.msra.mxu0 0.0
      %1735 = vmatpush.msra.mxu0 0.0
      %1736 = vmatpush.msra.mxu0 0.0
      %1737 = vmatpush.msra.mxu0 0.0
      %1738 = vmatpush.msra.mxu0 0.0
      %1739 = vmatpush.msra.mxu0 %v1680
      %1740 = vmatmul.f32.gmra.mxu0 %v1674
      %v1741 = vpop.f32.mrf.mxu0
      %v1742 = vadd.f32 0.0, %v1741
      %1743 = vdwg.mxu0
      %1744 = vmatpush.msra.mxu0 0.0
      %1745 = vmatpush.msra.mxu0 0.0
      %1746 = vmatpush.msra.mxu0 0.0
      %1747 = vmatpush.msra.mxu0 0.0
      %1748 = vmatpush.msra.mxu0 0.0
      %1749 = vmatpush.msra.mxu0 0.0
      %1750 = vmatpush.msra.mxu0 0.0
      %1751 = vmatpush.msra.mxu0 0.0
      %1752 = vmatpush.msra.mxu0 0.0
      %1753 = vmatpush.msra.mxu0 0.0
      %1754 = vmatpush.msra.mxu0 0.0
      %1755 = vmatpush.msra.mxu0 0.0
      %1756 = vmatpush.msra.mxu0 0.0
      %1757 = vmatpush.msra.mxu0 0.0
      %1758 = vmatpush.msra.mxu0 0.0
      %1759 = vmatpush.msra.mxu0 %v1682
      %1760 = vmatmul.f32.gmra.mxu0 %v1674
      %v1761 = vpop.f32.mrf.mxu0
      %v1762 = vadd.f32 0.0, %v1761
      %1763 = vdwg.mxu0
      %v1764 = vadd.f32 %v1619, %v1702
      %v1765 = vadd.f32 %v1620, %v1722
      %v1766 = vadd.f32 %v1621, %v1742
      %v1767 = vadd.f32 %v1622, %v1762
      %vm1768 = vcmask 1043456
      %v1769 = vsel %vm1768, %v1764, 0.0
      %v1770 = vsel %vm1768, %v1765, 0.0
      %v1771 = vadd.f32 %v1769, %v1770
      %v1772 = vsel %vm1768, %v1766, 0.0
      %v1773 = vadd.f32 %v1771, %v1772
      %v1774 = vsel %vm1768, %v1767, 0.0
      %v1775 = vadd.f32 %v1773, %v1774
      %1776 = vadd.xlane.f32.xlu0 %v1775
      %v1777 = vpop.xlane.xlu0 %1776
      %v1778 = vrcp.pop 512.0
      %v1779 = vmul.f32 512.0, %v1778
      %v1780 = vsub.f32 1.0, %v1779
      %v1781 = vmul.f32 %v1778, %v1780
      %v1782 = vadd.f32 %v1778, %v1781
      %vm1783 = vweird.f32 %v1778
      %v1784 = vsel %vm1783, %v1778, %v1782
      %v1785 = vmul.f32 %v1777, %v1784
      %v1786 = vsub.f32 %v1764, %v1785
      %v1787 = vsub.f32 %v1765, %v1785
      %v1788 = vsub.f32 %v1766, %v1785
      %v1789 = vsub.f32 %v1767, %v1785
      %v1790 = vmul.f32 %v1786, %v1786
      %v1791 = vmul.f32 %v1787, %v1787
      %v1792 = vmul.f32 %v1788, %v1788
      %v1793 = vmul.f32 %v1789, %v1789
      %v1794 = vsel %vm1768, %v1790, 0.0
      %v1795 = vsel %vm1768, %v1791, 0.0
      %v1796 = vadd.f32 %v1794, %v1795
      %v1797 = vsel %vm1768, %v1792, 0.0
      %v1798 = vadd.f32 %v1796, %v1797
      %v1799 = vsel %vm1768, %v1793, 0.0
      %v1800 = vadd.f32 %v1798, %v1799
      %1801 = vadd.xlane.f32.xlu0 %v1800
      %v1802 = vpop.xlane.xlu0 %1801
      %v1803 = vmul.f32 %v1802, %v1784
      %v1804 = vadd.f32 %v1803, 1e-05
      %v1805 = vrsqrt.pop %v1804
      %v1806 = vmul.f32 %v1805, %v1804
      %v1807 = vmul.f32 %v1806, %v1805
      %v1808 = vmul.f32 0.5, %v1807
      %v1809 = vsub.f32 1.5, %v1808
      %v1810 = vmul.f32 %v1805, %v1809
      %vm1811 = vweird.f32 %v1804
      %vm1812 = vweird.f32 %v1805
      %vm1813 = vmor %vm1811, %vm1812
      %v1814 = vsel %vm1813, %v1805, %v1810
      %v1815 = vmul.f32 %v1786, %v1814
      %v1816 = vmul.f32 %v1787, %v1814
      %v1817 = vmul.f32 %v1788, %v1814
      %v1818 = vmul.f32 %v1789, %v1814
      %v1819 = vld [vmem:[%s2] sm:$0xf]
      %1821 = vset.pattern.permute.xlu0 0
      %1822 = vperm.xlu0 %1821, %v1819
      %v1823 = vpop.permute.xlu0 %1822
      %v1825 = vmul.f32 %v1815, %v1823
      %v1826 = vmul.f32 %v1816, %v1823
      %v1827 = vmul.f32 %v1817, %v1823
      %v1828 = vmul.f32 %v1818, %v1823
      %v1829 = vld [vmem:[%s3] sm:$0xf]
      %1831 = vset.pattern.permute.xlu0 0
      %1832 = vperm.xlu0 %1831, %v1829
      %v1833 = vpop.permute.xlu0 %1832
      %v1835 = vadd.f32 %v1825, %v1833
      %v1836 = vadd.f32 %v1826, %v1833
      %v1837 = vadd.f32 %v1827, %v1833
      %v1838 = vadd.f32 %v1828, %v1833
      %v1839 = vmax.f32 %v1835, 0.0
      %v1840 = vmax.f32 %v1836, 0.0
      %v1841 = vmax.f32 %v1837, 0.0
      %v1842 = vmax.f32 %v1838, 0.0
      %1847 = vrot.lane.b32.xlu0 %v1839, 17
      %v1848 = vpop.permute.xlu0 %1847
      %1849 = vrot.lane.b32.xlu0 %v1840, 17
      %v1850 = vpop.permute.xlu0 %1849
      %1851 = vrot.lane.b32.xlu0 %v1841, 17
      %v1852 = vpop.permute.xlu0 %1851
      %1853 = vrot.lane.b32.xlu0 %v1842, 17
      %v1854 = vpop.permute.xlu0 %1853
      %v1855 = vsel %vm501, %v1848, %v1850
      %v1856 = vsel %vm501, %v1850, %v1852
      %v1857 = vsel %vm501, %v1852, %v1854
      %vm1863 = vcmask 1043592
      %1864 = vst.msk [vmem:[#allocation2] sm:$0xf] %vm1863, %v1848
      %1865 = vst [vmem:[#allocation2 + $0x8] sm:$0xf] %v1855
      %1866 = vst [vmem:[#allocation2 + $0x10] sm:$0xf] %v1856
      %1867 = vst [vmem:[#allocation2 + $0x18] sm:$0xf] %v1857
      %vm1868 = vcmask 134144
      %1869 = vst.msk [vmem:[#allocation2 + $0x20] sm:$0xf] %vm1868, %v1854
      %v1870 = vld [vmem:[#allocation2] sm:$0xf]
      %v1871 = vld [vmem:[#allocation2 + $0x8] sm:$0xf]
      %v1872 = vld [vmem:[#allocation2 + $0x10] sm:$0xf]
      %v1873 = vld [vmem:[#allocation2 + $0x18] sm:$0xf]
      %v1874 = vld [vmem:[%s8] sm:$0xf]
      %v1876 = vperm.slane %v1874, 0
      %v1877 = vperm.slane %v1874, 1
      %v1878 = vperm.slane %v1874, 2
      %v1879 = vperm.slane %v1874, 3
      %v1884 = vmul.f32 %v1870, %v1876
      %v1885 = vmul.f32 %v1871, %v1877
      %v1886 = vmul.f32 %v1872, %v1878
      %v1887 = vmul.f32 %v1873, %v1879
      %s1888 = scalar_lea.vmem %s1, 576
      %v1889 = vld [vmem:[%s1888] sm:$0xf]
      %v1890 = vld [vmem:[#allocation2 + $0x20] sm:$0xf]
      %v1891 = vld [vmem:[%s537] sm:$0xf]
      %v1893 = vperm.slane %v1891, 0
      %v1894 = vperm.slane %v1891, 1
      %v1895 = vperm.slane %v1891, 2
      %v1896 = vperm.slane %v1891, 3
      %1897 = vrot.lane.b32.xlu0 %v1893, 1
      %v1898 = vpop.permute.xlu0 %1897
      %1899 = vrot.lane.b32.xlu0 %v1894, 1
      %v1900 = vpop.permute.xlu0 %1899
      %1901 = vrot.lane.b32.xlu0 %v1895, 1
      %v1902 = vpop.permute.xlu0 %1901
      %1903 = vrot.lane.b32.xlu0 %v1896, 1
      %v1904 = vpop.permute.xlu0 %1903
      %v1905 = vsel %vm552, %v1898, %v1900
      %v1906 = vsel %vm552, %v1900, %v1902
      %v1907 = vsel %vm552, %v1902, %v1904
      %v1913 = vmul.f32 %v1870, %v1898
      %v1914 = vmul.f32 %v1871, %v1905
      %v1915 = vmul.f32 %v1872, %v1906
      %v1916 = vmul.f32 %v1873, %v1907
      %v1917 = vmul.f32 %v1890, %v1904
      %s1918 = scalar_lea.vmem %s1, 640
      %v1919 = vld [vmem:[%s1918] sm:$0xf]
      %1925 = vrot.lane.b32.xlu0 %v1913, 127
      %v1926 = vpop.permute.xlu0 %1925
      %1927 = vrot.lane.b32.xlu0 %v1914, 127
      %v1928 = vpop.permute.xlu0 %1927
      %1929 = vrot.lane.b32.xlu0 %v1915, 127
      %v1930 = vpop.permute.xlu0 %1929
      %1931 = vrot.lane.b32.xlu0 %v1916, 127
      %v1932 = vpop.permute.xlu0 %1931
      %1933 = vrot.lane.b32.xlu0 %v1917, 127
      %v1934 = vpop.permute.xlu0 %1933
      %v1935 = vsel %vm583, %v1926, %v1928
      %v1936 = vsel %vm583, %v1928, %v1930
      %v1937 = vsel %vm583, %v1930, %v1932
      %v1938 = vsel %vm583, %v1932, %v1934
      %vm1939 = vcmask 31744
      %v1941 = vsel %vm1939, %v1919, 0
      %v1943 = vsel %vm1768, %v1935, 0
      %v1945 = vsel %vm1768, %v1936, 0
      %v1947 = vsel %vm1768, %v1937, 0
      %v1949 = vsel %vm1768, %v1938, 0
      %1951 = vmatpush.msra.mxu0 0.0
      %1952 = vmatpush.msra.mxu0 0.0
      %1953 = vmatpush.msra.mxu0 0.0
      %1954 = vmatpush.msra.mxu0 0.0
      %1955 = vmatpush.msra.mxu0 0.0
      %1956 = vmatpush.msra.mxu0 0.0
      %1957 = vmatpush.msra.mxu0 0.0
      %1958 = vmatpush.msra.mxu0 0.0
      %1959 = vmatpush.msra.mxu0 0.0
      %1960 = vmatpush.msra.mxu0 0.0
      %1961 = vmatpush.msra.mxu0 0.0
      %1962 = vmatpush.msra.mxu0 0.0
      %1963 = vmatpush.msra.mxu0 0.0
      %1964 = vmatpush.msra.mxu0 0.0
      %1965 = vmatpush.msra.mxu0 0.0
      %1966 = vmatpush.msra.mxu0 %v1943
      %1967 = vmatmul.f32.gmra.mxu0 %v1941
      %v1968 = vpop.f32.mrf.mxu0
      %v1969 = vadd.f32 0.0, %v1968
      %1970 = vdwg.mxu0
      %1971 = vmatpush.msra.mxu0 0.0
      %1972 = vmatpush.msra.mxu0 0.0
      %1973 = vmatpush.msra.mxu0 0.0
      %1974 = vmatpush.msra.mxu0 0.0
      %1975 = vmatpush.msra.mxu0 0.0
      %1976 = vmatpush.msra.mxu0 0.0
      %1977 = vmatpush.msra.mxu0 0.0
      %1978 = vmatpush.msra.mxu0 0.0
      %1979 = vmatpush.msra.mxu0 0.0
      %1980 = vmatpush.msra.mxu0 0.0
      %1981 = vmatpush.msra.mxu0 0.0
      %1982 = vmatpush.msra.mxu0 0.0
      %1983 = vmatpush.msra.mxu0 0.0
      %1984 = vmatpush.msra.mxu0 0.0
      %1985 = vmatpush.msra.mxu0 0.0
      %1986 = vmatpush.msra.mxu0 %v1945
      %1987 = vmatmul.f32.gmra.mxu0 %v1941
      %v1988 = vpop.f32.mrf.mxu0
      %v1989 = vadd.f32 0.0, %v1988
      %1990 = vdwg.mxu0
      %1991 = vmatpush.msra.mxu0 0.0
      %1992 = vmatpush.msra.mxu0 0.0
      %1993 = vmatpush.msra.mxu0 0.0
      %1994 = vmatpush.msra.mxu0 0.0
      %1995 = vmatpush.msra.mxu0 0.0
      %1996 = vmatpush.msra.mxu0 0.0
      %1997 = vmatpush.msra.mxu0 0.0
      %1998 = vmatpush.msra.mxu0 0.0
      %1999 = vmatpush.msra.mxu0 0.0
      %2000 = vmatpush.msra.mxu0 0.0
      %2001 = vmatpush.msra.mxu0 0.0
      %2002 = vmatpush.msra.mxu0 0.0
      %2003 = vmatpush.msra.mxu0 0.0
      %2004 = vmatpush.msra.mxu0 0.0
      %2005 = vmatpush.msra.mxu0 0.0
      %2006 = vmatpush.msra.mxu0 %v1947
      %2007 = vmatmul.f32.gmra.mxu0 %v1941
      %v2008 = vpop.f32.mrf.mxu0
      %v2009 = vadd.f32 0.0, %v2008
      %2010 = vdwg.mxu0
      %2011 = vmatpush.msra.mxu0 0.0
      %2012 = vmatpush.msra.mxu0 0.0
      %2013 = vmatpush.msra.mxu0 0.0
      %2014 = vmatpush.msra.mxu0 0.0
      %2015 = vmatpush.msra.mxu0 0.0
      %2016 = vmatpush.msra.mxu0 0.0
      %2017 = vmatpush.msra.mxu0 0.0
      %2018 = vmatpush.msra.mxu0 0.0
      %2019 = vmatpush.msra.mxu0 0.0
      %2020 = vmatpush.msra.mxu0 0.0
      %2021 = vmatpush.msra.mxu0 0.0
      %2022 = vmatpush.msra.mxu0 0.0
      %2023 = vmatpush.msra.mxu0 0.0
      %2024 = vmatpush.msra.mxu0 0.0
      %2025 = vmatpush.msra.mxu0 0.0
      %2026 = vmatpush.msra.mxu0 %v1949
      %2027 = vmatmul.f32.gmra.mxu0 %v1941
      %v2028 = vpop.f32.mrf.mxu0
      %v2029 = vadd.f32 0.0, %v2028
      %2030 = vdwg.mxu0
      %v2032 = vsel %vm1939, %v1889, 0
      %v2035 = vsel %vm1768, %v1884, 0
      %v2038 = vsel %vm1768, %v1885, 0
      %v2041 = vsel %vm1768, %v1886, 0
      %v2044 = vsel %vm1768, %v1887, 0
      %2046 = vmatpush.msra.mxu0 0.0
      %2047 = vmatpush.msra.mxu0 0.0
      %2048 = vmatpush.msra.mxu0 0.0
      %2049 = vmatpush.msra.mxu0 0.0
      %2050 = vmatpush.msra.mxu0 0.0
      %2051 = vmatpush.msra.mxu0 0.0
      %2052 = vmatpush.msra.mxu0 0.0
      %2053 = vmatpush.msra.mxu0 0.0
      %2054 = vmatpush.msra.mxu0 0.0
      %2055 = vmatpush.msra.mxu0 0.0
      %2056 = vmatpush.msra.mxu0 0.0
      %2057 = vmatpush.msra.mxu0 0.0
      %2058 = vmatpush.msra.mxu0 0.0
      %2059 = vmatpush.msra.mxu0 0.0
      %2060 = vmatpush.msra.mxu0 0.0
      %2061 = vmatpush.msra.mxu0 %v2035
      %2062 = vmatmul.f32.gmra.mxu0 %v2032
      %v2063 = vpop.f32.mrf.mxu0
      %v2064 = vadd.f32 %v1969, %v2063
      %2065 = vdwg.mxu0
      %2066 = vmatpush.msra.mxu0 0.0
      %2067 = vmatpush.msra.mxu0 0.0
      %2068 = vmatpush.msra.mxu0 0.0
      %2069 = vmatpush.msra.mxu0 0.0
      %2070 = vmatpush.msra.mxu0 0.0
      %2071 = vmatpush.msra.mxu0 0.0
      %2072 = vmatpush.msra.mxu0 0.0
      %2073 = vmatpush.msra.mxu0 0.0
      %2074 = vmatpush.msra.mxu0 0.0
      %2075 = vmatpush.msra.mxu0 0.0
      %2076 = vmatpush.msra.mxu0 0.0
      %2077 = vmatpush.msra.mxu0 0.0
      %2078 = vmatpush.msra.mxu0 0.0
      %2079 = vmatpush.msra.mxu0 0.0
      %2080 = vmatpush.msra.mxu0 0.0
      %2081 = vmatpush.msra.mxu0 %v2038
      %2082 = vmatmul.f32.gmra.mxu0 %v2032
      %v2083 = vpop.f32.mrf.mxu0
      %v2084 = vadd.f32 %v1989, %v2083
      %2085 = vdwg.mxu0
      %2086 = vmatpush.msra.mxu0 0.0
      %2087 = vmatpush.msra.mxu0 0.0
      %2088 = vmatpush.msra.mxu0 0.0
      %2089 = vmatpush.msra.mxu0 0.0
      %2090 = vmatpush.msra.mxu0 0.0
      %2091 = vmatpush.msra.mxu0 0.0
      %2092 = vmatpush.msra.mxu0 0.0
      %2093 = vmatpush.msra.mxu0 0.0
      %2094 = vmatpush.msra.mxu0 0.0
      %2095 = vmatpush.msra.mxu0 0.0
      %2096 = vmatpush.msra.mxu0 0.0
      %2097 = vmatpush.msra.mxu0 0.0
      %2098 = vmatpush.msra.mxu0 0.0
      %2099 = vmatpush.msra.mxu0 0.0
      %2100 = vmatpush.msra.mxu0 0.0
      %2101 = vmatpush.msra.mxu0 %v2041
      %2102 = vmatmul.f32.gmra.mxu0 %v2032
      %v2103 = vpop.f32.mrf.mxu0
      %v2104 = vadd.f32 %v2009, %v2103
      %2105 = vdwg.mxu0
      %2106 = vmatpush.msra.mxu0 0.0
      %2107 = vmatpush.msra.mxu0 0.0
      %2108 = vmatpush.msra.mxu0 0.0
      %2109 = vmatpush.msra.mxu0 0.0
      %2110 = vmatpush.msra.mxu0 0.0
      %2111 = vmatpush.msra.mxu0 0.0
      %2112 = vmatpush.msra.mxu0 0.0
      %2113 = vmatpush.msra.mxu0 0.0
      %2114 = vmatpush.msra.mxu0 0.0
      %2115 = vmatpush.msra.mxu0 0.0
      %2116 = vmatpush.msra.mxu0 0.0
      %2117 = vmatpush.msra.mxu0 0.0
      %2118 = vmatpush.msra.mxu0 0.0
      %2119 = vmatpush.msra.mxu0 0.0
      %2120 = vmatpush.msra.mxu0 0.0
      %2121 = vmatpush.msra.mxu0 %v2044
      %2122 = vmatmul.f32.gmra.mxu0 %v2032
      %v2123 = vpop.f32.mrf.mxu0
      %v2124 = vadd.f32 %v2029, %v2123
      %2125 = vdwg.mxu0
      %v2126 = vld [vmem:[%s776] sm:$0xf]
      %v2128 = vperm.slane %v2126, 0
      %v2129 = vperm.slane %v2126, 1
      %v2130 = vperm.slane %v2126, 2
      %v2131 = vperm.slane %v2126, 3
      %2132 = vrot.lane.b32.xlu0 %v2128, 2
      %v2133 = vpop.permute.xlu0 %2132
      %2134 = vrot.lane.b32.xlu0 %v2129, 2
      %v2135 = vpop.permute.xlu0 %2134
      %2136 = vrot.lane.b32.xlu0 %v2130, 2
      %v2137 = vpop.permute.xlu0 %2136
      %2138 = vrot.lane.b32.xlu0 %v2131, 2
      %v2139 = vpop.permute.xlu0 %2138
      %v2140 = vsel %vm791, %v2133, %v2135
      %v2141 = vsel %vm791, %v2135, %v2137
      %v2142 = vsel %vm791, %v2137, %v2139
      %v2148 = vmul.f32 %v1870, %v2133
      %v2149 = vmul.f32 %v1871, %v2140
      %v2150 = vmul.f32 %v1872, %v2141
      %v2151 = vmul.f32 %v1873, %v2142
      %v2152 = vmul.f32 %v1890, %v2139
      %s2153 = scalar_lea.vmem %s1, 704
      %v2154 = vld [vmem:[%s2153] sm:$0xf]
      %2160 = vrot.lane.b32.xlu0 %v2148, 126
      %v2161 = vpop.permute.xlu0 %2160
      %2162 = vrot.lane.b32.xlu0 %v2149, 126
      %v2163 = vpop.permute.xlu0 %2162
      %2164 = vrot.lane.b32.xlu0 %v2150, 126
      %v2165 = vpop.permute.xlu0 %2164
      %2166 = vrot.lane.b32.xlu0 %v2151, 126
      %v2167 = vpop.permute.xlu0 %2166
      %2168 = vrot.lane.b32.xlu0 %v2152, 126
      %v2169 = vpop.permute.xlu0 %2168
      %v2170 = vsel %vm822, %v2161, %v2163
      %v2171 = vsel %vm822, %v2163, %v2165
      %v2172 = vsel %vm822, %v2165, %v2167
      %v2173 = vsel %vm822, %v2167, %v2169
      %v2175 = vsel %vm1939, %v2154, 0
      %v2177 = vsel %vm1768, %v2170, 0
      %v2179 = vsel %vm1768, %v2171, 0
      %v2181 = vsel %vm1768, %v2172, 0
      %v2183 = vsel %vm1768, %v2173, 0
      %2185 = vmatpush.msra.mxu0 0.0
      %2186 = vmatpush.msra.mxu0 0.0
      %2187 = vmatpush.msra.mxu0 0.0
      %2188 = vmatpush.msra.mxu0 0.0
      %2189 = vmatpush.msra.mxu0 0.0
      %2190 = vmatpush.msra.mxu0 0.0
      %2191 = vmatpush.msra.mxu0 0.0
      %2192 = vmatpush.msra.mxu0 0.0
      %2193 = vmatpush.msra.mxu0 0.0
      %2194 = vmatpush.msra.mxu0 0.0
      %2195 = vmatpush.msra.mxu0 0.0
      %2196 = vmatpush.msra.mxu0 0.0
      %2197 = vmatpush.msra.mxu0 0.0
      %2198 = vmatpush.msra.mxu0 0.0
      %2199 = vmatpush.msra.mxu0 0.0
      %2200 = vmatpush.msra.mxu0 %v2177
      %2201 = vmatmul.f32.gmra.mxu0 %v2175
      %v2202 = vpop.f32.mrf.mxu0
      %v2203 = vadd.f32 0.0, %v2202
      %2204 = vdwg.mxu0
      %2205 = vmatpush.msra.mxu0 0.0
      %2206 = vmatpush.msra.mxu0 0.0
      %2207 = vmatpush.msra.mxu0 0.0
      %2208 = vmatpush.msra.mxu0 0.0
      %2209 = vmatpush.msra.mxu0 0.0
      %2210 = vmatpush.msra.mxu0 0.0
      %2211 = vmatpush.msra.mxu0 0.0
      %2212 = vmatpush.msra.mxu0 0.0
      %2213 = vmatpush.msra.mxu0 0.0
      %2214 = vmatpush.msra.mxu0 0.0
      %2215 = vmatpush.msra.mxu0 0.0
      %2216 = vmatpush.msra.mxu0 0.0
      %2217 = vmatpush.msra.mxu0 0.0
      %2218 = vmatpush.msra.mxu0 0.0
      %2219 = vmatpush.msra.mxu0 0.0
      %2220 = vmatpush.msra.mxu0 %v2179
      %2221 = vmatmul.f32.gmra.mxu0 %v2175
      %v2222 = vpop.f32.mrf.mxu0
      %v2223 = vadd.f32 0.0, %v2222
      %2224 = vdwg.mxu0
      %2225 = vmatpush.msra.mxu0 0.0
      %2226 = vmatpush.msra.mxu0 0.0
      %2227 = vmatpush.msra.mxu0 0.0
      %2228 = vmatpush.msra.mxu0 0.0
      %2229 = vmatpush.msra.mxu0 0.0
      %2230 = vmatpush.msra.mxu0 0.0
      %2231 = vmatpush.msra.mxu0 0.0
      %2232 = vmatpush.msra.mxu0 0.0
      %2233 = vmatpush.msra.mxu0 0.0
      %2234 = vmatpush.msra.mxu0 0.0
      %2235 = vmatpush.msra.mxu0 0.0
      %2236 = vmatpush.msra.mxu0 0.0
      %2237 = vmatpush.msra.mxu0 0.0
      %2238 = vmatpush.msra.mxu0 0.0
      %2239 = vmatpush.msra.mxu0 0.0
      %2240 = vmatpush.msra.mxu0 %v2181
      %2241 = vmatmul.f32.gmra.mxu0 %v2175
      %v2242 = vpop.f32.mrf.mxu0
      %v2243 = vadd.f32 0.0, %v2242
      %2244 = vdwg.mxu0
      %2245 = vmatpush.msra.mxu0 0.0
      %2246 = vmatpush.msra.mxu0 0.0
      %2247 = vmatpush.msra.mxu0 0.0
      %2248 = vmatpush.msra.mxu0 0.0
      %2249 = vmatpush.msra.mxu0 0.0
      %2250 = vmatpush.msra.mxu0 0.0
      %2251 = vmatpush.msra.mxu0 0.0
      %2252 = vmatpush.msra.mxu0 0.0
      %2253 = vmatpush.msra.mxu0 0.0
      %2254 = vmatpush.msra.mxu0 0.0
      %2255 = vmatpush.msra.mxu0 0.0
      %2256 = vmatpush.msra.mxu0 0.0
      %2257 = vmatpush.msra.mxu0 0.0
      %2258 = vmatpush.msra.mxu0 0.0
      %2259 = vmatpush.msra.mxu0 0.0
      %2260 = vmatpush.msra.mxu0 %v2183
      %2261 = vmatmul.f32.gmra.mxu0 %v2175
      %v2262 = vpop.f32.mrf.mxu0
      %v2263 = vadd.f32 0.0, %v2262
      %2264 = vdwg.mxu0
      %v2265 = vadd.f32 %v2064, %v2203
      %v2266 = vadd.f32 %v2084, %v2223
      %v2267 = vadd.f32 %v2104, %v2243
      %v2268 = vadd.f32 %v2124, %v2263
      %v2269 = vld [vmem:[%s922] sm:$0xf]
      %v2271 = vperm.slane %v2269, 0
      %v2272 = vperm.slane %v2269, 1
      %v2273 = vperm.slane %v2269, 2
      %v2274 = vperm.slane %v2269, 3
      %2275 = vrot.lane.b32.xlu0 %v2271, 16
      %v2276 = vpop.permute.xlu0 %2275
      %2277 = vrot.lane.b32.xlu0 %v2272, 16
      %v2278 = vpop.permute.xlu0 %2277
      %2279 = vrot.lane.b32.xlu0 %v2273, 16
      %v2280 = vpop.permute.xlu0 %2279
      %2281 = vrot.lane.b32.xlu0 %v2274, 16
      %v2282 = vpop.permute.xlu0 %2281
      %v2283 = vsel %vm937, %v2276, %v2278
      %v2284 = vsel %vm937, %v2278, %v2280
      %v2285 = vsel %vm937, %v2280, %v2282
      %v2291 = vmul.f32 %v1870, %v2276
      %v2292 = vmul.f32 %v1871, %v2283
      %v2293 = vmul.f32 %v1872, %v2284
      %v2294 = vmul.f32 %v1873, %v2285
      %v2295 = vmul.f32 %v1890, %v2282
      %s2296 = scalar_lea.vmem %s1, 768
      %v2297 = vld [vmem:[%s2296] sm:$0xf]
      %2303 = vrot.lane.b32.xlu0 %v2291, 112
      %v2304 = vpop.permute.xlu0 %2303
      %2305 = vrot.lane.b32.xlu0 %v2292, 112
      %v2306 = vpop.permute.xlu0 %2305
      %2307 = vrot.lane.b32.xlu0 %v2293, 112
      %v2308 = vpop.permute.xlu0 %2307
      %2309 = vrot.lane.b32.xlu0 %v2294, 112
      %v2310 = vpop.permute.xlu0 %2309
      %2311 = vrot.lane.b32.xlu0 %v2295, 112
      %v2312 = vpop.permute.xlu0 %2311
      %v2313 = vsel %vm968, %v2304, %v2306
      %v2314 = vsel %vm968, %v2306, %v2308
      %v2315 = vsel %vm968, %v2308, %v2310
      %v2316 = vsel %vm968, %v2310, %v2312
      %v2318 = vsel %vm1939, %v2297, 0
      %v2320 = vsel %vm1768, %v2313, 0
      %v2322 = vsel %vm1768, %v2314, 0
      %v2324 = vsel %vm1768, %v2315, 0
      %v2326 = vsel %vm1768, %v2316, 0
      %2328 = vmatpush.msra.mxu0 0.0
      %2329 = vmatpush.msra.mxu0 0.0
      %2330 = vmatpush.msra.mxu0 0.0
      %2331 = vmatpush.msra.mxu0 0.0
      %2332 = vmatpush.msra.mxu0 0.0
      %2333 = vmatpush.msra.mxu0 0.0
      %2334 = vmatpush.msra.mxu0 0.0
      %2335 = vmatpush.msra.mxu0 0.0
      %2336 = vmatpush.msra.mxu0 0.0
      %2337 = vmatpush.msra.mxu0 0.0
      %2338 = vmatpush.msra.mxu0 0.0
      %2339 = vmatpush.msra.mxu0 0.0
      %2340 = vmatpush.msra.mxu0 0.0
      %2341 = vmatpush.msra.mxu0 0.0
      %2342 = vmatpush.msra.mxu0 0.0
      %2343 = vmatpush.msra.mxu0 %v2320
      %2344 = vmatmul.f32.gmra.mxu0 %v2318
      %v2345 = vpop.f32.mrf.mxu0
      %v2346 = vadd.f32 0.0, %v2345
      %2347 = vdwg.mxu0
      %2348 = vmatpush.msra.mxu0 0.0
      %2349 = vmatpush.msra.mxu0 0.0
      %2350 = vmatpush.msra.mxu0 0.0
      %2351 = vmatpush.msra.mxu0 0.0
      %2352 = vmatpush.msra.mxu0 0.0
      %2353 = vmatpush.msra.mxu0 0.0
      %2354 = vmatpush.msra.mxu0 0.0
      %2355 = vmatpush.msra.mxu0 0.0
      %2356 = vmatpush.msra.mxu0 0.0
      %2357 = vmatpush.msra.mxu0 0.0
      %2358 = vmatpush.msra.mxu0 0.0
      %2359 = vmatpush.msra.mxu0 0.0
      %2360 = vmatpush.msra.mxu0 0.0
      %2361 = vmatpush.msra.mxu0 0.0
      %2362 = vmatpush.msra.mxu0 0.0
      %2363 = vmatpush.msra.mxu0 %v2322
      %2364 = vmatmul.f32.gmra.mxu0 %v2318
      %v2365 = vpop.f32.mrf.mxu0
      %v2366 = vadd.f32 0.0, %v2365
      %2367 = vdwg.mxu0
      %2368 = vmatpush.msra.mxu0 0.0
      %2369 = vmatpush.msra.mxu0 0.0
      %2370 = vmatpush.msra.mxu0 0.0
      %2371 = vmatpush.msra.mxu0 0.0
      %2372 = vmatpush.msra.mxu0 0.0
      %2373 = vmatpush.msra.mxu0 0.0
      %2374 = vmatpush.msra.mxu0 0.0
      %2375 = vmatpush.msra.mxu0 0.0
      %2376 = vmatpush.msra.mxu0 0.0
      %2377 = vmatpush.msra.mxu0 0.0
      %2378 = vmatpush.msra.mxu0 0.0
      %2379 = vmatpush.msra.mxu0 0.0
      %2380 = vmatpush.msra.mxu0 0.0
      %2381 = vmatpush.msra.mxu0 0.0
      %2382 = vmatpush.msra.mxu0 0.0
      %2383 = vmatpush.msra.mxu0 %v2324
      %2384 = vmatmul.f32.gmra.mxu0 %v2318
      %v2385 = vpop.f32.mrf.mxu0
      %v2386 = vadd.f32 0.0, %v2385
      %2387 = vdwg.mxu0
      %2388 = vmatpush.msra.mxu0 0.0
      %2389 = vmatpush.msra.mxu0 0.0
      %2390 = vmatpush.msra.mxu0 0.0
      %2391 = vmatpush.msra.mxu0 0.0
      %2392 = vmatpush.msra.mxu0 0.0
      %2393 = vmatpush.msra.mxu0 0.0
      %2394 = vmatpush.msra.mxu0 0.0
      %2395 = vmatpush.msra.mxu0 0.0
      %2396 = vmatpush.msra.mxu0 0.0
      %2397 = vmatpush.msra.mxu0 0.0
      %2398 = vmatpush.msra.mxu0 0.0
      %2399 = vmatpush.msra.mxu0 0.0
      %2400 = vmatpush.msra.mxu0 0.0
      %2401 = vmatpush.msra.mxu0 0.0
      %2402 = vmatpush.msra.mxu0 0.0
      %2403 = vmatpush.msra.mxu0 %v2326
      %2404 = vmatmul.f32.gmra.mxu0 %v2318
      %v2405 = vpop.f32.mrf.mxu0
      %v2406 = vadd.f32 0.0, %v2405
      %2407 = vdwg.mxu0
      %v2408 = vadd.f32 %v2265, %v2346
      %v2409 = vadd.f32 %v2266, %v2366
      %v2410 = vadd.f32 %v2267, %v2386
      %v2411 = vadd.f32 %v2268, %v2406
      %s2412 = scalar_lea.vmem %s1, 832
      %v2413 = vld [vmem:[%s2412] sm:$0xf]
      %2419 = vrot.lane.b32.xlu0 %v1870, 111
      %v2420 = vpop.permute.xlu0 %2419
      %2421 = vrot.lane.b32.xlu0 %v1871, 111
      %v2422 = vpop.permute.xlu0 %2421
      %2423 = vrot.lane.b32.xlu0 %v1872, 111
      %v2424 = vpop.permute.xlu0 %2423
      %2425 = vrot.lane.b32.xlu0 %v1873, 111
      %v2426 = vpop.permute.xlu0 %2425
      %2427 = vrot.lane.b32.xlu0 %v1890, 111
      %v2428 = vpop.permute.xlu0 %2427
      %v2429 = vsel %vm1085, %v2420, %v2422
      %v2430 = vsel %vm1085, %v2422, %v2424
      %v2431 = vsel %vm1085, %v2424, %v2426
      %v2432 = vsel %vm1085, %v2426, %v2428
      %v2434 = vsel %vm1939, %v2413, 0
      %v2436 = vsel %vm1768, %v2429, 0
      %v2438 = vsel %vm1768, %v2430, 0
      %v2440 = vsel %vm1768, %v2431, 0
      %v2442 = vsel %vm1768, %v2432, 0
      %2444 = vmatpush.msra.mxu0 0.0
      %2445 = vmatpush.msra.mxu0 0.0
      %2446 = vmatpush.msra.mxu0 0.0
      %2447 = vmatpush.msra.mxu0 0.0
      %2448 = vmatpush.msra.mxu0 0.0
      %2449 = vmatpush.msra.mxu0 0.0
      %2450 = vmatpush.msra.mxu0 0.0
      %2451 = vmatpush.msra.mxu0 0.0
      %2452 = vmatpush.msra.mxu0 0.0
      %2453 = vmatpush.msra.mxu0 0.0
      %2454 = vmatpush.msra.mxu0 0.0
      %2455 = vmatpush.msra.mxu0 0.0
      %2456 = vmatpush.msra.mxu0 0.0
      %2457 = vmatpush.msra.mxu0 0.0
      %2458 = vmatpush.msra.mxu0 0.0
      %2459 = vmatpush.msra.mxu0 %v2436
      %2460 = vmatmul.f32.gmra.mxu0 %v2434
      %v2461 = vpop.f32.mrf.mxu0
      %v2462 = vadd.f32 0.0, %v2461
      %2463 = vdwg.mxu0
      %2464 = vmatpush.msra.mxu0 0.0
      %2465 = vmatpush.msra.mxu0 0.0
      %2466 = vmatpush.msra.mxu0 0.0
      %2467 = vmatpush.msra.mxu0 0.0
      %2468 = vmatpush.msra.mxu0 0.0
      %2469 = vmatpush.msra.mxu0 0.0
      %2470 = vmatpush.msra.mxu0 0.0
      %2471 = vmatpush.msra.mxu0 0.0
      %2472 = vmatpush.msra.mxu0 0.0
      %2473 = vmatpush.msra.mxu0 0.0
      %2474 = vmatpush.msra.mxu0 0.0
      %2475 = vmatpush.msra.mxu0 0.0
      %2476 = vmatpush.msra.mxu0 0.0
      %2477 = vmatpush.msra.mxu0 0.0
      %2478 = vmatpush.msra.mxu0 0.0
      %2479 = vmatpush.msra.mxu0 %v2438
      %2480 = vmatmul.f32.gmra.mxu0 %v2434
      %v2481 = vpop.f32.mrf.mxu0
      %v2482 = vadd.f32 0.0, %v2481
      %2483 = vdwg.mxu0
      %2484 = vmatpush.msra.mxu0 0.0
      %2485 = vmatpush.msra.mxu0 0.0
      %2486 = vmatpush.msra.mxu0 0.0
      %2487 = vmatpush.msra.mxu0 0.0
      %2488 = vmatpush.msra.mxu0 0.0
      %2489 = vmatpush.msra.mxu0 0.0
      %2490 = vmatpush.msra.mxu0 0.0
      %2491 = vmatpush.msra.mxu0 0.0
      %2492 = vmatpush.msra.mxu0 0.0
      %2493 = vmatpush.msra.mxu0 0.0
      %2494 = vmatpush.msra.mxu0 0.0
      %2495 = vmatpush.msra.mxu0 0.0
      %2496 = vmatpush.msra.mxu0 0.0
      %2497 = vmatpush.msra.mxu0 0.0
      %2498 = vmatpush.msra.mxu0 0.0
      %2499 = vmatpush.msra.mxu0 %v2440
      %2500 = vmatmul.f32.gmra.mxu0 %v2434
      %v2501 = vpop.f32.mrf.mxu0
      %v2502 = vadd.f32 0.0, %v2501
      %2503 = vdwg.mxu0
      %2504 = vmatpush.msra.mxu0 0.0
      %2505 = vmatpush.msra.mxu0 0.0
      %2506 = vmatpush.msra.mxu0 0.0
      %2507 = vmatpush.msra.mxu0 0.0
      %2508 = vmatpush.msra.mxu0 0.0
      %2509 = vmatpush.msra.mxu0 0.0
      %2510 = vmatpush.msra.mxu0 0.0
      %2511 = vmatpush.msra.mxu0 0.0
      %2512 = vmatpush.msra.mxu0 0.0
      %2513 = vmatpush.msra.mxu0 0.0
      %2514 = vmatpush.msra.mxu0 0.0
      %2515 = vmatpush.msra.mxu0 0.0
      %2516 = vmatpush.msra.mxu0 0.0
      %2517 = vmatpush.msra.mxu0 0.0
      %2518 = vmatpush.msra.mxu0 0.0
      %2519 = vmatpush.msra.mxu0 %v2442
      %2520 = vmatmul.f32.gmra.mxu0 %v2434
      %v2521 = vpop.f32.mrf.mxu0
      %v2522 = vadd.f32 0.0, %v2521
      %2523 = vdwg.mxu0
      %v2524 = vadd.f32 %v2408, %v2462
      %v2525 = vadd.f32 %v2409, %v2482
      %v2526 = vadd.f32 %v2410, %v2502
      %v2527 = vadd.f32 %v2411, %v2522
      %v2528 = vld [vmem:[%s1185] sm:$0xf]
      %v2530 = vperm.slane %v2528, 0
      %v2531 = vperm.slane %v2528, 1
      %v2532 = vperm.slane %v2528, 2
      %v2533 = vperm.slane %v2528, 3
      %2534 = vrot.lane.b32.xlu0 %v2530, 18
      %v2535 = vpop.permute.xlu0 %2534
      %2536 = vrot.lane.b32.xlu0 %v2531, 18
      %v2537 = vpop.permute.xlu0 %2536
      %2538 = vrot.lane.b32.xlu0 %v2532, 18
      %v2539 = vpop.permute.xlu0 %2538
      %2540 = vrot.lane.b32.xlu0 %v2533, 18
      %v2541 = vpop.permute.xlu0 %2540
      %v2542 = vsel %vm1200, %v2535, %v2537
      %v2543 = vsel %vm1200, %v2537, %v2539
      %v2544 = vsel %vm1200, %v2539, %v2541
      %v2550 = vmul.f32 %v1870, %v2535
      %v2551 = vmul.f32 %v1871, %v2542
      %v2552 = vmul.f32 %v1872, %v2543
      %v2553 = vmul.f32 %v1873, %v2544
      %v2554 = vmul.f32 %v1890, %v2541
      %s2555 = scalar_lea.vmem %s1, 896
      %v2556 = vld [vmem:[%s2555] sm:$0xf]
      %2562 = vrot.lane.b32.xlu0 %v2550, 110
      %v2563 = vpop.permute.xlu0 %2562
      %2564 = vrot.lane.b32.xlu0 %v2551, 110
      %v2565 = vpop.permute.xlu0 %2564
      %2566 = vrot.lane.b32.xlu0 %v2552, 110
      %v2567 = vpop.permute.xlu0 %2566
      %2568 = vrot.lane.b32.xlu0 %v2553, 110
      %v2569 = vpop.permute.xlu0 %2568
      %2570 = vrot.lane.b32.xlu0 %v2554, 110
      %v2571 = vpop.permute.xlu0 %2570
      %v2572 = vsel %vm1231, %v2563, %v2565
      %v2573 = vsel %vm1231, %v2565, %v2567
      %v2574 = vsel %vm1231, %v2567, %v2569
      %v2575 = vsel %vm1231, %v2569, %v2571
      %v2577 = vsel %vm1939, %v2556, 0
      %v2579 = vsel %vm1768, %v2572, 0
      %v2581 = vsel %vm1768, %v2573, 0
      %v2583 = vsel %vm1768, %v2574, 0
      %v2585 = vsel %vm1768, %v2575, 0
      %2587 = vmatpush.msra.mxu0 0.0
      %2588 = vmatpush.msra.mxu0 0.0
      %2589 = vmatpush.msra.mxu0 0.0
      %2590 = vmatpush.msra.mxu0 0.0
      %2591 = vmatpush.msra.mxu0 0.0
      %2592 = vmatpush.msra.mxu0 0.0
      %2593 = vmatpush.msra.mxu0 0.0
      %2594 = vmatpush.msra.mxu0 0.0
      %2595 = vmatpush.msra.mxu0 0.0
      %2596 = vmatpush.msra.mxu0 0.0
      %2597 = vmatpush.msra.mxu0 0.0
      %2598 = vmatpush.msra.mxu0 0.0
      %2599 = vmatpush.msra.mxu0 0.0
      %2600 = vmatpush.msra.mxu0 0.0
      %2601 = vmatpush.msra.mxu0 0.0
      %2602 = vmatpush.msra.mxu0 %v2579
      %2603 = vmatmul.f32.gmra.mxu0 %v2577
      %v2604 = vpop.f32.mrf.mxu0
      %v2605 = vadd.f32 0.0, %v2604
      %2606 = vdwg.mxu0
      %2607 = vmatpush.msra.mxu0 0.0
      %2608 = vmatpush.msra.mxu0 0.0
      %2609 = vmatpush.msra.mxu0 0.0
      %2610 = vmatpush.msra.mxu0 0.0
      %2611 = vmatpush.msra.mxu0 0.0
      %2612 = vmatpush.msra.mxu0 0.0
      %2613 = vmatpush.msra.mxu0 0.0
      %2614 = vmatpush.msra.mxu0 0.0
      %2615 = vmatpush.msra.mxu0 0.0
      %2616 = vmatpush.msra.mxu0 0.0
      %2617 = vmatpush.msra.mxu0 0.0
      %2618 = vmatpush.msra.mxu0 0.0
      %2619 = vmatpush.msra.mxu0 0.0
      %2620 = vmatpush.msra.mxu0 0.0
      %2621 = vmatpush.msra.mxu0 0.0
      %2622 = vmatpush.msra.mxu0 %v2581
      %2623 = vmatmul.f32.gmra.mxu0 %v2577
      %v2624 = vpop.f32.mrf.mxu0
      %v2625 = vadd.f32 0.0, %v2624
      %2626 = vdwg.mxu0
      %2627 = vmatpush.msra.mxu0 0.0
      %2628 = vmatpush.msra.mxu0 0.0
      %2629 = vmatpush.msra.mxu0 0.0
      %2630 = vmatpush.msra.mxu0 0.0
      %2631 = vmatpush.msra.mxu0 0.0
      %2632 = vmatpush.msra.mxu0 0.0
      %2633 = vmatpush.msra.mxu0 0.0
      %2634 = vmatpush.msra.mxu0 0.0
      %2635 = vmatpush.msra.mxu0 0.0
      %2636 = vmatpush.msra.mxu0 0.0
      %2637 = vmatpush.msra.mxu0 0.0
      %2638 = vmatpush.msra.mxu0 0.0
      %2639 = vmatpush.msra.mxu0 0.0
      %2640 = vmatpush.msra.mxu0 0.0
      %2641 = vmatpush.msra.mxu0 0.0
      %2642 = vmatpush.msra.mxu0 %v2583
      %2643 = vmatmul.f32.gmra.mxu0 %v2577
      %v2644 = vpop.f32.mrf.mxu0
      %v2645 = vadd.f32 0.0, %v2644
      %2646 = vdwg.mxu0
      %2647 = vmatpush.msra.mxu0 0.0
      %2648 = vmatpush.msra.mxu0 0.0
      %2649 = vmatpush.msra.mxu0 0.0
      %2650 = vmatpush.msra.mxu0 0.0
      %2651 = vmatpush.msra.mxu0 0.0
      %2652 = vmatpush.msra.mxu0 0.0
      %2653 = vmatpush.msra.mxu0 0.0
      %2654 = vmatpush.msra.mxu0 0.0
      %2655 = vmatpush.msra.mxu0 0.0
      %2656 = vmatpush.msra.mxu0 0.0
      %2657 = vmatpush.msra.mxu0 0.0
      %2658 = vmatpush.msra.mxu0 0.0
      %2659 = vmatpush.msra.mxu0 0.0
      %2660 = vmatpush.msra.mxu0 0.0
      %2661 = vmatpush.msra.mxu0 0.0
      %2662 = vmatpush.msra.mxu0 %v2585
      %2663 = vmatmul.f32.gmra.mxu0 %v2577
      %v2664 = vpop.f32.mrf.mxu0
      %v2665 = vadd.f32 0.0, %v2664
      %2666 = vdwg.mxu0
      %v2667 = vadd.f32 %v2524, %v2605
      %v2668 = vadd.f32 %v2525, %v2625
      %v2669 = vadd.f32 %v2526, %v2645
      %v2670 = vadd.f32 %v2527, %v2665
      %v2671 = vld [vmem:[%s1331] sm:$0xf]
      %v2673 = vperm.slane %v2671, 0
      %v2674 = vperm.slane %v2671, 1
      %v2675 = vperm.slane %v2671, 2
      %v2676 = vperm.slane %v2671, 3
      %2677 = vrot.lane.b32.xlu0 %v2673, 32
      %v2678 = vpop.permute.xlu0 %2677
      %2679 = vrot.lane.b32.xlu0 %v2674, 32
      %v2680 = vpop.permute.xlu0 %2679
      %2681 = vrot.lane.b32.xlu0 %v2675, 32
      %v2682 = vpop.permute.xlu0 %2681
      %2683 = vrot.lane.b32.xlu0 %v2676, 32
      %v2684 = vpop.permute.xlu0 %2683
      %v2685 = vsel %vm1346, %v2678, %v2680
      %v2686 = vsel %vm1346, %v2680, %v2682
      %v2687 = vsel %vm1346, %v2682, %v2684
      %v2693 = vmul.f32 %v1870, %v2678
      %v2694 = vmul.f32 %v1871, %v2685
      %v2695 = vmul.f32 %v1872, %v2686
      %v2696 = vmul.f32 %v1873, %v2687
      %v2697 = vmul.f32 %v1890, %v2684
      %s2698 = scalar_lea.vmem %s1, 960
      %v2699 = vld [vmem:[%s2698] sm:$0xf]
      %2705 = vrot.lane.b32.xlu0 %v2693, 96
      %v2706 = vpop.permute.xlu0 %2705
      %2707 = vrot.lane.b32.xlu0 %v2694, 96
      %v2708 = vpop.permute.xlu0 %2707
      %2709 = vrot.lane.b32.xlu0 %v2695, 96
      %v2710 = vpop.permute.xlu0 %2709
      %2711 = vrot.lane.b32.xlu0 %v2696, 96
      %v2712 = vpop.permute.xlu0 %2711
      %2713 = vrot.lane.b32.xlu0 %v2697, 96
      %v2714 = vpop.permute.xlu0 %2713
      %v2715 = vsel %vm1377, %v2706, %v2708
      %v2716 = vsel %vm1377, %v2708, %v2710
      %v2717 = vsel %vm1377, %v2710, %v2712
      %v2718 = vsel %vm1377, %v2712, %v2714
      %v2720 = vsel %vm1939, %v2699, 0
      %v2722 = vsel %vm1768, %v2715, 0
      %v2724 = vsel %vm1768, %v2716, 0
      %v2726 = vsel %vm1768, %v2717, 0
      %v2728 = vsel %vm1768, %v2718, 0
      %2730 = vmatpush.msra.mxu0 0.0
      %2731 = vmatpush.msra.mxu0 0.0
      %2732 = vmatpush.msra.mxu0 0.0
      %2733 = vmatpush.msra.mxu0 0.0
      %2734 = vmatpush.msra.mxu0 0.0
      %2735 = vmatpush.msra.mxu0 0.0
      %2736 = vmatpush.msra.mxu0 0.0
      %2737 = vmatpush.msra.mxu0 0.0
      %2738 = vmatpush.msra.mxu0 0.0
      %2739 = vmatpush.msra.mxu0 0.0
      %2740 = vmatpush.msra.mxu0 0.0
      %2741 = vmatpush.msra.mxu0 0.0
      %2742 = vmatpush.msra.mxu0 0.0
      %2743 = vmatpush.msra.mxu0 0.0
      %2744 = vmatpush.msra.mxu0 0.0
      %2745 = vmatpush.msra.mxu0 %v2722
      %2746 = vmatmul.f32.gmra.mxu0 %v2720
      %v2747 = vpop.f32.mrf.mxu0
      %v2748 = vadd.f32 0.0, %v2747
      %2749 = vdwg.mxu0
      %2750 = vmatpush.msra.mxu0 0.0
      %2751 = vmatpush.msra.mxu0 0.0
      %2752 = vmatpush.msra.mxu0 0.0
      %2753 = vmatpush.msra.mxu0 0.0
      %2754 = vmatpush.msra.mxu0 0.0
      %2755 = vmatpush.msra.mxu0 0.0
      %2756 = vmatpush.msra.mxu0 0.0
      %2757 = vmatpush.msra.mxu0 0.0
      %2758 = vmatpush.msra.mxu0 0.0
      %2759 = vmatpush.msra.mxu0 0.0
      %2760 = vmatpush.msra.mxu0 0.0
      %2761 = vmatpush.msra.mxu0 0.0
      %2762 = vmatpush.msra.mxu0 0.0
      %2763 = vmatpush.msra.mxu0 0.0
      %2764 = vmatpush.msra.mxu0 0.0
      %2765 = vmatpush.msra.mxu0 %v2724
      %2766 = vmatmul.f32.gmra.mxu0 %v2720
      %v2767 = vpop.f32.mrf.mxu0
      %v2768 = vadd.f32 0.0, %v2767
      %2769 = vdwg.mxu0
      %2770 = vmatpush.msra.mxu0 0.0
      %2771 = vmatpush.msra.mxu0 0.0
      %2772 = vmatpush.msra.mxu0 0.0
      %2773 = vmatpush.msra.mxu0 0.0
      %2774 = vmatpush.msra.mxu0 0.0
      %2775 = vmatpush.msra.mxu0 0.0
      %2776 = vmatpush.msra.mxu0 0.0
      %2777 = vmatpush.msra.mxu0 0.0
      %2778 = vmatpush.msra.mxu0 0.0
      %2779 = vmatpush.msra.mxu0 0.0
      %2780 = vmatpush.msra.mxu0 0.0
      %2781 = vmatpush.msra.mxu0 0.0
      %2782 = vmatpush.msra.mxu0 0.0
      %2783 = vmatpush.msra.mxu0 0.0
      %2784 = vmatpush.msra.mxu0 0.0
      %2785 = vmatpush.msra.mxu0 %v2726
      %2786 = vmatmul.f32.gmra.mxu0 %v2720
      %v2787 = vpop.f32.mrf.mxu0
      %v2788 = vadd.f32 0.0, %v2787
      %2789 = vdwg.mxu0
      %2790 = vmatpush.msra.mxu0 0.0
      %2791 = vmatpush.msra.mxu0 0.0
      %2792 = vmatpush.msra.mxu0 0.0
      %2793 = vmatpush.msra.mxu0 0.0
      %2794 = vmatpush.msra.mxu0 0.0
      %2795 = vmatpush.msra.mxu0 0.0
      %2796 = vmatpush.msra.mxu0 0.0
      %2797 = vmatpush.msra.mxu0 0.0
      %2798 = vmatpush.msra.mxu0 0.0
      %2799 = vmatpush.msra.mxu0 0.0
      %2800 = vmatpush.msra.mxu0 0.0
      %2801 = vmatpush.msra.mxu0 0.0
      %2802 = vmatpush.msra.mxu0 0.0
      %2803 = vmatpush.msra.mxu0 0.0
      %2804 = vmatpush.msra.mxu0 0.0
      %2805 = vmatpush.msra.mxu0 %v2728
      %2806 = vmatmul.f32.gmra.mxu0 %v2720
      %v2807 = vpop.f32.mrf.mxu0
      %v2808 = vadd.f32 0.0, %v2807
      %2809 = vdwg.mxu0
      %v2810 = vadd.f32 %v2667, %v2748
      %v2811 = vadd.f32 %v2668, %v2768
      %v2812 = vadd.f32 %v2669, %v2788
      %v2813 = vadd.f32 %v2670, %v2808
      %v2814 = vld [vmem:[%s1477] sm:$0xf]
      %v2816 = vperm.slane %v2814, 0
      %v2817 = vperm.slane %v2814, 1
      %v2818 = vperm.slane %v2814, 2
      %v2819 = vperm.slane %v2814, 3
      %2820 = vrot.lane.b32.xlu0 %v2816, 33
      %v2821 = vpop.permute.xlu0 %2820
      %2822 = vrot.lane.b32.xlu0 %v2817, 33
      %v2823 = vpop.permute.xlu0 %2822
      %2824 = vrot.lane.b32.xlu0 %v2818, 33
      %v2825 = vpop.permute.xlu0 %2824
      %2826 = vrot.lane.b32.xlu0 %v2819, 33
      %v2827 = vpop.permute.xlu0 %2826
      %v2828 = vsel %vm1492, %v2821, %v2823
      %v2829 = vsel %vm1492, %v2823, %v2825
      %v2830 = vsel %vm1492, %v2825, %v2827
      %v2836 = vmul.f32 %v1870, %v2821
      %v2837 = vmul.f32 %v1871, %v2828
      %v2838 = vmul.f32 %v1872, %v2829
      %v2839 = vmul.f32 %v1873, %v2830
      %v2840 = vmul.f32 %v1890, %v2827
      %s2841 = scalar_lea.vmem %s1, 1024
      %v2842 = vld [vmem:[%s2841] sm:$0xf]
      %2848 = vrot.lane.b32.xlu0 %v2836, 95
      %v2849 = vpop.permute.xlu0 %2848
      %2850 = vrot.lane.b32.xlu0 %v2837, 95
      %v2851 = vpop.permute.xlu0 %2850
      %2852 = vrot.lane.b32.xlu0 %v2838, 95
      %v2853 = vpop.permute.xlu0 %2852
      %2854 = vrot.lane.b32.xlu0 %v2839, 95
      %v2855 = vpop.permute.xlu0 %2854
      %2856 = vrot.lane.b32.xlu0 %v2840, 95
      %v2857 = vpop.permute.xlu0 %2856
      %v2858 = vsel %vm1523, %v2849, %v2851
      %v2859 = vsel %vm1523, %v2851, %v2853
      %v2860 = vsel %vm1523, %v2853, %v2855
      %v2861 = vsel %vm1523, %v2855, %v2857
      %v2863 = vsel %vm1939, %v2842, 0
      %v2865 = vsel %vm1768, %v2858, 0
      %v2867 = vsel %vm1768, %v2859, 0
      %v2869 = vsel %vm1768, %v2860, 0
      %v2871 = vsel %vm1768, %v2861, 0
      %2873 = vmatpush.msra.mxu0 0.0
      %2874 = vmatpush.msra.mxu0 0.0
      %2875 = vmatpush.msra.mxu0 0.0
      %2876 = vmatpush.msra.mxu0 0.0
      %2877 = vmatpush.msra.mxu0 0.0
      %2878 = vmatpush.msra.mxu0 0.0
      %2879 = vmatpush.msra.mxu0 0.0
      %2880 = vmatpush.msra.mxu0 0.0
      %2881 = vmatpush.msra.mxu0 0.0
      %2882 = vmatpush.msra.mxu0 0.0
      %2883 = vmatpush.msra.mxu0 0.0
      %2884 = vmatpush.msra.mxu0 0.0
      %2885 = vmatpush.msra.mxu0 0.0
      %2886 = vmatpush.msra.mxu0 0.0
      %2887 = vmatpush.msra.mxu0 0.0
      %2888 = vmatpush.msra.mxu0 %v2865
      %2889 = vmatmul.f32.gmra.mxu0 %v2863
      %v2890 = vpop.f32.mrf.mxu0
      %v2891 = vadd.f32 0.0, %v2890
      %2892 = vdwg.mxu0
      %2893 = vmatpush.msra.mxu0 0.0
      %2894 = vmatpush.msra.mxu0 0.0
      %2895 = vmatpush.msra.mxu0 0.0
      %2896 = vmatpush.msra.mxu0 0.0
      %2897 = vmatpush.msra.mxu0 0.0
      %2898 = vmatpush.msra.mxu0 0.0
      %2899 = vmatpush.msra.mxu0 0.0
      %2900 = vmatpush.msra.mxu0 0.0
      %2901 = vmatpush.msra.mxu0 0.0
      %2902 = vmatpush.msra.mxu0 0.0
      %2903 = vmatpush.msra.mxu0 0.0
      %2904 = vmatpush.msra.mxu0 0.0
      %2905 = vmatpush.msra.mxu0 0.0
      %2906 = vmatpush.msra.mxu0 0.0
      %2907 = vmatpush.msra.mxu0 0.0
      %2908 = vmatpush.msra.mxu0 %v2867
      %2909 = vmatmul.f32.gmra.mxu0 %v2863
      %v2910 = vpop.f32.mrf.mxu0
      %v2911 = vadd.f32 0.0, %v2910
      %2912 = vdwg.mxu0
      %2913 = vmatpush.msra.mxu0 0.0
      %2914 = vmatpush.msra.mxu0 0.0
      %2915 = vmatpush.msra.mxu0 0.0
      %2916 = vmatpush.msra.mxu0 0.0
      %2917 = vmatpush.msra.mxu0 0.0
      %2918 = vmatpush.msra.mxu0 0.0
      %2919 = vmatpush.msra.mxu0 0.0
      %2920 = vmatpush.msra.mxu0 0.0
      %2921 = vmatpush.msra.mxu0 0.0
      %2922 = vmatpush.msra.mxu0 0.0
      %2923 = vmatpush.msra.mxu0 0.0
      %2924 = vmatpush.msra.mxu0 0.0
      %2925 = vmatpush.msra.mxu0 0.0
      %2926 = vmatpush.msra.mxu0 0.0
      %2927 = vmatpush.msra.mxu0 0.0
      %2928 = vmatpush.msra.mxu0 %v2869
      %2929 = vmatmul.f32.gmra.mxu0 %v2863
      %v2930 = vpop.f32.mrf.mxu0
      %v2931 = vadd.f32 0.0, %v2930
      %2932 = vdwg.mxu0
      %2933 = vmatpush.msra.mxu0 0.0
      %2934 = vmatpush.msra.mxu0 0.0
      %2935 = vmatpush.msra.mxu0 0.0
      %2936 = vmatpush.msra.mxu0 0.0
      %2937 = vmatpush.msra.mxu0 0.0
      %2938 = vmatpush.msra.mxu0 0.0
      %2939 = vmatpush.msra.mxu0 0.0
      %2940 = vmatpush.msra.mxu0 0.0
      %2941 = vmatpush.msra.mxu0 0.0
      %2942 = vmatpush.msra.mxu0 0.0
      %2943 = vmatpush.msra.mxu0 0.0
      %2944 = vmatpush.msra.mxu0 0.0
      %2945 = vmatpush.msra.mxu0 0.0
      %2946 = vmatpush.msra.mxu0 0.0
      %2947 = vmatpush.msra.mxu0 0.0
      %2948 = vmatpush.msra.mxu0 %v2871
      %2949 = vmatmul.f32.gmra.mxu0 %v2863
      %v2950 = vpop.f32.mrf.mxu0
      %v2951 = vadd.f32 0.0, %v2950
      %2952 = vdwg.mxu0
      %v2953 = vadd.f32 %v2810, %v2891
      %v2954 = vadd.f32 %v2811, %v2911
      %v2955 = vadd.f32 %v2812, %v2931
      %v2956 = vadd.f32 %v2813, %v2951
      %v2957 = vld [vmem:[%s1623] sm:$0xf]
      %v2959 = vperm.slane %v2957, 0
      %v2960 = vperm.slane %v2957, 1
      %v2961 = vperm.slane %v2957, 2
      %v2962 = vperm.slane %v2957, 3
      %2963 = vrot.lane.b32.xlu0 %v2959, 34
      %v2964 = vpop.permute.xlu0 %2963
      %2965 = vrot.lane.b32.xlu0 %v2960, 34
      %v2966 = vpop.permute.xlu0 %2965
      %2967 = vrot.lane.b32.xlu0 %v2961, 34
      %v2968 = vpop.permute.xlu0 %2967
      %2969 = vrot.lane.b32.xlu0 %v2962, 34
      %v2970 = vpop.permute.xlu0 %2969
      %v2971 = vsel %vm445, %v2964, %v2966
      %v2972 = vsel %vm445, %v2966, %v2968
      %v2973 = vsel %vm445, %v2968, %v2970
      %v2979 = vmul.f32 %v1870, %v2964
      %v2980 = vmul.f32 %v1871, %v2971
      %v2981 = vmul.f32 %v1872, %v2972
      %v2982 = vmul.f32 %v1873, %v2973
      %v2983 = vmul.f32 %v1890, %v2970
      %s2984 = scalar_lea.vmem %s1, 1088
      %v2985 = vld [vmem:[%s2984] sm:$0xf]
      %2991 = vrot.lane.b32.xlu0 %v2979, 94
      %v2992 = vpop.permute.xlu0 %2991
      %2993 = vrot.lane.b32.xlu0 %v2980, 94
      %v2994 = vpop.permute.xlu0 %2993
      %2995 = vrot.lane.b32.xlu0 %v2981, 94
      %v2996 = vpop.permute.xlu0 %2995
      %2997 = vrot.lane.b32.xlu0 %v2982, 94
      %v2998 = vpop.permute.xlu0 %2997
      %2999 = vrot.lane.b32.xlu0 %v2983, 94
      %v3000 = vpop.permute.xlu0 %2999
      %v3001 = vsel %vm1668, %v2992, %v2994
      %v3002 = vsel %vm1668, %v2994, %v2996
      %v3003 = vsel %vm1668, %v2996, %v2998
      %v3004 = vsel %vm1668, %v2998, %v3000
      %v3006 = vsel %vm1939, %v2985, 0
      %v3008 = vsel %vm1768, %v3001, 0
      %v3010 = vsel %vm1768, %v3002, 0
      %v3012 = vsel %vm1768, %v3003, 0
      %v3014 = vsel %vm1768, %v3004, 0
      %3016 = vmatpush.msra.mxu0 0.0
      %3017 = vmatpush.msra.mxu0 0.0
      %3018 = vmatpush.msra.mxu0 0.0
      %3019 = vmatpush.msra.mxu0 0.0
      %3020 = vmatpush.msra.mxu0 0.0
      %3021 = vmatpush.msra.mxu0 0.0
      %3022 = vmatpush.msra.mxu0 0.0
      %3023 = vmatpush.msra.mxu0 0.0
      %3024 = vmatpush.msra.mxu0 0.0
      %3025 = vmatpush.msra.mxu0 0.0
      %3026 = vmatpush.msra.mxu0 0.0
      %3027 = vmatpush.msra.mxu0 0.0
      %3028 = vmatpush.msra.mxu0 0.0
      %3029 = vmatpush.msra.mxu0 0.0
      %3030 = vmatpush.msra.mxu0 0.0
      %3031 = vmatpush.msra.mxu0 %v3008
      %3032 = vmatmul.f32.gmra.mxu0 %v3006
      %v3033 = vpop.f32.mrf.mxu0
      %v3034 = vadd.f32 0.0, %v3033
      %3035 = vdwg.mxu0
      %3036 = vmatpush.msra.mxu0 0.0
      %3037 = vmatpush.msra.mxu0 0.0
      %3038 = vmatpush.msra.mxu0 0.0
      %3039 = vmatpush.msra.mxu0 0.0
      %3040 = vmatpush.msra.mxu0 0.0
      %3041 = vmatpush.msra.mxu0 0.0
      %3042 = vmatpush.msra.mxu0 0.0
      %3043 = vmatpush.msra.mxu0 0.0
      %3044 = vmatpush.msra.mxu0 0.0
      %3045 = vmatpush.msra.mxu0 0.0
      %3046 = vmatpush.msra.mxu0 0.0
      %3047 = vmatpush.msra.mxu0 0.0
      %3048 = vmatpush.msra.mxu0 0.0
      %3049 = vmatpush.msra.mxu0 0.0
      %3050 = vmatpush.msra.mxu0 0.0
      %3051 = vmatpush.msra.mxu0 %v3010
      %3052 = vmatmul.f32.gmra.mxu0 %v3006
      %v3053 = vpop.f32.mrf.mxu0
      %v3054 = vadd.f32 0.0, %v3053
      %3055 = vdwg.mxu0
      %3056 = vmatpush.msra.mxu0 0.0
      %3057 = vmatpush.msra.mxu0 0.0
      %3058 = vmatpush.msra.mxu0 0.0
      %3059 = vmatpush.msra.mxu0 0.0
      %3060 = vmatpush.msra.mxu0 0.0
      %3061 = vmatpush.msra.mxu0 0.0
      %3062 = vmatpush.msra.mxu0 0.0
      %3063 = vmatpush.msra.mxu0 0.0
      %3064 = vmatpush.msra.mxu0 0.0
      %3065 = vmatpush.msra.mxu0 0.0
      %3066 = vmatpush.msra.mxu0 0.0
      %3067 = vmatpush.msra.mxu0 0.0
      %3068 = vmatpush.msra.mxu0 0.0
      %3069 = vmatpush.msra.mxu0 0.0
      %3070 = vmatpush.msra.mxu0 0.0
      %3071 = vmatpush.msra.mxu0 %v3012
      %3072 = vmatmul.f32.gmra.mxu0 %v3006
      %v3073 = vpop.f32.mrf.mxu0
      %v3074 = vadd.f32 0.0, %v3073
      %3075 = vdwg.mxu0
      %3076 = vmatpush.msra.mxu0 0.0
      %3077 = vmatpush.msra.mxu0 0.0
      %3078 = vmatpush.msra.mxu0 0.0
      %3079 = vmatpush.msra.mxu0 0.0
      %3080 = vmatpush.msra.mxu0 0.0
      %3081 = vmatpush.msra.mxu0 0.0
      %3082 = vmatpush.msra.mxu0 0.0
      %3083 = vmatpush.msra.mxu0 0.0
      %3084 = vmatpush.msra.mxu0 0.0
      %3085 = vmatpush.msra.mxu0 0.0
      %3086 = vmatpush.msra.mxu0 0.0
      %3087 = vmatpush.msra.mxu0 0.0
      %3088 = vmatpush.msra.mxu0 0.0
      %3089 = vmatpush.msra.mxu0 0.0
      %3090 = vmatpush.msra.mxu0 0.0
      %3091 = vmatpush.msra.mxu0 %v3014
      %3092 = vmatmul.f32.gmra.mxu0 %v3006
      %v3093 = vpop.f32.mrf.mxu0
      %v3094 = vadd.f32 0.0, %v3093
      %3095 = vdwg.mxu0
      %v3096 = vadd.f32 %v2953, %v3034
      %v3097 = vadd.f32 %v2954, %v3054
      %v3098 = vadd.f32 %v2955, %v3074
      %v3099 = vadd.f32 %v2956, %v3094
      %v3100 = vsel %vm1768, %v3096, 0.0
      %v3101 = vsel %vm1768, %v3097, 0.0
      %v3102 = vadd.f32 %v3100, %v3101
      %v3103 = vsel %vm1768, %v3098, 0.0
      %v3104 = vadd.f32 %v3102, %v3103
      %v3105 = vsel %vm1768, %v3099, 0.0
      %v3106 = vadd.f32 %v3104, %v3105
      %3107 = vadd.xlane.f32.xlu0 %v3106
      %v3108 = vpop.xlane.xlu0 %3107
      %v3109 = vmul.f32 %v3108, %v1784
      %v3110 = vsub.f32 %v3096, %v3109
      %v3111 = vsub.f32 %v3097, %v3109
      %v3112 = vsub.f32 %v3098, %v3109
      %v3113 = vsub.f32 %v3099, %v3109
      %v3114 = vmul.f32 %v3110, %v3110
      %v3115 = vmul.f32 %v3111, %v3111
      %v3116 = vmul.f32 %v3112, %v3112
      %v3117 = vmul.f32 %v3113, %v3113
      %v3118 = vsel %vm1768, %v3114, 0.0
      %v3119 = vsel %vm1768, %v3115, 0.0
      %v3120 = vadd.f32 %v3118, %v3119
      %v3121 = vsel %vm1768, %v3116, 0.0
      %v3122 = vadd.f32 %v3120, %v3121
      %v3123 = vsel %vm1768, %v3117, 0.0
      %v3124 = vadd.f32 %v3122, %v3123
      %3125 = vadd.xlane.f32.xlu0 %v3124
      %v3126 = vpop.xlane.xlu0 %3125
      %v3127 = vmul.f32 %v3126, %v1784
      %v3128 = vadd.f32 %v3127, 1e-05
      %v3129 = vrsqrt.pop %v3128
      %v3130 = vmul.f32 %v3129, %v3128
      %v3131 = vmul.f32 %v3130, %v3129
      %v3132 = vmul.f32 0.5, %v3131
      %v3133 = vsub.f32 1.5, %v3132
      %v3134 = vmul.f32 %v3129, %v3133
      %vm3135 = vweird.f32 %v3128
      %vm3136 = vweird.f32 %v3129
      %vm3137 = vmor %vm3135, %vm3136
      %v3138 = vsel %vm3137, %v3129, %v3134
      %v3139 = vmul.f32 %v3110, %v3138
      %v3140 = vmul.f32 %v3111, %v3138
      %v3141 = vmul.f32 %v3112, %v3138
      %v3142 = vmul.f32 %v3113, %v3138
      %s3143 = scalar_lea.vmem %s2, 64
      %v3144 = vld [vmem:[%s3143] sm:$0xf]
      %3146 = vset.pattern.permute.xlu0 0
      %3147 = vperm.xlu0 %3146, %v3144
      %v3148 = vpop.permute.xlu0 %3147
      %v3150 = vmul.f32 %v3139, %v3148
      %v3151 = vmul.f32 %v3140, %v3148
      %v3152 = vmul.f32 %v3141, %v3148
      %v3153 = vmul.f32 %v3142, %v3148
      %s3154 = scalar_lea.vmem %s3, 64
      %v3155 = vld [vmem:[%s3154] sm:$0xf]
      %3157 = vset.pattern.permute.xlu0 0
      %3158 = vperm.xlu0 %3157, %v3155
      %v3159 = vpop.permute.xlu0 %3158
      %v3161 = vadd.f32 %v3150, %v3159
      %v3162 = vadd.f32 %v3151, %v3159
      %v3163 = vadd.f32 %v3152, %v3159
      %v3164 = vadd.f32 %v3153, %v3159
      %v3165 = vmax.f32 %v3161, 0.0
      %v3166 = vmax.f32 %v3162, 0.0
      %v3167 = vmax.f32 %v3163, 0.0
      %v3168 = vmax.f32 %v3164, 0.0
      %v3169 = vld [vmem:[%s4] sm:$0xff]
      %v3170 = vld [vmem:[%s4 + $0x8] sm:$0xff]
      %v3171 = vld [vmem:[%s4 + $0x10] sm:$0xff]
      %v3172 = vld [vmem:[%s4 + $0x18] sm:$0xff]
      %v3173 = vld [vmem:[%s4 + $0x20] sm:$0xff]
      %v3174 = vld [vmem:[%s4 + $0x28] sm:$0xff]
      %v3175 = vld [vmem:[%s4 + $0x30] sm:$0xff]
      %v3176 = vld [vmem:[%s4 + $0x38] sm:$0xff]
      %v3177 = vld [vmem:[%s4 + $0x40] sm:$0xff]
      %v3178 = vld [vmem:[%s4 + $0x48] sm:$0xff]
      %v3179 = vld [vmem:[%s4 + $0x50] sm:$0xff]
      %v3180 = vld [vmem:[%s4 + $0x58] sm:$0xff]
      %v3181 = vld [vmem:[%s4 + $0x60] sm:$0xff]
      %v3182 = vld [vmem:[%s4 + $0x68] sm:$0xff]
      %v3183 = vld [vmem:[%s4 + $0x70] sm:$0xff]
      %v3184 = vld [vmem:[%s4 + $0x78] sm:$0xff]
      %v3185 = vld [vmem:[%s4 + $0x80] sm:$0xff]
      %v3186 = vld [vmem:[%s4 + $0x88] sm:$0xff]
      %v3187 = vld [vmem:[%s4 + $0x90] sm:$0xff]
      %v3188 = vld [vmem:[%s4 + $0x98] sm:$0xff]
      %v3189 = vld [vmem:[%s4 + $0xa0] sm:$0xff]
      %v3190 = vld [vmem:[%s4 + $0xa8] sm:$0xff]
      %v3191 = vld [vmem:[%s4 + $0xb0] sm:$0xff]
      %v3192 = vld [vmem:[%s4 + $0xb8] sm:$0xff]
      %v3193 = vld [vmem:[%s4 + $0xc0] sm:$0xff]
      %v3194 = vld [vmem:[%s4 + $0xc8] sm:$0xff]
      %v3195 = vld [vmem:[%s4 + $0xd0] sm:$0xff]
      %v3196 = vld [vmem:[%s4 + $0xd8] sm:$0xff]
      %v3197 = vld [vmem:[%s4 + $0xe0] sm:$0xff]
      %v3198 = vld [vmem:[%s4 + $0xe8] sm:$0xff]
      %v3199 = vld [vmem:[%s4 + $0xf0] sm:$0xff]
      %v3200 = vld [vmem:[%s4 + $0xf8] sm:$0xff]
      %v3201 = vld [vmem:[%s4 + $0x100] sm:$0xff]
      %v3202 = vld [vmem:[%s4 + $0x108] sm:$0xff]
      %v3203 = vld [vmem:[%s4 + $0x110] sm:$0xff]
      %v3204 = vld [vmem:[%s4 + $0x118] sm:$0xff]
      %v3205 = vld [vmem:[%s4 + $0x120] sm:$0xff]
      %v3206 = vld [vmem:[%s4 + $0x128] sm:$0xff]
      %v3207 = vld [vmem:[%s4 + $0x130] sm:$0xff]
      %v3208 = vld [vmem:[%s4 + $0x138] sm:$0xff]
      %v3209 = vld [vmem:[%s4 + $0x140] sm:$0xff]
      %v3210 = vld [vmem:[%s4 + $0x148] sm:$0xff]
      %v3211 = vld [vmem:[%s4 + $0x150] sm:$0xff]
      %v3212 = vld [vmem:[%s4 + $0x158] sm:$0xff]
      %v3213 = vld [vmem:[%s4 + $0x160] sm:$0xff]
      %v3214 = vld [vmem:[%s4 + $0x168] sm:$0xff]
      %v3215 = vld [vmem:[%s4 + $0x170] sm:$0xff]
      %v3216 = vld [vmem:[%s4 + $0x178] sm:$0xff]
      %v3217 = vld [vmem:[%s4 + $0x180] sm:$0xff]
      %v3218 = vld [vmem:[%s4 + $0x188] sm:$0xff]
      %v3219 = vld [vmem:[%s4 + $0x190] sm:$0xff]
      %v3220 = vld [vmem:[%s4 + $0x198] sm:$0xff]
      %v3221 = vld [vmem:[%s4 + $0x1a0] sm:$0xff]
      %v3222 = vld [vmem:[%s4 + $0x1a8] sm:$0xff]
      %v3223 = vld [vmem:[%s4 + $0x1b0] sm:$0xff]
      %v3224 = vld [vmem:[%s4 + $0x1b8] sm:$0xff]
      %v3225 = vld [vmem:[%s4 + $0x1c0] sm:$0xff]
      %v3226 = vld [vmem:[%s4 + $0x1c8] sm:$0xff]
      %v3227 = vld [vmem:[%s4 + $0x1d0] sm:$0xff]
      %v3228 = vld [vmem:[%s4 + $0x1d8] sm:$0xff]
      %v3229 = vld [vmem:[%s4 + $0x1e0] sm:$0xff]
      %v3230 = vld [vmem:[%s4 + $0x1e8] sm:$0xff]
      %v3231 = vld [vmem:[%s4 + $0x1f0] sm:$0xff]
      %v3232 = vld [vmem:[%s4 + $0x1f8] sm:$0xff]
      %3233 = vmatpush.msra.mxu0 %v3184
      %3234 = vmatpush.msra.mxu0 %v3183
      %3235 = vmatpush.msra.mxu0 %v3182
      %3236 = vmatpush.msra.mxu0 %v3181
      %3237 = vmatpush.msra.mxu0 %v3180
      %3238 = vmatpush.msra.mxu0 %v3179
      %3239 = vmatpush.msra.mxu0 %v3178
      %3240 = vmatpush.msra.mxu0 %v3177
      %3241 = vmatpush.msra.mxu0 %v3176
      %3242 = vmatpush.msra.mxu0 %v3175
      %3243 = vmatpush.msra.mxu0 %v3174
      %3244 = vmatpush.msra.mxu0 %v3173
      %3245 = vmatpush.msra.mxu0 %v3172
      %3246 = vmatpush.msra.mxu0 %v3171
      %3247 = vmatpush.msra.mxu0 %v3170
      %3248 = vmatpush.msra.mxu0 %v3169
      %3249 = vmatmul.f32.gmra.mxu0 %v3165
      %v3250 = vpop.f32.mrf.mxu0
      %v3251 = vadd.f32 0.0, %v3250
      %3252 = vdwg.mxu0
      %3253 = vmatpush.msra.mxu0 %v3200
      %3254 = vmatpush.msra.mxu0 %v3199
      %3255 = vmatpush.msra.mxu0 %v3198
      %3256 = vmatpush.msra.mxu0 %v3197
      %3257 = vmatpush.msra.mxu0 %v3196
      %3258 = vmatpush.msra.mxu0 %v3195
      %3259 = vmatpush.msra.mxu0 %v3194
      %3260 = vmatpush.msra.mxu0 %v3193
      %3261 = vmatpush.msra.mxu0 %v3192
      %3262 = vmatpush.msra.mxu0 %v3191
      %3263 = vmatpush.msra.mxu0 %v3190
      %3264 = vmatpush.msra.mxu0 %v3189
      %3265 = vmatpush.msra.mxu0 %v3188
      %3266 = vmatpush.msra.mxu0 %v3187
      %3267 = vmatpush.msra.mxu0 %v3186
      %3268 = vmatpush.msra.mxu0 %v3185
      %3269 = vmatmul.f32.gmra.mxu0 %v3166
      %v3270 = vpop.f32.mrf.mxu0
      %v3271 = vadd.f32 %v3251, %v3270
      %3272 = vdwg.mxu0
      %3273 = vmatpush.msra.mxu0 %v3216
      %3274 = vmatpush.msra.mxu0 %v3215
      %3275 = vmatpush.msra.mxu0 %v3214
      %3276 = vmatpush.msra.mxu0 %v3213
      %3277 = vmatpush.msra.mxu0 %v3212
      %3278 = vmatpush.msra.mxu0 %v3211
      %3279 = vmatpush.msra.mxu0 %v3210
      %3280 = vmatpush.msra.mxu0 %v3209
      %3281 = vmatpush.msra.mxu0 %v3208
      %3282 = vmatpush.msra.mxu0 %v3207
      %3283 = vmatpush.msra.mxu0 %v3206
      %3284 = vmatpush.msra.mxu0 %v3205
      %3285 = vmatpush.msra.mxu0 %v3204
      %3286 = vmatpush.msra.mxu0 %v3203
      %3287 = vmatpush.msra.mxu0 %v3202
      %3288 = vmatpush.msra.mxu0 %v3201
      %3289 = vmatmul.f32.gmra.mxu0 %v3167
      %v3290 = vpop.f32.mrf.mxu0
      %v3291 = vadd.f32 %v3271, %v3290
      %3292 = vdwg.mxu0
      %3293 = vmatpush.msra.mxu0 %v3232
      %3294 = vmatpush.msra.mxu0 %v3231
      %3295 = vmatpush.msra.mxu0 %v3230
      %3296 = vmatpush.msra.mxu0 %v3229
      %3297 = vmatpush.msra.mxu0 %v3228
      %3298 = vmatpush.msra.mxu0 %v3227
      %3299 = vmatpush.msra.mxu0 %v3226
      %3300 = vmatpush.msra.mxu0 %v3225
      %3301 = vmatpush.msra.mxu0 %v3224
      %3302 = vmatpush.msra.mxu0 %v3223
      %3303 = vmatpush.msra.mxu0 %v3222
      %3304 = vmatpush.msra.mxu0 %v3221
      %3305 = vmatpush.msra.mxu0 %v3220
      %3306 = vmatpush.msra.mxu0 %v3219
      %3307 = vmatpush.msra.mxu0 %v3218
      %3308 = vmatpush.msra.mxu0 %v3217
      %3309 = vmatmul.f32.gmra.mxu0 %v3168
      %v3310 = vpop.f32.mrf.mxu0
      %v3311 = vadd.f32 %v3291, %v3310
      %3312 = vdwg.mxu0
      %s3313 = scalar_lea.vmem %s4, 512
      %v3314 = vld [vmem:[%s3313] sm:$0xff]
      %v3315 = vld [vmem:[%s3313 + $0x8] sm:$0xff]
      %v3316 = vld [vmem:[%s3313 + $0x10] sm:$0xff]
      %v3317 = vld [vmem:[%s3313 + $0x18] sm:$0xff]
      %v3318 = vld [vmem:[%s3313 + $0x20] sm:$0xff]
      %v3319 = vld [vmem:[%s3313 + $0x28] sm:$0xff]
      %v3320 = vld [vmem:[%s3313 + $0x30] sm:$0xff]
      %v3321 = vld [vmem:[%s3313 + $0x38] sm:$0xff]
      %v3322 = vld [vmem:[%s3313 + $0x40] sm:$0xff]
      %v3323 = vld [vmem:[%s3313 + $0x48] sm:$0xff]
      %v3324 = vld [vmem:[%s3313 + $0x50] sm:$0xff]
      %v3325 = vld [vmem:[%s3313 + $0x58] sm:$0xff]
      %v3326 = vld [vmem:[%s3313 + $0x60] sm:$0xff]
      %v3327 = vld [vmem:[%s3313 + $0x68] sm:$0xff]
      %v3328 = vld [vmem:[%s3313 + $0x70] sm:$0xff]
      %v3329 = vld [vmem:[%s3313 + $0x78] sm:$0xff]
      %v3330 = vld [vmem:[%s3313 + $0x80] sm:$0xff]
      %v3331 = vld [vmem:[%s3313 + $0x88] sm:$0xff]
      %v3332 = vld [vmem:[%s3313 + $0x90] sm:$0xff]
      %v3333 = vld [vmem:[%s3313 + $0x98] sm:$0xff]
      %v3334 = vld [vmem:[%s3313 + $0xa0] sm:$0xff]
      %v3335 = vld [vmem:[%s3313 + $0xa8] sm:$0xff]
      %v3336 = vld [vmem:[%s3313 + $0xb0] sm:$0xff]
      %v3337 = vld [vmem:[%s3313 + $0xb8] sm:$0xff]
      %v3338 = vld [vmem:[%s3313 + $0xc0] sm:$0xff]
      %v3339 = vld [vmem:[%s3313 + $0xc8] sm:$0xff]
      %v3340 = vld [vmem:[%s3313 + $0xd0] sm:$0xff]
      %v3341 = vld [vmem:[%s3313 + $0xd8] sm:$0xff]
      %v3342 = vld [vmem:[%s3313 + $0xe0] sm:$0xff]
      %v3343 = vld [vmem:[%s3313 + $0xe8] sm:$0xff]
      %v3344 = vld [vmem:[%s3313 + $0xf0] sm:$0xff]
      %v3345 = vld [vmem:[%s3313 + $0xf8] sm:$0xff]
      %v3346 = vld [vmem:[%s3313 + $0x100] sm:$0xff]
      %v3347 = vld [vmem:[%s3313 + $0x108] sm:$0xff]
      %v3348 = vld [vmem:[%s3313 + $0x110] sm:$0xff]
      %v3349 = vld [vmem:[%s3313 + $0x118] sm:$0xff]
      %v3350 = vld [vmem:[%s3313 + $0x120] sm:$0xff]
      %v3351 = vld [vmem:[%s3313 + $0x128] sm:$0xff]
      %v3352 = vld [vmem:[%s3313 + $0x130] sm:$0xff]
      %v3353 = vld [vmem:[%s3313 + $0x138] sm:$0xff]
      %v3354 = vld [vmem:[%s3313 + $0x140] sm:$0xff]
      %v3355 = vld [vmem:[%s3313 + $0x148] sm:$0xff]
      %v3356 = vld [vmem:[%s3313 + $0x150] sm:$0xff]
      %v3357 = vld [vmem:[%s3313 + $0x158] sm:$0xff]
      %v3358 = vld [vmem:[%s3313 + $0x160] sm:$0xff]
      %v3359 = vld [vmem:[%s3313 + $0x168] sm:$0xff]
      %v3360 = vld [vmem:[%s3313 + $0x170] sm:$0xff]
      %v3361 = vld [vmem:[%s3313 + $0x178] sm:$0xff]
      %v3362 = vld [vmem:[%s3313 + $0x180] sm:$0xff]
      %v3363 = vld [vmem:[%s3313 + $0x188] sm:$0xff]
      %v3364 = vld [vmem:[%s3313 + $0x190] sm:$0xff]
      %v3365 = vld [vmem:[%s3313 + $0x198] sm:$0xff]
      %v3366 = vld [vmem:[%s3313 + $0x1a0] sm:$0xff]
      %v3367 = vld [vmem:[%s3313 + $0x1a8] sm:$0xff]
      %v3368 = vld [vmem:[%s3313 + $0x1b0] sm:$0xff]
      %v3369 = vld [vmem:[%s3313 + $0x1b8] sm:$0xff]
      %v3370 = vld [vmem:[%s3313 + $0x1c0] sm:$0xff]
      %v3371 = vld [vmem:[%s3313 + $0x1c8] sm:$0xff]
      %v3372 = vld [vmem:[%s3313 + $0x1d0] sm:$0xff]
      %v3373 = vld [vmem:[%s3313 + $0x1d8] sm:$0xff]
      %v3374 = vld [vmem:[%s3313 + $0x1e0] sm:$0xff]
      %v3375 = vld [vmem:[%s3313 + $0x1e8] sm:$0xff]
      %v3376 = vld [vmem:[%s3313 + $0x1f0] sm:$0xff]
      %v3377 = vld [vmem:[%s3313 + $0x1f8] sm:$0xff]
      %3378 = vmatpush.msra.mxu0 %v3329
      %3379 = vmatpush.msra.mxu0 %v3328
      %3380 = vmatpush.msra.mxu0 %v3327
      %3381 = vmatpush.msra.mxu0 %v3326
      %3382 = vmatpush.msra.mxu0 %v3325
      %3383 = vmatpush.msra.mxu0 %v3324
      %3384 = vmatpush.msra.mxu0 %v3323
      %3385 = vmatpush.msra.mxu0 %v3322
      %3386 = vmatpush.msra.mxu0 %v3321
      %3387 = vmatpush.msra.mxu0 %v3320
      %3388 = vmatpush.msra.mxu0 %v3319
      %3389 = vmatpush.msra.mxu0 %v3318
      %3390 = vmatpush.msra.mxu0 %v3317
      %3391 = vmatpush.msra.mxu0 %v3316
      %3392 = vmatpush.msra.mxu0 %v3315
      %3393 = vmatpush.msra.mxu0 %v3314
      %3394 = vmatmul.f32.gmra.mxu0 %v3165
      %v3395 = vpop.f32.mrf.mxu0
      %v3396 = vadd.f32 0.0, %v3395
      %3397 = vdwg.mxu0
      %3398 = vmatpush.msra.mxu0 %v3345
      %3399 = vmatpush.msra.mxu0 %v3344
      %3400 = vmatpush.msra.mxu0 %v3343
      %3401 = vmatpush.msra.mxu0 %v3342
      %3402 = vmatpush.msra.mxu0 %v3341
      %3403 = vmatpush.msra.mxu0 %v3340
      %3404 = vmatpush.msra.mxu0 %v3339
      %3405 = vmatpush.msra.mxu0 %v3338
      %3406 = vmatpush.msra.mxu0 %v3337
      %3407 = vmatpush.msra.mxu0 %v3336
      %3408 = vmatpush.msra.mxu0 %v3335
      %3409 = vmatpush.msra.mxu0 %v3334
      %3410 = vmatpush.msra.mxu0 %v3333
      %3411 = vmatpush.msra.mxu0 %v3332
      %3412 = vmatpush.msra.mxu0 %v3331
      %3413 = vmatpush.msra.mxu0 %v3330
      %3414 = vmatmul.f32.gmra.mxu0 %v3166
      %v3415 = vpop.f32.mrf.mxu0
      %v3416 = vadd.f32 %v3396, %v3415
      %3417 = vdwg.mxu0
      %3418 = vmatpush.msra.mxu0 %v3361
      %3419 = vmatpush.msra.mxu0 %v3360
      %3420 = vmatpush.msra.mxu0 %v3359
      %3421 = vmatpush.msra.mxu0 %v3358
      %3422 = vmatpush.msra.mxu0 %v3357
      %3423 = vmatpush.msra.mxu0 %v3356
      %3424 = vmatpush.msra.mxu0 %v3355
      %3425 = vmatpush.msra.mxu0 %v3354
      %3426 = vmatpush.msra.mxu0 %v3353
      %3427 = vmatpush.msra.mxu0 %v3352
      %3428 = vmatpush.msra.mxu0 %v3351
      %3429 = vmatpush.msra.mxu0 %v3350
      %3430 = vmatpush.msra.mxu0 %v3349
      %3431 = vmatpush.msra.mxu0 %v3348
      %3432 = vmatpush.msra.mxu0 %v3347
      %3433 = vmatpush.msra.mxu0 %v3346
      %3434 = vmatmul.f32.gmra.mxu0 %v3167
      %v3435 = vpop.f32.mrf.mxu0
      %v3436 = vadd.f32 %v3416, %v3435
      %3437 = vdwg.mxu0
      %3438 = vmatpush.msra.mxu0 %v3377
      %3439 = vmatpush.msra.mxu0 %v3376
      %3440 = vmatpush.msra.mxu0 %v3375
      %3441 = vmatpush.msra.mxu0 %v3374
      %3442 = vmatpush.msra.mxu0 %v3373
      %3443 = vmatpush.msra.mxu0 %v3372
      %3444 = vmatpush.msra.mxu0 %v3371
      %3445 = vmatpush.msra.mxu0 %v3370
      %3446 = vmatpush.msra.mxu0 %v3369
      %3447 = vmatpush.msra.mxu0 %v3368
      %3448 = vmatpush.msra.mxu0 %v3367
      %3449 = vmatpush.msra.mxu0 %v3366
      %3450 = vmatpush.msra.mxu0 %v3365
      %3451 = vmatpush.msra.mxu0 %v3364
      %3452 = vmatpush.msra.mxu0 %v3363
      %3453 = vmatpush.msra.mxu0 %v3362
      %3454 = vmatmul.f32.gmra.mxu0 %v3168
      %v3455 = vpop.f32.mrf.mxu0
      %v3456 = vadd.f32 %v3436, %v3455
      %3457 = vdwg.mxu0
      %s3458 = scalar_lea.vmem %s4, 1024
      %v3459 = vld [vmem:[%s3458] sm:$0xff]
      %v3460 = vld [vmem:[%s3458 + $0x8] sm:$0xff]
      %v3461 = vld [vmem:[%s3458 + $0x10] sm:$0xff]
      %v3462 = vld [vmem:[%s3458 + $0x18] sm:$0xff]
      %v3463 = vld [vmem:[%s3458 + $0x20] sm:$0xff]
      %v3464 = vld [vmem:[%s3458 + $0x28] sm:$0xff]
      %v3465 = vld [vmem:[%s3458 + $0x30] sm:$0xff]
      %v3466 = vld [vmem:[%s3458 + $0x38] sm:$0xff]
      %v3467 = vld [vmem:[%s3458 + $0x40] sm:$0xff]
      %v3468 = vld [vmem:[%s3458 + $0x48] sm:$0xff]
      %v3469 = vld [vmem:[%s3458 + $0x50] sm:$0xff]
      %v3470 = vld [vmem:[%s3458 + $0x58] sm:$0xff]
      %v3471 = vld [vmem:[%s3458 + $0x60] sm:$0xff]
      %v3472 = vld [vmem:[%s3458 + $0x68] sm:$0xff]
      %v3473 = vld [vmem:[%s3458 + $0x70] sm:$0xff]
      %v3474 = vld [vmem:[%s3458 + $0x78] sm:$0xff]
      %v3475 = vld [vmem:[%s3458 + $0x80] sm:$0xff]
      %v3476 = vld [vmem:[%s3458 + $0x88] sm:$0xff]
      %v3477 = vld [vmem:[%s3458 + $0x90] sm:$0xff]
      %v3478 = vld [vmem:[%s3458 + $0x98] sm:$0xff]
      %v3479 = vld [vmem:[%s3458 + $0xa0] sm:$0xff]
      %v3480 = vld [vmem:[%s3458 + $0xa8] sm:$0xff]
      %v3481 = vld [vmem:[%s3458 + $0xb0] sm:$0xff]
      %v3482 = vld [vmem:[%s3458 + $0xb8] sm:$0xff]
      %v3483 = vld [vmem:[%s3458 + $0xc0] sm:$0xff]
      %v3484 = vld [vmem:[%s3458 + $0xc8] sm:$0xff]
      %v3485 = vld [vmem:[%s3458 + $0xd0] sm:$0xff]
      %v3486 = vld [vmem:[%s3458 + $0xd8] sm:$0xff]
      %v3487 = vld [vmem:[%s3458 + $0xe0] sm:$0xff]
      %v3488 = vld [vmem:[%s3458 + $0xe8] sm:$0xff]
      %v3489 = vld [vmem:[%s3458 + $0xf0] sm:$0xff]
      %v3490 = vld [vmem:[%s3458 + $0xf8] sm:$0xff]
      %v3491 = vld [vmem:[%s3458 + $0x100] sm:$0xff]
      %v3492 = vld [vmem:[%s3458 + $0x108] sm:$0xff]
      %v3493 = vld [vmem:[%s3458 + $0x110] sm:$0xff]
      %v3494 = vld [vmem:[%s3458 + $0x118] sm:$0xff]
      %v3495 = vld [vmem:[%s3458 + $0x120] sm:$0xff]
      %v3496 = vld [vmem:[%s3458 + $0x128] sm:$0xff]
      %v3497 = vld [vmem:[%s3458 + $0x130] sm:$0xff]
      %v3498 = vld [vmem:[%s3458 + $0x138] sm:$0xff]
      %v3499 = vld [vmem:[%s3458 + $0x140] sm:$0xff]
      %v3500 = vld [vmem:[%s3458 + $0x148] sm:$0xff]
      %v3501 = vld [vmem:[%s3458 + $0x150] sm:$0xff]
      %v3502 = vld [vmem:[%s3458 + $0x158] sm:$0xff]
      %v3503 = vld [vmem:[%s3458 + $0x160] sm:$0xff]
      %v3504 = vld [vmem:[%s3458 + $0x168] sm:$0xff]
      %v3505 = vld [vmem:[%s3458 + $0x170] sm:$0xff]
      %v3506 = vld [vmem:[%s3458 + $0x178] sm:$0xff]
      %v3507 = vld [vmem:[%s3458 + $0x180] sm:$0xff]
      %v3508 = vld [vmem:[%s3458 + $0x188] sm:$0xff]
      %v3509 = vld [vmem:[%s3458 + $0x190] sm:$0xff]
      %v3510 = vld [vmem:[%s3458 + $0x198] sm:$0xff]
      %v3511 = vld [vmem:[%s3458 + $0x1a0] sm:$0xff]
      %v3512 = vld [vmem:[%s3458 + $0x1a8] sm:$0xff]
      %v3513 = vld [vmem:[%s3458 + $0x1b0] sm:$0xff]
      %v3514 = vld [vmem:[%s3458 + $0x1b8] sm:$0xff]
      %v3515 = vld [vmem:[%s3458 + $0x1c0] sm:$0xff]
      %v3516 = vld [vmem:[%s3458 + $0x1c8] sm:$0xff]
      %v3517 = vld [vmem:[%s3458 + $0x1d0] sm:$0xff]
      %v3518 = vld [vmem:[%s3458 + $0x1d8] sm:$0xff]
      %v3519 = vld [vmem:[%s3458 + $0x1e0] sm:$0xff]
      %v3520 = vld [vmem:[%s3458 + $0x1e8] sm:$0xff]
      %v3521 = vld [vmem:[%s3458 + $0x1f0] sm:$0xff]
      %v3522 = vld [vmem:[%s3458 + $0x1f8] sm:$0xff]
      %3523 = vmatpush.msra.mxu0 %v3474
      %3524 = vmatpush.msra.mxu0 %v3473
      %3525 = vmatpush.msra.mxu0 %v3472
      %3526 = vmatpush.msra.mxu0 %v3471
      %3527 = vmatpush.msra.mxu0 %v3470
      %3528 = vmatpush.msra.mxu0 %v3469
      %3529 = vmatpush.msra.mxu0 %v3468
      %3530 = vmatpush.msra.mxu0 %v3467
      %3531 = vmatpush.msra.mxu0 %v3466
      %3532 = vmatpush.msra.mxu0 %v3465
      %3533 = vmatpush.msra.mxu0 %v3464
      %3534 = vmatpush.msra.mxu0 %v3463
      %3535 = vmatpush.msra.mxu0 %v3462
      %3536 = vmatpush.msra.mxu0 %v3461
      %3537 = vmatpush.msra.mxu0 %v3460
      %3538 = vmatpush.msra.mxu0 %v3459
      %3539 = vmatmul.f32.gmra.mxu0 %v3165
      %v3540 = vpop.f32.mrf.mxu0
      %v3541 = vadd.f32 0.0, %v3540
      %3542 = vdwg.mxu0
      %3543 = vmatpush.msra.mxu0 %v3490
      %3544 = vmatpush.msra.mxu0 %v3489
      %3545 = vmatpush.msra.mxu0 %v3488
      %3546 = vmatpush.msra.mxu0 %v3487
      %3547 = vmatpush.msra.mxu0 %v3486
      %3548 = vmatpush.msra.mxu0 %v3485
      %3549 = vmatpush.msra.mxu0 %v3484
      %3550 = vmatpush.msra.mxu0 %v3483
      %3551 = vmatpush.msra.mxu0 %v3482
      %3552 = vmatpush.msra.mxu0 %v3481
      %3553 = vmatpush.msra.mxu0 %v3480
      %3554 = vmatpush.msra.mxu0 %v3479
      %3555 = vmatpush.msra.mxu0 %v3478
      %3556 = vmatpush.msra.mxu0 %v3477
      %3557 = vmatpush.msra.mxu0 %v3476
      %3558 = vmatpush.msra.mxu0 %v3475
      %3559 = vmatmul.f32.gmra.mxu0 %v3166
      %v3560 = vpop.f32.mrf.mxu0
      %v3561 = vadd.f32 %v3541, %v3560
      %3562 = vdwg.mxu0
      %3563 = vmatpush.msra.mxu0 %v3506
      %3564 = vmatpush.msra.mxu0 %v3505
      %3565 = vmatpush.msra.mxu0 %v3504
      %3566 = vmatpush.msra.mxu0 %v3503
      %3567 = vmatpush.msra.mxu0 %v3502
      %3568 = vmatpush.msra.mxu0 %v3501
      %3569 = vmatpush.msra.mxu0 %v3500
      %3570 = vmatpush.msra.mxu0 %v3499
      %3571 = vmatpush.msra.mxu0 %v3498
      %3572 = vmatpush.msra.mxu0 %v3497
      %3573 = vmatpush.msra.mxu0 %v3496
      %3574 = vmatpush.msra.mxu0 %v3495
      %3575 = vmatpush.msra.mxu0 %v3494
      %3576 = vmatpush.msra.mxu0 %v3493
      %3577 = vmatpush.msra.mxu0 %v3492
      %3578 = vmatpush.msra.mxu0 %v3491
      %3579 = vmatmul.f32.gmra.mxu0 %v3167
      %v3580 = vpop.f32.mrf.mxu0
      %v3581 = vadd.f32 %v3561, %v3580
      %3582 = vdwg.mxu0
      %3583 = vmatpush.msra.mxu0 %v3522
      %3584 = vmatpush.msra.mxu0 %v3521
      %3585 = vmatpush.msra.mxu0 %v3520
      %3586 = vmatpush.msra.mxu0 %v3519
      %3587 = vmatpush.msra.mxu0 %v3518
      %3588 = vmatpush.msra.mxu0 %v3517
      %3589 = vmatpush.msra.mxu0 %v3516
      %3590 = vmatpush.msra.mxu0 %v3515
      %3591 = vmatpush.msra.mxu0 %v3514
      %3592 = vmatpush.msra.mxu0 %v3513
      %3593 = vmatpush.msra.mxu0 %v3512
      %3594 = vmatpush.msra.mxu0 %v3511
      %3595 = vmatpush.msra.mxu0 %v3510
      %3596 = vmatpush.msra.mxu0 %v3509
      %3597 = vmatpush.msra.mxu0 %v3508
      %3598 = vmatpush.msra.mxu0 %v3507
      %3599 = vmatmul.f32.gmra.mxu0 %v3168
      %v3600 = vpop.f32.mrf.mxu0
      %v3601 = vadd.f32 %v3581, %v3600
      %3602 = vdwg.mxu0
      %s3603 = scalar_lea.vmem %s4, 1536
      %v3604 = vld [vmem:[%s3603] sm:$0xff]
      %v3605 = vld [vmem:[%s3603 + $0x8] sm:$0xff]
      %v3606 = vld [vmem:[%s3603 + $0x10] sm:$0xff]
      %v3607 = vld [vmem:[%s3603 + $0x18] sm:$0xff]
      %v3608 = vld [vmem:[%s3603 + $0x20] sm:$0xff]
      %v3609 = vld [vmem:[%s3603 + $0x28] sm:$0xff]
      %v3610 = vld [vmem:[%s3603 + $0x30] sm:$0xff]
      %v3611 = vld [vmem:[%s3603 + $0x38] sm:$0xff]
      %v3612 = vld [vmem:[%s3603 + $0x40] sm:$0xff]
      %v3613 = vld [vmem:[%s3603 + $0x48] sm:$0xff]
      %v3614 = vld [vmem:[%s3603 + $0x50] sm:$0xff]
      %v3615 = vld [vmem:[%s3603 + $0x58] sm:$0xff]
      %v3616 = vld [vmem:[%s3603 + $0x60] sm:$0xff]
      %v3617 = vld [vmem:[%s3603 + $0x68] sm:$0xff]
      %v3618 = vld [vmem:[%s3603 + $0x70] sm:$0xff]
      %v3619 = vld [vmem:[%s3603 + $0x78] sm:$0xff]
      %v3620 = vld [vmem:[%s3603 + $0x80] sm:$0xff]
      %v3621 = vld [vmem:[%s3603 + $0x88] sm:$0xff]
      %v3622 = vld [vmem:[%s3603 + $0x90] sm:$0xff]
      %v3623 = vld [vmem:[%s3603 + $0x98] sm:$0xff]
      %v3624 = vld [vmem:[%s3603 + $0xa0] sm:$0xff]
      %v3625 = vld [vmem:[%s3603 + $0xa8] sm:$0xff]
      %v3626 = vld [vmem:[%s3603 + $0xb0] sm:$0xff]
      %v3627 = vld [vmem:[%s3603 + $0xb8] sm:$0xff]
      %v3628 = vld [vmem:[%s3603 + $0xc0] sm:$0xff]
      %v3629 = vld [vmem:[%s3603 + $0xc8] sm:$0xff]
      %v3630 = vld [vmem:[%s3603 + $0xd0] sm:$0xff]
      %v3631 = vld [vmem:[%s3603 + $0xd8] sm:$0xff]
      %v3632 = vld [vmem:[%s3603 + $0xe0] sm:$0xff]
      %v3633 = vld [vmem:[%s3603 + $0xe8] sm:$0xff]
      %v3634 = vld [vmem:[%s3603 + $0xf0] sm:$0xff]
      %v3635 = vld [vmem:[%s3603 + $0xf8] sm:$0xff]
      %v3636 = vld [vmem:[%s3603 + $0x100] sm:$0xff]
      %v3637 = vld [vmem:[%s3603 + $0x108] sm:$0xff]
      %v3638 = vld [vmem:[%s3603 + $0x110] sm:$0xff]
      %v3639 = vld [vmem:[%s3603 + $0x118] sm:$0xff]
      %v3640 = vld [vmem:[%s3603 + $0x120] sm:$0xff]
      %v3641 = vld [vmem:[%s3603 + $0x128] sm:$0xff]
      %v3642 = vld [vmem:[%s3603 + $0x130] sm:$0xff]
      %v3643 = vld [vmem:[%s3603 + $0x138] sm:$0xff]
      %v3644 = vld [vmem:[%s3603 + $0x140] sm:$0xff]
      %v3645 = vld [vmem:[%s3603 + $0x148] sm:$0xff]
      %v3646 = vld [vmem:[%s3603 + $0x150] sm:$0xff]
      %v3647 = vld [vmem:[%s3603 + $0x158] sm:$0xff]
      %v3648 = vld [vmem:[%s3603 + $0x160] sm:$0xff]
      %v3649 = vld [vmem:[%s3603 + $0x168] sm:$0xff]
      %v3650 = vld [vmem:[%s3603 + $0x170] sm:$0xff]
      %v3651 = vld [vmem:[%s3603 + $0x178] sm:$0xff]
      %v3652 = vld [vmem:[%s3603 + $0x180] sm:$0xff]
      %v3653 = vld [vmem:[%s3603 + $0x188] sm:$0xff]
      %v3654 = vld [vmem:[%s3603 + $0x190] sm:$0xff]
      %v3655 = vld [vmem:[%s3603 + $0x198] sm:$0xff]
      %v3656 = vld [vmem:[%s3603 + $0x1a0] sm:$0xff]
      %v3657 = vld [vmem:[%s3603 + $0x1a8] sm:$0xff]
      %v3658 = vld [vmem:[%s3603 + $0x1b0] sm:$0xff]
      %v3659 = vld [vmem:[%s3603 + $0x1b8] sm:$0xff]
      %v3660 = vld [vmem:[%s3603 + $0x1c0] sm:$0xff]
      %v3661 = vld [vmem:[%s3603 + $0x1c8] sm:$0xff]
      %v3662 = vld [vmem:[%s3603 + $0x1d0] sm:$0xff]
      %v3663 = vld [vmem:[%s3603 + $0x1d8] sm:$0xff]
      %v3664 = vld [vmem:[%s3603 + $0x1e0] sm:$0xff]
      %v3665 = vld [vmem:[%s3603 + $0x1e8] sm:$0xff]
      %v3666 = vld [vmem:[%s3603 + $0x1f0] sm:$0xff]
      %v3667 = vld [vmem:[%s3603 + $0x1f8] sm:$0xff]
      %3668 = vmatpush.msra.mxu0 %v3619
      %3669 = vmatpush.msra.mxu0 %v3618
      %3670 = vmatpush.msra.mxu0 %v3617
      %3671 = vmatpush.msra.mxu0 %v3616
      %3672 = vmatpush.msra.mxu0 %v3615
      %3673 = vmatpush.msra.mxu0 %v3614
      %3674 = vmatpush.msra.mxu0 %v3613
      %3675 = vmatpush.msra.mxu0 %v3612
      %3676 = vmatpush.msra.mxu0 %v3611
      %3677 = vmatpush.msra.mxu0 %v3610
      %3678 = vmatpush.msra.mxu0 %v3609
      %3679 = vmatpush.msra.mxu0 %v3608
      %3680 = vmatpush.msra.mxu0 %v3607
      %3681 = vmatpush.msra.mxu0 %v3606
      %3682 = vmatpush.msra.mxu0 %v3605
      %3683 = vmatpush.msra.mxu0 %v3604
      %3684 = vmatmul.f32.gmra.mxu0 %v3165
      %v3685 = vpop.f32.mrf.mxu0
      %v3686 = vadd.f32 0.0, %v3685
      %3687 = vdwg.mxu0
      %3688 = vmatpush.msra.mxu0 %v3635
      %3689 = vmatpush.msra.mxu0 %v3634
      %3690 = vmatpush.msra.mxu0 %v3633
      %3691 = vmatpush.msra.mxu0 %v3632
      %3692 = vmatpush.msra.mxu0 %v3631
      %3693 = vmatpush.msra.mxu0 %v3630
      %3694 = vmatpush.msra.mxu0 %v3629
      %3695 = vmatpush.msra.mxu0 %v3628
      %3696 = vmatpush.msra.mxu0 %v3627
      %3697 = vmatpush.msra.mxu0 %v3626
      %3698 = vmatpush.msra.mxu0 %v3625
      %3699 = vmatpush.msra.mxu0 %v3624
      %3700 = vmatpush.msra.mxu0 %v3623
      %3701 = vmatpush.msra.mxu0 %v3622
      %3702 = vmatpush.msra.mxu0 %v3621
      %3703 = vmatpush.msra.mxu0 %v3620
      %3704 = vmatmul.f32.gmra.mxu0 %v3166
      %v3705 = vpop.f32.mrf.mxu0
      %v3706 = vadd.f32 %v3686, %v3705
      %3707 = vdwg.mxu0
      %3708 = vmatpush.msra.mxu0 %v3651
      %3709 = vmatpush.msra.mxu0 %v3650
      %3710 = vmatpush.msra.mxu0 %v3649
      %3711 = vmatpush.msra.mxu0 %v3648
      %3712 = vmatpush.msra.mxu0 %v3647
      %3713 = vmatpush.msra.mxu0 %v3646
      %3714 = vmatpush.msra.mxu0 %v3645
      %3715 = vmatpush.msra.mxu0 %v3644
      %3716 = vmatpush.msra.mxu0 %v3643
      %3717 = vmatpush.msra.mxu0 %v3642
      %3718 = vmatpush.msra.mxu0 %v3641
      %3719 = vmatpush.msra.mxu0 %v3640
      %3720 = vmatpush.msra.mxu0 %v3639
      %3721 = vmatpush.msra.mxu0 %v3638
      %3722 = vmatpush.msra.mxu0 %v3637
      %3723 = vmatpush.msra.mxu0 %v3636
      %3724 = vmatmul.f32.gmra.mxu0 %v3167
      %v3725 = vpop.f32.mrf.mxu0
      %v3726 = vadd.f32 %v3706, %v3725
      %3727 = vdwg.mxu0
      %3728 = vmatpush.msra.mxu0 %v3667
      %3729 = vmatpush.msra.mxu0 %v3666
      %3730 = vmatpush.msra.mxu0 %v3665
      %3731 = vmatpush.msra.mxu0 %v3664
      %3732 = vmatpush.msra.mxu0 %v3663
      %3733 = vmatpush.msra.mxu0 %v3662
      %3734 = vmatpush.msra.mxu0 %v3661
      %3735 = vmatpush.msra.mxu0 %v3660
      %3736 = vmatpush.msra.mxu0 %v3659
      %3737 = vmatpush.msra.mxu0 %v3658
      %3738 = vmatpush.msra.mxu0 %v3657
      %3739 = vmatpush.msra.mxu0 %v3656
      %3740 = vmatpush.msra.mxu0 %v3655
      %3741 = vmatpush.msra.mxu0 %v3654
      %3742 = vmatpush.msra.mxu0 %v3653
      %3743 = vmatpush.msra.mxu0 %v3652
      %3744 = vmatmul.f32.gmra.mxu0 %v3168
      %v3745 = vpop.f32.mrf.mxu0
      %v3746 = vadd.f32 %v3726, %v3745
      %3747 = vdwg.mxu0
      %v3748 = vmax.f32 %v3311, %v3456
      %v3749 = vmax.f32 %v3601, %v3746
      %v3750 = vmax.f32 %v3748, %v3749
      %3752 = vrot.lane.b32.xlu0 %v3750, 9
      %v3753 = vpop.permute.xlu0 %3752
      %vm3755 = vcmask 1043528
      %3756 = vst.msk [vmem:[#allocation2] sm:$0xf] %vm3755, %v3753
      %vm3757 = vcmask 68608
      %3758 = vst.msk [vmem:[#allocation2 + $0x8] sm:$0xf] %vm3757, %v3753
      %v3759 = vld [vmem:[#allocation2] sm:$0xf]
      %v3760 = vld [vmem:[%s9] sm:$0x1]
      %v3762 = vperm.slane %v3760, 0
      %v3764 = vmul.f32 %v3759, %v3762
      %s3765 = scalar_lea.vmem %s1, 1152
      %v3766 = vld [vmem:[%s3765] sm:$0xff]
      %v3767 = vld [vmem:[#allocation2 + $0x8] sm:$0xf]
      %s3768 = scalar_lea.vmem %s9, 1
      %v3769 = vld [vmem:[%s3768] sm:$0x1]
      %v3771 = vperm.slane %v3769, 0
      %3772 = vrot.lane.b32.xlu0 %v3771, 1
      %v3773 = vpop.permute.xlu0 %3772
      %v3775 = vmul.f32 %v3759, %v3773
      %v3776 = vmul.f32 %v3767, %v3773
      %s3777 = scalar_lea.vmem %s1, 1216
      %v3778 = vld [vmem:[%s3777] sm:$0xff]
      %3781 = vrot.lane.b32.xlu0 %v3775, 127
      %v3782 = vpop.permute.xlu0 %3781
      %3783 = vrot.lane.b32.xlu0 %v3776, 127
      %v3784 = vpop.permute.xlu0 %3783
      %v3785 = vsel %vm583, %v3782, %v3784
      %v3787 = vsel %vm1939, %v3778, 0
      %v3789 = vsel %vm1768, %v3785, 0
      %3791 = vmatpush.msra.mxu0 0.0
      %3792 = vmatpush.msra.mxu0 0.0
      %3793 = vmatpush.msra.mxu0 0.0
      %3794 = vmatpush.msra.mxu0 0.0
      %3795 = vmatpush.msra.mxu0 0.0
      %3796 = vmatpush.msra.mxu0 0.0
      %3797 = vmatpush.msra.mxu0 0.0
      %3798 = vmatpush.msra.mxu0 0.0
      %3799 = vmatpush.msra.mxu0 0.0
      %3800 = vmatpush.msra.mxu0 0.0
      %3801 = vmatpush.msra.mxu0 0.0
      %3802 = vmatpush.msra.mxu0 0.0
      %3803 = vmatpush.msra.mxu0 0.0
      %3804 = vmatpush.msra.mxu0 0.0
      %3805 = vmatpush.msra.mxu0 0.0
      %3806 = vmatpush.msra.mxu0 %v3789
      %3807 = vmatmul.f32.gmra.mxu0 %v3787
      %v3808 = vpop.f32.mrf.mxu0
      %v3809 = vadd.f32 0.0, %v3808
      %3810 = vdwg.mxu0
      %v3812 = vsel %vm1939, %v3766, 0
      %v3815 = vsel %vm1768, %v3764, 0
      %3817 = vmatpush.msra.mxu0 0.0
      %3818 = vmatpush.msra.mxu0 0.0
      %3819 = vmatpush.msra.mxu0 0.0
      %3820 = vmatpush.msra.mxu0 0.0
      %3821 = vmatpush.msra.mxu0 0.0
      %3822 = vmatpush.msra.mxu0 0.0
      %3823 = vmatpush.msra.mxu0 0.0
      %3824 = vmatpush.msra.mxu0 0.0
      %3825 = vmatpush.msra.mxu0 0.0
      %3826 = vmatpush.msra.mxu0 0.0
      %3827 = vmatpush.msra.mxu0 0.0
      %3828 = vmatpush.msra.mxu0 0.0
      %3829 = vmatpush.msra.mxu0 0.0
      %3830 = vmatpush.msra.mxu0 0.0
      %3831 = vmatpush.msra.mxu0 0.0
      %3832 = vmatpush.msra.mxu0 %v3815
      %3833 = vmatmul.f32.gmra.mxu0 %v3812
      %v3834 = vpop.f32.mrf.mxu0
      %v3835 = vadd.f32 %v3809, %v3834
      %3836 = vdwg.mxu0
      %s3837 = scalar_lea.vmem %s9, 2
      %v3838 = vld [vmem:[%s3837] sm:$0x1]
      %v3840 = vperm.slane %v3838, 0
      %3841 = vrot.lane.b32.xlu0 %v3840, 2
      %v3842 = vpop.permute.xlu0 %3841
      %v3844 = vmul.f32 %v3759, %v3842
      %v3845 = vmul.f32 %v3767, %v3842
      %s3846 = scalar_lea.vmem %s1, 1280
      %v3847 = vld [vmem:[%s3846] sm:$0xff]
      %3850 = vrot.lane.b32.xlu0 %v3844, 126
      %v3851 = vpop.permute.xlu0 %3850
      %3852 = vrot.lane.b32.xlu0 %v3845, 126
      %v3853 = vpop.permute.xlu0 %3852
      %v3854 = vsel %vm822, %v3851, %v3853
      %v3856 = vsel %vm1939, %v3847, 0
      %v3858 = vsel %vm1768, %v3854, 0
      %3860 = vmatpush.msra.mxu0 0.0
      %3861 = vmatpush.msra.mxu0 0.0
      %3862 = vmatpush.msra.mxu0 0.0
      %3863 = vmatpush.msra.mxu0 0.0
      %3864 = vmatpush.msra.mxu0 0.0
      %3865 = vmatpush.msra.mxu0 0.0
      %3866 = vmatpush.msra.mxu0 0.0
      %3867 = vmatpush.msra.mxu0 0.0
      %3868 = vmatpush.msra.mxu0 0.0
      %3869 = vmatpush.msra.mxu0 0.0
      %3870 = vmatpush.msra.mxu0 0.0
      %3871 = vmatpush.msra.mxu0 0.0
      %3872 = vmatpush.msra.mxu0 0.0
      %3873 = vmatpush.msra.mxu0 0.0
      %3874 = vmatpush.msra.mxu0 0.0
      %3875 = vmatpush.msra.mxu0 %v3858
      %3876 = vmatmul.f32.gmra.mxu0 %v3856
      %v3877 = vpop.f32.mrf.mxu0
      %v3878 = vadd.f32 0.0, %v3877
      %3879 = vdwg.mxu0
      %v3880 = vadd.f32 %v3835, %v3878
      %s3881 = scalar_lea.vmem %s9, 3
      %v3882 = vld [vmem:[%s3881] sm:$0x1]
      %v3884 = vperm.slane %v3882, 0
      %3885 = vrot.lane.b32.xlu0 %v3884, 8
      %v3886 = vpop.permute.xlu0 %3885
      %v3888 = vmul.f32 %v3759, %v3886
      %v3889 = vmul.f32 %v3767, %v3886
      %s3890 = scalar_lea.vmem %s1, 1344
      %v3891 = vld [vmem:[%s3890] sm:$0xff]
      %3894 = vrot.lane.b32.xlu0 %v3888, 120
      %v3895 = vpop.permute.xlu0 %3894
      %3896 = vrot.lane.b32.xlu0 %v3889, 120
      %v3897 = vpop.permute.xlu0 %3896
      %vm3898 = vcmask 982016
      %v3899 = vsel %vm3898, %v3895, %v3897
      %v3901 = vsel %vm1939, %v3891, 0
      %v3903 = vsel %vm1768, %v3899, 0
      %3905 = vmatpush.msra.mxu0 0.0
      %3906 = vmatpush.msra.mxu0 0.0
      %3907 = vmatpush.msra.mxu0 0.0
      %3908 = vmatpush.msra.mxu0 0.0
      %3909 = vmatpush.msra.mxu0 0.0
      %3910 = vmatpush.msra.mxu0 0.0
      %3911 = vmatpush.msra.mxu0 0.0
      %3912 = vmatpush.msra.mxu0 0.0
      %3913 = vmatpush.msra.mxu0 0.0
      %3914 = vmatpush.msra.mxu0 0.0
      %3915 = vmatpush.msra.mxu0 0.0
      %3916 = vmatpush.msra.mxu0 0.0
      %3917 = vmatpush.msra.mxu0 0.0
      %3918 = vmatpush.msra.mxu0 0.0
      %3919 = vmatpush.msra.mxu0 0.0
      %3920 = vmatpush.msra.mxu0 %v3903
      %3921 = vmatmul.f32.gmra.mxu0 %v3901
      %v3922 = vpop.f32.mrf.mxu0
      %v3923 = vadd.f32 0.0, %v3922
      %3924 = vdwg.mxu0
      %v3925 = vadd.f32 %v3880, %v3923
      %s3926 = scalar_lea.vmem %s1, 1408
      %v3927 = vld [vmem:[%s3926] sm:$0xff]
      %3930 = vrot.lane.b32.xlu0 %v3759, 119
      %v3931 = vpop.permute.xlu0 %3930
      %3932 = vrot.lane.b32.xlu0 %v3767, 119
      %v3933 = vpop.permute.xlu0 %3932
      %vm3934 = vcmask 973824
      %v3935 = vsel %vm3934, %v3931, %v3933
      %v3937 = vsel %vm1939, %v3927, 0
      %v3939 = vsel %vm1768, %v3935, 0
      %3941 = vmatpush.msra.mxu0 0.0
      %3942 = vmatpush.msra.mxu0 0.0
      %3943 = vmatpush.msra.mxu0 0.0
      %3944 = vmatpush.msra.mxu0 0.0
      %3945 = vmatpush.msra.mxu0 0.0
      %3946 = vmatpush.msra.mxu0 0.0
      %3947 = vmatpush.msra.mxu0 0.0
      %3948 = vmatpush.msra.mxu0 0.0
      %3949 = vmatpush.msra.mxu0 0.0
      %3950 = vmatpush.msra.mxu0 0.0
      %3951 = vmatpush.msra.mxu0 0.0
      %3952 = vmatpush.msra.mxu0 0.0
      %3953 = vmatpush.msra.mxu0 0.0
      %3954 = vmatpush.msra.mxu0 0.0
      %3955 = vmatpush.msra.mxu0 0.0
      %3956 = vmatpush.msra.mxu0 %v3939
      %3957 = vmatmul.f32.gmra.mxu0 %v3937
      %v3958 = vpop.f32.mrf.mxu0
      %v3959 = vadd.f32 0.0, %v3958
      %3960 = vdwg.mxu0
      %v3961 = vadd.f32 %v3925, %v3959
      %s3962 = scalar_lea.vmem %s9, 5
      %v3963 = vld [vmem:[%s3962] sm:$0x1]
      %v3965 = vperm.slane %v3963, 0
      %3966 = vrot.lane.b32.xlu0 %v3965, 10
      %v3967 = vpop.permute.xlu0 %3966
      %v3969 = vmul.f32 %v3759, %v3967
      %v3970 = vmul.f32 %v3767, %v3967
      %s3971 = scalar_lea.vmem %s1, 1472
      %v3972 = vld [vmem:[%s3971] sm:$0xff]
      %3975 = vrot.lane.b32.xlu0 %v3969, 118
      %v3976 = vpop.permute.xlu0 %3975
      %3977 = vrot.lane.b32.xlu0 %v3970, 118
      %v3978 = vpop.permute.xlu0 %3977
      %vm3979 = vcmask 965632
      %v3980 = vsel %vm3979, %v3976, %v3978
      %v3982 = vsel %vm1939, %v3972, 0
      %v3984 = vsel %vm1768, %v3980, 0
      %3986 = vmatpush.msra.mxu0 0.0
      %3987 = vmatpush.msra.mxu0 0.0
      %3988 = vmatpush.msra.mxu0 0.0
      %3989 = vmatpush.msra.mxu0 0.0
      %3990 = vmatpush.msra.mxu0 0.0
      %3991 = vmatpush.msra.mxu0 0.0
      %3992 = vmatpush.msra.mxu0 0.0
      %3993 = vmatpush.msra.mxu0 0.0
      %3994 = vmatpush.msra.mxu0 0.0
      %3995 = vmatpush.msra.mxu0 0.0
      %3996 = vmatpush.msra.mxu0 0.0
      %3997 = vmatpush.msra.mxu0 0.0
      %3998 = vmatpush.msra.mxu0 0.0
      %3999 = vmatpush.msra.mxu0 0.0
      %4000 = vmatpush.msra.mxu0 0.0
      %4001 = vmatpush.msra.mxu0 %v3984
      %4002 = vmatmul.f32.gmra.mxu0 %v3982
      %v4003 = vpop.f32.mrf.mxu0
      %v4004 = vadd.f32 0.0, %v4003
      %4005 = vdwg.mxu0
      %v4006 = vadd.f32 %v3961, %v4004
      %s4007 = scalar_lea.vmem %s9, 6
      %v4008 = vld [vmem:[%s4007] sm:$0x1]
      %v4010 = vperm.slane %v4008, 0
      %4011 = vrot.lane.b32.xlu0 %v4010, 16
      %v4012 = vpop.permute.xlu0 %4011
      %v4014 = vmul.f32 %v3759, %v4012
      %v4015 = vmul.f32 %v3767, %v4012
      %s4016 = scalar_lea.vmem %s1, 1536
      %v4017 = vld [vmem:[%s4016] sm:$0xff]
      %4020 = vrot.lane.b32.xlu0 %v4014, 112
      %v4021 = vpop.permute.xlu0 %4020
      %4022 = vrot.lane.b32.xlu0 %v4015, 112
      %v4023 = vpop.permute.xlu0 %4022
      %v4024 = vsel %vm968, %v4021, %v4023
      %v4026 = vsel %vm1939, %v4017, 0
      %v4028 = vsel %vm1768, %v4024, 0
      %4030 = vmatpush.msra.mxu0 0.0
      %4031 = vmatpush.msra.mxu0 0.0
      %4032 = vmatpush.msra.mxu0 0.0
      %4033 = vmatpush.msra.mxu0 0.0
      %4034 = vmatpush.msra.mxu0 0.0
      %4035 = vmatpush.msra.mxu0 0.0
      %4036 = vmatpush.msra.mxu0 0.0
      %4037 = vmatpush.msra.mxu0 0.0
      %4038 = vmatpush.msra.mxu0 0.0
      %4039 = vmatpush.msra.mxu0 0.0
      %4040 = vmatpush.msra.mxu0 0.0
      %4041 = vmatpush.msra.mxu0 0.0
      %4042 = vmatpush.msra.mxu0 0.0
      %4043 = vmatpush.msra.mxu0 0.0
      %4044 = vmatpush.msra.mxu0 0.0
      %4045 = vmatpush.msra.mxu0 %v4028
      %4046 = vmatmul.f32.gmra.mxu0 %v4026
      %v4047 = vpop.f32.mrf.mxu0
      %v4048 = vadd.f32 0.0, %v4047
      %4049 = vdwg.mxu0
      %v4050 = vadd.f32 %v4006, %v4048
      %s4051 = scalar_lea.vmem %s9, 7
      %v4052 = vld [vmem:[%s4051] sm:$0x1]
      %v4054 = vperm.slane %v4052, 0
      %4055 = vrot.lane.b32.xlu0 %v4054, 17
      %v4056 = vpop.permute.xlu0 %4055
      %v4058 = vmul.f32 %v3759, %v4056
      %v4059 = vmul.f32 %v3767, %v4056
      %s4060 = scalar_lea.vmem %s1, 1600
      %v4061 = vld [vmem:[%s4060] sm:$0xff]
      %4064 = vrot.lane.b32.xlu0 %v4058, 111
      %v4065 = vpop.permute.xlu0 %4064
      %4066 = vrot.lane.b32.xlu0 %v4059, 111
      %v4067 = vpop.permute.xlu0 %4066
      %v4068 = vsel %vm1085, %v4065, %v4067
      %v4070 = vsel %vm1939, %v4061, 0
      %v4072 = vsel %vm1768, %v4068, 0
      %4074 = vmatpush.msra.mxu0 0.0
      %4075 = vmatpush.msra.mxu0 0.0
      %4076 = vmatpush.msra.mxu0 0.0
      %4077 = vmatpush.msra.mxu0 0.0
      %4078 = vmatpush.msra.mxu0 0.0
      %4079 = vmatpush.msra.mxu0 0.0
      %4080 = vmatpush.msra.mxu0 0.0
      %4081 = vmatpush.msra.mxu0 0.0
      %4082 = vmatpush.msra.mxu0 0.0
      %4083 = vmatpush.msra.mxu0 0.0
      %4084 = vmatpush.msra.mxu0 0.0
      %4085 = vmatpush.msra.mxu0 0.0
      %4086 = vmatpush.msra.mxu0 0.0
      %4087 = vmatpush.msra.mxu0 0.0
      %4088 = vmatpush.msra.mxu0 0.0
      %4089 = vmatpush.msra.mxu0 %v4072
      %4090 = vmatmul.f32.gmra.mxu0 %v4070
      %v4091 = vpop.f32.mrf.mxu0
      %v4092 = vadd.f32 0.0, %v4091
      %4093 = vdwg.mxu0
      %v4094 = vadd.f32 %v4050, %v4092
      %s4095 = scalar_lea.vmem %s9, 8
      %v4096 = vld [vmem:[%s4095] sm:$0x1]
      %v4098 = vperm.slane %v4096, 0
      %4099 = vrot.lane.b32.xlu0 %v4098, 18
      %v4100 = vpop.permute.xlu0 %4099
      %v4102 = vmul.f32 %v3759, %v4100
      %v4103 = vmul.f32 %v3767, %v4100
      %s4104 = scalar_lea.vmem %s1, 1664
      %v4105 = vld [vmem:[%s4104] sm:$0xff]
      %4108 = vrot.lane.b32.xlu0 %v4102, 110
      %v4109 = vpop.permute.xlu0 %4108
      %4110 = vrot.lane.b32.xlu0 %v4103, 110
      %v4111 = vpop.permute.xlu0 %4110
      %v4112 = vsel %vm1231, %v4109, %v4111
      %v4114 = vsel %vm1939, %v4105, 0
      %v4116 = vsel %vm1768, %v4112, 0
      %4118 = vmatpush.msra.mxu0 0.0
      %4119 = vmatpush.msra.mxu0 0.0
      %4120 = vmatpush.msra.mxu0 0.0
      %4121 = vmatpush.msra.mxu0 0.0
      %4122 = vmatpush.msra.mxu0 0.0
      %4123 = vmatpush.msra.mxu0 0.0
      %4124 = vmatpush.msra.mxu0 0.0
      %4125 = vmatpush.msra.mxu0 0.0
      %4126 = vmatpush.msra.mxu0 0.0
      %4127 = vmatpush.msra.mxu0 0.0
      %4128 = vmatpush.msra.mxu0 0.0
      %4129 = vmatpush.msra.mxu0 0.0
      %4130 = vmatpush.msra.mxu0 0.0
      %4131 = vmatpush.msra.mxu0 0.0
      %4132 = vmatpush.msra.mxu0 0.0
      %4133 = vmatpush.msra.mxu0 %v4116
      %4134 = vmatmul.f32.gmra.mxu0 %v4114
      %v4135 = vpop.f32.mrf.mxu0
      %v4136 = vadd.f32 0.0, %v4135
      %4137 = vdwg.mxu0
      %v4138 = vadd.f32 %v4094, %v4136
      %4139 = vadd.xlane.f32.xlu0 %v4138
      %v4140 = vpop.xlane.xlu0 %4139
      %v4141 = vrcp.pop 128.0
      %v4142 = vmul.f32 128.0, %v4141
      %v4143 = vsub.f32 1.0, %v4142
      %v4144 = vmul.f32 %v4141, %v4143
      %v4145 = vadd.f32 %v4141, %v4144
      %vm4146 = vweird.f32 %v4141
      %v4147 = vsel %vm4146, %v4141, %v4145
      %v4148 = vmul.f32 %v4140, %v4147
      %v4149 = vsub.f32 %v4138, %v4148
      %v4150 = vmul.f32 %v4149, %v4149
      %4151 = vadd.xlane.f32.xlu0 %v4150
      %v4152 = vpop.xlane.xlu0 %4151
      %v4153 = vmul.f32 %v4152, %v4147
      %v4154 = vadd.f32 %v4153, 1e-05
      %v4155 = vrsqrt.pop %v4154
      %v4156 = vmul.f32 %v4155, %v4154
      %v4157 = vmul.f32 %v4156, %v4155
      %v4158 = vmul.f32 0.5, %v4157
      %v4159 = vsub.f32 1.5, %v4158
      %v4160 = vmul.f32 %v4155, %v4159
      %vm4161 = vweird.f32 %v4154
      %vm4162 = vweird.f32 %v4155
      %vm4163 = vmor %vm4161, %vm4162
      %v4164 = vsel %vm4163, %v4155, %v4160
      %v4165 = vmul.f32 %v4149, %v4164
      %s4166 = scalar_lea.vmem %s2, 128
      %v4167 = vld [vmem:[%s4166] sm:$0xff]
      %4169 = vset.pattern.permute.xlu0 0
      %4170 = vperm.xlu0 %4169, %v4167
      %v4171 = vpop.permute.xlu0 %4170
      %v4173 = vmul.f32 %v4165, %v4171
      %s4174 = scalar_lea.vmem %s3, 128
      %v4175 = vld [vmem:[%s4174] sm:$0xff]
      %4177 = vset.pattern.permute.xlu0 0
      %4178 = vperm.xlu0 %4177, %v4175
      %v4179 = vpop.permute.xlu0 %4178
      %v4181 = vadd.f32 %v4173, %v4179
      %v4182 = vmax.f32 %v4181, 0.0
      %4184 = vrot.lane.b32.xlu0 %v4182, 9
      %v4185 = vpop.permute.xlu0 %4184
      %vm4187 = vcmask 1047624
      %4188 = vst.msk [vmem:[#allocation2] sm:$0xff] %vm4187, %v4185
      %vm4189 = vcmask 72704
      %4190 = vst.msk [vmem:[#allocation2 + $0x8] sm:$0xff] %vm4189, %v4185
      %v4191 = vld [vmem:[#allocation2] sm:$0xff]
      %v4192 = vld [vmem:[%s9] sm:$0x1]
      %v4194 = vperm.slane %v4192, 0
      %v4196 = vmul.f32 %v4191, %v4194
      %s4197 = scalar_lea.vmem %s1, 1728
      %v4198 = vld [vmem:[%s4197] sm:$0xff]
      %v4199 = vld [vmem:[#allocation2 + $0x8] sm:$0xff]
      %v4200 = vld [vmem:[%s3768] sm:$0x1]
      %v4202 = vperm.slane %v4200, 0
      %4203 = vrot.lane.b32.xlu0 %v4202, 1
      %v4204 = vpop.permute.xlu0 %4203
      %v4206 = vmul.f32 %v4191, %v4204
      %v4207 = vmul.f32 %v4199, %v4204
      %s4208 = scalar_lea.vmem %s1, 1792
      %v4209 = vld [vmem:[%s4208] sm:$0xff]
      %4212 = vrot.lane.b32.xlu0 %v4206, 127
      %v4213 = vpop.permute.xlu0 %4212
      %4214 = vrot.lane.b32.xlu0 %v4207, 127
      %v4215 = vpop.permute.xlu0 %4214
      %v4216 = vsel %vm583, %v4213, %v4215
      %vm4218 = vcmask 64512
      %v4220 = vsel %vm4218, %v4209, 0
      %4222 = vmatpush.msra.mxu0 0.0
      %4223 = vmatpush.msra.mxu0 0.0
      %4224 = vmatpush.msra.mxu0 0.0
      %4225 = vmatpush.msra.mxu0 0.0
      %4226 = vmatpush.msra.mxu0 0.0
      %4227 = vmatpush.msra.mxu0 0.0
      %4228 = vmatpush.msra.mxu0 0.0
      %4229 = vmatpush.msra.mxu0 0.0
      %4230 = vmatpush.msra.mxu0 0.0
      %4231 = vmatpush.msra.mxu0 0.0
      %4232 = vmatpush.msra.mxu0 0.0
      %4233 = vmatpush.msra.mxu0 0.0
      %4234 = vmatpush.msra.mxu0 0.0
      %4235 = vmatpush.msra.mxu0 0.0
      %4236 = vmatpush.msra.mxu0 0.0
      %4237 = vmatpush.msra.mxu0 %v4216
      %4238 = vmatmul.f32.gmra.mxu0 %v4220
      %v4239 = vpop.f32.mrf.mxu0
      %v4240 = vadd.f32 0.0, %v4239
      %4241 = vdwg.mxu0
      %v4243 = vsel %vm4218, %v4198, 0
      %4245 = vmatpush.msra.mxu0 0.0
      %4246 = vmatpush.msra.mxu0 0.0
      %4247 = vmatpush.msra.mxu0 0.0
      %4248 = vmatpush.msra.mxu0 0.0
      %4249 = vmatpush.msra.mxu0 0.0
      %4250 = vmatpush.msra.mxu0 0.0
      %4251 = vmatpush.msra.mxu0 0.0
      %4252 = vmatpush.msra.mxu0 0.0
      %4253 = vmatpush.msra.mxu0 0.0
      %4254 = vmatpush.msra.mxu0 0.0
      %4255 = vmatpush.msra.mxu0 0.0
      %4256 = vmatpush.msra.mxu0 0.0
      %4257 = vmatpush.msra.mxu0 0.0
      %4258 = vmatpush.msra.mxu0 0.0
      %4259 = vmatpush.msra.mxu0 0.0
      %4260 = vmatpush.msra.mxu0 %v4196
      %4261 = vmatmul.f32.gmra.mxu0 %v4243
      %v4262 = vpop.f32.mrf.mxu0
      %v4263 = vadd.f32 %v4240, %v4262
      %4264 = vdwg.mxu0
      %v4265 = vld [vmem:[%s3837] sm:$0x1]
      %v4267 = vperm.slane %v4265, 0
      %4268 = vrot.lane.b32.xlu0 %v4267, 2
      %v4269 = vpop.permute.xlu0 %4268
      %v4271 = vmul.f32 %v4191, %v4269
      %v4272 = vmul.f32 %v4199, %v4269
      %s4273 = scalar_lea.vmem %s1, 1856
      %v4274 = vld [vmem:[%s4273] sm:$0xff]
      %4277 = vrot.lane.b32.xlu0 %v4271, 126
      %v4278 = vpop.permute.xlu0 %4277
      %4279 = vrot.lane.b32.xlu0 %v4272, 126
      %v4280 = vpop.permute.xlu0 %4279
      %v4281 = vsel %vm822, %v4278, %v4280
      %v4284 = vsel %vm4218, %v4274, 0
      %4286 = vmatpush.msra.mxu0 0.0
      %4287 = vmatpush.msra.mxu0 0.0
      %4288 = vmatpush.msra.mxu0 0.0
      %4289 = vmatpush.msra.mxu0 0.0
      %4290 = vmatpush.msra.mxu0 0.0
      %4291 = vmatpush.msra.mxu0 0.0
      %4292 = vmatpush.msra.mxu0 0.0
      %4293 = vmatpush.msra.mxu0 0.0
      %4294 = vmatpush.msra.mxu0 0.0
      %4295 = vmatpush.msra.mxu0 0.0
      %4296 = vmatpush.msra.mxu0 0.0
      %4297 = vmatpush.msra.mxu0 0.0
      %4298 = vmatpush.msra.mxu0 0.0
      %4299 = vmatpush.msra.mxu0 0.0
      %4300 = vmatpush.msra.mxu0 0.0
      %4301 = vmatpush.msra.mxu0 %v4281
      %4302 = vmatmul.f32.gmra.mxu0 %v4284
      %v4303 = vpop.f32.mrf.mxu0
      %v4304 = vadd.f32 0.0, %v4303
      %4305 = vdwg.mxu0
      %v4306 = vadd.f32 %v4263, %v4304
      %v4307 = vld [vmem:[%s3881] sm:$0x1]
      %v4309 = vperm.slane %v4307, 0
      %4310 = vrot.lane.b32.xlu0 %v4309, 8
      %v4311 = vpop.permute.xlu0 %4310
      %v4313 = vmul.f32 %v4191, %v4311
      %v4314 = vmul.f32 %v4199, %v4311
      %s4315 = scalar_lea.vmem %s1, 1920
      %v4316 = vld [vmem:[%s4315] sm:$0xff]
      %4319 = vrot.lane.b32.xlu0 %v4313, 120
      %v4320 = vpop.permute.xlu0 %4319
      %4321 = vrot.lane.b32.xlu0 %v4314, 120
      %v4322 = vpop.permute.xlu0 %4321
      %v4323 = vsel %vm3898, %v4320, %v4322
      %v4326 = vsel %vm4218, %v4316, 0
      %4328 = vmatpush.msra.mxu0 0.0
      %4329 = vmatpush.msra.mxu0 0.0
      %4330 = vmatpush.msra.mxu0 0.0
      %4331 = vmatpush.msra.mxu0 0.0
      %4332 = vmatpush.msra.mxu0 0.0
      %4333 = vmatpush.msra.mxu0 0.0
      %4334 = vmatpush.msra.mxu0 0.0
      %4335 = vmatpush.msra.mxu0 0.0
      %4336 = vmatpush.msra.mxu0 0.0
      %4337 = vmatpush.msra.mxu0 0.0
      %4338 = vmatpush.msra.mxu0 0.0
      %4339 = vmatpush.msra.mxu0 0.0
      %4340 = vmatpush.msra.mxu0 0.0
      %4341 = vmatpush.msra.mxu0 0.0
      %4342 = vmatpush.msra.mxu0 0.0
      %4343 = vmatpush.msra.mxu0 %v4323
      %4344 = vmatmul.f32.gmra.mxu0 %v4326
      %v4345 = vpop.f32.mrf.mxu0
      %v4346 = vadd.f32 0.0, %v4345
      %4347 = vdwg.mxu0
      %v4348 = vadd.f32 %v4306, %v4346
      %s4349 = scalar_lea.vmem %s1, 1984
      %v4350 = vld [vmem:[%s4349] sm:$0xff]
      %4353 = vrot.lane.b32.xlu0 %v4191, 119
      %v4354 = vpop.permute.xlu0 %4353
      %4355 = vrot.lane.b32.xlu0 %v4199, 119
      %v4356 = vpop.permute.xlu0 %4355
      %v4357 = vsel %vm3934, %v4354, %v4356
      %v4360 = vsel %vm4218, %v4350, 0
      %4362 = vmatpush.msra.mxu0 0.0
      %4363 = vmatpush.msra.mxu0 0.0
      %4364 = vmatpush.msra.mxu0 0.0
      %4365 = vmatpush.msra.mxu0 0.0
      %4366 = vmatpush.msra.mxu0 0.0
      %4367 = vmatpush.msra.mxu0 0.0
      %4368 = vmatpush.msra.mxu0 0.0
      %4369 = vmatpush.msra.mxu0 0.0
      %4370 = vmatpush.msra.mxu0 0.0
      %4371 = vmatpush.msra.mxu0 0.0
      %4372 = vmatpush.msra.mxu0 0.0
      %4373 = vmatpush.msra.mxu0 0.0
      %4374 = vmatpush.msra.mxu0 0.0
      %4375 = vmatpush.msra.mxu0 0.0
      %4376 = vmatpush.msra.mxu0 0.0
      %4377 = vmatpush.msra.mxu0 %v4357
      %4378 = vmatmul.f32.gmra.mxu0 %v4360
      %v4379 = vpop.f32.mrf.mxu0
      %v4380 = vadd.f32 0.0, %v4379
      %4381 = vdwg.mxu0
      %v4382 = vadd.f32 %v4348, %v4380
      %v4383 = vld [vmem:[%s3962] sm:$0x1]
      %v4385 = vperm.slane %v4383, 0
      %4386 = vrot.lane.b32.xlu0 %v4385, 10
      %v4387 = vpop.permute.xlu0 %4386
      %v4389 = vmul.f32 %v4191, %v4387
      %v4390 = vmul.f32 %v4199, %v4387
      %s4391 = scalar_lea.vmem %s1, 2048
      %v4392 = vld [vmem:[%s4391] sm:$0xff]
      %4395 = vrot.lane.b32.xlu0 %v4389, 118
      %v4396 = vpop.permute.xlu0 %4395
      %4397 = vrot.lane.b32.xlu0 %v4390, 118
      %v4398 = vpop.permute.xlu0 %4397
      %v4399 = vsel %vm3979, %v4396, %v4398
      %v4402 = vsel %vm4218, %v4392, 0
      %4404 = vmatpush.msra.mxu0 0.0
      %4405 = vmatpush.msra.mxu0 0.0
      %4406 = vmatpush.msra.mxu0 0.0
      %4407 = vmatpush.msra.mxu0 0.0
      %4408 = vmatpush.msra.mxu0 0.0
      %4409 = vmatpush.msra.mxu0 0.0
      %4410 = vmatpush.msra.mxu0 0.0
      %4411 = vmatpush.msra.mxu0 0.0
      %4412 = vmatpush.msra.mxu0 0.0
      %4413 = vmatpush.msra.mxu0 0.0
      %4414 = vmatpush.msra.mxu0 0.0
      %4415 = vmatpush.msra.mxu0 0.0
      %4416 = vmatpush.msra.mxu0 0.0
      %4417 = vmatpush.msra.mxu0 0.0
      %4418 = vmatpush.msra.mxu0 0.0
      %4419 = vmatpush.msra.mxu0 %v4399
      %4420 = vmatmul.f32.gmra.mxu0 %v4402
      %v4421 = vpop.f32.mrf.mxu0
      %v4422 = vadd.f32 0.0, %v4421
      %4423 = vdwg.mxu0
      %v4424 = vadd.f32 %v4382, %v4422
      %v4425 = vld [vmem:[%s4007] sm:$0x1]
      %v4427 = vperm.slane %v4425, 0
      %4428 = vrot.lane.b32.xlu0 %v4427, 16
      %v4429 = vpop.permute.xlu0 %4428
      %v4431 = vmul.f32 %v4191, %v4429
      %v4432 = vmul.f32 %v4199, %v4429
      %s4433 = scalar_lea.vmem %s1, 2112
      %v4434 = vld [vmem:[%s4433] sm:$0xff]
      %4437 = vrot.lane.b32.xlu0 %v4431, 112
      %v4438 = vpop.permute.xlu0 %4437
      %4439 = vrot.lane.b32.xlu0 %v4432, 112
      %v4440 = vpop.permute.xlu0 %4439
      %v4441 = vsel %vm968, %v4438, %v4440
      %v4444 = vsel %vm4218, %v4434, 0
      %4446 = vmatpush.msra.mxu0 0.0
      %4447 = vmatpush.msra.mxu0 0.0
      %4448 = vmatpush.msra.mxu0 0.0
      %4449 = vmatpush.msra.mxu0 0.0
      %4450 = vmatpush.msra.mxu0 0.0
      %4451 = vmatpush.msra.mxu0 0.0
      %4452 = vmatpush.msra.mxu0 0.0
      %4453 = vmatpush.msra.mxu0 0.0
      %4454 = vmatpush.msra.mxu0 0.0
      %4455 = vmatpush.msra.mxu0 0.0
      %4456 = vmatpush.msra.mxu0 0.0
      %4457 = vmatpush.msra.mxu0 0.0
      %4458 = vmatpush.msra.mxu0 0.0
      %4459 = vmatpush.msra.mxu0 0.0
      %4460 = vmatpush.msra.mxu0 0.0
      %4461 = vmatpush.msra.mxu0 %v4441
      %4462 = vmatmul.f32.gmra.mxu0 %v4444
      %v4463 = vpop.f32.mrf.mxu0
      %v4464 = vadd.f32 0.0, %v4463
      %4465 = vdwg.mxu0
      %v4466 = vadd.f32 %v4424, %v4464
      %v4467 = vld [vmem:[%s4051] sm:$0x1]
      %v4469 = vperm.slane %v4467, 0
      %4470 = vrot.lane.b32.xlu0 %v4469, 17
      %v4471 = vpop.permute.xlu0 %4470
      %v4473 = vmul.f32 %v4191, %v4471
      %v4474 = vmul.f32 %v4199, %v4471
      %s4475 = scalar_lea.vmem %s1, 2176
      %v4476 = vld [vmem:[%s4475] sm:$0xff]
      %4479 = vrot.lane.b32.xlu0 %v4473, 111
      %v4480 = vpop.permute.xlu0 %4479
      %4481 = vrot.lane.b32.xlu0 %v4474, 111
      %v4482 = vpop.permute.xlu0 %4481
      %v4483 = vsel %vm1085, %v4480, %v4482
      %v4486 = vsel %vm4218, %v4476, 0
      %4488 = vmatpush.msra.mxu0 0.0
      %4489 = vmatpush.msra.mxu0 0.0
      %4490 = vmatpush.msra.mxu0 0.0
      %4491 = vmatpush.msra.mxu0 0.0
      %4492 = vmatpush.msra.mxu0 0.0
      %4493 = vmatpush.msra.mxu0 0.0
      %4494 = vmatpush.msra.mxu0 0.0
      %4495 = vmatpush.msra.mxu0 0.0
      %4496 = vmatpush.msra.mxu0 0.0
      %4497 = vmatpush.msra.mxu0 0.0
      %4498 = vmatpush.msra.mxu0 0.0
      %4499 = vmatpush.msra.mxu0 0.0
      %4500 = vmatpush.msra.mxu0 0.0
      %4501 = vmatpush.msra.mxu0 0.0
      %4502 = vmatpush.msra.mxu0 0.0
      %4503 = vmatpush.msra.mxu0 %v4483
      %4504 = vmatmul.f32.gmra.mxu0 %v4486
      %v4505 = vpop.f32.mrf.mxu0
      %v4506 = vadd.f32 0.0, %v4505
      %4507 = vdwg.mxu0
      %v4508 = vadd.f32 %v4466, %v4506
      %v4509 = vld [vmem:[%s4095] sm:$0x1]
      %v4511 = vperm.slane %v4509, 0
      %4512 = vrot.lane.b32.xlu0 %v4511, 18
      %v4513 = vpop.permute.xlu0 %4512
      %v4515 = vmul.f32 %v4191, %v4513
      %v4516 = vmul.f32 %v4199, %v4513
      %s4517 = scalar_lea.vmem %s1, 2240
      %v4518 = vld [vmem:[%s4517] sm:$0xff]
      %4521 = vrot.lane.b32.xlu0 %v4515, 110
      %v4522 = vpop.permute.xlu0 %4521
      %4523 = vrot.lane.b32.xlu0 %v4516, 110
      %v4524 = vpop.permute.xlu0 %4523
      %v4525 = vsel %vm1231, %v4522, %v4524
      %v4528 = vsel %vm4218, %v4518, 0
      %4530 = vmatpush.msra.mxu0 0.0
      %4531 = vmatpush.msra.mxu0 0.0
      %4532 = vmatpush.msra.mxu0 0.0
      %4533 = vmatpush.msra.mxu0 0.0
      %4534 = vmatpush.msra.mxu0 0.0
      %4535 = vmatpush.msra.mxu0 0.0
      %4536 = vmatpush.msra.mxu0 0.0
      %4537 = vmatpush.msra.mxu0 0.0
      %4538 = vmatpush.msra.mxu0 0.0
      %4539 = vmatpush.msra.mxu0 0.0
      %4540 = vmatpush.msra.mxu0 0.0
      %4541 = vmatpush.msra.mxu0 0.0
      %4542 = vmatpush.msra.mxu0 0.0
      %4543 = vmatpush.msra.mxu0 0.0
      %4544 = vmatpush.msra.mxu0 0.0
      %4545 = vmatpush.msra.mxu0 %v4525
      %4546 = vmatmul.f32.gmra.mxu0 %v4528
      %v4547 = vpop.f32.mrf.mxu0
      %v4548 = vadd.f32 0.0, %v4547
      %4549 = vdwg.mxu0
      %v4550 = vadd.f32 %v4508, %v4548
      %4551 = vadd.xlane.f32.xlu0 %v4550
      %v4552 = vpop.xlane.xlu0 %4551
      %v4553 = vmul.f32 %v4552, %v4147
      %v4554 = vsub.f32 %v4550, %v4553
      %v4555 = vmul.f32 %v4554, %v4554
      %4556 = vadd.xlane.f32.xlu0 %v4555
      %v4557 = vpop.xlane.xlu0 %4556
      %v4558 = vmul.f32 %v4557, %v4147
      %v4559 = vadd.f32 %v4558, 1e-05
      %v4560 = vrsqrt.pop %v4559
      %v4561 = vmul.f32 %v4560, %v4559
      %v4562 = vmul.f32 %v4561, %v4560
      %v4563 = vmul.f32 0.5, %v4562
      %v4564 = vsub.f32 1.5, %v4563
      %v4565 = vmul.f32 %v4560, %v4564
      %vm4566 = vweird.f32 %v4559
      %vm4567 = vweird.f32 %v4560
      %vm4568 = vmor %vm4566, %vm4567
      %v4569 = vsel %vm4568, %v4560, %v4565
      %v4570 = vmul.f32 %v4554, %v4569
      %s4571 = scalar_lea.vmem %s2, 192
      %v4572 = vld [vmem:[%s4571] sm:$0xff]
      %4574 = vset.pattern.permute.xlu0 0
      %4575 = vperm.xlu0 %4574, %v4572
      %v4576 = vpop.permute.xlu0 %4575
      %v4578 = vmul.f32 %v4570, %v4576
      %s4579 = scalar_lea.vmem %s3, 192
      %v4580 = vld [vmem:[%s4579] sm:$0xff]
      %4582 = vset.pattern.permute.xlu0 0
      %4583 = vperm.xlu0 %4582, %v4580
      %v4584 = vpop.permute.xlu0 %4583
      %v4586 = vadd.f32 %v4578, %v4584
      %v4587 = vmax.f32 %v4586, 0.0
      %v4588 = vld [vmem:[%s5] sm:$0xff]
      %v4589 = vld [vmem:[%s5 + $0x8] sm:$0xff]
      %v4590 = vld [vmem:[%s5 + $0x10] sm:$0xff]
      %v4591 = vld [vmem:[%s5 + $0x18] sm:$0xff]
      %v4592 = vld [vmem:[%s5 + $0x20] sm:$0xff]
      %v4593 = vld [vmem:[%s5 + $0x28] sm:$0xff]
      %v4594 = vld [vmem:[%s5 + $0x30] sm:$0xff]
      %v4595 = vld [vmem:[%s5 + $0x38] sm:$0xff]
      %v4596 = vld [vmem:[%s5 + $0x40] sm:$0xff]
      %v4597 = vld [vmem:[%s5 + $0x48] sm:$0xff]
      %v4598 = vld [vmem:[%s5 + $0x50] sm:$0xff]
      %v4599 = vld [vmem:[%s5 + $0x58] sm:$0xff]
      %v4600 = vld [vmem:[%s5 + $0x60] sm:$0xff]
      %v4601 = vld [vmem:[%s5 + $0x68] sm:$0xff]
      %v4602 = vld [vmem:[%s5 + $0x70] sm:$0xff]
      %v4603 = vld [vmem:[%s5 + $0x78] sm:$0xff]
      %4604 = vmatpush.msra.mxu0 %v4603
      %4605 = vmatpush.msra.mxu0 %v4602
      %4606 = vmatpush.msra.mxu0 %v4601
      %4607 = vmatpush.msra.mxu0 %v4600
      %4608 = vmatpush.msra.mxu0 %v4599
      %4609 = vmatpush.msra.mxu0 %v4598
      %4610 = vmatpush.msra.mxu0 %v4597
      %4611 = vmatpush.msra.mxu0 %v4596
      %4612 = vmatpush.msra.mxu0 %v4595
      %4613 = vmatpush.msra.mxu0 %v4594
      %4614 = vmatpush.msra.mxu0 %v4593
      %4615 = vmatpush.msra.mxu0 %v4592
      %4616 = vmatpush.msra.mxu0 %v4591
      %4617 = vmatpush.msra.mxu0 %v4590
      %4618 = vmatpush.msra.mxu0 %v4589
      %4619 = vmatpush.msra.mxu0 %v4588
      %4620 = vmatmul.f32.gmra.mxu0 %v4587
      %v4621 = vpop.f32.mrf.mxu0
      %v4622 = vadd.f32 0.0, %v4621
      %4623 = vdwg.mxu0
      %s4624 = scalar_lea.vmem %s5, 128
      %v4625 = vld [vmem:[%s4624] sm:$0xff]
      %v4626 = vld [vmem:[%s4624 + $0x8] sm:$0xff]
      %v4627 = vld [vmem:[%s4624 + $0x10] sm:$0xff]
      %v4628 = vld [vmem:[%s4624 + $0x18] sm:$0xff]
      %v4629 = vld [vmem:[%s4624 + $0x20] sm:$0xff]
      %v4630 = vld [vmem:[%s4624 + $0x28] sm:$0xff]
      %v4631 = vld [vmem:[%s4624 + $0x30] sm:$0xff]
      %v4632 = vld [vmem:[%s4624 + $0x38] sm:$0xff]
      %v4633 = vld [vmem:[%s4624 + $0x40] sm:$0xff]
      %v4634 = vld [vmem:[%s4624 + $0x48] sm:$0xff]
      %v4635 = vld [vmem:[%s4624 + $0x50] sm:$0xff]
      %v4636 = vld [vmem:[%s4624 + $0x58] sm:$0xff]
      %v4637 = vld [vmem:[%s4624 + $0x60] sm:$0xff]
      %v4638 = vld [vmem:[%s4624 + $0x68] sm:$0xff]
      %v4639 = vld [vmem:[%s4624 + $0x70] sm:$0xff]
      %v4640 = vld [vmem:[%s4624 + $0x78] sm:$0xff]
      %4641 = vmatpush.msra.mxu0 %v4640
      %4642 = vmatpush.msra.mxu0 %v4639
      %4643 = vmatpush.msra.mxu0 %v4638
      %4644 = vmatpush.msra.mxu0 %v4637
      %4645 = vmatpush.msra.mxu0 %v4636
      %4646 = vmatpush.msra.mxu0 %v4635
      %4647 = vmatpush.msra.mxu0 %v4634
      %4648 = vmatpush.msra.mxu0 %v4633
      %4649 = vmatpush.msra.mxu0 %v4632
      %4650 = vmatpush.msra.mxu0 %v4631
      %4651 = vmatpush.msra.mxu0 %v4630
      %4652 = vmatpush.msra.mxu0 %v4629
      %4653 = vmatpush.msra.mxu0 %v4628
      %4654 = vmatpush.msra.mxu0 %v4627
      %4655 = vmatpush.msra.mxu0 %v4626
      %4656 = vmatpush.msra.mxu0 %v4625
      %4657 = vmatmul.f32.gmra.mxu0 %v4587
      %v4658 = vpop.f32.mrf.mxu0
      %v4659 = vadd.f32 0.0, %v4658
      %4660 = vdwg.mxu0
      %s4661 = scalar_lea.vmem %s5, 256
      %v4662 = vld [vmem:[%s4661] sm:$0xff]
      %v4663 = vld [vmem:[%s4661 + $0x8] sm:$0xff]
      %v4664 = vld [vmem:[%s4661 + $0x10] sm:$0xff]
      %v4665 = vld [vmem:[%s4661 + $0x18] sm:$0xff]
      %v4666 = vld [vmem:[%s4661 + $0x20] sm:$0xff]
      %v4667 = vld [vmem:[%s4661 + $0x28] sm:$0xff]
      %v4668 = vld [vmem:[%s4661 + $0x30] sm:$0xff]
      %v4669 = vld [vmem:[%s4661 + $0x38] sm:$0xff]
      %v4670 = vld [vmem:[%s4661 + $0x40] sm:$0xff]
      %v4671 = vld [vmem:[%s4661 + $0x48] sm:$0xff]
      %v4672 = vld [vmem:[%s4661 + $0x50] sm:$0xff]
      %v4673 = vld [vmem:[%s4661 + $0x58] sm:$0xff]
      %v4674 = vld [vmem:[%s4661 + $0x60] sm:$0xff]
      %v4675 = vld [vmem:[%s4661 + $0x68] sm:$0xff]
      %v4676 = vld [vmem:[%s4661 + $0x70] sm:$0xff]
      %v4677 = vld [vmem:[%s4661 + $0x78] sm:$0xff]
      %4678 = vmatpush.msra.mxu0 %v4677
      %4679 = vmatpush.msra.mxu0 %v4676
      %4680 = vmatpush.msra.mxu0 %v4675
      %4681 = vmatpush.msra.mxu0 %v4674
      %4682 = vmatpush.msra.mxu0 %v4673
      %4683 = vmatpush.msra.mxu0 %v4672
      %4684 = vmatpush.msra.mxu0 %v4671
      %4685 = vmatpush.msra.mxu0 %v4670
      %4686 = vmatpush.msra.mxu0 %v4669
      %4687 = vmatpush.msra.mxu0 %v4668
      %4688 = vmatpush.msra.mxu0 %v4667
      %4689 = vmatpush.msra.mxu0 %v4666
      %4690 = vmatpush.msra.mxu0 %v4665
      %4691 = vmatpush.msra.mxu0 %v4664
      %4692 = vmatpush.msra.mxu0 %v4663
      %4693 = vmatpush.msra.mxu0 %v4662
      %4694 = vmatmul.f32.gmra.mxu0 %v4587
      %v4695 = vpop.f32.mrf.mxu0
      %v4696 = vadd.f32 0.0, %v4695
      %4697 = vdwg.mxu0
      %s4698 = scalar_lea.vmem %s5, 384
      %v4699 = vld [vmem:[%s4698] sm:$0xff]
      %v4700 = vld [vmem:[%s4698 + $0x8] sm:$0xff]
      %v4701 = vld [vmem:[%s4698 + $0x10] sm:$0xff]
      %v4702 = vld [vmem:[%s4698 + $0x18] sm:$0xff]
      %v4703 = vld [vmem:[%s4698 + $0x20] sm:$0xff]
      %v4704 = vld [vmem:[%s4698 + $0x28] sm:$0xff]
      %v4705 = vld [vmem:[%s4698 + $0x30] sm:$0xff]
      %v4706 = vld [vmem:[%s4698 + $0x38] sm:$0xff]
      %v4707 = vld [vmem:[%s4698 + $0x40] sm:$0xff]
      %v4708 = vld [vmem:[%s4698 + $0x48] sm:$0xff]
      %v4709 = vld [vmem:[%s4698 + $0x50] sm:$0xff]
      %v4710 = vld [vmem:[%s4698 + $0x58] sm:$0xff]
      %v4711 = vld [vmem:[%s4698 + $0x60] sm:$0xff]
      %v4712 = vld [vmem:[%s4698 + $0x68] sm:$0xff]
      %v4713 = vld [vmem:[%s4698 + $0x70] sm:$0xff]
      %v4714 = vld [vmem:[%s4698 + $0x78] sm:$0xff]
      %4715 = vmatpush.msra.mxu0 %v4714
      %4716 = vmatpush.msra.mxu0 %v4713
      %4717 = vmatpush.msra.mxu0 %v4712
      %4718 = vmatpush.msra.mxu0 %v4711
      %4719 = vmatpush.msra.mxu0 %v4710
      %4720 = vmatpush.msra.mxu0 %v4709
      %4721 = vmatpush.msra.mxu0 %v4708
      %4722 = vmatpush.msra.mxu0 %v4707
      %4723 = vmatpush.msra.mxu0 %v4706
      %4724 = vmatpush.msra.mxu0 %v4705
      %4725 = vmatpush.msra.mxu0 %v4704
      %4726 = vmatpush.msra.mxu0 %v4703
      %4727 = vmatpush.msra.mxu0 %v4702
      %4728 = vmatpush.msra.mxu0 %v4701
      %4729 = vmatpush.msra.mxu0 %v4700
      %4730 = vmatpush.msra.mxu0 %v4699
      %4731 = vmatmul.f32.gmra.mxu0 %v4587
      %v4732 = vpop.f32.mrf.mxu0
      %v4733 = vadd.f32 0.0, %v4732
      %4734 = vdwg.mxu0
      %v4735 = vmax.f32 %v4622, %v4659
      %v4736 = vmax.f32 %v4696, %v4733
      %v4737 = vmax.f32 %v4735, %v4736
      %4739 = vrot.lane.b32.xlu0 %v4737, 5
      %v4740 = vpop.permute.xlu0 %4739
      %vm4742 = vcmask 302120
      %4743 = vst.msk [vmem:[#allocation2] sm:$0xff] %vm4742, %v4740
      %v4744 = vld [vmem:[#allocation2] sm:$0xff]
      %v4745 = vld [vmem:[%s10] sm:$0x1]
      %v4747 = vperm.slane %v4745, 0
      %v4749 = vmul.f32 %v4744, %v4747
      %s4750 = scalar_lea.vmem %s1, 2304
      %v4751 = vld [vmem:[%s4750] sm:$0xff]
      %v4752 = vld [vmem:[%s4750 + $0x8] sm:$0xff]
      %s4753 = scalar_lea.vmem %s10, 1
      %v4754 = vld [vmem:[%s4753] sm:$0x1]
      %v4756 = vperm.slane %v4754, 0
      %4757 = vrot.lane.b32.xlu0 %v4756, 1
      %v4758 = vpop.permute.xlu0 %4757
      %v4760 = vmul.f32 %v4744, %v4758
      %s4761 = scalar_lea.vmem %s1, 2368
      %v4762 = vld [vmem:[%s4761] sm:$0xff]
      %v4763 = vld [vmem:[%s4761 + $0x8] sm:$0xff]
      %4765 = vrot.lane.b32.xlu0 %v4760, 127
      %v4766 = vpop.permute.xlu0 %4765
      %v4769 = vsel %vm4218, %v4762, 0
      %v4772 = vsel %vm4218, %v4763, 0
      %4774 = vmatpush.msra.mxu0 0.0
      %4775 = vmatpush.msra.mxu0 0.0
      %4776 = vmatpush.msra.mxu0 0.0
      %4777 = vmatpush.msra.mxu0 0.0
      %4778 = vmatpush.msra.mxu0 0.0
      %4779 = vmatpush.msra.mxu0 0.0
      %4780 = vmatpush.msra.mxu0 0.0
      %4781 = vmatpush.msra.mxu0 0.0
      %4782 = vmatpush.msra.mxu0 0.0
      %4783 = vmatpush.msra.mxu0 0.0
      %4784 = vmatpush.msra.mxu0 0.0
      %4785 = vmatpush.msra.mxu0 0.0
      %4786 = vmatpush.msra.mxu0 0.0
      %4787 = vmatpush.msra.mxu0 0.0
      %4788 = vmatpush.msra.mxu0 0.0
      %4789 = vmatpush.msra.mxu0 %v4766
      %4790 = vmatmul.f32.gmra.mxu0 %v4769
      %v4791 = vpop.f32.mrf.mxu0
      %v4792 = vadd.f32 0.0, %v4791
      %4793 = vmatmul.f32.gmra.mxu0 %v4772
      %v4794 = vpop.f32.mrf.mxu0
      %v4795 = vadd.f32 0.0, %v4794
      %4796 = vdwg.mxu0
      %v4798 = vsel %vm4218, %v4751, 0
      %v4801 = vsel %vm4218, %v4752, 0
      %4803 = vmatpush.msra.mxu0 0.0
      %4804 = vmatpush.msra.mxu0 0.0
      %4805 = vmatpush.msra.mxu0 0.0
      %4806 = vmatpush.msra.mxu0 0.0
      %4807 = vmatpush.msra.mxu0 0.0
      %4808 = vmatpush.msra.mxu0 0.0
      %4809 = vmatpush.msra.mxu0 0.0
      %4810 = vmatpush.msra.mxu0 0.0
      %4811 = vmatpush.msra.mxu0 0.0
      %4812 = vmatpush.msra.mxu0 0.0
      %4813 = vmatpush.msra.mxu0 0.0
      %4814 = vmatpush.msra.mxu0 0.0
      %4815 = vmatpush.msra.mxu0 0.0
      %4816 = vmatpush.msra.mxu0 0.0
      %4817 = vmatpush.msra.mxu0 0.0
      %4818 = vmatpush.msra.mxu0 %v4749
      %4819 = vmatmul.f32.gmra.mxu0 %v4798
      %v4820 = vpop.f32.mrf.mxu0
      %v4821 = vadd.f32 %v4792, %v4820
      %4822 = vmatmul.f32.gmra.mxu0 %v4801
      %v4823 = vpop.f32.mrf.mxu0
      %v4824 = vadd.f32 %v4795, %v4823
      %4825 = vdwg.mxu0
      %s4826 = scalar_lea.vmem %s10, 2
      %v4827 = vld [vmem:[%s4826] sm:$0x1]
      %v4829 = vperm.slane %v4827, 0
      %4830 = vrot.lane.b32.xlu0 %v4829, 2
      %v4831 = vpop.permute.xlu0 %4830
      %v4833 = vmul.f32 %v4744, %v4831
      %s4834 = scalar_lea.vmem %s1, 2432
      %v4835 = vld [vmem:[%s4834] sm:$0xff]
      %v4836 = vld [vmem:[%s4834 + $0x8] sm:$0xff]
      %4838 = vrot.lane.b32.xlu0 %v4833, 126
      %v4839 = vpop.permute.xlu0 %4838
      %v4842 = vsel %vm4218, %v4835, 0
      %v4845 = vsel %vm4218, %v4836, 0
      %4847 = vmatpush.msra.mxu0 0.0
      %4848 = vmatpush.msra.mxu0 0.0
      %4849 = vmatpush.msra.mxu0 0.0
      %4850 = vmatpush.msra.mxu0 0.0
      %4851 = vmatpush.msra.mxu0 0.0
      %4852 = vmatpush.msra.mxu0 0.0
      %4853 = vmatpush.msra.mxu0 0.0
      %4854 = vmatpush.msra.mxu0 0.0
      %4855 = vmatpush.msra.mxu0 0.0
      %4856 = vmatpush.msra.mxu0 0.0
      %4857 = vmatpush.msra.mxu0 0.0
      %4858 = vmatpush.msra.mxu0 0.0
      %4859 = vmatpush.msra.mxu0 0.0
      %4860 = vmatpush.msra.mxu0 0.0
      %4861 = vmatpush.msra.mxu0 0.0
      %4862 = vmatpush.msra.mxu0 %v4839
      %4863 = vmatmul.f32.gmra.mxu0 %v4842
      %v4864 = vpop.f32.mrf.mxu0
      %v4865 = vadd.f32 0.0, %v4864
      %4866 = vmatmul.f32.gmra.mxu0 %v4845
      %v4867 = vpop.f32.mrf.mxu0
      %v4868 = vadd.f32 0.0, %v4867
      %4869 = vdwg.mxu0
      %v4870 = vadd.f32 %v4821, %v4865
      %v4871 = vadd.f32 %v4824, %v4868
      %s4872 = scalar_lea.vmem %s10, 3
      %v4873 = vld [vmem:[%s4872] sm:$0x1]
      %v4875 = vperm.slane %v4873, 0
      %4876 = vrot.lane.b32.xlu0 %v4875, 4
      %v4877 = vpop.permute.xlu0 %4876
      %v4879 = vmul.f32 %v4744, %v4877
      %s4880 = scalar_lea.vmem %s1, 2496
      %v4881 = vld [vmem:[%s4880] sm:$0xff]
      %v4882 = vld [vmem:[%s4880 + $0x8] sm:$0xff]
      %4884 = vrot.lane.b32.xlu0 %v4879, 124
      %v4885 = vpop.permute.xlu0 %4884
      %v4888 = vsel %vm4218, %v4881, 0
      %v4891 = vsel %vm4218, %v4882, 0
      %4893 = vmatpush.msra.mxu0 0.0
      %4894 = vmatpush.msra.mxu0 0.0
      %4895 = vmatpush.msra.mxu0 0.0
      %4896 = vmatpush.msra.mxu0 0.0
      %4897 = vmatpush.msra.mxu0 0.0
      %4898 = vmatpush.msra.mxu0 0.0
      %4899 = vmatpush.msra.mxu0 0.0
      %4900 = vmatpush.msra.mxu0 0.0
      %4901 = vmatpush.msra.mxu0 0.0
      %4902 = vmatpush.msra.mxu0 0.0
      %4903 = vmatpush.msra.mxu0 0.0
      %4904 = vmatpush.msra.mxu0 0.0
      %4905 = vmatpush.msra.mxu0 0.0
      %4906 = vmatpush.msra.mxu0 0.0
      %4907 = vmatpush.msra.mxu0 0.0
      %4908 = vmatpush.msra.mxu0 %v4885
      %4909 = vmatmul.f32.gmra.mxu0 %v4888
      %v4910 = vpop.f32.mrf.mxu0
      %v4911 = vadd.f32 0.0, %v4910
      %4912 = vmatmul.f32.gmra.mxu0 %v4891
      %v4913 = vpop.f32.mrf.mxu0
      %v4914 = vadd.f32 0.0, %v4913
      %4915 = vdwg.mxu0
      %v4916 = vadd.f32 %v4870, %v4911
      %v4917 = vadd.f32 %v4871, %v4914
      %s4918 = scalar_lea.vmem %s1, 2560
      %v4919 = vld [vmem:[%s4918] sm:$0xff]
      %v4920 = vld [vmem:[%s4918 + $0x8] sm:$0xff]
      %4922 = vrot.lane.b32.xlu0 %v4744, 123
      %v4923 = vpop.permute.xlu0 %4922
      %v4926 = vsel %vm4218, %v4919, 0
      %v4929 = vsel %vm4218, %v4920, 0
      %4931 = vmatpush.msra.mxu0 0.0
      %4932 = vmatpush.msra.mxu0 0.0
      %4933 = vmatpush.msra.mxu0 0.0
      %4934 = vmatpush.msra.mxu0 0.0
      %4935 = vmatpush.msra.mxu0 0.0
      %4936 = vmatpush.msra.mxu0 0.0
      %4937 = vmatpush.msra.mxu0 0.0
      %4938 = vmatpush.msra.mxu0 0.0
      %4939 = vmatpush.msra.mxu0 0.0
      %4940 = vmatpush.msra.mxu0 0.0
      %4941 = vmatpush.msra.mxu0 0.0
      %4942 = vmatpush.msra.mxu0 0.0
      %4943 = vmatpush.msra.mxu0 0.0
      %4944 = vmatpush.msra.mxu0 0.0
      %4945 = vmatpush.msra.mxu0 0.0
      %4946 = vmatpush.msra.mxu0 %v4923
      %4947 = vmatmul.f32.gmra.mxu0 %v4926
      %v4948 = vpop.f32.mrf.mxu0
      %v4949 = vadd.f32 0.0, %v4948
      %4950 = vmatmul.f32.gmra.mxu0 %v4929
      %v4951 = vpop.f32.mrf.mxu0
      %v4952 = vadd.f32 0.0, %v4951
      %4953 = vdwg.mxu0
      %v4954 = vadd.f32 %v4916, %v4949
      %v4955 = vadd.f32 %v4917, %v4952
      %s4956 = scalar_lea.vmem %s10, 5
      %v4957 = vld [vmem:[%s4956] sm:$0x1]
      %v4959 = vperm.slane %v4957, 0
      %4960 = vrot.lane.b32.xlu0 %v4959, 6
      %v4961 = vpop.permute.xlu0 %4960
      %v4963 = vmul.f32 %v4744, %v4961
      %s4964 = scalar_lea.vmem %s1, 2624
      %v4965 = vld [vmem:[%s4964] sm:$0xff]
      %v4966 = vld [vmem:[%s4964 + $0x8] sm:$0xff]
      %4968 = vrot.lane.b32.xlu0 %v4963, 122
      %v4969 = vpop.permute.xlu0 %4968
      %v4972 = vsel %vm4218, %v4965, 0
      %v4975 = vsel %vm4218, %v4966, 0
      %4977 = vmatpush.msra.mxu0 0.0
      %4978 = vmatpush.msra.mxu0 0.0
      %4979 = vmatpush.msra.mxu0 0.0
      %4980 = vmatpush.msra.mxu0 0.0
      %4981 = vmatpush.msra.mxu0 0.0
      %4982 = vmatpush.msra.mxu0 0.0
      %4983 = vmatpush.msra.mxu0 0.0
      %4984 = vmatpush.msra.mxu0 0.0
      %4985 = vmatpush.msra.mxu0 0.0
      %4986 = vmatpush.msra.mxu0 0.0
      %4987 = vmatpush.msra.mxu0 0.0
      %4988 = vmatpush.msra.mxu0 0.0
      %4989 = vmatpush.msra.mxu0 0.0
      %4990 = vmatpush.msra.mxu0 0.0
      %4991 = vmatpush.msra.mxu0 0.0
      %4992 = vmatpush.msra.mxu0 %v4969
      %4993 = vmatmul.f32.gmra.mxu0 %v4972
      %v4994 = vpop.f32.mrf.mxu0
      %v4995 = vadd.f32 0.0, %v4994
      %4996 = vmatmul.f32.gmra.mxu0 %v4975
      %v4997 = vpop.f32.mrf.mxu0
      %v4998 = vadd.f32 0.0, %v4997
      %4999 = vdwg.mxu0
      %v5000 = vadd.f32 %v4954, %v4995
      %v5001 = vadd.f32 %v4955, %v4998
      %s5002 = scalar_lea.vmem %s10, 6
      %v5003 = vld [vmem:[%s5002] sm:$0x1]
      %v5005 = vperm.slane %v5003, 0
      %5006 = vrot.lane.b32.xlu0 %v5005, 8
      %v5007 = vpop.permute.xlu0 %5006
      %v5009 = vmul.f32 %v4744, %v5007
      %s5010 = scalar_lea.vmem %s1, 2688
      %v5011 = vld [vmem:[%s5010] sm:$0xff]
      %v5012 = vld [vmem:[%s5010 + $0x8] sm:$0xff]
      %5014 = vrot.lane.b32.xlu0 %v5009, 120
      %v5015 = vpop.permute.xlu0 %5014
      %v5018 = vsel %vm4218, %v5011, 0
      %v5021 = vsel %vm4218, %v5012, 0
      %5023 = vmatpush.msra.mxu0 0.0
      %5024 = vmatpush.msra.mxu0 0.0
      %5025 = vmatpush.msra.mxu0 0.0
      %5026 = vmatpush.msra.mxu0 0.0
      %5027 = vmatpush.msra.mxu0 0.0
      %5028 = vmatpush.msra.mxu0 0.0
      %5029 = vmatpush.msra.mxu0 0.0
      %5030 = vmatpush.msra.mxu0 0.0
      %5031 = vmatpush.msra.mxu0 0.0
      %5032 = vmatpush.msra.mxu0 0.0
      %5033 = vmatpush.msra.mxu0 0.0
      %5034 = vmatpush.msra.mxu0 0.0
      %5035 = vmatpush.msra.mxu0 0.0
      %5036 = vmatpush.msra.mxu0 0.0
      %5037 = vmatpush.msra.mxu0 0.0
      %5038 = vmatpush.msra.mxu0 %v5015
      %5039 = vmatmul.f32.gmra.mxu0 %v5018
      %v5040 = vpop.f32.mrf.mxu0
      %v5041 = vadd.f32 0.0, %v5040
      %5042 = vmatmul.f32.gmra.mxu0 %v5021
      %v5043 = vpop.f32.mrf.mxu0
      %v5044 = vadd.f32 0.0, %v5043
      %5045 = vdwg.mxu0
      %v5046 = vadd.f32 %v5000, %v5041
      %v5047 = vadd.f32 %v5001, %v5044
      %s5048 = scalar_lea.vmem %s10, 7
      %v5049 = vld [vmem:[%s5048] sm:$0x1]
      %v5051 = vperm.slane %v5049, 0
      %5052 = vrot.lane.b32.xlu0 %v5051, 9
      %v5053 = vpop.permute.xlu0 %5052
      %v5055 = vmul.f32 %v4744, %v5053
      %s5056 = scalar_lea.vmem %s1, 2752
      %v5057 = vld [vmem:[%s5056] sm:$0xff]
      %v5058 = vld [vmem:[%s5056 + $0x8] sm:$0xff]
      %5060 = vrot.lane.b32.xlu0 %v5055, 119
      %v5061 = vpop.permute.xlu0 %5060
      %v5064 = vsel %vm4218, %v5057, 0
      %v5067 = vsel %vm4218, %v5058, 0
      %5069 = vmatpush.msra.mxu0 0.0
      %5070 = vmatpush.msra.mxu0 0.0
      %5071 = vmatpush.msra.mxu0 0.0
      %5072 = vmatpush.msra.mxu0 0.0
      %5073 = vmatpush.msra.mxu0 0.0
      %5074 = vmatpush.msra.mxu0 0.0
      %5075 = vmatpush.msra.mxu0 0.0
      %5076 = vmatpush.msra.mxu0 0.0
      %5077 = vmatpush.msra.mxu0 0.0
      %5078 = vmatpush.msra.mxu0 0.0
      %5079 = vmatpush.msra.mxu0 0.0
      %5080 = vmatpush.msra.mxu0 0.0
      %5081 = vmatpush.msra.mxu0 0.0
      %5082 = vmatpush.msra.mxu0 0.0
      %5083 = vmatpush.msra.mxu0 0.0
      %5084 = vmatpush.msra.mxu0 %v5061
      %5085 = vmatmul.f32.gmra.mxu0 %v5064
      %v5086 = vpop.f32.mrf.mxu0
      %v5087 = vadd.f32 0.0, %v5086
      %5088 = vmatmul.f32.gmra.mxu0 %v5067
      %v5089 = vpop.f32.mrf.mxu0
      %v5090 = vadd.f32 0.0, %v5089
      %5091 = vdwg.mxu0
      %v5092 = vadd.f32 %v5046, %v5087
      %v5093 = vadd.f32 %v5047, %v5090
      %s5094 = scalar_lea.vmem %s10, 8
      %v5095 = vld [vmem:[%s5094] sm:$0x1]
      %v5097 = vperm.slane %v5095, 0
      %5098 = vrot.lane.b32.xlu0 %v5097, 10
      %v5099 = vpop.permute.xlu0 %5098
      %v5101 = vmul.f32 %v4744, %v5099
      %s5102 = scalar_lea.vmem %s1, 2816
      %v5103 = vld [vmem:[%s5102] sm:$0xff]
      %v5104 = vld [vmem:[%s5102 + $0x8] sm:$0xff]
      %5106 = vrot.lane.b32.xlu0 %v5101, 118
      %v5107 = vpop.permute.xlu0 %5106
      %v5110 = vsel %vm4218, %v5103, 0
      %v5113 = vsel %vm4218, %v5104, 0
      %5115 = vmatpush.msra.mxu0 0.0
      %5116 = vmatpush.msra.mxu0 0.0
      %5117 = vmatpush.msra.mxu0 0.0
      %5118 = vmatpush.msra.mxu0 0.0
      %5119 = vmatpush.msra.mxu0 0.0
      %5120 = vmatpush.msra.mxu0 0.0
      %5121 = vmatpush.msra.mxu0 0.0
      %5122 = vmatpush.msra.mxu0 0.0
      %5123 = vmatpush.msra.mxu0 0.0
      %5124 = vmatpush.msra.mxu0 0.0
      %5125 = vmatpush.msra.mxu0 0.0
      %5126 = vmatpush.msra.mxu0 0.0
      %5127 = vmatpush.msra.mxu0 0.0
      %5128 = vmatpush.msra.mxu0 0.0
      %5129 = vmatpush.msra.mxu0 0.0
      %5130 = vmatpush.msra.mxu0 %v5107
      %5131 = vmatmul.f32.gmra.mxu0 %v5110
      %v5132 = vpop.f32.mrf.mxu0
      %v5133 = vadd.f32 0.0, %v5132
      %5134 = vmatmul.f32.gmra.mxu0 %v5113
      %v5135 = vpop.f32.mrf.mxu0
      %v5136 = vadd.f32 0.0, %v5135
      %5137 = vdwg.mxu0
      %v5138 = vadd.f32 %v5092, %v5133
      %v5139 = vadd.f32 %v5093, %v5136
      %v5140 = vsel %vm1346, %v5138, 0.0
      %5141 = vadd.xlane.f32.xlu0 %v5140
      %v5142 = vpop.xlane.xlu0 %5141
      %v5143 = vsel %vm1346, %v5139, 0.0
      %5144 = vadd.xlane.f32.xlu0 %v5143
      %v5145 = vpop.xlane.xlu0 %5144
      %v5146 = vrcp.pop 32.0
      %v5147 = vmul.f32 32.0, %v5146
      %v5148 = vsub.f32 1.0, %v5147
      %v5149 = vmul.f32 %v5146, %v5148
      %v5150 = vadd.f32 %v5146, %v5149
      %vm5151 = vweird.f32 %v5146
      %v5152 = vsel %vm5151, %v5146, %v5150
      %v5153 = vmul.f32 %v5142, %v5152
      %v5154 = vmul.f32 %v5145, %v5152
      %v5155 = vsub.f32 %v5138, %v5153
      %v5156 = vsub.f32 %v5139, %v5154
      %v5157 = vmul.f32 %v5155, %v5155
      %v5158 = vmul.f32 %v5156, %v5156
      %v5159 = vsel %vm1346, %v5157, 0.0
      %5160 = vadd.xlane.f32.xlu0 %v5159
      %v5161 = vpop.xlane.xlu0 %5160
      %v5162 = vsel %vm1346, %v5158, 0.0
      %5163 = vadd.xlane.f32.xlu0 %v5162
      %v5164 = vpop.xlane.xlu0 %5163
      %v5165 = vmul.f32 %v5161, %v5152
      %v5166 = vmul.f32 %v5164, %v5152
      %v5167 = vadd.f32 %v5165, 1e-05
      %v5168 = vadd.f32 %v5166, 1e-05
      %v5169 = vrsqrt.pop %v5167
      %v5170 = vmul.f32 %v5169, %v5167
      %v5171 = vmul.f32 %v5170, %v5169
      %v5172 = vmul.f32 0.5, %v5171
      %v5173 = vsub.f32 1.5, %v5172
      %v5174 = vmul.f32 %v5169, %v5173
      %vm5175 = vweird.f32 %v5167
      %vm5176 = vweird.f32 %v5169
      %vm5177 = vmor %vm5175, %vm5176
      %v5178 = vsel %vm5177, %v5169, %v5174
      %v5179 = vrsqrt.pop %v5168
      %v5180 = vmul.f32 %v5179, %v5168
      %v5181 = vmul.f32 %v5180, %v5179
      %v5182 = vmul.f32 0.5, %v5181
      %v5183 = vsub.f32 1.5, %v5182
      %v5184 = vmul.f32 %v5179, %v5183
      %vm5185 = vweird.f32 %v5168
      %vm5186 = vweird.f32 %v5179
      %vm5187 = vmor %vm5185, %vm5186
      %v5188 = vsel %vm5187, %v5179, %v5184
      %v5189 = vmul.f32 %v5155, %v5178
      %v5190 = vmul.f32 %v5156, %v5188
      %s5191 = scalar_lea.vmem %s2, 256
      %v5192 = vld [vmem:[%s5191] sm:$0xff]
      %v5193 = vld [vmem:[%s5191 + $0x8] sm:$0xff]
      %5195 = vset.pattern.permute.xlu0 0
      %5196 = vperm.xlu0 %5195, %v5192
      %v5197 = vpop.permute.xlu0 %5196
      %5200 = vset.pattern.permute.xlu0 0
      %5201 = vperm.xlu0 %5200, %v5193
      %v5202 = vpop.permute.xlu0 %5201
      %v5204 = vmul.f32 %v5189, %v5197
      %v5205 = vmul.f32 %v5190, %v5202
      %s5206 = scalar_lea.vmem %s3, 256
      %v5207 = vld [vmem:[%s5206] sm:$0xff]
      %v5208 = vld [vmem:[%s5206 + $0x8] sm:$0xff]
      %5210 = vset.pattern.permute.xlu0 0
      %5211 = vperm.xlu0 %5210, %v5207
      %v5212 = vpop.permute.xlu0 %5211
      %5215 = vset.pattern.permute.xlu0 0
      %5216 = vperm.xlu0 %5215, %v5208
      %v5217 = vpop.permute.xlu0 %5216
      %v5219 = vadd.f32 %v5204, %v5212
      %v5220 = vadd.f32 %v5205, %v5217
      %v5221 = vmax.f32 %v5219, 0.0
      %v5222 = vmax.f32 %v5220, 0.0
      %5225 = vrot.lane.b32.xlu0 %v5221, 5
      %v5226 = vpop.permute.xlu0 %5225
      %5227 = vrot.lane.b32.xlu0 %v5222, 5
      %v5228 = vpop.permute.xlu0 %5227
      %5231 = vst.msk [vmem:[#allocation2] sm:$0xff] %vm4742, %v5226
      %5232 = vst.msk [vmem:[#allocation2 + $0x28] sm:$0xff] %vm4742, %v5228
      %v5233 = vld [vmem:[#allocation2] sm:$0xff]
      %v5234 = vld [vmem:[#allocation2 + $0x28] sm:$0xff]
      %v5235 = vld [vmem:[%s10] sm:$0x1]
      %v5237 = vperm.slane %v5235, 0
      %v5239 = vmul.f32 %v5233, %v5237
      %v5240 = vmul.f32 %v5234, %v5237
      %s5241 = scalar_lea.vmem %s1, 2880
      %v5242 = vld [vmem:[%s5241] sm:$0xff]
      %v5243 = vld [vmem:[%s5241 + $0x8] sm:$0xff]
      %v5244 = vld [vmem:[%s4753] sm:$0x1]
      %v5246 = vperm.slane %v5244, 0
      %5247 = vrot.lane.b32.xlu0 %v5246, 1
      %v5248 = vpop.permute.xlu0 %5247
      %v5250 = vmul.f32 %v5233, %v5248
      %v5251 = vmul.f32 %v5234, %v5248
      %s5252 = scalar_lea.vmem %s1, 2944
      %v5253 = vld [vmem:[%s5252] sm:$0xff]
      %v5254 = vld [vmem:[%s5252 + $0x8] sm:$0xff]
      %5257 = vrot.lane.b32.xlu0 %v5250, 127
      %v5258 = vpop.permute.xlu0 %5257
      %5259 = vrot.lane.b32.xlu0 %v5251, 127
      %v5260 = vpop.permute.xlu0 %5259
      %v5264 = vsel %vm937, %v5253, 0
      %v5267 = vsel %vm937, %v5254, 0
      %5269 = vmatpush.msra.mxu0 0.0
      %5270 = vmatpush.msra.mxu0 0.0
      %5271 = vmatpush.msra.mxu0 0.0
      %5272 = vmatpush.msra.mxu0 0.0
      %5273 = vmatpush.msra.mxu0 0.0
      %5274 = vmatpush.msra.mxu0 0.0
      %5275 = vmatpush.msra.mxu0 0.0
      %5276 = vmatpush.msra.mxu0 0.0
      %5277 = vmatpush.msra.mxu0 0.0
      %5278 = vmatpush.msra.mxu0 0.0
      %5279 = vmatpush.msra.mxu0 0.0
      %5280 = vmatpush.msra.mxu0 0.0
      %5281 = vmatpush.msra.mxu0 0.0
      %5282 = vmatpush.msra.mxu0 0.0
      %5283 = vmatpush.msra.mxu0 %v5260
      %5284 = vmatpush.msra.mxu0 %v5258
      %5285 = vmatmul.f32.gmra.mxu0 %v5264
      %v5286 = vpop.f32.mrf.mxu0
      %v5287 = vadd.f32 0.0, %v5286
      %5288 = vmatmul.f32.gmra.mxu0 %v5267
      %v5289 = vpop.f32.mrf.mxu0
      %v5290 = vadd.f32 0.0, %v5289
      %5291 = vdwg.mxu0
      %v5293 = vsel %vm937, %v5242, 0
      %v5296 = vsel %vm937, %v5243, 0
      %5298 = vmatpush.msra.mxu0 0.0
      %5299 = vmatpush.msra.mxu0 0.0
      %5300 = vmatpush.msra.mxu0 0.0
      %5301 = vmatpush.msra.mxu0 0.0
      %5302 = vmatpush.msra.mxu0 0.0
      %5303 = vmatpush.msra.mxu0 0.0
      %5304 = vmatpush.msra.mxu0 0.0
      %5305 = vmatpush.msra.mxu0 0.0
      %5306 = vmatpush.msra.mxu0 0.0
      %5307 = vmatpush.msra.mxu0 0.0
      %5308 = vmatpush.msra.mxu0 0.0
      %5309 = vmatpush.msra.mxu0 0.0
      %5310 = vmatpush.msra.mxu0 0.0
      %5311 = vmatpush.msra.mxu0 0.0
      %5312 = vmatpush.msra.mxu0 %v5240
      %5313 = vmatpush.msra.mxu0 %v5239
      %5314 = vmatmul.f32.gmra.mxu0 %v5293
      %v5315 = vpop.f32.mrf.mxu0
      %v5316 = vadd.f32 %v5287, %v5315
      %5317 = vmatmul.f32.gmra.mxu0 %v5296
      %v5318 = vpop.f32.mrf.mxu0
      %v5319 = vadd.f32 %v5290, %v5318
      %5320 = vdwg.mxu0
      %v5321 = vld [vmem:[%s4826] sm:$0x1]
      %v5323 = vperm.slane %v5321, 0
      %5324 = vrot.lane.b32.xlu0 %v5323, 2
      %v5325 = vpop.permute.xlu0 %5324
      %v5327 = vmul.f32 %v5233, %v5325
      %v5328 = vmul.f32 %v5234, %v5325
      %s5329 = scalar_lea.vmem %s1, 3008
      %v5330 = vld [vmem:[%s5329] sm:$0xff]
      %v5331 = vld [vmem:[%s5329 + $0x8] sm:$0xff]
      %5334 = vrot.lane.b32.xlu0 %v5327, 126
      %v5335 = vpop.permute.xlu0 %5334
      %5336 = vrot.lane.b32.xlu0 %v5328, 126
      %v5337 = vpop.permute.xlu0 %5336
      %v5341 = vsel %vm937, %v5330, 0
      %v5344 = vsel %vm937, %v5331, 0
      %5346 = vmatpush.msra.mxu0 0.0
      %5347 = vmatpush.msra.mxu0 0.0
      %5348 = vmatpush.msra.mxu0 0.0
      %5349 = vmatpush.msra.mxu0 0.0
      %5350 = vmatpush.msra.mxu0 0.0
      %5351 = vmatpush.msra.mxu0 0.0
      %5352 = vmatpush.msra.mxu0 0.0
      %5353 = vmatpush.msra.mxu0 0.0
      %5354 = vmatpush.msra.mxu0 0.0
      %5355 = vmatpush.msra.mxu0 0.0
      %5356 = vmatpush.msra.mxu0 0.0
      %5357 = vmatpush.msra.mxu0 0.0
      %5358 = vmatpush.msra.mxu0 0.0
      %5359 = vmatpush.msra.mxu0 0.0
      %5360 = vmatpush.msra.mxu0 %v5337
      %5361 = vmatpush.msra.mxu0 %v5335
      %5362 = vmatmul.f32.gmra.mxu0 %v5341
      %v5363 = vpop.f32.mrf.mxu0
      %v5364 = vadd.f32 0.0, %v5363
      %5365 = vmatmul.f32.gmra.mxu0 %v5344
      %v5366 = vpop.f32.mrf.mxu0
      %v5367 = vadd.f32 0.0, %v5366
      %5368 = vdwg.mxu0
      %v5369 = vadd.f32 %v5316, %v5364
      %v5370 = vadd.f32 %v5319, %v5367
      %v5371 = vld [vmem:[%s4872] sm:$0x1]
      %v5373 = vperm.slane %v5371, 0
      %5374 = vrot.lane.b32.xlu0 %v5373, 4
      %v5375 = vpop.permute.xlu0 %5374
      %v5377 = vmul.f32 %v5233, %v5375
      %v5378 = vmul.f32 %v5234, %v5375
      %s5379 = scalar_lea.vmem %s1, 3072
      %v5380 = vld [vmem:[%s5379] sm:$0xff]
      %v5381 = vld [vmem:[%s5379 + $0x8] sm:$0xff]
      %5384 = vrot.lane.b32.xlu0 %v5377, 124
      %v5385 = vpop.permute.xlu0 %5384
      %5386 = vrot.lane.b32.xlu0 %v5378, 124
      %v5387 = vpop.permute.xlu0 %5386
      %v5391 = vsel %vm937, %v5380, 0
      %v5394 = vsel %vm937, %v5381, 0
      %5396 = vmatpush.msra.mxu0 0.0
      %5397 = vmatpush.msra.mxu0 0.0
      %5398 = vmatpush.msra.mxu0 0.0
      %5399 = vmatpush.msra.mxu0 0.0
      %5400 = vmatpush.msra.mxu0 0.0
      %5401 = vmatpush.msra.mxu0 0.0
      %5402 = vmatpush.msra.mxu0 0.0
      %5403 = vmatpush.msra.mxu0 0.0
      %5404 = vmatpush.msra.mxu0 0.0
      %5405 = vmatpush.msra.mxu0 0.0
      %5406 = vmatpush.msra.mxu0 0.0
      %5407 = vmatpush.msra.mxu0 0.0
      %5408 = vmatpush.msra.mxu0 0.0
      %5409 = vmatpush.msra.mxu0 0.0
      %5410 = vmatpush.msra.mxu0 %v5387
      %5411 = vmatpush.msra.mxu0 %v5385
      %5412 = vmatmul.f32.gmra.mxu0 %v5391
      %v5413 = vpop.f32.mrf.mxu0
      %v5414 = vadd.f32 0.0, %v5413
      %5415 = vmatmul.f32.gmra.mxu0 %v5394
      %v5416 = vpop.f32.mrf.mxu0
      %v5417 = vadd.f32 0.0, %v5416
      %5418 = vdwg.mxu0
      %v5419 = vadd.f32 %v5369, %v5414
      %v5420 = vadd.f32 %v5370, %v5417
      %s5421 = scalar_lea.vmem %s1, 3136
      %v5422 = vld [vmem:[%s5421] sm:$0xff]
      %v5423 = vld [vmem:[%s5421 + $0x8] sm:$0xff]
      %5426 = vrot.lane.b32.xlu0 %v5233, 123
      %v5427 = vpop.permute.xlu0 %5426
      %5428 = vrot.lane.b32.xlu0 %v5234, 123
      %v5429 = vpop.permute.xlu0 %5428
      %v5433 = vsel %vm937, %v5422, 0
      %v5436 = vsel %vm937, %v5423, 0
      %5438 = vmatpush.msra.mxu0 0.0
      %5439 = vmatpush.msra.mxu0 0.0
      %5440 = vmatpush.msra.mxu0 0.0
      %5441 = vmatpush.msra.mxu0 0.0
      %5442 = vmatpush.msra.mxu0 0.0
      %5443 = vmatpush.msra.mxu0 0.0
      %5444 = vmatpush.msra.mxu0 0.0
      %5445 = vmatpush.msra.mxu0 0.0
      %5446 = vmatpush.msra.mxu0 0.0
      %5447 = vmatpush.msra.mxu0 0.0
      %5448 = vmatpush.msra.mxu0 0.0
      %5449 = vmatpush.msra.mxu0 0.0
      %5450 = vmatpush.msra.mxu0 0.0
      %5451 = vmatpush.msra.mxu0 0.0
      %5452 = vmatpush.msra.mxu0 %v5429
      %5453 = vmatpush.msra.mxu0 %v5427
      %5454 = vmatmul.f32.gmra.mxu0 %v5433
      %v5455 = vpop.f32.mrf.mxu0
      %v5456 = vadd.f32 0.0, %v5455
      %5457 = vmatmul.f32.gmra.mxu0 %v5436
      %v5458 = vpop.f32.mrf.mxu0
      %v5459 = vadd.f32 0.0, %v5458
      %5460 = vdwg.mxu0
      %v5461 = vadd.f32 %v5419, %v5456
      %v5462 = vadd.f32 %v5420, %v5459
      %v5463 = vld [vmem:[%s4956] sm:$0x1]
      %v5465 = vperm.slane %v5463, 0
      %5466 = vrot.lane.b32.xlu0 %v5465, 6
      %v5467 = vpop.permute.xlu0 %5466
      %v5469 = vmul.f32 %v5233, %v5467
      %v5470 = vmul.f32 %v5234, %v5467
      %s5471 = scalar_lea.vmem %s1, 3200
      %v5472 = vld [vmem:[%s5471] sm:$0xff]
      %v5473 = vld [vmem:[%s5471 + $0x8] sm:$0xff]
      %5476 = vrot.lane.b32.xlu0 %v5469, 122
      %v5477 = vpop.permute.xlu0 %5476
      %5478 = vrot.lane.b32.xlu0 %v5470, 122
      %v5479 = vpop.permute.xlu0 %5478
      %v5483 = vsel %vm937, %v5472, 0
      %v5486 = vsel %vm937, %v5473, 0
      %5488 = vmatpush.msra.mxu0 0.0
      %5489 = vmatpush.msra.mxu0 0.0
      %5490 = vmatpush.msra.mxu0 0.0
      %5491 = vmatpush.msra.mxu0 0.0
      %5492 = vmatpush.msra.mxu0 0.0
      %5493 = vmatpush.msra.mxu0 0.0
      %5494 = vmatpush.msra.mxu0 0.0
      %5495 = vmatpush.msra.mxu0 0.0
      %5496 = vmatpush.msra.mxu0 0.0
      %5497 = vmatpush.msra.mxu0 0.0
      %5498 = vmatpush.msra.mxu0 0.0
      %5499 = vmatpush.msra.mxu0 0.0
      %5500 = vmatpush.msra.mxu0 0.0
      %5501 = vmatpush.msra.mxu0 0.0
      %5502 = vmatpush.msra.mxu0 %v5479
      %5503 = vmatpush.msra.mxu0 %v5477
      %5504 = vmatmul.f32.gmra.mxu0 %v5483
      %v5505 = vpop.f32.mrf.mxu0
      %v5506 = vadd.f32 0.0, %v5505
      %5507 = vmatmul.f32.gmra.mxu0 %v5486
      %v5508 = vpop.f32.mrf.mxu0
      %v5509 = vadd.f32 0.0, %v5508
      %5510 = vdwg.mxu0
      %v5511 = vadd.f32 %v5461, %v5506
      %v5512 = vadd.f32 %v5462, %v5509
      %v5513 = vld [vmem:[%s5002] sm:$0x1]
      %v5515 = vperm.slane %v5513, 0
      %5516 = vrot.lane.b32.xlu0 %v5515, 8
      %v5517 = vpop.permute.xlu0 %5516
      %v5519 = vmul.f32 %v5233, %v5517
      %v5520 = vmul.f32 %v5234, %v5517
      %s5521 = scalar_lea.vmem %s1, 3264
      %v5522 = vld [vmem:[%s5521] sm:$0xff]
      %v5523 = vld [vmem:[%s5521 + $0x8] sm:$0xff]
      %5526 = vrot.lane.b32.xlu0 %v5519, 120
      %v5527 = vpop.permute.xlu0 %5526
      %5528 = vrot.lane.b32.xlu0 %v5520, 120
      %v5529 = vpop.permute.xlu0 %5528
      %v5533 = vsel %vm937, %v5522, 0
      %v5536 = vsel %vm937, %v5523, 0
      %5538 = vmatpush.msra.mxu0 0.0
      %5539 = vmatpush.msra.mxu0 0.0
      %5540 = vmatpush.msra.mxu0 0.0
      %5541 = vmatpush.msra.mxu0 0.0
      %5542 = vmatpush.msra.mxu0 0.0
      %5543 = vmatpush.msra.mxu0 0.0
      %5544 = vmatpush.msra.mxu0 0.0
      %5545 = vmatpush.msra.mxu0 0.0
      %5546 = vmatpush.msra.mxu0 0.0
      %5547 = vmatpush.msra.mxu0 0.0
      %5548 = vmatpush.msra.mxu0 0.0
      %5549 = vmatpush.msra.mxu0 0.0
      %5550 = vmatpush.msra.mxu0 0.0
      %5551 = vmatpush.msra.mxu0 0.0
      %5552 = vmatpush.msra.mxu0 %v5529
      %5553 = vmatpush.msra.mxu0 %v5527
      %5554 = vmatmul.f32.gmra.mxu0 %v5533
      %v5555 = vpop.f32.mrf.mxu0
      %v5556 = vadd.f32 0.0, %v5555
      %5557 = vmatmul.f32.gmra.mxu0 %v5536
      %v5558 = vpop.f32.mrf.mxu0
      %v5559 = vadd.f32 0.0, %v5558
      %5560 = vdwg.mxu0
      %v5561 = vadd.f32 %v5511, %v5556
      %v5562 = vadd.f32 %v5512, %v5559
      %v5563 = vld [vmem:[%s5048] sm:$0x1]
      %v5565 = vperm.slane %v5563, 0
      %5566 = vrot.lane.b32.xlu0 %v5565, 9
      %v5567 = vpop.permute.xlu0 %5566
      %v5569 = vmul.f32 %v5233, %v5567
      %v5570 = vmul.f32 %v5234, %v5567
      %s5571 = scalar_lea.vmem %s1, 3328
      %v5572 = vld [vmem:[%s5571] sm:$0xff]
      %v5573 = vld [vmem:[%s5571 + $0x8] sm:$0xff]
      %5576 = vrot.lane.b32.xlu0 %v5569, 119
      %v5577 = vpop.permute.xlu0 %5576
      %5578 = vrot.lane.b32.xlu0 %v5570, 119
      %v5579 = vpop.permute.xlu0 %5578
      %v5583 = vsel %vm937, %v5572, 0
      %v5586 = vsel %vm937, %v5573, 0
      %5588 = vmatpush.msra.mxu0 0.0
      %5589 = vmatpush.msra.mxu0 0.0
      %5590 = vmatpush.msra.mxu0 0.0
      %5591 = vmatpush.msra.mxu0 0.0
      %5592 = vmatpush.msra.mxu0 0.0
      %5593 = vmatpush.msra.mxu0 0.0
      %5594 = vmatpush.msra.mxu0 0.0
      %5595 = vmatpush.msra.mxu0 0.0
      %5596 = vmatpush.msra.mxu0 0.0
      %5597 = vmatpush.msra.mxu0 0.0
      %5598 = vmatpush.msra.mxu0 0.0
      %5599 = vmatpush.msra.mxu0 0.0
      %5600 = vmatpush.msra.mxu0 0.0
      %5601 = vmatpush.msra.mxu0 0.0
      %5602 = vmatpush.msra.mxu0 %v5579
      %5603 = vmatpush.msra.mxu0 %v5577
      %5604 = vmatmul.f32.gmra.mxu0 %v5583
      %v5605 = vpop.f32.mrf.mxu0
      %v5606 = vadd.f32 0.0, %v5605
      %5607 = vmatmul.f32.gmra.mxu0 %v5586
      %v5608 = vpop.f32.mrf.mxu0
      %v5609 = vadd.f32 0.0, %v5608
      %5610 = vdwg.mxu0
      %v5611 = vadd.f32 %v5561, %v5606
      %v5612 = vadd.f32 %v5562, %v5609
      %v5613 = vld [vmem:[%s5094] sm:$0x1]
      %v5615 = vperm.slane %v5613, 0
      %5616 = vrot.lane.b32.xlu0 %v5615, 10
      %v5617 = vpop.permute.xlu0 %5616
      %v5619 = vmul.f32 %v5233, %v5617
      %v5620 = vmul.f32 %v5234, %v5617
      %s5621 = scalar_lea.vmem %s1, 3392
      %v5622 = vld [vmem:[%s5621] sm:$0xff]
      %v5623 = vld [vmem:[%s5621 + $0x8] sm:$0xff]
      %5626 = vrot.lane.b32.xlu0 %v5619, 118
      %v5627 = vpop.permute.xlu0 %5626
      %5628 = vrot.lane.b32.xlu0 %v5620, 118
      %v5629 = vpop.permute.xlu0 %5628
      %v5633 = vsel %vm937, %v5622, 0
      %v5636 = vsel %vm937, %v5623, 0
      %5638 = vmatpush.msra.mxu0 0.0
      %5639 = vmatpush.msra.mxu0 0.0
      %5640 = vmatpush.msra.mxu0 0.0
      %5641 = vmatpush.msra.mxu0 0.0
      %5642 = vmatpush.msra.mxu0 0.0
      %5643 = vmatpush.msra.mxu0 0.0
      %5644 = vmatpush.msra.mxu0 0.0
      %5645 = vmatpush.msra.mxu0 0.0
      %5646 = vmatpush.msra.mxu0 0.0
      %5647 = vmatpush.msra.mxu0 0.0
      %5648 = vmatpush.msra.mxu0 0.0
      %5649 = vmatpush.msra.mxu0 0.0
      %5650 = vmatpush.msra.mxu0 0.0
      %5651 = vmatpush.msra.mxu0 0.0
      %5652 = vmatpush.msra.mxu0 %v5629
      %5653 = vmatpush.msra.mxu0 %v5627
      %5654 = vmatmul.f32.gmra.mxu0 %v5633
      %v5655 = vpop.f32.mrf.mxu0
      %v5656 = vadd.f32 0.0, %v5655
      %5657 = vmatmul.f32.gmra.mxu0 %v5636
      %v5658 = vpop.f32.mrf.mxu0
      %v5659 = vadd.f32 0.0, %v5658
      %5660 = vdwg.mxu0
      %v5661 = vadd.f32 %v5611, %v5656
      %v5662 = vadd.f32 %v5612, %v5659
      %v5663 = vsel %vm1346, %v5661, 0.0
      %5664 = vadd.xlane.f32.xlu0 %v5663
      %v5665 = vpop.xlane.xlu0 %5664
      %v5666 = vsel %vm1346, %v5662, 0.0
      %5667 = vadd.xlane.f32.xlu0 %v5666
      %v5668 = vpop.xlane.xlu0 %5667
      %v5669 = vmul.f32 %v5665, %v5152
      %v5670 = vmul.f32 %v5668, %v5152
      %v5671 = vsub.f32 %v5661, %v5669
      %v5672 = vsub.f32 %v5662, %v5670
      %v5673 = vmul.f32 %v5671, %v5671
      %v5674 = vmul.f32 %v5672, %v5672
      %v5675 = vsel %vm1346, %v5673, 0.0
      %5676 = vadd.xlane.f32.xlu0 %v5675
      %v5677 = vpop.xlane.xlu0 %5676
      %v5678 = vsel %vm1346, %v5674, 0.0
      %5679 = vadd.xlane.f32.xlu0 %v5678
      %v5680 = vpop.xlane.xlu0 %5679
      %v5681 = vmul.f32 %v5677, %v5152
      %v5682 = vmul.f32 %v5680, %v5152
      %v5683 = vadd.f32 %v5681, 1e-05
      %v5684 = vadd.f32 %v5682, 1e-05
      %v5685 = vrsqrt.pop %v5683
      %v5686 = vmul.f32 %v5685, %v5683
      %v5687 = vmul.f32 %v5686, %v5685
      %v5688 = vmul.f32 0.5, %v5687
      %v5689 = vsub.f32 1.5, %v5688
      %v5690 = vmul.f32 %v5685, %v5689
      %vm5691 = vweird.f32 %v5683
      %vm5692 = vweird.f32 %v5685
      %vm5693 = vmor %vm5691, %vm5692
      %v5694 = vsel %vm5693, %v5685, %v5690
      %v5695 = vrsqrt.pop %v5684
      %v5696 = vmul.f32 %v5695, %v5684
      %v5697 = vmul.f32 %v5696, %v5695
      %v5698 = vmul.f32 0.5, %v5697
      %v5699 = vsub.f32 1.5, %v5698
      %v5700 = vmul.f32 %v5695, %v5699
      %vm5701 = vweird.f32 %v5684
      %vm5702 = vweird.f32 %v5695
      %vm5703 = vmor %vm5701, %vm5702
      %v5704 = vsel %vm5703, %v5695, %v5700
      %v5705 = vmul.f32 %v5671, %v5694
      %v5706 = vmul.f32 %v5672, %v5704
      %s5707 = scalar_lea.vmem %s2, 320
      %v5708 = vld [vmem:[%s5707] sm:$0xff]
      %v5709 = vld [vmem:[%s5707 + $0x8] sm:$0xff]
      %5711 = vset.pattern.permute.xlu0 0
      %5712 = vperm.xlu0 %5711, %v5708
      %v5713 = vpop.permute.xlu0 %5712
      %5716 = vset.pattern.permute.xlu0 0
      %5717 = vperm.xlu0 %5716, %v5709
      %v5718 = vpop.permute.xlu0 %5717
      %v5720 = vmul.f32 %v5705, %v5713
      %v5721 = vmul.f32 %v5706, %v5718
      %s5722 = scalar_lea.vmem %s3, 320
      %v5723 = vld [vmem:[%s5722] sm:$0xff]
      %v5724 = vld [vmem:[%s5722 + $0x8] sm:$0xff]
      %5726 = vset.pattern.permute.xlu0 0
      %5727 = vperm.xlu0 %5726, %v5723
      %v5728 = vpop.permute.xlu0 %5727
      %5731 = vset.pattern.permute.xlu0 0
      %5732 = vperm.xlu0 %5731, %v5724
      %v5733 = vpop.permute.xlu0 %5732
      %v5735 = vadd.f32 %v5720, %v5728
      %v5736 = vadd.f32 %v5721, %v5733
      %v5737 = vmax.f32 %v5735, 0.0
      %v5738 = vmax.f32 %v5736, 0.0
      %v5739 = vld [vmem:[%s6] sm:$0xff]
      %v5740 = vld [vmem:[%s6 + $0x8] sm:$0xff]
      %v5741 = vld [vmem:[%s6 + $0x10] sm:$0xff]
      %v5742 = vld [vmem:[%s6 + $0x18] sm:$0xff]
      %v5744 = vsel %vm1346, %v5737, 0
      %v5747 = vsel %vm1346, %v5738, 0
      %5749 = vmatpush.msra.mxu0 0.0
      %5750 = vmatpush.msra.mxu0 0.0
      %5751 = vmatpush.msra.mxu0 0.0
      %5752 = vmatpush.msra.mxu0 0.0
      %5753 = vmatpush.msra.mxu0 0.0
      %5754 = vmatpush.msra.mxu0 0.0
      %5755 = vmatpush.msra.mxu0 0.0
      %5756 = vmatpush.msra.mxu0 0.0
      %5757 = vmatpush.msra.mxu0 0.0
      %5758 = vmatpush.msra.mxu0 0.0
      %5759 = vmatpush.msra.mxu0 0.0
      %5760 = vmatpush.msra.mxu0 0.0
      %5761 = vmatpush.msra.mxu0 %v5742
      %5762 = vmatpush.msra.mxu0 %v5741
      %5763 = vmatpush.msra.mxu0 %v5740
      %5764 = vmatpush.msra.mxu0 %v5739
      %5765 = vmatmul.f32.gmra.mxu0 %v5744
      %v5766 = vpop.f32.mrf.mxu0
      %v5767 = vadd.f32 0.0, %v5766
      %5768 = vmatmul.f32.gmra.mxu0 %v5747
      %v5769 = vpop.f32.mrf.mxu0
      %v5770 = vadd.f32 0.0, %v5769
      %5771 = vdwg.mxu0
      %s5772 = scalar_lea.vmem %s6, 32
      %v5773 = vld [vmem:[%s5772] sm:$0xff]
      %v5774 = vld [vmem:[%s5772 + $0x8] sm:$0xff]
      %v5775 = vld [vmem:[%s5772 + $0x10] sm:$0xff]
      %v5776 = vld [vmem:[%s5772 + $0x18] sm:$0xff]
      %5777 = vmatpush.msra.mxu0 0.0
      %5778 = vmatpush.msra.mxu0 0.0
      %5779 = vmatpush.msra.mxu0 0.0
      %5780 = vmatpush.msra.mxu0 0.0
      %5781 = vmatpush.msra.mxu0 0.0
      %5782 = vmatpush.msra.mxu0 0.0
      %5783 = vmatpush.msra.mxu0 0.0
      %5784 = vmatpush.msra.mxu0 0.0
      %5785 = vmatpush.msra.mxu0 0.0
      %5786 = vmatpush.msra.mxu0 0.0
      %5787 = vmatpush.msra.mxu0 0.0
      %5788 = vmatpush.msra.mxu0 0.0
      %5789 = vmatpush.msra.mxu0 %v5776
      %5790 = vmatpush.msra.mxu0 %v5775
      %5791 = vmatpush.msra.mxu0 %v5774
      %5792 = vmatpush.msra.mxu0 %v5773
      %5793 = vmatmul.f32.gmra.mxu0 %v5744
      %v5794 = vpop.f32.mrf.mxu0
      %v5795 = vadd.f32 0.0, %v5794
      %5796 = vmatmul.f32.gmra.mxu0 %v5747
      %v5797 = vpop.f32.mrf.mxu0
      %v5798 = vadd.f32 0.0, %v5797
      %5799 = vdwg.mxu0
      %s5800 = scalar_lea.vmem %s6, 64
      %v5801 = vld [vmem:[%s5800] sm:$0xff]
      %v5802 = vld [vmem:[%s5800 + $0x8] sm:$0xff]
      %v5803 = vld [vmem:[%s5800 + $0x10] sm:$0xff]
      %v5804 = vld [vmem:[%s5800 + $0x18] sm:$0xff]
      %5805 = vmatpush.msra.mxu0 0.0
      %5806 = vmatpush.msra.mxu0 0.0
      %5807 = vmatpush.msra.mxu0 0.0
      %5808 = vmatpush.msra.mxu0 0.0
      %5809 = vmatpush.msra.mxu0 0.0
      %5810 = vmatpush.msra.mxu0 0.0
      %5811 = vmatpush.msra.mxu0 0.0
      %5812 = vmatpush.msra.mxu0 0.0
      %5813 = vmatpush.msra.mxu0 0.0
      %5814 = vmatpush.msra.mxu0 0.0
      %5815 = vmatpush.msra.mxu0 0.0
      %5816 = vmatpush.msra.mxu0 0.0
      %5817 = vmatpush.msra.mxu0 %v5804
      %5818 = vmatpush.msra.mxu0 %v5803
      %5819 = vmatpush.msra.mxu0 %v5802
      %5820 = vmatpush.msra.mxu0 %v5801
      %5821 = vmatmul.f32.gmra.mxu0 %v5744
      %v5822 = vpop.f32.mrf.mxu0
      %v5823 = vadd.f32 0.0, %v5822
      %5824 = vmatmul.f32.gmra.mxu0 %v5747
      %v5825 = vpop.f32.mrf.mxu0
      %v5826 = vadd.f32 0.0, %v5825
      %5827 = vdwg.mxu0
      %s5828 = scalar_lea.vmem %s6, 96
      %v5829 = vld [vmem:[%s5828] sm:$0xff]
      %v5830 = vld [vmem:[%s5828 + $0x8] sm:$0xff]
      %v5831 = vld [vmem:[%s5828 + $0x10] sm:$0xff]
      %v5832 = vld [vmem:[%s5828 + $0x18] sm:$0xff]
      %5833 = vmatpush.msra.mxu0 0.0
      %5834 = vmatpush.msra.mxu0 0.0
      %5835 = vmatpush.msra.mxu0 0.0
      %5836 = vmatpush.msra.mxu0 0.0
      %5837 = vmatpush.msra.mxu0 0.0
      %5838 = vmatpush.msra.mxu0 0.0
      %5839 = vmatpush.msra.mxu0 0.0
      %5840 = vmatpush.msra.mxu0 0.0
      %5841 = vmatpush.msra.mxu0 0.0
      %5842 = vmatpush.msra.mxu0 0.0
      %5843 = vmatpush.msra.mxu0 0.0
      %5844 = vmatpush.msra.mxu0 0.0
      %5845 = vmatpush.msra.mxu0 %v5832
      %5846 = vmatpush.msra.mxu0 %v5831
      %5847 = vmatpush.msra.mxu0 %v5830
      %5848 = vmatpush.msra.mxu0 %v5829
      %5849 = vmatmul.f32.gmra.mxu0 %v5744
      %v5850 = vpop.f32.mrf.mxu0
      %v5851 = vadd.f32 0.0, %v5850
      %5852 = vmatmul.f32.gmra.mxu0 %v5747
      %v5853 = vpop.f32.mrf.mxu0
      %v5854 = vadd.f32 0.0, %v5853
      %5855 = vdwg.mxu0
      %v5856 = vmax.f32 %v5767, %v5795
      %v5857 = vmax.f32 %v5770, %v5798
      %v5858 = vmax.f32 %v5823, %v5851
      %v5859 = vmax.f32 %v5826, %v5854
      %v5860 = vmax.f32 %v5856, %v5858
      %v5861 = vmax.f32 %v5857, %v5859
      %5864 = vrot.lane.b32.xlu0 %v5860, 3
      %v5865 = vpop.permute.xlu0 %5864
      %5866 = vrot.lane.b32.xlu0 %v5861, 3
      %v5867 = vpop.permute.xlu0 %5866
      %vm5870 = vcmask 89112
      %5871 = vst.msk [vmem:[#allocation2] sm:$0xff] %vm5870, %v5865
      %5872 = vst.msk [vmem:[#allocation2 + $0x28] sm:$0xff] %vm5870, %v5867
      %v5873 = vld [vmem:[#allocation2] sm:$0xff]
      %v5874 = vld [vmem:[#allocation2 + $0x28] sm:$0xff]
      %v5875 = vld [vmem:[%s11] sm:$0x1]
      %v5877 = vperm.slane %v5875, 0
      %v5879 = vmul.f32 %v5873, %v5877
      %v5880 = vmul.f32 %v5874, %v5877
      %s5881 = scalar_lea.vmem %s1, 3456
      %v5882 = vld [vmem:[%s5881] sm:$0xff]
      %v5883 = vld [vmem:[%s5881 + $0x8] sm:$0xff]
      %v5884 = vld [vmem:[%s5881 + $0x10] sm:$0xff]
      %v5885 = vld [vmem:[%s5881 + $0x18] sm:$0xff]
      %s5886 = scalar_lea.vmem %s11, 1
      %v5887 = vld [vmem:[%s5886] sm:$0x1]
      %v5889 = vperm.slane %v5887, 0
      %5890 = vrot.lane.b32.xlu0 %v5889, 1
      %v5891 = vpop.permute.xlu0 %5890
      %v5893 = vmul.f32 %v5873, %v5891
      %v5894 = vmul.f32 %v5874, %v5891
      %s5895 = scalar_lea.vmem %s1, 3520
      %v5896 = vld [vmem:[%s5895] sm:$0xff]
      %v5897 = vld [vmem:[%s5895 + $0x8] sm:$0xff]
      %v5898 = vld [vmem:[%s5895 + $0x10] sm:$0xff]
      %v5899 = vld [vmem:[%s5895 + $0x18] sm:$0xff]
      %5902 = vrot.lane.b32.xlu0 %v5893, 127
      %v5903 = vpop.permute.xlu0 %5902
      %5904 = vrot.lane.b32.xlu0 %v5894, 127
      %v5905 = vpop.permute.xlu0 %5904
      %v5909 = vsel %vm937, %v5896, 0
      %v5912 = vsel %vm937, %v5897, 0
      %v5915 = vsel %vm937, %v5898, 0
      %v5918 = vsel %vm937, %v5899, 0
      %5920 = vmatpush.msra.mxu0 0.0
      %5921 = vmatpush.msra.mxu0 0.0
      %5922 = vmatpush.msra.mxu0 0.0
      %5923 = vmatpush.msra.mxu0 0.0
      %5924 = vmatpush.msra.mxu0 0.0
      %5925 = vmatpush.msra.mxu0 0.0
      %5926 = vmatpush.msra.mxu0 0.0
      %5927 = vmatpush.msra.mxu0 0.0
      %5928 = vmatpush.msra.mxu0 0.0
      %5929 = vmatpush.msra.mxu0 0.0
      %5930 = vmatpush.msra.mxu0 0.0
      %5931 = vmatpush.msra.mxu0 0.0
      %5932 = vmatpush.msra.mxu0 0.0
      %5933 = vmatpush.msra.mxu0 0.0
      %5934 = vmatpush.msra.mxu0 %v5905
      %5935 = vmatpush.msra.mxu0 %v5903
      %5936 = vmatmul.f32.gmra.mxu0 %v5909
      %v5937 = vpop.f32.mrf.mxu0
      %v5938 = vadd.f32 0.0, %v5937
      %5939 = vmatmul.f32.gmra.mxu0 %v5912
      %v5940 = vpop.f32.mrf.mxu0
      %v5941 = vadd.f32 0.0, %v5940
      %5942 = vmatmul.f32.gmra.mxu0 %v5915
      %v5943 = vpop.f32.mrf.mxu0
      %v5944 = vadd.f32 0.0, %v5943
      %5945 = vmatmul.f32.gmra.mxu0 %v5918
      %v5946 = vpop.f32.mrf.mxu0
      %v5947 = vadd.f32 0.0, %v5946
      %5948 = vdwg.mxu0
      %v5950 = vsel %vm937, %v5882, 0
      %v5953 = vsel %vm937, %v5883, 0
      %v5956 = vsel %vm937, %v5884, 0
      %v5959 = vsel %vm937, %v5885, 0
      %5961 = vmatpush.msra.mxu0 0.0
      %5962 = vmatpush.msra.mxu0 0.0
      %5963 = vmatpush.msra.mxu0 0.0
      %5964 = vmatpush.msra.mxu0 0.0
      %5965 = vmatpush.msra.mxu0 0.0
      %5966 = vmatpush.msra.mxu0 0.0
      %5967 = vmatpush.msra.mxu0 0.0
      %5968 = vmatpush.msra.mxu0 0.0
      %5969 = vmatpush.msra.mxu0 0.0
      %5970 = vmatpush.msra.mxu0 0.0
      %5971 = vmatpush.msra.mxu0 0.0
      %5972 = vmatpush.msra.mxu0 0.0
      %5973 = vmatpush.msra.mxu0 0.0
      %5974 = vmatpush.msra.mxu0 0.0
      %5975 = vmatpush.msra.mxu0 %v5880
      %5976 = vmatpush.msra.mxu0 %v5879
      %5977 = vmatmul.f32.gmra.mxu0 %v5950
      %v5978 = vpop.f32.mrf.mxu0
      %v5979 = vadd.f32 %v5938, %v5978
      %5980 = vmatmul.f32.gmra.mxu0 %v5953
      %v5981 = vpop.f32.mrf.mxu0
      %v5982 = vadd.f32 %v5941, %v5981
      %5983 = vmatmul.f32.gmra.mxu0 %v5956
      %v5984 = vpop.f32.mrf.mxu0
      %v5985 = vadd.f32 %v5944, %v5984
      %5986 = vmatmul.f32.gmra.mxu0 %v5959
      %v5987 = vpop.f32.mrf.mxu0
      %v5988 = vadd.f32 %v5947, %v5987
      %5989 = vdwg.mxu0
      %s5990 = scalar_lea.vmem %s11, 2
      %v5991 = vld [vmem:[%s5990] sm:$0x1]
      %v5993 = vperm.slane %v5991, 0
      %5994 = vrot.lane.b32.xlu0 %v5993, 2
      %v5995 = vpop.permute.xlu0 %5994
      %v5997 = vmul.f32 %v5873, %v5995
      %v5998 = vmul.f32 %v5874, %v5995
      %s5999 = scalar_lea.vmem %s1, 3584
      %v6000 = vld [vmem:[%s5999] sm:$0xff]
      %v6001 = vld [vmem:[%s5999 + $0x8] sm:$0xff]
      %v6002 = vld [vmem:[%s5999 + $0x10] sm:$0xff]
      %v6003 = vld [vmem:[%s5999 + $0x18] sm:$0xff]
      %6006 = vrot.lane.b32.xlu0 %v5997, 126
      %v6007 = vpop.permute.xlu0 %6006
      %6008 = vrot.lane.b32.xlu0 %v5998, 126
      %v6009 = vpop.permute.xlu0 %6008
      %v6013 = vsel %vm937, %v6000, 0
      %v6016 = vsel %vm937, %v6001, 0
      %v6019 = vsel %vm937, %v6002, 0
      %v6022 = vsel %vm937, %v6003, 0
      %6024 = vmatpush.msra.mxu0 0.0
      %6025 = vmatpush.msra.mxu0 0.0
      %6026 = vmatpush.msra.mxu0 0.0
      %6027 = vmatpush.msra.mxu0 0.0
      %6028 = vmatpush.msra.mxu0 0.0
      %6029 = vmatpush.msra.mxu0 0.0
      %6030 = vmatpush.msra.mxu0 0.0
      %6031 = vmatpush.msra.mxu0 0.0
      %6032 = vmatpush.msra.mxu0 0.0
      %6033 = vmatpush.msra.mxu0 0.0
      %6034 = vmatpush.msra.mxu0 0.0
      %6035 = vmatpush.msra.mxu0 0.0
      %6036 = vmatpush.msra.mxu0 0.0
      %6037 = vmatpush.msra.mxu0 0.0
      %6038 = vmatpush.msra.mxu0 %v6009
      %6039 = vmatpush.msra.mxu0 %v6007
      %6040 = vmatmul.f32.gmra.mxu0 %v6013
      %v6041 = vpop.f32.mrf.mxu0
      %v6042 = vadd.f32 0.0, %v6041
      %6043 = vmatmul.f32.gmra.mxu0 %v6016
      %v6044 = vpop.f32.mrf.mxu0
      %v6045 = vadd.f32 0.0, %v6044
      %6046 = vmatmul.f32.gmra.mxu0 %v6019
      %v6047 = vpop.f32.mrf.mxu0
      %v6048 = vadd.f32 0.0, %v6047
      %6049 = vmatmul.f32.gmra.mxu0 %v6022
      %v6050 = vpop.f32.mrf.mxu0
      %v6051 = vadd.f32 0.0, %v6050
      %6052 = vdwg.mxu0
      %v6053 = vadd.f32 %v5979, %v6042
      %v6054 = vadd.f32 %v5982, %v6045
      %v6055 = vadd.f32 %v5985, %v6048
      %v6056 = vadd.f32 %v5988, %v6051
      %s6057 = scalar_lea.vmem %s11, 3
      %v6058 = vld [vmem:[%s6057] sm:$0x1]
      %v6060 = vperm.slane %v6058, 0
      %6061 = vrot.lane.b32.xlu0 %v6060, 2
      %v6062 = vpop.permute.xlu0 %6061
      %v6064 = vmul.f32 %v5873, %v6062
      %v6065 = vmul.f32 %v5874, %v6062
      %s6066 = scalar_lea.vmem %s1, 3648
      %v6067 = vld [vmem:[%s6066] sm:$0xff]
      %v6068 = vld [vmem:[%s6066 + $0x8] sm:$0xff]
      %v6069 = vld [vmem:[%s6066 + $0x10] sm:$0xff]
      %v6070 = vld [vmem:[%s6066 + $0x18] sm:$0xff]
      %6073 = vrot.lane.b32.xlu0 %v6064, 126
      %v6074 = vpop.permute.xlu0 %6073
      %6075 = vrot.lane.b32.xlu0 %v6065, 126
      %v6076 = vpop.permute.xlu0 %6075
      %v6080 = vsel %vm937, %v6067, 0
      %v6083 = vsel %vm937, %v6068, 0
      %v6086 = vsel %vm937, %v6069, 0
      %v6089 = vsel %vm937, %v6070, 0
      %6091 = vmatpush.msra.mxu0 0.0
      %6092 = vmatpush.msra.mxu0 0.0
      %6093 = vmatpush.msra.mxu0 0.0
      %6094 = vmatpush.msra.mxu0 0.0
      %6095 = vmatpush.msra.mxu0 0.0
      %6096 = vmatpush.msra.mxu0 0.0
      %6097 = vmatpush.msra.mxu0 0.0
      %6098 = vmatpush.msra.mxu0 0.0
      %6099 = vmatpush.msra.mxu0 0.0
      %6100 = vmatpush.msra.mxu0 0.0
      %6101 = vmatpush.msra.mxu0 0.0
      %6102 = vmatpush.msra.mxu0 0.0
      %6103 = vmatpush.msra.mxu0 0.0
      %6104 = vmatpush.msra.mxu0 0.0
      %6105 = vmatpush.msra.mxu0 %v6076
      %6106 = vmatpush.msra.mxu0 %v6074
      %6107 = vmatmul.f32.gmra.mxu0 %v6080
      %v6108 = vpop.f32.mrf.mxu0
      %v6109 = vadd.f32 0.0, %v6108
      %6110 = vmatmul.f32.gmra.mxu0 %v6083
      %v6111 = vpop.f32.mrf.mxu0
      %v6112 = vadd.f32 0.0, %v6111
      %6113 = vmatmul.f32.gmra.mxu0 %v6086
      %v6114 = vpop.f32.mrf.mxu0
      %v6115 = vadd.f32 0.0, %v6114
      %6116 = vmatmul.f32.gmra.mxu0 %v6089
      %v6117 = vpop.f32.mrf.mxu0
      %v6118 = vadd.f32 0.0, %v6117
      %6119 = vdwg.mxu0
      %v6120 = vadd.f32 %v6053, %v6109
      %v6121 = vadd.f32 %v6054, %v6112
      %v6122 = vadd.f32 %v6055, %v6115
      %v6123 = vadd.f32 %v6056, %v6118
      %s6124 = scalar_lea.vmem %s1, 3712
      %v6125 = vld [vmem:[%s6124] sm:$0xff]
      %v6126 = vld [vmem:[%s6124 + $0x8] sm:$0xff]
      %v6127 = vld [vmem:[%s6124 + $0x10] sm:$0xff]
      %v6128 = vld [vmem:[%s6124 + $0x18] sm:$0xff]
      %6131 = vrot.lane.b32.xlu0 %v5873, 125
      %v6132 = vpop.permute.xlu0 %6131
      %6133 = vrot.lane.b32.xlu0 %v5874, 125
      %v6134 = vpop.permute.xlu0 %6133
      %v6138 = vsel %vm937, %v6125, 0
      %v6141 = vsel %vm937, %v6126, 0
      %v6144 = vsel %vm937, %v6127, 0
      %v6147 = vsel %vm937, %v6128, 0
      %6149 = vmatpush.msra.mxu0 0.0
      %6150 = vmatpush.msra.mxu0 0.0
      %6151 = vmatpush.msra.mxu0 0.0
      %6152 = vmatpush.msra.mxu0 0.0
      %6153 = vmatpush.msra.mxu0 0.0
      %6154 = vmatpush.msra.mxu0 0.0
      %6155 = vmatpush.msra.mxu0 0.0
      %6156 = vmatpush.msra.mxu0 0.0
      %6157 = vmatpush.msra.mxu0 0.0
      %6158 = vmatpush.msra.mxu0 0.0
      %6159 = vmatpush.msra.mxu0 0.0
      %6160 = vmatpush.msra.mxu0 0.0
      %6161 = vmatpush.msra.mxu0 0.0
      %6162 = vmatpush.msra.mxu0 0.0
      %6163 = vmatpush.msra.mxu0 %v6134
      %6164 = vmatpush.msra.mxu0 %v6132
      %6165 = vmatmul.f32.gmra.mxu0 %v6138
      %v6166 = vpop.f32.mrf.mxu0
      %v6167 = vadd.f32 0.0, %v6166
      %6168 = vmatmul.f32.gmra.mxu0 %v6141
      %v6169 = vpop.f32.mrf.mxu0
      %v6170 = vadd.f32 0.0, %v6169
      %6171 = vmatmul.f32.gmra.mxu0 %v6144
      %v6172 = vpop.f32.mrf.mxu0
      %v6173 = vadd.f32 0.0, %v6172
      %6174 = vmatmul.f32.gmra.mxu0 %v6147
      %v6175 = vpop.f32.mrf.mxu0
      %v6176 = vadd.f32 0.0, %v6175
      %6177 = vdwg.mxu0
      %v6178 = vadd.f32 %v6120, %v6167
      %v6179 = vadd.f32 %v6121, %v6170
      %v6180 = vadd.f32 %v6122, %v6173
      %v6181 = vadd.f32 %v6123, %v6176
      %s6182 = scalar_lea.vmem %s11, 5
      %v6183 = vld [vmem:[%s6182] sm:$0x1]
      %v6185 = vperm.slane %v6183, 0
      %6186 = vrot.lane.b32.xlu0 %v6185, 4
      %v6187 = vpop.permute.xlu0 %6186
      %v6189 = vmul.f32 %v5873, %v6187
      %v6190 = vmul.f32 %v5874, %v6187
      %s6191 = scalar_lea.vmem %s1, 3776
      %v6192 = vld [vmem:[%s6191] sm:$0xff]
      %v6193 = vld [vmem:[%s6191 + $0x8] sm:$0xff]
      %v6194 = vld [vmem:[%s6191 + $0x10] sm:$0xff]
      %v6195 = vld [vmem:[%s6191 + $0x18] sm:$0xff]
      %6198 = vrot.lane.b32.xlu0 %v6189, 124
      %v6199 = vpop.permute.xlu0 %6198
      %6200 = vrot.lane.b32.xlu0 %v6190, 124
      %v6201 = vpop.permute.xlu0 %6200
      %v6205 = vsel %vm937, %v6192, 0
      %v6208 = vsel %vm937, %v6193, 0
      %v6211 = vsel %vm937, %v6194, 0
      %v6214 = vsel %vm937, %v6195, 0
      %6216 = vmatpush.msra.mxu0 0.0
      %6217 = vmatpush.msra.mxu0 0.0
      %6218 = vmatpush.msra.mxu0 0.0
      %6219 = vmatpush.msra.mxu0 0.0
      %6220 = vmatpush.msra.mxu0 0.0
      %6221 = vmatpush.msra.mxu0 0.0
      %6222 = vmatpush.msra.mxu0 0.0
      %6223 = vmatpush.msra.mxu0 0.0
      %6224 = vmatpush.msra.mxu0 0.0
      %6225 = vmatpush.msra.mxu0 0.0
      %6226 = vmatpush.msra.mxu0 0.0
      %6227 = vmatpush.msra.mxu0 0.0
      %6228 = vmatpush.msra.mxu0 0.0
      %6229 = vmatpush.msra.mxu0 0.0
      %6230 = vmatpush.msra.mxu0 %v6201
      %6231 = vmatpush.msra.mxu0 %v6199
      %6232 = vmatmul.f32.gmra.mxu0 %v6205
      %v6233 = vpop.f32.mrf.mxu0
      %v6234 = vadd.f32 0.0, %v6233
      %6235 = vmatmul.f32.gmra.mxu0 %v6208
      %v6236 = vpop.f32.mrf.mxu0
      %v6237 = vadd.f32 0.0, %v6236
      %6238 = vmatmul.f32.gmra.mxu0 %v6211
      %v6239 = vpop.f32.mrf.mxu0
      %v6240 = vadd.f32 0.0, %v6239
      %6241 = vmatmul.f32.gmra.mxu0 %v6214
      %v6242 = vpop.f32.mrf.mxu0
      %v6243 = vadd.f32 0.0, %v6242
      %6244 = vdwg.mxu0
      %v6245 = vadd.f32 %v6178, %v6234
      %v6246 = vadd.f32 %v6179, %v6237
      %v6247 = vadd.f32 %v6180, %v6240
      %v6248 = vadd.f32 %v6181, %v6243
      %s6249 = scalar_lea.vmem %s11, 6
      %v6250 = vld [vmem:[%s6249] sm:$0x1]
      %v6252 = vperm.slane %v6250, 0
      %6253 = vrot.lane.b32.xlu0 %v6252, 4
      %v6254 = vpop.permute.xlu0 %6253
      %v6256 = vmul.f32 %v5873, %v6254
      %v6257 = vmul.f32 %v5874, %v6254
      %s6258 = scalar_lea.vmem %s1, 3840
      %v6259 = vld [vmem:[%s6258] sm:$0xff]
      %v6260 = vld [vmem:[%s6258 + $0x8] sm:$0xff]
      %v6261 = vld [vmem:[%s6258 + $0x10] sm:$0xff]
      %v6262 = vld [vmem:[%s6258 + $0x18] sm:$0xff]
      %6265 = vrot.lane.b32.xlu0 %v6256, 124
      %v6266 = vpop.permute.xlu0 %6265
      %6267 = vrot.lane.b32.xlu0 %v6257, 124
      %v6268 = vpop.permute.xlu0 %6267
      %v6272 = vsel %vm937, %v6259, 0
      %v6275 = vsel %vm937, %v6260, 0
      %v6278 = vsel %vm937, %v6261, 0
      %v6281 = vsel %vm937, %v6262, 0
      %6283 = vmatpush.msra.mxu0 0.0
      %6284 = vmatpush.msra.mxu0 0.0
      %6285 = vmatpush.msra.mxu0 0.0
      %6286 = vmatpush.msra.mxu0 0.0
      %6287 = vmatpush.msra.mxu0 0.0
      %6288 = vmatpush.msra.mxu0 0.0
      %6289 = vmatpush.msra.mxu0 0.0
      %6290 = vmatpush.msra.mxu0 0.0
      %6291 = vmatpush.msra.mxu0 0.0
      %6292 = vmatpush.msra.mxu0 0.0
      %6293 = vmatpush.msra.mxu0 0.0
      %6294 = vmatpush.msra.mxu0 0.0
      %6295 = vmatpush.msra.mxu0 0.0
      %6296 = vmatpush.msra.mxu0 0.0
      %6297 = vmatpush.msra.mxu0 %v6268
      %6298 = vmatpush.msra.mxu0 %v6266
      %6299 = vmatmul.f32.gmra.mxu0 %v6272
      %v6300 = vpop.f32.mrf.mxu0
      %v6301 = vadd.f32 0.0, %v6300
      %6302 = vmatmul.f32.gmra.mxu0 %v6275
      %v6303 = vpop.f32.mrf.mxu0
      %v6304 = vadd.f32 0.0, %v6303
      %6305 = vmatmul.f32.gmra.mxu0 %v6278
      %v6306 = vpop.f32.mrf.mxu0
      %v6307 = vadd.f32 0.0, %v6306
      %6308 = vmatmul.f32.gmra.mxu0 %v6281
      %v6309 = vpop.f32.mrf.mxu0
      %v6310 = vadd.f32 0.0, %v6309
      %6311 = vdwg.mxu0
      %v6312 = vadd.f32 %v6245, %v6301
      %v6313 = vadd.f32 %v6246, %v6304
      %v6314 = vadd.f32 %v6247, %v6307
      %v6315 = vadd.f32 %v6248, %v6310
      %s6316 = scalar_lea.vmem %s11, 7
      %v6317 = vld [vmem:[%s6316] sm:$0x1]
      %v6319 = vperm.slane %v6317, 0
      %6320 = vrot.lane.b32.xlu0 %v6319, 5
      %v6321 = vpop.permute.xlu0 %6320
      %v6323 = vmul.f32 %v5873, %v6321
      %v6324 = vmul.f32 %v5874, %v6321
      %s6325 = scalar_lea.vmem %s1, 3904
      %v6326 = vld [vmem:[%s6325] sm:$0xff]
      %v6327 = vld [vmem:[%s6325 + $0x8] sm:$0xff]
      %v6328 = vld [vmem:[%s6325 + $0x10] sm:$0xff]
      %v6329 = vld [vmem:[%s6325 + $0x18] sm:$0xff]
      %6332 = vrot.lane.b32.xlu0 %v6323, 123
      %v6333 = vpop.permute.xlu0 %6332
      %6334 = vrot.lane.b32.xlu0 %v6324, 123
      %v6335 = vpop.permute.xlu0 %6334
      %v6339 = vsel %vm937, %v6326, 0
      %v6342 = vsel %vm937, %v6327, 0
      %v6345 = vsel %vm937, %v6328, 0
      %v6348 = vsel %vm937, %v6329, 0
      %6350 = vmatpush.msra.mxu0 0.0
      %6351 = vmatpush.msra.mxu0 0.0
      %6352 = vmatpush.msra.mxu0 0.0
      %6353 = vmatpush.msra.mxu0 0.0
      %6354 = vmatpush.msra.mxu0 0.0
      %6355 = vmatpush.msra.mxu0 0.0
      %6356 = vmatpush.msra.mxu0 0.0
      %6357 = vmatpush.msra.mxu0 0.0
      %6358 = vmatpush.msra.mxu0 0.0
      %6359 = vmatpush.msra.mxu0 0.0
      %6360 = vmatpush.msra.mxu0 0.0
      %6361 = vmatpush.msra.mxu0 0.0
      %6362 = vmatpush.msra.mxu0 0.0
      %6363 = vmatpush.msra.mxu0 0.0
      %6364 = vmatpush.msra.mxu0 %v6335
      %6365 = vmatpush.msra.mxu0 %v6333
      %6366 = vmatmul.f32.gmra.mxu0 %v6339
      %v6367 = vpop.f32.mrf.mxu0
      %v6368 = vadd.f32 0.0, %v6367
      %6369 = vmatmul.f32.gmra.mxu0 %v6342
      %v6370 = vpop.f32.mrf.mxu0
      %v6371 = vadd.f32 0.0, %v6370
      %6372 = vmatmul.f32.gmra.mxu0 %v6345
      %v6373 = vpop.f32.mrf.mxu0
      %v6374 = vadd.f32 0.0, %v6373
      %6375 = vmatmul.f32.gmra.mxu0 %v6348
      %v6376 = vpop.f32.mrf.mxu0
      %v6377 = vadd.f32 0.0, %v6376
      %6378 = vdwg.mxu0
      %v6379 = vadd.f32 %v6312, %v6368
      %v6380 = vadd.f32 %v6313, %v6371
      %v6381 = vadd.f32 %v6314, %v6374
      %v6382 = vadd.f32 %v6315, %v6377
      %s6383 = scalar_lea.vmem %s11, 8
      %v6384 = vld [vmem:[%s6383] sm:$0x1]
      %v6386 = vperm.slane %v6384, 0
      %6387 = vrot.lane.b32.xlu0 %v6386, 6
      %v6388 = vpop.permute.xlu0 %6387
      %v6390 = vmul.f32 %v5873, %v6388
      %v6391 = vmul.f32 %v5874, %v6388
      %s6392 = scalar_lea.vmem %s1, 3968
      %v6393 = vld [vmem:[%s6392] sm:$0xff]
      %v6394 = vld [vmem:[%s6392 + $0x8] sm:$0xff]
      %v6395 = vld [vmem:[%s6392 + $0x10] sm:$0xff]
      %v6396 = vld [vmem:[%s6392 + $0x18] sm:$0xff]
      %6399 = vrot.lane.b32.xlu0 %v6390, 122
      %v6400 = vpop.permute.xlu0 %6399
      %6401 = vrot.lane.b32.xlu0 %v6391, 122
      %v6402 = vpop.permute.xlu0 %6401
      %v6406 = vsel %vm937, %v6393, 0
      %v6409 = vsel %vm937, %v6394, 0
      %v6412 = vsel %vm937, %v6395, 0
      %v6415 = vsel %vm937, %v6396, 0
      %6417 = vmatpush.msra.mxu0 0.0
      %6418 = vmatpush.msra.mxu0 0.0
      %6419 = vmatpush.msra.mxu0 0.0
      %6420 = vmatpush.msra.mxu0 0.0
      %6421 = vmatpush.msra.mxu0 0.0
      %6422 = vmatpush.msra.mxu0 0.0
      %6423 = vmatpush.msra.mxu0 0.0
      %6424 = vmatpush.msra.mxu0 0.0
      %6425 = vmatpush.msra.mxu0 0.0
      %6426 = vmatpush.msra.mxu0 0.0
      %6427 = vmatpush.msra.mxu0 0.0
      %6428 = vmatpush.msra.mxu0 0.0
      %6429 = vmatpush.msra.mxu0 0.0
      %6430 = vmatpush.msra.mxu0 0.0
      %6431 = vmatpush.msra.mxu0 %v6402
      %6432 = vmatpush.msra.mxu0 %v6400
      %6433 = vmatmul.f32.gmra.mxu0 %v6406
      %v6434 = vpop.f32.mrf.mxu0
      %v6435 = vadd.f32 0.0, %v6434
      %6436 = vmatmul.f32.gmra.mxu0 %v6409
      %v6437 = vpop.f32.mrf.mxu0
      %v6438 = vadd.f32 0.0, %v6437
      %6439 = vmatmul.f32.gmra.mxu0 %v6412
      %v6440 = vpop.f32.mrf.mxu0
      %v6441 = vadd.f32 0.0, %v6440
      %6442 = vmatmul.f32.gmra.mxu0 %v6415
      %v6443 = vpop.f32.mrf.mxu0
      %v6444 = vadd.f32 0.0, %v6443
      %6445 = vdwg.mxu0
      %v6446 = vadd.f32 %v6379, %v6435
      %v6447 = vadd.f32 %v6380, %v6438
      %v6448 = vadd.f32 %v6381, %v6441
      %v6449 = vadd.f32 %v6382, %v6444
      %v6450 = vsel %vm4218, %v6446, 0.0
      %6451 = vadd.xlane.f32.xlu0 %v6450
      %v6452 = vpop.xlane.xlu0 %6451
      %v6453 = vsel %vm4218, %v6447, 0.0
      %6454 = vadd.xlane.f32.xlu0 %v6453
      %v6455 = vpop.xlane.xlu0 %6454
      %v6456 = vsel %vm4218, %v6448, 0.0
      %6457 = vadd.xlane.f32.xlu0 %v6456
      %v6458 = vpop.xlane.xlu0 %6457
      %v6459 = vsel %vm4218, %v6449, 0.0
      %6460 = vadd.xlane.f32.xlu0 %v6459
      %v6461 = vpop.xlane.xlu0 %6460
      %v6462 = vrcp.pop 8.0
      %v6463 = vmul.f32 8.0, %v6462
      %v6464 = vsub.f32 1.0, %v6463
      %v6465 = vmul.f32 %v6462, %v6464
      %v6466 = vadd.f32 %v6462, %v6465
      %vm6467 = vweird.f32 %v6462
      %v6468 = vsel %vm6467, %v6462, %v6466
      %v6469 = vmul.f32 %v6452, %v6468
      %v6470 = vmul.f32 %v6455, %v6468
      %v6471 = vmul.f32 %v6458, %v6468
      %v6472 = vmul.f32 %v6461, %v6468
      %v6473 = vsub.f32 %v6446, %v6469
      %v6474 = vsub.f32 %v6447, %v6470
      %v6475 = vsub.f32 %v6448, %v6471
      %v6476 = vsub.f32 %v6449, %v6472
      %v6477 = vmul.f32 %v6473, %v6473
      %v6478 = vmul.f32 %v6474, %v6474
      %v6479 = vmul.f32 %v6475, %v6475
      %v6480 = vmul.f32 %v6476, %v6476
      %v6481 = vsel %vm4218, %v6477, 0.0
      %6482 = vadd.xlane.f32.xlu0 %v6481
      %v6483 = vpop.xlane.xlu0 %6482
      %v6484 = vsel %vm4218, %v6478, 0.0
      %6485 = vadd.xlane.f32.xlu0 %v6484
      %v6486 = vpop.xlane.xlu0 %6485
      %v6487 = vsel %vm4218, %v6479, 0.0
      %6488 = vadd.xlane.f32.xlu0 %v6487
      %v6489 = vpop.xlane.xlu0 %6488
      %v6490 = vsel %vm4218, %v6480, 0.0
      %6491 = vadd.xlane.f32.xlu0 %v6490
      %v6492 = vpop.xlane.xlu0 %6491
      %v6493 = vmul.f32 %v6483, %v6468
      %v6494 = vmul.f32 %v6486, %v6468
      %v6495 = vmul.f32 %v6489, %v6468
      %v6496 = vmul.f32 %v6492, %v6468
      %v6497 = vadd.f32 %v6493, 1e-05
      %v6498 = vadd.f32 %v6494, 1e-05
      %v6499 = vadd.f32 %v6495, 1e-05
      %v6500 = vadd.f32 %v6496, 1e-05
      %v6501 = vrsqrt.pop %v6497
      %v6502 = vmul.f32 %v6501, %v6497
      %v6503 = vmul.f32 %v6502, %v6501
      %v6504 = vmul.f32 0.5, %v6503
      %v6505 = vsub.f32 1.5, %v6504
      %v6506 = vmul.f32 %v6501, %v6505
      %vm6507 = vweird.f32 %v6497
      %vm6508 = vweird.f32 %v6501
      %vm6509 = vmor %vm6507, %vm6508
      %v6510 = vsel %vm6509, %v6501, %v6506
      %v6511 = vrsqrt.pop %v6498
      %v6512 = vmul.f32 %v6511, %v6498
      %v6513 = vmul.f32 %v6512, %v6511
      %v6514 = vmul.f32 0.5, %v6513
      %v6515 = vsub.f32 1.5, %v6514
      %v6516 = vmul.f32 %v6511, %v6515
      %vm6517 = vweird.f32 %v6498
      %vm6518 = vweird.f32 %v6511
      %vm6519 = vmor %vm6517, %vm6518
      %v6520 = vsel %vm6519, %v6511, %v6516
      %v6521 = vrsqrt.pop %v6499
      %v6522 = vmul.f32 %v6521, %v6499
      %v6523 = vmul.f32 %v6522, %v6521
      %v6524 = vmul.f32 0.5, %v6523
      %v6525 = vsub.f32 1.5, %v6524
      %v6526 = vmul.f32 %v6521, %v6525
      %vm6527 = vweird.f32 %v6499
      %vm6528 = vweird.f32 %v6521
      %vm6529 = vmor %vm6527, %vm6528
      %v6530 = vsel %vm6529, %v6521, %v6526
      %v6531 = vrsqrt.pop %v6500
      %v6532 = vmul.f32 %v6531, %v6500
      %v6533 = vmul.f32 %v6532, %v6531
      %v6534 = vmul.f32 0.5, %v6533
      %v6535 = vsub.f32 1.5, %v6534
      %v6536 = vmul.f32 %v6531, %v6535
      %vm6537 = vweird.f32 %v6500
      %vm6538 = vweird.f32 %v6531
      %vm6539 = vmor %vm6537, %vm6538
      %v6540 = vsel %vm6539, %v6531, %v6536
      %v6541 = vmul.f32 %v6473, %v6510
      %v6542 = vmul.f32 %v6474, %v6520
      %v6543 = vmul.f32 %v6475, %v6530
      %v6544 = vmul.f32 %v6476, %v6540
      %s6545 = scalar_lea.vmem %s2, 384
      %v6546 = vld [vmem:[%s6545] sm:$0xff]
      %v6547 = vld [vmem:[%s6545 + $0x8] sm:$0xff]
      %v6548 = vld [vmem:[%s6545 + $0x10] sm:$0xff]
      %v6549 = vld [vmem:[%s6545 + $0x18] sm:$0xff]
      %6551 = vset.pattern.permute.xlu0 0
      %6552 = vperm.xlu0 %6551, %v6546
      %v6553 = vpop.permute.xlu0 %6552
      %6556 = vset.pattern.permute.xlu0 0
      %6557 = vperm.xlu0 %6556, %v6547
      %v6558 = vpop.permute.xlu0 %6557
      %6561 = vset.pattern.permute.xlu0 0
      %6562 = vperm.xlu0 %6561, %v6548
      %v6563 = vpop.permute.xlu0 %6562
      %6566 = vset.pattern.permute.xlu0 0
      %6567 = vperm.xlu0 %6566, %v6549
      %v6568 = vpop.permute.xlu0 %6567
      %v6570 = vmul.f32 %v6541, %v6553
      %v6571 = vmul.f32 %v6542, %v6558
      %v6572 = vmul.f32 %v6543, %v6563
      %v6573 = vmul.f32 %v6544, %v6568
      %s6574 = scalar_lea.vmem %s3, 384
      %v6575 = vld [vmem:[%s6574] sm:$0xff]
      %v6576 = vld [vmem:[%s6574 + $0x8] sm:$0xff]
      %v6577 = vld [vmem:[%s6574 + $0x10] sm:$0xff]
      %v6578 = vld [vmem:[%s6574 + $0x18] sm:$0xff]
      %6580 = vset.pattern.permute.xlu0 0
      %6581 = vperm.xlu0 %6580, %v6575
      %v6582 = vpop.permute.xlu0 %6581
      %6585 = vset.pattern.permute.xlu0 0
      %6586 = vperm.xlu0 %6585, %v6576
      %v6587 = vpop.permute.xlu0 %6586
      %6590 = vset.pattern.permute.xlu0 0
      %6591 = vperm.xlu0 %6590, %v6577
      %v6592 = vpop.permute.xlu0 %6591
      %6595 = vset.pattern.permute.xlu0 0
      %6596 = vperm.xlu0 %6595, %v6578
      %v6597 = vpop.permute.xlu0 %6596
      %v6599 = vadd.f32 %v6570, %v6582
      %v6600 = vadd.f32 %v6571, %v6587
      %v6601 = vadd.f32 %v6572, %v6592
      %v6602 = vadd.f32 %v6573, %v6597
      %v6603 = vmax.f32 %v6599, 0.0
      %v6604 = vmax.f32 %v6600, 0.0
      %v6605 = vmax.f32 %v6601, 0.0
      %v6606 = vmax.f32 %v6602, 0.0
      %6611 = vrot.lane.b32.xlu0 %v6603, 3
      %v6612 = vpop.permute.xlu0 %6611
      %6613 = vrot.lane.b32.xlu0 %v6604, 3
      %v6614 = vpop.permute.xlu0 %6613
      %6615 = vrot.lane.b32.xlu0 %v6605, 3
      %v6616 = vpop.permute.xlu0 %6615
      %6617 = vrot.lane.b32.xlu0 %v6606, 3
      %v6618 = vpop.permute.xlu0 %6617
      %6623 = vst.msk [vmem:[#allocation2] sm:$0xff] %vm5870, %v6612
      %6624 = vst.msk [vmem:[#allocation2 + $0x28] sm:$0xff] %vm5870, %v6614
      %6625 = vst.msk [vmem:[#allocation2 + $0x50] sm:$0xff] %vm5870, %v6616
      %6626 = vst.msk [vmem:[#allocation2 + $0x78] sm:$0xff] %vm5870, %v6618
      %v6627 = vld [vmem:[#allocation2] sm:$0xff]
      %v6628 = vld [vmem:[#allocation2 + $0x28] sm:$0xff]
      %v6629 = vld [vmem:[#allocation2 + $0x50] sm:$0xff]
      %v6630 = vld [vmem:[#allocation2 + $0x78] sm:$0xff]
      %v6631 = vld [vmem:[%s11] sm:$0x1]
      %v6633 = vperm.slane %v6631, 0
      %v6635 = vmul.f32 %v6627, %v6633
      %v6636 = vmul.f32 %v6628, %v6633
      %v6637 = vmul.f32 %v6629, %v6633
      %v6638 = vmul.f32 %v6630, %v6633
      %s6639 = scalar_lea.vmem %s1, 4032
      %v6640 = vld [vmem:[%s6639] sm:$0xff]
      %v6641 = vld [vmem:[%s6639 + $0x8] sm:$0xff]
      %v6642 = vld [vmem:[%s6639 + $0x10] sm:$0xff]
      %v6643 = vld [vmem:[%s6639 + $0x18] sm:$0xff]
      %v6644 = vld [vmem:[%s5886] sm:$0x1]
      %v6646 = vperm.slane %v6644, 0
      %6647 = vrot.lane.b32.xlu0 %v6646, 1
      %v6648 = vpop.permute.xlu0 %6647
      %v6650 = vmul.f32 %v6627, %v6648
      %v6651 = vmul.f32 %v6628, %v6648
      %v6652 = vmul.f32 %v6629, %v6648
      %v6653 = vmul.f32 %v6630, %v6648
      %s6654 = scalar_lea.vmem %s1, 4096
      %v6655 = vld [vmem:[%s6654] sm:$0xff]
      %v6656 = vld [vmem:[%s6654 + $0x8] sm:$0xff]
      %v6657 = vld [vmem:[%s6654 + $0x10] sm:$0xff]
      %v6658 = vld [vmem:[%s6654 + $0x18] sm:$0xff]
      %6663 = vrot.lane.b32.xlu0 %v6650, 127
      %v6664 = vpop.permute.xlu0 %6663
      %6665 = vrot.lane.b32.xlu0 %v6651, 127
      %v6666 = vpop.permute.xlu0 %6665
      %6667 = vrot.lane.b32.xlu0 %v6652, 127
      %v6668 = vpop.permute.xlu0 %6667
      %6669 = vrot.lane.b32.xlu0 %v6653, 127
      %v6670 = vpop.permute.xlu0 %6669
      %v6676 = vsel %vm1346, %v6655, 0
      %v6679 = vsel %vm1346, %v6656, 0
      %v6682 = vsel %vm1346, %v6657, 0
      %v6685 = vsel %vm1346, %v6658, 0
      %6687 = vmatpush.msra.mxu0 0.0
      %6688 = vmatpush.msra.mxu0 0.0
      %6689 = vmatpush.msra.mxu0 0.0
      %6690 = vmatpush.msra.mxu0 0.0
      %6691 = vmatpush.msra.mxu0 0.0
      %6692 = vmatpush.msra.mxu0 0.0
      %6693 = vmatpush.msra.mxu0 0.0
      %6694 = vmatpush.msra.mxu0 0.0
      %6695 = vmatpush.msra.mxu0 0.0
      %6696 = vmatpush.msra.mxu0 0.0
      %6697 = vmatpush.msra.mxu0 0.0
      %6698 = vmatpush.msra.mxu0 0.0
      %6699 = vmatpush.msra.mxu0 %v6670
      %6700 = vmatpush.msra.mxu0 %v6668
      %6701 = vmatpush.msra.mxu0 %v6666
      %6702 = vmatpush.msra.mxu0 %v6664
      %6703 = vmatmul.f32.gmra.mxu0 %v6676
      %v6704 = vpop.f32.mrf.mxu0
      %v6705 = vadd.f32 0.0, %v6704
      %6706 = vmatmul.f32.gmra.mxu0 %v6679
      %v6707 = vpop.f32.mrf.mxu0
      %v6708 = vadd.f32 0.0, %v6707
      %6709 = vmatmul.f32.gmra.mxu0 %v6682
      %v6710 = vpop.f32.mrf.mxu0
      %v6711 = vadd.f32 0.0, %v6710
      %6712 = vmatmul.f32.gmra.mxu0 %v6685
      %v6713 = vpop.f32.mrf.mxu0
      %v6714 = vadd.f32 0.0, %v6713
      %6715 = vdwg.mxu0
      %v6717 = vsel %vm1346, %v6640, 0
      %v6720 = vsel %vm1346, %v6641, 0
      %v6723 = vsel %vm1346, %v6642, 0
      %v6726 = vsel %vm1346, %v6643, 0
      %6728 = vmatpush.msra.mxu0 0.0
      %6729 = vmatpush.msra.mxu0 0.0
      %6730 = vmatpush.msra.mxu0 0.0
      %6731 = vmatpush.msra.mxu0 0.0
      %6732 = vmatpush.msra.mxu0 0.0
      %6733 = vmatpush.msra.mxu0 0.0
      %6734 = vmatpush.msra.mxu0 0.0
      %6735 = vmatpush.msra.mxu0 0.0
      %6736 = vmatpush.msra.mxu0 0.0
      %6737 = vmatpush.msra.mxu0 0.0
      %6738 = vmatpush.msra.mxu0 0.0
      %6739 = vmatpush.msra.mxu0 0.0
      %6740 = vmatpush.msra.mxu0 %v6638
      %6741 = vmatpush.msra.mxu0 %v6637
      %6742 = vmatpush.msra.mxu0 %v6636
      %6743 = vmatpush.msra.mxu0 %v6635
      %6744 = vmatmul.f32.gmra.mxu0 %v6717
      %v6745 = vpop.f32.mrf.mxu0
      %v6746 = vadd.f32 %v6705, %v6745
      %6747 = vmatmul.f32.gmra.mxu0 %v6720
      %v6748 = vpop.f32.mrf.mxu0
      %v6749 = vadd.f32 %v6708, %v6748
      %6750 = vmatmul.f32.gmra.mxu0 %v6723
      %v6751 = vpop.f32.mrf.mxu0
      %v6752 = vadd.f32 %v6711, %v6751
      %6753 = vmatmul.f32.gmra.mxu0 %v6726
      %v6754 = vpop.f32.mrf.mxu0
      %v6755 = vadd.f32 %v6714, %v6754
      %6756 = vdwg.mxu0
      %v6757 = vld [vmem:[%s5990] sm:$0x1]
      %v6759 = vperm.slane %v6757, 0
      %6760 = vrot.lane.b32.xlu0 %v6759, 2
      %v6761 = vpop.permute.xlu0 %6760
      %v6763 = vmul.f32 %v6627, %v6761
      %v6764 = vmul.f32 %v6628, %v6761
      %v6765 = vmul.f32 %v6629, %v6761
      %v6766 = vmul.f32 %v6630, %v6761
      %s6767 = scalar_lea.vmem %s1, 4160
      %v6768 = vld [vmem:[%s6767] sm:$0xff]
      %v6769 = vld [vmem:[%s6767 + $0x8] sm:$0xff]
      %v6770 = vld [vmem:[%s6767 + $0x10] sm:$0xff]
      %v6771 = vld [vmem:[%s6767 + $0x18] sm:$0xff]
      %6776 = vrot.lane.b32.xlu0 %v6763, 126
      %v6777 = vpop.permute.xlu0 %6776
      %6778 = vrot.lane.b32.xlu0 %v6764, 126
      %v6779 = vpop.permute.xlu0 %6778
      %6780 = vrot.lane.b32.xlu0 %v6765, 126
      %v6781 = vpop.permute.xlu0 %6780
      %6782 = vrot.lane.b32.xlu0 %v6766, 126
      %v6783 = vpop.permute.xlu0 %6782
      %v6789 = vsel %vm1346, %v6768, 0
      %v6792 = vsel %vm1346, %v6769, 0
      %v6795 = vsel %vm1346, %v6770, 0
      %v6798 = vsel %vm1346, %v6771, 0
      %6800 = vmatpush.msra.mxu0 0.0
      %6801 = vmatpush.msra.mxu0 0.0
      %6802 = vmatpush.msra.mxu0 0.0
      %6803 = vmatpush.msra.mxu0 0.0
      %6804 = vmatpush.msra.mxu0 0.0
      %6805 = vmatpush.msra.mxu0 0.0
      %6806 = vmatpush.msra.mxu0 0.0
      %6807 = vmatpush.msra.mxu0 0.0
      %6808 = vmatpush.msra.mxu0 0.0
      %6809 = vmatpush.msra.mxu0 0.0
      %6810 = vmatpush.msra.mxu0 0.0
      %6811 = vmatpush.msra.mxu0 0.0
      %6812 = vmatpush.msra.mxu0 %v6783
      %6813 = vmatpush.msra.mxu0 %v6781
      %6814 = vmatpush.msra.mxu0 %v6779
      %6815 = vmatpush.msra.mxu0 %v6777
      %6816 = vmatmul.f32.gmra.mxu0 %v6789
      %v6817 = vpop.f32.mrf.mxu0
      %v6818 = vadd.f32 0.0, %v6817
      %6819 = vmatmul.f32.gmra.mxu0 %v6792
      %v6820 = vpop.f32.mrf.mxu0
      %v6821 = vadd.f32 0.0, %v6820
      %6822 = vmatmul.f32.gmra.mxu0 %v6795
      %v6823 = vpop.f32.mrf.mxu0
      %v6824 = vadd.f32 0.0, %v6823
      %6825 = vmatmul.f32.gmra.mxu0 %v6798
      %v6826 = vpop.f32.mrf.mxu0
      %v6827 = vadd.f32 0.0, %v6826
      %6828 = vdwg.mxu0
      %v6829 = vadd.f32 %v6746, %v6818
      %v6830 = vadd.f32 %v6749, %v6821
      %v6831 = vadd.f32 %v6752, %v6824
      %v6832 = vadd.f32 %v6755, %v6827
      %v6833 = vld [vmem:[%s6057] sm:$0x1]
      %v6835 = vperm.slane %v6833, 0
      %6836 = vrot.lane.b32.xlu0 %v6835, 2
      %v6837 = vpop.permute.xlu0 %6836
      %v6839 = vmul.f32 %v6627, %v6837
      %v6840 = vmul.f32 %v6628, %v6837
      %v6841 = vmul.f32 %v6629, %v6837
      %v6842 = vmul.f32 %v6630, %v6837
      %s6843 = scalar_lea.vmem %s1, 4224
      %v6844 = vld [vmem:[%s6843] sm:$0xff]
      %v6845 = vld [vmem:[%s6843 + $0x8] sm:$0xff]
      %v6846 = vld [vmem:[%s6843 + $0x10] sm:$0xff]
      %v6847 = vld [vmem:[%s6843 + $0x18] sm:$0xff]
      %6852 = vrot.lane.b32.xlu0 %v6839, 126
      %v6853 = vpop.permute.xlu0 %6852
      %6854 = vrot.lane.b32.xlu0 %v6840, 126
      %v6855 = vpop.permute.xlu0 %6854
      %6856 = vrot.lane.b32.xlu0 %v6841, 126
      %v6857 = vpop.permute.xlu0 %6856
      %6858 = vrot.lane.b32.xlu0 %v6842, 126
      %v6859 = vpop.permute.xlu0 %6858
      %v6865 = vsel %vm1346, %v6844, 0
      %v6868 = vsel %vm1346, %v6845, 0
      %v6871 = vsel %vm1346, %v6846, 0
      %v6874 = vsel %vm1346, %v6847, 0
      %6876 = vmatpush.msra.mxu0 0.0
      %6877 = vmatpush.msra.mxu0 0.0
      %6878 = vmatpush.msra.mxu0 0.0
      %6879 = vmatpush.msra.mxu0 0.0
      %6880 = vmatpush.msra.mxu0 0.0
      %6881 = vmatpush.msra.mxu0 0.0
      %6882 = vmatpush.msra.mxu0 0.0
      %6883 = vmatpush.msra.mxu0 0.0
      %6884 = vmatpush.msra.mxu0 0.0
      %6885 = vmatpush.msra.mxu0 0.0
      %6886 = vmatpush.msra.mxu0 0.0
      %6887 = vmatpush.msra.mxu0 0.0
      %6888 = vmatpush.msra.mxu0 %v6859
      %6889 = vmatpush.msra.mxu0 %v6857
      %6890 = vmatpush.msra.mxu0 %v6855
      %6891 = vmatpush.msra.mxu0 %v6853
      %6892 = vmatmul.f32.gmra.mxu0 %v6865
      %v6893 = vpop.f32.mrf.mxu0
      %v6894 = vadd.f32 0.0, %v6893
      %6895 = vmatmul.f32.gmra.mxu0 %v6868
      %v6896 = vpop.f32.mrf.mxu0
      %v6897 = vadd.f32 0.0, %v6896
      %6898 = vmatmul.f32.gmra.mxu0 %v6871
      %v6899 = vpop.f32.mrf.mxu0
      %v6900 = vadd.f32 0.0, %v6899
      %6901 = vmatmul.f32.gmra.mxu0 %v6874
      %v6902 = vpop.f32.mrf.mxu0
      %v6903 = vadd.f32 0.0, %v6902
      %6904 = vdwg.mxu0
      %v6905 = vadd.f32 %v6829, %v6894
      %v6906 = vadd.f32 %v6830, %v6897
      %v6907 = vadd.f32 %v6831, %v6900
      %v6908 = vadd.f32 %v6832, %v6903
      %s6909 = scalar_lea.vmem %s1, 4288
      %v6910 = vld [vmem:[%s6909] sm:$0xff]
      %v6911 = vld [vmem:[%s6909 + $0x8] sm:$0xff]
      %v6912 = vld [vmem:[%s6909 + $0x10] sm:$0xff]
      %v6913 = vld [vmem:[%s6909 + $0x18] sm:$0xff]
      %6918 = vrot.lane.b32.xlu0 %v6627, 125
      %v6919 = vpop.permute.xlu0 %6918
      %6920 = vrot.lane.b32.xlu0 %v6628, 125
      %v6921 = vpop.permute.xlu0 %6920
      %6922 = vrot.lane.b32.xlu0 %v6629, 125
      %v6923 = vpop.permute.xlu0 %6922
      %6924 = vrot.lane.b32.xlu0 %v6630, 125
      %v6925 = vpop.permute.xlu0 %6924
      %v6931 = vsel %vm1346, %v6910, 0
      %v6934 = vsel %vm1346, %v6911, 0
      %v6937 = vsel %vm1346, %v6912, 0
      %v6940 = vsel %vm1346, %v6913, 0
      %6942 = vmatpush.msra.mxu0 0.0
      %6943 = vmatpush.msra.mxu0 0.0
      %6944 = vmatpush.msra.mxu0 0.0
      %6945 = vmatpush.msra.mxu0 0.0
      %6946 = vmatpush.msra.mxu0 0.0
      %6947 = vmatpush.msra.mxu0 0.0
      %6948 = vmatpush.msra.mxu0 0.0
      %6949 = vmatpush.msra.mxu0 0.0
      %6950 = vmatpush.msra.mxu0 0.0
      %6951 = vmatpush.msra.mxu0 0.0
      %6952 = vmatpush.msra.mxu0 0.0
      %6953 = vmatpush.msra.mxu0 0.0
      %6954 = vmatpush.msra.mxu0 %v6925
      %6955 = vmatpush.msra.mxu0 %v6923
      %6956 = vmatpush.msra.mxu0 %v6921
      %6957 = vmatpush.msra.mxu0 %v6919
      %6958 = vmatmul.f32.gmra.mxu0 %v6931
      %v6959 = vpop.f32.mrf.mxu0
      %v6960 = vadd.f32 0.0, %v6959
      %6961 = vmatmul.f32.gmra.mxu0 %v6934
      %v6962 = vpop.f32.mrf.mxu0
      %v6963 = vadd.f32 0.0, %v6962
      %6964 = vmatmul.f32.gmra.mxu0 %v6937
      %v6965 = vpop.f32.mrf.mxu0
      %v6966 = vadd.f32 0.0, %v6965
      %6967 = vmatmul.f32.gmra.mxu0 %v6940
      %v6968 = vpop.f32.mrf.mxu0
      %v6969 = vadd.f32 0.0, %v6968
      %6970 = vdwg.mxu0
      %v6971 = vadd.f32 %v6905, %v6960
      %v6972 = vadd.f32 %v6906, %v6963
      %v6973 = vadd.f32 %v6907, %v6966
      %v6974 = vadd.f32 %v6908, %v6969
      %v6975 = vld [vmem:[%s6182] sm:$0x1]
      %v6977 = vperm.slane %v6975, 0
      %6978 = vrot.lane.b32.xlu0 %v6977, 4
      %v6979 = vpop.permute.xlu0 %6978
      %v6981 = vmul.f32 %v6627, %v6979
      %v6982 = vmul.f32 %v6628, %v6979
      %v6983 = vmul.f32 %v6629, %v6979
      %v6984 = vmul.f32 %v6630, %v6979
      %s6985 = scalar_lea.vmem %s1, 4352
      %v6986 = vld [vmem:[%s6985] sm:$0xff]
      %v6987 = vld [vmem:[%s6985 + $0x8] sm:$0xff]
      %v6988 = vld [vmem:[%s6985 + $0x10] sm:$0xff]
      %v6989 = vld [vmem:[%s6985 + $0x18] sm:$0xff]
      %6994 = vrot.lane.b32.xlu0 %v6981, 124
      %v6995 = vpop.permute.xlu0 %6994
      %6996 = vrot.lane.b32.xlu0 %v6982, 124
      %v6997 = vpop.permute.xlu0 %6996
      %6998 = vrot.lane.b32.xlu0 %v6983, 124
      %v6999 = vpop.permute.xlu0 %6998
      %7000 = vrot.lane.b32.xlu0 %v6984, 124
      %v7001 = vpop.permute.xlu0 %7000
      %v7007 = vsel %vm1346, %v6986, 0
      %v7010 = vsel %vm1346, %v6987, 0
      %v7013 = vsel %vm1346, %v6988, 0
      %v7016 = vsel %vm1346, %v6989, 0
      %7018 = vmatpush.msra.mxu0 0.0
      %7019 = vmatpush.msra.mxu0 0.0
      %7020 = vmatpush.msra.mxu0 0.0
      %7021 = vmatpush.msra.mxu0 0.0
      %7022 = vmatpush.msra.mxu0 0.0
      %7023 = vmatpush.msra.mxu0 0.0
      %7024 = vmatpush.msra.mxu0 0.0
      %7025 = vmatpush.msra.mxu0 0.0
      %7026 = vmatpush.msra.mxu0 0.0
      %7027 = vmatpush.msra.mxu0 0.0
      %7028 = vmatpush.msra.mxu0 0.0
      %7029 = vmatpush.msra.mxu0 0.0
      %7030 = vmatpush.msra.mxu0 %v7001
      %7031 = vmatpush.msra.mxu0 %v6999
      %7032 = vmatpush.msra.mxu0 %v6997
      %7033 = vmatpush.msra.mxu0 %v6995
      %7034 = vmatmul.f32.gmra.mxu0 %v7007
      %v7035 = vpop.f32.mrf.mxu0
      %v7036 = vadd.f32 0.0, %v7035
      %7037 = vmatmul.f32.gmra.mxu0 %v7010
      %v7038 = vpop.f32.mrf.mxu0
      %v7039 = vadd.f32 0.0, %v7038
      %7040 = vmatmul.f32.gmra.mxu0 %v7013
      %v7041 = vpop.f32.mrf.mxu0
      %v7042 = vadd.f32 0.0, %v7041
      %7043 = vmatmul.f32.gmra.mxu0 %v7016
      %v7044 = vpop.f32.mrf.mxu0
      %v7045 = vadd.f32 0.0, %v7044
      %7046 = vdwg.mxu0
      %v7047 = vadd.f32 %v6971, %v7036
      %v7048 = vadd.f32 %v6972, %v7039
      %v7049 = vadd.f32 %v6973, %v7042
      %v7050 = vadd.f32 %v6974, %v7045
      %v7051 = vld [vmem:[%s6249] sm:$0x1]
      %v7053 = vperm.slane %v7051, 0
      %7054 = vrot.lane.b32.xlu0 %v7053, 4
      %v7055 = vpop.permute.xlu0 %7054
      %v7057 = vmul.f32 %v6627, %v7055
      %v7058 = vmul.f32 %v6628, %v7055
      %v7059 = vmul.f32 %v6629, %v7055
      %v7060 = vmul.f32 %v6630, %v7055
      %s7061 = scalar_lea.vmem %s1, 4416
      %v7062 = vld [vmem:[%s7061] sm:$0xff]
      %v7063 = vld [vmem:[%s7061 + $0x8] sm:$0xff]
      %v7064 = vld [vmem:[%s7061 + $0x10] sm:$0xff]
      %v7065 = vld [vmem:[%s7061 + $0x18] sm:$0xff]
      %7070 = vrot.lane.b32.xlu0 %v7057, 124
      %v7071 = vpop.permute.xlu0 %7070
      %7072 = vrot.lane.b32.xlu0 %v7058, 124
      %v7073 = vpop.permute.xlu0 %7072
      %7074 = vrot.lane.b32.xlu0 %v7059, 124
      %v7075 = vpop.permute.xlu0 %7074
      %7076 = vrot.lane.b32.xlu0 %v7060, 124
      %v7077 = vpop.permute.xlu0 %7076
      %v7083 = vsel %vm1346, %v7062, 0
      %v7086 = vsel %vm1346, %v7063, 0
      %v7089 = vsel %vm1346, %v7064, 0
      %v7092 = vsel %vm1346, %v7065, 0
      %7094 = vmatpush.msra.mxu0 0.0
      %7095 = vmatpush.msra.mxu0 0.0
      %7096 = vmatpush.msra.mxu0 0.0
      %7097 = vmatpush.msra.mxu0 0.0
      %7098 = vmatpush.msra.mxu0 0.0
      %7099 = vmatpush.msra.mxu0 0.0
      %7100 = vmatpush.msra.mxu0 0.0
      %7101 = vmatpush.msra.mxu0 0.0
      %7102 = vmatpush.msra.mxu0 0.0
      %7103 = vmatpush.msra.mxu0 0.0
      %7104 = vmatpush.msra.mxu0 0.0
      %7105 = vmatpush.msra.mxu0 0.0
      %7106 = vmatpush.msra.mxu0 %v7077
      %7107 = vmatpush.msra.mxu0 %v7075
      %7108 = vmatpush.msra.mxu0 %v7073
      %7109 = vmatpush.msra.mxu0 %v7071
      %7110 = vmatmul.f32.gmra.mxu0 %v7083
      %v7111 = vpop.f32.mrf.mxu0
      %v7112 = vadd.f32 0.0, %v7111
      %7113 = vmatmul.f32.gmra.mxu0 %v7086
      %v7114 = vpop.f32.mrf.mxu0
      %v7115 = vadd.f32 0.0, %v7114
      %7116 = vmatmul.f32.gmra.mxu0 %v7089
      %v7117 = vpop.f32.mrf.mxu0
      %v7118 = vadd.f32 0.0, %v7117
      %7119 = vmatmul.f32.gmra.mxu0 %v7092
      %v7120 = vpop.f32.mrf.mxu0
      %v7121 = vadd.f32 0.0, %v7120
      %7122 = vdwg.mxu0
      %v7123 = vadd.f32 %v7047, %v7112
      %v7124 = vadd.f32 %v7048, %v7115
      %v7125 = vadd.f32 %v7049, %v7118
      %v7126 = vadd.f32 %v7050, %v7121
      %v7127 = vld [vmem:[%s6316] sm:$0x1]
      %v7129 = vperm.slane %v7127, 0
      %7130 = vrot.lane.b32.xlu0 %v7129, 5
      %v7131 = vpop.permute.xlu0 %7130
      %v7133 = vmul.f32 %v6627, %v7131
      %v7134 = vmul.f32 %v6628, %v7131
      %v7135 = vmul.f32 %v6629, %v7131
      %v7136 = vmul.f32 %v6630, %v7131
      %s7137 = scalar_lea.vmem %s1, 4480
      %v7138 = vld [vmem:[%s7137] sm:$0xff]
      %v7139 = vld [vmem:[%s7137 + $0x8] sm:$0xff]
      %v7140 = vld [vmem:[%s7137 + $0x10] sm:$0xff]
      %v7141 = vld [vmem:[%s7137 + $0x18] sm:$0xff]
      %7146 = vrot.lane.b32.xlu0 %v7133, 123
      %v7147 = vpop.permute.xlu0 %7146
      %7148 = vrot.lane.b32.xlu0 %v7134, 123
      %v7149 = vpop.permute.xlu0 %7148
      %7150 = vrot.lane.b32.xlu0 %v7135, 123
      %v7151 = vpop.permute.xlu0 %7150
      %7152 = vrot.lane.b32.xlu0 %v7136, 123
      %v7153 = vpop.permute.xlu0 %7152
      %v7159 = vsel %vm1346, %v7138, 0
      %v7162 = vsel %vm1346, %v7139, 0
      %v7165 = vsel %vm1346, %v7140, 0
      %v7168 = vsel %vm1346, %v7141, 0
      %7170 = vmatpush.msra.mxu0 0.0
      %7171 = vmatpush.msra.mxu0 0.0
      %7172 = vmatpush.msra.mxu0 0.0
      %7173 = vmatpush.msra.mxu0 0.0
      %7174 = vmatpush.msra.mxu0 0.0
      %7175 = vmatpush.msra.mxu0 0.0
      %7176 = vmatpush.msra.mxu0 0.0
      %7177 = vmatpush.msra.mxu0 0.0
      %7178 = vmatpush.msra.mxu0 0.0
      %7179 = vmatpush.msra.mxu0 0.0
      %7180 = vmatpush.msra.mxu0 0.0
      %7181 = vmatpush.msra.mxu0 0.0
      %7182 = vmatpush.msra.mxu0 %v7153
      %7183 = vmatpush.msra.mxu0 %v7151
      %7184 = vmatpush.msra.mxu0 %v7149
      %7185 = vmatpush.msra.mxu0 %v7147
      %7186 = vmatmul.f32.gmra.mxu0 %v7159
      %v7187 = vpop.f32.mrf.mxu0
      %v7188 = vadd.f32 0.0, %v7187
      %7189 = vmatmul.f32.gmra.mxu0 %v7162
      %v7190 = vpop.f32.mrf.mxu0
      %v7191 = vadd.f32 0.0, %v7190
      %7192 = vmatmul.f32.gmra.mxu0 %v7165
      %v7193 = vpop.f32.mrf.mxu0
      %v7194 = vadd.f32 0.0, %v7193
      %7195 = vmatmul.f32.gmra.mxu0 %v7168
      %v7196 = vpop.f32.mrf.mxu0
      %v7197 = vadd.f32 0.0, %v7196
      %7198 = vdwg.mxu0
      %v7199 = vadd.f32 %v7123, %v7188
      %v7200 = vadd.f32 %v7124, %v7191
      %v7201 = vadd.f32 %v7125, %v7194
      %v7202 = vadd.f32 %v7126, %v7197
      %v7203 = vld [vmem:[%s6383] sm:$0x1]
      %v7205 = vperm.slane %v7203, 0
      %7206 = vrot.lane.b32.xlu0 %v7205, 6
      %v7207 = vpop.permute.xlu0 %7206
      %v7209 = vmul.f32 %v6627, %v7207
      %v7210 = vmul.f32 %v6628, %v7207
      %v7211 = vmul.f32 %v6629, %v7207
      %v7212 = vmul.f32 %v6630, %v7207
      %s7213 = scalar_lea.vmem %s1, 4544
      %v7214 = vld [vmem:[%s7213] sm:$0xff]
      %v7215 = vld [vmem:[%s7213 + $0x8] sm:$0xff]
      %v7216 = vld [vmem:[%s7213 + $0x10] sm:$0xff]
      %v7217 = vld [vmem:[%s7213 + $0x18] sm:$0xff]
      %7222 = vrot.lane.b32.xlu0 %v7209, 122
      %v7223 = vpop.permute.xlu0 %7222
      %7224 = vrot.lane.b32.xlu0 %v7210, 122
      %v7225 = vpop.permute.xlu0 %7224
      %7226 = vrot.lane.b32.xlu0 %v7211, 122
      %v7227 = vpop.permute.xlu0 %7226
      %7228 = vrot.lane.b32.xlu0 %v7212, 122
      %v7229 = vpop.permute.xlu0 %7228
      %v7235 = vsel %vm1346, %v7214, 0
      %v7238 = vsel %vm1346, %v7215, 0
      %v7241 = vsel %vm1346, %v7216, 0
      %v7244 = vsel %vm1346, %v7217, 0
      %7246 = vmatpush.msra.mxu0 0.0
      %7247 = vmatpush.msra.mxu0 0.0
      %7248 = vmatpush.msra.mxu0 0.0
      %7249 = vmatpush.msra.mxu0 0.0
      %7250 = vmatpush.msra.mxu0 0.0
      %7251 = vmatpush.msra.mxu0 0.0
      %7252 = vmatpush.msra.mxu0 0.0
      %7253 = vmatpush.msra.mxu0 0.0
      %7254 = vmatpush.msra.mxu0 0.0
      %7255 = vmatpush.msra.mxu0 0.0
      %7256 = vmatpush.msra.mxu0 0.0
      %7257 = vmatpush.msra.mxu0 0.0
      %7258 = vmatpush.msra.mxu0 %v7229
      %7259 = vmatpush.msra.mxu0 %v7227
      %7260 = vmatpush.msra.mxu0 %v7225
      %7261 = vmatpush.msra.mxu0 %v7223
      %7262 = vmatmul.f32.gmra.mxu0 %v7235
      %v7263 = vpop.f32.mrf.mxu0
      %v7264 = vadd.f32 0.0, %v7263
      %7265 = vmatmul.f32.gmra.mxu0 %v7238
      %v7266 = vpop.f32.mrf.mxu0
      %v7267 = vadd.f32 0.0, %v7266
      %7268 = vmatmul.f32.gmra.mxu0 %v7241
      %v7269 = vpop.f32.mrf.mxu0
      %v7270 = vadd.f32 0.0, %v7269
      %7271 = vmatmul.f32.gmra.mxu0 %v7244
      %v7272 = vpop.f32.mrf.mxu0
      %v7273 = vadd.f32 0.0, %v7272
      %7274 = vdwg.mxu0
      %v7275 = vadd.f32 %v7199, %v7264
      %v7276 = vadd.f32 %v7200, %v7267
      %v7277 = vadd.f32 %v7201, %v7270
      %v7278 = vadd.f32 %v7202, %v7273
      %v7279 = vsel %vm4218, %v7275, 0.0
      %7280 = vadd.xlane.f32.xlu0 %v7279
      %v7281 = vpop.xlane.xlu0 %7280
      %v7282 = vsel %vm4218, %v7276, 0.0
      %7283 = vadd.xlane.f32.xlu0 %v7282
      %v7284 = vpop.xlane.xlu0 %7283
      %v7285 = vsel %vm4218, %v7277, 0.0
      %7286 = vadd.xlane.f32.xlu0 %v7285
      %v7287 = vpop.xlane.xlu0 %7286
      %v7288 = vsel %vm4218, %v7278, 0.0
      %7289 = vadd.xlane.f32.xlu0 %v7288
      %v7290 = vpop.xlane.xlu0 %7289
      %v7291 = vmul.f32 %v7281, %v6468
      %v7292 = vmul.f32 %v7284, %v6468
      %v7293 = vmul.f32 %v7287, %v6468
      %v7294 = vmul.f32 %v7290, %v6468
      %v7295 = vsub.f32 %v7275, %v7291
      %v7296 = vsub.f32 %v7276, %v7292
      %v7297 = vsub.f32 %v7277, %v7293
      %v7298 = vsub.f32 %v7278, %v7294
      %v7299 = vmul.f32 %v7295, %v7295
      %v7300 = vmul.f32 %v7296, %v7296
      %v7301 = vmul.f32 %v7297, %v7297
      %v7302 = vmul.f32 %v7298, %v7298
      %v7303 = vsel %vm4218, %v7299, 0.0
      %7304 = vadd.xlane.f32.xlu0 %v7303
      %v7305 = vpop.xlane.xlu0 %7304
      %v7306 = vsel %vm4218, %v7300, 0.0
      %7307 = vadd.xlane.f32.xlu0 %v7306
      %v7308 = vpop.xlane.xlu0 %7307
      %v7309 = vsel %vm4218, %v7301, 0.0
      %7310 = vadd.xlane.f32.xlu0 %v7309
      %v7311 = vpop.xlane.xlu0 %7310
      %v7312 = vsel %vm4218, %v7302, 0.0
      %7313 = vadd.xlane.f32.xlu0 %v7312
      %v7314 = vpop.xlane.xlu0 %7313
      %v7315 = vmul.f32 %v7305, %v6468
      %v7316 = vmul.f32 %v7308, %v6468
      %v7317 = vmul.f32 %v7311, %v6468
      %v7318 = vmul.f32 %v7314, %v6468
      %v7319 = vadd.f32 %v7315, 1e-05
      %v7320 = vadd.f32 %v7316, 1e-05
      %v7321 = vadd.f32 %v7317, 1e-05
      %v7322 = vadd.f32 %v7318, 1e-05
      %v7323 = vrsqrt.pop %v7319
      %v7324 = vmul.f32 %v7323, %v7319
      %v7325 = vmul.f32 %v7324, %v7323
      %v7326 = vmul.f32 0.5, %v7325
      %v7327 = vsub.f32 1.5, %v7326
      %v7328 = vmul.f32 %v7323, %v7327
      %vm7329 = vweird.f32 %v7319
      %vm7330 = vweird.f32 %v7323
      %vm7331 = vmor %vm7329, %vm7330
      %v7332 = vsel %vm7331, %v7323, %v7328
      %v7333 = vrsqrt.pop %v7320
      %v7334 = vmul.f32 %v7333, %v7320
      %v7335 = vmul.f32 %v7334, %v7333
      %v7336 = vmul.f32 0.5, %v7335
      %v7337 = vsub.f32 1.5, %v7336
      %v7338 = vmul.f32 %v7333, %v7337
      %vm7339 = vweird.f32 %v7320
      %vm7340 = vweird.f32 %v7333
      %vm7341 = vmor %vm7339, %vm7340
      %v7342 = vsel %vm7341, %v7333, %v7338
      %v7343 = vrsqrt.pop %v7321
      %v7344 = vmul.f32 %v7343, %v7321
      %v7345 = vmul.f32 %v7344, %v7343
      %v7346 = vmul.f32 0.5, %v7345
      %v7347 = vsub.f32 1.5, %v7346
      %v7348 = vmul.f32 %v7343, %v7347
      %vm7349 = vweird.f32 %v7321
      %vm7350 = vweird.f32 %v7343
      %vm7351 = vmor %vm7349, %vm7350
      %v7352 = vsel %vm7351, %v7343, %v7348
      %v7353 = vrsqrt.pop %v7322
      %v7354 = vmul.f32 %v7353, %v7322
      %v7355 = vmul.f32 %v7354, %v7353
      %v7356 = vmul.f32 0.5, %v7355
      %v7357 = vsub.f32 1.5, %v7356
      %v7358 = vmul.f32 %v7353, %v7357
      %vm7359 = vweird.f32 %v7322
      %vm7360 = vweird.f32 %v7353
      %vm7361 = vmor %vm7359, %vm7360
      %v7362 = vsel %vm7361, %v7353, %v7358
      %v7363 = vmul.f32 %v7295, %v7332
      %v7364 = vmul.f32 %v7296, %v7342
      %v7365 = vmul.f32 %v7297, %v7352
      %v7366 = vmul.f32 %v7298, %v7362
      %s7367 = scalar_lea.vmem %s2, 448
      %v7368 = vld [vmem:[%s7367] sm:$0xff]
      %v7369 = vld [vmem:[%s7367 + $0x8] sm:$0xff]
      %v7370 = vld [vmem:[%s7367 + $0x10] sm:$0xff]
      %v7371 = vld [vmem:[%s7367 + $0x18] sm:$0xff]
      %7373 = vset.pattern.permute.xlu0 0
      %7374 = vperm.xlu0 %7373, %v7368
      %v7375 = vpop.permute.xlu0 %7374
      %7378 = vset.pattern.permute.xlu0 0
      %7379 = vperm.xlu0 %7378, %v7369
      %v7380 = vpop.permute.xlu0 %7379
      %7383 = vset.pattern.permute.xlu0 0
      %7384 = vperm.xlu0 %7383, %v7370
      %v7385 = vpop.permute.xlu0 %7384
      %7388 = vset.pattern.permute.xlu0 0
      %7389 = vperm.xlu0 %7388, %v7371
      %v7390 = vpop.permute.xlu0 %7389
      %v7392 = vmul.f32 %v7363, %v7375
      %v7393 = vmul.f32 %v7364, %v7380
      %v7394 = vmul.f32 %v7365, %v7385
      %v7395 = vmul.f32 %v7366, %v7390
      %s7396 = scalar_lea.vmem %s3, 448
      %v7397 = vld [vmem:[%s7396] sm:$0xff]
      %v7398 = vld [vmem:[%s7396 + $0x8] sm:$0xff]
      %v7399 = vld [vmem:[%s7396 + $0x10] sm:$0xff]
      %v7400 = vld [vmem:[%s7396 + $0x18] sm:$0xff]
      %7402 = vset.pattern.permute.xlu0 0
      %7403 = vperm.xlu0 %7402, %v7397
      %v7404 = vpop.permute.xlu0 %7403
      %7407 = vset.pattern.permute.xlu0 0
      %7408 = vperm.xlu0 %7407, %v7398
      %v7409 = vpop.permute.xlu0 %7408
      %7412 = vset.pattern.permute.xlu0 0
      %7413 = vperm.xlu0 %7412, %v7399
      %v7414 = vpop.permute.xlu0 %7413
      %7417 = vset.pattern.permute.xlu0 0
      %7418 = vperm.xlu0 %7417, %v7400
      %v7419 = vpop.permute.xlu0 %7418
      %v7421 = vadd.f32 %v7392, %v7404
      %v7422 = vadd.f32 %v7393, %v7409
      %v7423 = vadd.f32 %v7394, %v7414
      %v7424 = vadd.f32 %v7395, %v7419
      %v7425 = vmax.f32 %v7421, 0.0
      %v7426 = vmax.f32 %v7422, 0.0
      %v7427 = vmax.f32 %v7423, 0.0
      %v7428 = vmax.f32 %v7424, 0.0
      %v7429 = vld [vmem:[%s7] sm:$0xff]
      %v7431 = vsel %vm4218, %v7425, 0
      %v7434 = vsel %vm4218, %v7426, 0
      %v7437 = vsel %vm4218, %v7427, 0
      %v7440 = vsel %vm4218, %v7428, 0
      %7442 = vmatpush.msra.mxu0 0.0
      %7443 = vmatpush.msra.mxu0 0.0
      %7444 = vmatpush.msra.mxu0 0.0
      %7445 = vmatpush.msra.mxu0 0.0
      %7446 = vmatpush.msra.mxu0 0.0
      %7447 = vmatpush.msra.mxu0 0.0
      %7448 = vmatpush.msra.mxu0 0.0
      %7449 = vmatpush.msra.mxu0 0.0
      %7450 = vmatpush.msra.mxu0 0.0
      %7451 = vmatpush.msra.mxu0 0.0
      %7452 = vmatpush.msra.mxu0 0.0
      %7453 = vmatpush.msra.mxu0 0.0
      %7454 = vmatpush.msra.mxu0 0.0
      %7455 = vmatpush.msra.mxu0 0.0
      %7456 = vmatpush.msra.mxu0 0.0
      %7457 = vmatpush.msra.mxu0 %v7429
      %7458 = vmatmul.f32.gmra.mxu0 %v7431
      %v7459 = vpop.f32.mrf.mxu0
      %v7460 = vadd.f32 0.0, %v7459
      %7461 = vmatmul.f32.gmra.mxu0 %v7434
      %v7462 = vpop.f32.mrf.mxu0
      %v7463 = vadd.f32 0.0, %v7462
      %7464 = vmatmul.f32.gmra.mxu0 %v7437
      %v7465 = vpop.f32.mrf.mxu0
      %v7466 = vadd.f32 0.0, %v7465
      %7467 = vmatmul.f32.gmra.mxu0 %v7440
      %v7468 = vpop.f32.mrf.mxu0
      %v7469 = vadd.f32 0.0, %v7468
      %7470 = vdwg.mxu0
      %s7471 = scalar_lea.vmem %s7, 8
      %v7472 = vld [vmem:[%s7471] sm:$0xff]
      %7473 = vmatpush.msra.mxu0 0.0
      %7474 = vmatpush.msra.mxu0 0.0
      %7475 = vmatpush.msra.mxu0 0.0
      %7476 = vmatpush.msra.mxu0 0.0
      %7477 = vmatpush.msra.mxu0 0.0
      %7478 = vmatpush.msra.mxu0 0.0
      %7479 = vmatpush.msra.mxu0 0.0
      %7480 = vmatpush.msra.mxu0 0.0
      %7481 = vmatpush.msra.mxu0 0.0
      %7482 = vmatpush.msra.mxu0 0.0
      %7483 = vmatpush.msra.mxu0 0.0
      %7484 = vmatpush.msra.mxu0 0.0
      %7485 = vmatpush.msra.mxu0 0.0
      %7486 = vmatpush.msra.mxu0 0.0
      %7487 = vmatpush.msra.mxu0 0.0
      %7488 = vmatpush.msra.mxu0 %v7472
      %7489 = vmatmul.f32.gmra.mxu0 %v7431
      %v7490 = vpop.f32.mrf.mxu0
      %v7491 = vadd.f32 0.0, %v7490
      %7492 = vmatmul.f32.gmra.mxu0 %v7434
      %v7493 = vpop.f32.mrf.mxu0
      %v7494 = vadd.f32 0.0, %v7493
      %7495 = vmatmul.f32.gmra.mxu0 %v7437
      %v7496 = vpop.f32.mrf.mxu0
      %v7497 = vadd.f32 0.0, %v7496
      %7498 = vmatmul.f32.gmra.mxu0 %v7440
      %v7499 = vpop.f32.mrf.mxu0
      %v7500 = vadd.f32 0.0, %v7499
      %7501 = vdwg.mxu0
      %s7502 = scalar_lea.vmem %s7, 16
      %v7503 = vld [vmem:[%s7502] sm:$0xff]
      %7504 = vmatpush.msra.mxu0 0.0
      %7505 = vmatpush.msra.mxu0 0.0
      %7506 = vmatpush.msra.mxu0 0.0
      %7507 = vmatpush.msra.mxu0 0.0
      %7508 = vmatpush.msra.mxu0 0.0
      %7509 = vmatpush.msra.mxu0 0.0
      %7510 = vmatpush.msra.mxu0 0.0
      %7511 = vmatpush.msra.mxu0 0.0
      %7512 = vmatpush.msra.mxu0 0.0
      %7513 = vmatpush.msra.mxu0 0.0
      %7514 = vmatpush.msra.mxu0 0.0
      %7515 = vmatpush.msra.mxu0 0.0
      %7516 = vmatpush.msra.mxu0 0.0
      %7517 = vmatpush.msra.mxu0 0.0
      %7518 = vmatpush.msra.mxu0 0.0
      %7519 = vmatpush.msra.mxu0 %v7503
      %7520 = vmatmul.f32.gmra.mxu0 %v7431
      %v7521 = vpop.f32.mrf.mxu0
      %v7522 = vadd.f32 0.0, %v7521
      %7523 = vmatmul.f32.gmra.mxu0 %v7434
      %v7524 = vpop.f32.mrf.mxu0
      %v7525 = vadd.f32 0.0, %v7524
      %7526 = vmatmul.f32.gmra.mxu0 %v7437
      %v7527 = vpop.f32.mrf.mxu0
      %v7528 = vadd.f32 0.0, %v7527
      %7529 = vmatmul.f32.gmra.mxu0 %v7440
      %v7530 = vpop.f32.mrf.mxu0
      %v7531 = vadd.f32 0.0, %v7530
      %7532 = vdwg.mxu0
      %s7533 = scalar_lea.vmem %s7, 24
      %v7534 = vld [vmem:[%s7533] sm:$0xff]
      %7535 = vmatpush.msra.mxu0 0.0
      %7536 = vmatpush.msra.mxu0 0.0
      %7537 = vmatpush.msra.mxu0 0.0
      %7538 = vmatpush.msra.mxu0 0.0
      %7539 = vmatpush.msra.mxu0 0.0
      %7540 = vmatpush.msra.mxu0 0.0
      %7541 = vmatpush.msra.mxu0 0.0
      %7542 = vmatpush.msra.mxu0 0.0
      %7543 = vmatpush.msra.mxu0 0.0
      %7544 = vmatpush.msra.mxu0 0.0
      %7545 = vmatpush.msra.mxu0 0.0
      %7546 = vmatpush.msra.mxu0 0.0
      %7547 = vmatpush.msra.mxu0 0.0
      %7548 = vmatpush.msra.mxu0 0.0
      %7549 = vmatpush.msra.mxu0 0.0
      %7550 = vmatpush.msra.mxu0 %v7534
      %7551 = vmatmul.f32.gmra.mxu0 %v7431
      %v7552 = vpop.f32.mrf.mxu0
      %v7553 = vadd.f32 0.0, %v7552
      %7554 = vmatmul.f32.gmra.mxu0 %v7434
      %v7555 = vpop.f32.mrf.mxu0
      %v7556 = vadd.f32 0.0, %v7555
      %7557 = vmatmul.f32.gmra.mxu0 %v7437
      %v7558 = vpop.f32.mrf.mxu0
      %v7559 = vadd.f32 0.0, %v7558
      %7560 = vmatmul.f32.gmra.mxu0 %v7440
      %v7561 = vpop.f32.mrf.mxu0
      %v7562 = vadd.f32 0.0, %v7561
      %7563 = vdwg.mxu0
      %v7564 = vmax.f32 %v7460, %v7491
      %v7565 = vmax.f32 %v7463, %v7494
      %v7566 = vmax.f32 %v7466, %v7497
      %v7567 = vmax.f32 %v7469, %v7500
      %v7568 = vmax.f32 %v7522, %v7553
      %v7569 = vmax.f32 %v7525, %v7556
      %v7570 = vmax.f32 %v7528, %v7559
      %v7571 = vmax.f32 %v7531, %v7562
      %v7572 = vmax.f32 %v7564, %v7568
      %v7573 = vmax.f32 %v7565, %v7569
      %v7574 = vmax.f32 %v7566, %v7570
      %v7575 = vmax.f32 %v7567, %v7571
      %7580 = vrot.lane.b32.xlu0 %v7572, 2
      %v7581 = vpop.permute.xlu0 %7580
      %7582 = vrot.lane.b32.xlu0 %v7573, 2
      %v7583 = vpop.permute.xlu0 %7582
      %7584 = vrot.lane.b32.xlu0 %v7574, 2
      %v7585 = vpop.permute.xlu0 %7584
      %7586 = vrot.lane.b32.xlu0 %v7575, 2
      %v7587 = vpop.permute.xlu0 %7586
      %vm7592 = vcmask 31760
      %7593 = vst.msk [vmem:[#allocation2] sm:$0xff] %vm7592, %v7581
      %7594 = vst.msk [vmem:[#allocation2 + $0x28] sm:$0xff] %vm7592, %v7583
      %7595 = vst.msk [vmem:[#allocation2 + $0x50] sm:$0xff] %vm7592, %v7585
      %7596 = vst.msk [vmem:[#allocation2 + $0x78] sm:$0xff] %vm7592, %v7587
      %v7597 = vld [vmem:[#allocation2] sm:$0xff]
      %v7598 = vld [vmem:[#allocation2 + $0x28] sm:$0xff]
      %v7599 = vld [vmem:[#allocation2 + $0x50] sm:$0xff]
      %v7600 = vld [vmem:[#allocation2 + $0x78] sm:$0xff]
      %s7601 = scalar_lea.vmem %s1, 4864
      %v7602 = vld [vmem:[%s7601] sm:$0xff]
      %v7603 = vld [vmem:[%s7601 + $0x8] sm:$0xff]
      %v7604 = vld [vmem:[%s7601 + $0x10] sm:$0xff]
      %v7605 = vld [vmem:[%s7601 + $0x18] sm:$0xff]
      %v7606 = vld [vmem:[%s7601 + $0x20] sm:$0xff]
      %v7607 = vld [vmem:[%s7601 + $0x28] sm:$0xff]
      %v7608 = vld [vmem:[%s7601 + $0x30] sm:$0xff]
      %v7609 = vld [vmem:[%s7601 + $0x38] sm:$0xff]
      %7614 = vrot.lane.b32.xlu0 %v7597, 126
      %v7615 = vpop.permute.xlu0 %7614
      %7616 = vrot.lane.b32.xlu0 %v7598, 126
      %v7617 = vpop.permute.xlu0 %7616
      %7618 = vrot.lane.b32.xlu0 %v7599, 126
      %v7619 = vpop.permute.xlu0 %7618
      %7620 = vrot.lane.b32.xlu0 %v7600, 126
      %v7621 = vpop.permute.xlu0 %7620
      %v7627 = vsel %vm1346, %v7602, 0
      %v7630 = vsel %vm1346, %v7603, 0
      %v7633 = vsel %vm1346, %v7604, 0
      %v7636 = vsel %vm1346, %v7605, 0
      %v7639 = vsel %vm1346, %v7606, 0
      %v7642 = vsel %vm1346, %v7607, 0
      %v7645 = vsel %vm1346, %v7608, 0
      %v7648 = vsel %vm1346, %v7609, 0
      %7650 = vmatpush.msra.mxu0 0.0
      %7651 = vmatpush.msra.mxu0 0.0
      %7652 = vmatpush.msra.mxu0 0.0
      %7653 = vmatpush.msra.mxu0 0.0
      %7654 = vmatpush.msra.mxu0 0.0
      %7655 = vmatpush.msra.mxu0 0.0
      %7656 = vmatpush.msra.mxu0 0.0
      %7657 = vmatpush.msra.mxu0 0.0
      %7658 = vmatpush.msra.mxu0 0.0
      %7659 = vmatpush.msra.mxu0 0.0
      %7660 = vmatpush.msra.mxu0 0.0
      %7661 = vmatpush.msra.mxu0 0.0
      %7662 = vmatpush.msra.mxu0 %v7621
      %7663 = vmatpush.msra.mxu0 %v7619
      %7664 = vmatpush.msra.mxu0 %v7617
      %7665 = vmatpush.msra.mxu0 %v7615
      %7666 = vmatmul.f32.gmra.mxu0 %v7627
      %v7667 = vpop.f32.mrf.mxu0
      %v7668 = vadd.f32 0.0, %v7667
      %7669 = vmatmul.f32.gmra.mxu0 %v7630
      %v7670 = vpop.f32.mrf.mxu0
      %v7671 = vadd.f32 0.0, %v7670
      %7672 = vmatmul.f32.gmra.mxu0 %v7633
      %v7673 = vpop.f32.mrf.mxu0
      %v7674 = vadd.f32 0.0, %v7673
      %7675 = vmatmul.f32.gmra.mxu0 %v7636
      %v7676 = vpop.f32.mrf.mxu0
      %v7677 = vadd.f32 0.0, %v7676
      %7678 = vmatmul.f32.gmra.mxu0 %v7639
      %v7679 = vpop.f32.mrf.mxu0
      %v7680 = vadd.f32 0.0, %v7679
      %7681 = vmatmul.f32.gmra.mxu0 %v7642
      %v7682 = vpop.f32.mrf.mxu0
      %v7683 = vadd.f32 0.0, %v7682
      %7684 = vmatmul.f32.gmra.mxu0 %v7645
      %v7685 = vpop.f32.mrf.mxu0
      %v7686 = vadd.f32 0.0, %v7685
      %7687 = vmatmul.f32.gmra.mxu0 %v7648
      %v7688 = vpop.f32.mrf.mxu0
      %v7689 = vadd.f32 0.0, %v7688
      %7690 = vdwg.mxu0
      %v7691 = vsel %vm791, %v7668, 0.0
      %7692 = vadd.xlane.f32.xlu0 %v7691
      %v7693 = vpop.xlane.xlu0 %7692
      %v7694 = vsel %vm791, %v7671, 0.0
      %7695 = vadd.xlane.f32.xlu0 %v7694
      %v7696 = vpop.xlane.xlu0 %7695
      %v7697 = vsel %vm791, %v7674, 0.0
      %7698 = vadd.xlane.f32.xlu0 %v7697
      %v7699 = vpop.xlane.xlu0 %7698
      %v7700 = vsel %vm791, %v7677, 0.0
      %7701 = vadd.xlane.f32.xlu0 %v7700
      %v7702 = vpop.xlane.xlu0 %7701
      %v7703 = vsel %vm791, %v7680, 0.0
      %7704 = vadd.xlane.f32.xlu0 %v7703
      %v7705 = vpop.xlane.xlu0 %7704
      %v7706 = vsel %vm791, %v7683, 0.0
      %7707 = vadd.xlane.f32.xlu0 %v7706
      %v7708 = vpop.xlane.xlu0 %7707
      %v7709 = vsel %vm791, %v7686, 0.0
      %7710 = vadd.xlane.f32.xlu0 %v7709
      %v7711 = vpop.xlane.xlu0 %7710
      %v7712 = vsel %vm791, %v7689, 0.0
      %7713 = vadd.xlane.f32.xlu0 %v7712
      %v7714 = vpop.xlane.xlu0 %7713
      %v7715 = vrcp.pop 2.0
      %v7716 = vmul.f32 2.0, %v7715
      %v7717 = vsub.f32 1.0, %v7716
      %v7718 = vmul.f32 %v7715, %v7717
      %v7719 = vadd.f32 %v7715, %v7718
      %vm7720 = vweird.f32 %v7715
      %v7721 = vsel %vm7720, %v7715, %v7719
      %v7722 = vmul.f32 %v7693, %v7721
      %v7723 = vmul.f32 %v7696, %v7721
      %v7724 = vmul.f32 %v7699, %v7721
      %v7725 = vmul.f32 %v7702, %v7721
      %v7726 = vmul.f32 %v7705, %v7721
      %v7727 = vmul.f32 %v7708, %v7721
      %v7728 = vmul.f32 %v7711, %v7721
      %v7729 = vmul.f32 %v7714, %v7721
      %v7730 = vsub.f32 %v7668, %v7722
      %v7731 = vsub.f32 %v7671, %v7723
      %v7732 = vsub.f32 %v7674, %v7724
      %v7733 = vsub.f32 %v7677, %v7725
      %v7734 = vsub.f32 %v7680, %v7726
      %v7735 = vsub.f32 %v7683, %v7727
      %v7736 = vsub.f32 %v7686, %v7728
      %v7737 = vsub.f32 %v7689, %v7729
      %v7738 = vmul.f32 %v7730, %v7730
      %v7739 = vmul.f32 %v7731, %v7731
      %v7740 = vmul.f32 %v7732, %v7732
      %v7741 = vmul.f32 %v7733, %v7733
      %v7742 = vmul.f32 %v7734, %v7734
      %v7743 = vmul.f32 %v7735, %v7735
      %v7744 = vmul.f32 %v7736, %v7736
      %v7745 = vmul.f32 %v7737, %v7737
      %v7746 = vsel %vm791, %v7738, 0.0
      %7747 = vadd.xlane.f32.xlu0 %v7746
      %v7748 = vpop.xlane.xlu0 %7747
      %v7749 = vsel %vm791, %v7739, 0.0
      %7750 = vadd.xlane.f32.xlu0 %v7749
      %v7751 = vpop.xlane.xlu0 %7750
      %v7752 = vsel %vm791, %v7740, 0.0
      %7753 = vadd.xlane.f32.xlu0 %v7752
      %v7754 = vpop.xlane.xlu0 %7753
      %v7755 = vsel %vm791, %v7741, 0.0
      %7756 = vadd.xlane.f32.xlu0 %v7755
      %v7757 = vpop.xlane.xlu0 %7756
      %v7758 = vsel %vm791, %v7742, 0.0
      %7759 = vadd.xlane.f32.xlu0 %v7758
      %v7760 = vpop.xlane.xlu0 %7759
      %v7761 = vsel %vm791, %v7743, 0.0
      %7762 = vadd.xlane.f32.xlu0 %v7761
      %v7763 = vpop.xlane.xlu0 %7762
      %v7764 = vsel %vm791, %v7744, 0.0
      %7765 = vadd.xlane.f32.xlu0 %v7764
      %v7766 = vpop.xlane.xlu0 %7765
      %v7767 = vsel %vm791, %v7745, 0.0
      %7768 = vadd.xlane.f32.xlu0 %v7767
      %v7769 = vpop.xlane.xlu0 %7768
      %v7770 = vmul.f32 %v7748, %v7721
      %v7771 = vmul.f32 %v7751, %v7721
      %v7772 = vmul.f32 %v7754, %v7721
      %v7773 = vmul.f32 %v7757, %v7721
      %v7774 = vmul.f32 %v7760, %v7721
      %v7775 = vmul.f32 %v7763, %v7721
      %v7776 = vmul.f32 %v7766, %v7721
      %v7777 = vmul.f32 %v7769, %v7721
      %v7778 = vadd.f32 %v7770, 1e-05
      %v7779 = vadd.f32 %v7771, 1e-05
      %v7780 = vadd.f32 %v7772, 1e-05
      %v7781 = vadd.f32 %v7773, 1e-05
      %v7782 = vadd.f32 %v7774, 1e-05
      %v7783 = vadd.f32 %v7775, 1e-05
      %v7784 = vadd.f32 %v7776, 1e-05
      %v7785 = vadd.f32 %v7777, 1e-05
      %v7786 = vrsqrt.pop %v7778
      %v7787 = vmul.f32 %v7786, %v7778
      %v7788 = vmul.f32 %v7787, %v7786
      %v7789 = vmul.f32 0.5, %v7788
      %v7790 = vsub.f32 1.5, %v7789
      %v7791 = vmul.f32 %v7786, %v7790
      %vm7792 = vweird.f32 %v7778
      %vm7793 = vweird.f32 %v7786
      %vm7794 = vmor %vm7792, %vm7793
      %v7795 = vsel %vm7794, %v7786, %v7791
      %v7796 = vrsqrt.pop %v7779
      %v7797 = vmul.f32 %v7796, %v7779
      %v7798 = vmul.f32 %v7797, %v7796
      %v7799 = vmul.f32 0.5, %v7798
      %v7800 = vsub.f32 1.5, %v7799
      %v7801 = vmul.f32 %v7796, %v7800
      %vm7802 = vweird.f32 %v7779
      %vm7803 = vweird.f32 %v7796
      %vm7804 = vmor %vm7802, %vm7803
      %v7805 = vsel %vm7804, %v7796, %v7801
      %v7806 = vrsqrt.pop %v7780
      %v7807 = vmul.f32 %v7806, %v7780
      %v7808 = vmul.f32 %v7807, %v7806
      %v7809 = vmul.f32 0.5, %v7808
      %v7810 = vsub.f32 1.5, %v7809
      %v7811 = vmul.f32 %v7806, %v7810
      %vm7812 = vweird.f32 %v7780
      %vm7813 = vweird.f32 %v7806
      %vm7814 = vmor %vm7812, %vm7813
      %v7815 = vsel %vm7814, %v7806, %v7811
      %v7816 = vrsqrt.pop %v7781
      %v7817 = vmul.f32 %v7816, %v7781
      %v7818 = vmul.f32 %v7817, %v7816
      %v7819 = vmul.f32 0.5, %v7818
      %v7820 = vsub.f32 1.5, %v7819
      %v7821 = vmul.f32 %v7816, %v7820
      %vm7822 = vweird.f32 %v7781
      %vm7823 = vweird.f32 %v7816
      %vm7824 = vmor %vm7822, %vm7823
      %v7825 = vsel %vm7824, %v7816, %v7821
      %v7826 = vrsqrt.pop %v7782
      %v7827 = vmul.f32 %v7826, %v7782
      %v7828 = vmul.f32 %v7827, %v7826
      %v7829 = vmul.f32 0.5, %v7828
      %v7830 = vsub.f32 1.5, %v7829
      %v7831 = vmul.f32 %v7826, %v7830
      %vm7832 = vweird.f32 %v7782
      %vm7833 = vweird.f32 %v7826
      %vm7834 = vmor %vm7832, %vm7833
      %v7835 = vsel %vm7834, %v7826, %v7831
      %v7836 = vrsqrt.pop %v7783
      %v7837 = vmul.f32 %v7836, %v7783
      %v7838 = vmul.f32 %v7837, %v7836
      %v7839 = vmul.f32 0.5, %v7838
      %v7840 = vsub.f32 1.5, %v7839
      %v7841 = vmul.f32 %v7836, %v7840
      %vm7842 = vweird.f32 %v7783
      %vm7843 = vweird.f32 %v7836
      %vm7844 = vmor %vm7842, %vm7843
      %v7845 = vsel %vm7844, %v7836, %v7841
      %v7846 = vrsqrt.pop %v7784
      %v7847 = vmul.f32 %v7846, %v7784
      %v7848 = vmul.f32 %v7847, %v7846
      %v7849 = vmul.f32 0.5, %v7848
      %v7850 = vsub.f32 1.5, %v7849
      %v7851 = vmul.f32 %v7846, %v7850
      %vm7852 = vweird.f32 %v7784
      %vm7853 = vweird.f32 %v7846
      %vm7854 = vmor %vm7852, %vm7853
      %v7855 = vsel %vm7854, %v7846, %v7851
      %v7856 = vrsqrt.pop %v7785
      %v7857 = vmul.f32 %v7856, %v7785
      %v7858 = vmul.f32 %v7857, %v7856
      %v7859 = vmul.f32 0.5, %v7858
      %v7860 = vsub.f32 1.5, %v7859
      %v7861 = vmul.f32 %v7856, %v7860
      %vm7862 = vweird.f32 %v7785
      %vm7863 = vweird.f32 %v7856
      %vm7864 = vmor %vm7862, %vm7863
      %v7865 = vsel %vm7864, %v7856, %v7861
      %v7866 = vmul.f32 %v7730, %v7795
      %v7867 = vmul.f32 %v7731, %v7805
      %v7868 = vmul.f32 %v7732, %v7815
      %v7869 = vmul.f32 %v7733, %v7825
      %v7870 = vmul.f32 %v7734, %v7835
      %v7871 = vmul.f32 %v7735, %v7845
      %v7872 = vmul.f32 %v7736, %v7855
      %v7873 = vmul.f32 %v7737, %v7865
      %s7874 = scalar_lea.vmem %s2, 512
      %v7875 = vld [vmem:[%s7874] sm:$0xff]
      %v7876 = vld [vmem:[%s7874 + $0x8] sm:$0xff]
      %v7877 = vld [vmem:[%s7874 + $0x10] sm:$0xff]
      %v7878 = vld [vmem:[%s7874 + $0x18] sm:$0xff]
      %v7879 = vld [vmem:[%s7874 + $0x20] sm:$0xff]
      %v7880 = vld [vmem:[%s7874 + $0x28] sm:$0xff]
      %v7881 = vld [vmem:[%s7874 + $0x30] sm:$0xff]
      %v7882 = vld [vmem:[%s7874 + $0x38] sm:$0xff]
      %7884 = vset.pattern.permute.xlu0 0
      %7885 = vperm.xlu0 %7884, %v7875
      %v7886 = vpop.permute.xlu0 %7885
      %7889 = vset.pattern.permute.xlu0 0
      %7890 = vperm.xlu0 %7889, %v7876
      %v7891 = vpop.permute.xlu0 %7890
      %7894 = vset.pattern.permute.xlu0 0
      %7895 = vperm.xlu0 %7894, %v7877
      %v7896 = vpop.permute.xlu0 %7895
      %7899 = vset.pattern.permute.xlu0 0
      %7900 = vperm.xlu0 %7899, %v7878
      %v7901 = vpop.permute.xlu0 %7900
      %7904 = vset.pattern.permute.xlu0 0
      %7905 = vperm.xlu0 %7904, %v7879
      %v7906 = vpop.permute.xlu0 %7905
      %7909 = vset.pattern.permute.xlu0 0
      %7910 = vperm.xlu0 %7909, %v7880
      %v7911 = vpop.permute.xlu0 %7910
      %7914 = vset.pattern.permute.xlu0 0
      %7915 = vperm.xlu0 %7914, %v7881
      %v7916 = vpop.permute.xlu0 %7915
      %7919 = vset.pattern.permute.xlu0 0
      %7920 = vperm.xlu0 %7919, %v7882
      %v7921 = vpop.permute.xlu0 %7920
      %v7923 = vmul.f32 %v7866, %v7886
      %v7924 = vmul.f32 %v7867, %v7891
      %v7925 = vmul.f32 %v7868, %v7896
      %v7926 = vmul.f32 %v7869, %v7901
      %v7927 = vmul.f32 %v7870, %v7906
      %v7928 = vmul.f32 %v7871, %v7911
      %v7929 = vmul.f32 %v7872, %v7916
      %v7930 = vmul.f32 %v7873, %v7921
      %s7931 = scalar_lea.vmem %s3, 512
      %v7932 = vld [vmem:[%s7931] sm:$0xff]
      %v7933 = vld [vmem:[%s7931 + $0x8] sm:$0xff]
      %v7934 = vld [vmem:[%s7931 + $0x10] sm:$0xff]
      %v7935 = vld [vmem:[%s7931 + $0x18] sm:$0xff]
      %v7936 = vld [vmem:[%s7931 + $0x20] sm:$0xff]
      %v7937 = vld [vmem:[%s7931 + $0x28] sm:$0xff]
      %v7938 = vld [vmem:[%s7931 + $0x30] sm:$0xff]
      %v7939 = vld [vmem:[%s7931 + $0x38] sm:$0xff]
      %7941 = vset.pattern.permute.xlu0 0
      %7942 = vperm.xlu0 %7941, %v7932
      %v7943 = vpop.permute.xlu0 %7942
      %7946 = vset.pattern.permute.xlu0 0
      %7947 = vperm.xlu0 %7946, %v7933
      %v7948 = vpop.permute.xlu0 %7947
      %7951 = vset.pattern.permute.xlu0 0
      %7952 = vperm.xlu0 %7951, %v7934
      %v7953 = vpop.permute.xlu0 %7952
      %7956 = vset.pattern.permute.xlu0 0
      %7957 = vperm.xlu0 %7956, %v7935
      %v7958 = vpop.permute.xlu0 %7957
      %7961 = vset.pattern.permute.xlu0 0
      %7962 = vperm.xlu0 %7961, %v7936
      %v7963 = vpop.permute.xlu0 %7962
      %7966 = vset.pattern.permute.xlu0 0
      %7967 = vperm.xlu0 %7966, %v7937
      %v7968 = vpop.permute.xlu0 %7967
      %7971 = vset.pattern.permute.xlu0 0
      %7972 = vperm.xlu0 %7971, %v7938
      %v7973 = vpop.permute.xlu0 %7972
      %7976 = vset.pattern.permute.xlu0 0
      %7977 = vperm.xlu0 %7976, %v7939
      %v7978 = vpop.permute.xlu0 %7977
      %v7980 = vadd.f32 %v7923, %v7943
      %v7981 = vadd.f32 %v7924, %v7948
      %v7982 = vadd.f32 %v7925, %v7953
      %v7983 = vadd.f32 %v7926, %v7958
      %v7984 = vadd.f32 %v7927, %v7963
      %v7985 = vadd.f32 %v7928, %v7968
      %v7986 = vadd.f32 %v7929, %v7973
      %v7987 = vadd.f32 %v7930, %v7978
      %v7988 = vmax.f32 %v7980, 0.0
      %v7989 = vmax.f32 %v7981, 0.0
      %v7990 = vmax.f32 %v7982, 0.0
      %v7991 = vmax.f32 %v7983, 0.0
      %v7992 = vmax.f32 %v7984, 0.0
      %v7993 = vmax.f32 %v7985, 0.0
      %v7994 = vmax.f32 %v7986, 0.0
      %v7995 = vmax.f32 %v7987, 0.0
      %8004 = vrot.lane.b32.xlu0 %v7988, 2
      %v8005 = vpop.permute.xlu0 %8004
      %8006 = vrot.lane.b32.xlu0 %v7989, 2
      %v8007 = vpop.permute.xlu0 %8006
      %8008 = vrot.lane.b32.xlu0 %v7990, 2
      %v8009 = vpop.permute.xlu0 %8008
      %8010 = vrot.lane.b32.xlu0 %v7991, 2
      %v8011 = vpop.permute.xlu0 %8010
      %8012 = vrot.lane.b32.xlu0 %v7992, 2
      %v8013 = vpop.permute.xlu0 %8012
      %8014 = vrot.lane.b32.xlu0 %v7993, 2
      %v8015 = vpop.permute.xlu0 %8014
      %8016 = vrot.lane.b32.xlu0 %v7994, 2
      %v8017 = vpop.permute.xlu0 %8016
      %8018 = vrot.lane.b32.xlu0 %v7995, 2
      %v8019 = vpop.permute.xlu0 %8018
      %8028 = vst.msk [vmem:[#allocation2] sm:$0xff] %vm7592, %v8005
      %8029 = vst.msk [vmem:[#allocation2 + $0x28] sm:$0xff] %vm7592, %v8007
      %8030 = vst.msk [vmem:[#allocation2 + $0x50] sm:$0xff] %vm7592, %v8009
      %8031 = vst.msk [vmem:[#allocation2 + $0x78] sm:$0xff] %vm7592, %v8011
      %8032 = vst.msk [vmem:[#allocation2 + $0xa0] sm:$0xff] %vm7592, %v8013
      %8033 = vst.msk [vmem:[#allocation2 + $0xc8] sm:$0xff] %vm7592, %v8015
      %8034 = vst.msk [vmem:[#allocation2 + $0xf0] sm:$0xff] %vm7592, %v8017
      %8035 = vst.msk [vmem:[#allocation2 + $0x118] sm:$0xff] %vm7592, %v8019
      %v8036 = vld [vmem:[#allocation2] sm:$0xff]
      %v8037 = vld [vmem:[#allocation2 + $0x28] sm:$0xff]
      %v8038 = vld [vmem:[#allocation2 + $0x50] sm:$0xff]
      %v8039 = vld [vmem:[#allocation2 + $0x78] sm:$0xff]
      %v8040 = vld [vmem:[#allocation2 + $0xa0] sm:$0xff]
      %v8041 = vld [vmem:[#allocation2 + $0xc8] sm:$0xff]
      %v8042 = vld [vmem:[#allocation2 + $0xf0] sm:$0xff]
      %v8043 = vld [vmem:[#allocation2 + $0x118] sm:$0xff]
      %s8044 = scalar_lea.vmem %s1, 5440
      %v8045 = vld [vmem:[%s8044] sm:$0xff]
      %v8046 = vld [vmem:[%s8044 + $0x8] sm:$0xff]
      %v8047 = vld [vmem:[%s8044 + $0x10] sm:$0xff]
      %v8048 = vld [vmem:[%s8044 + $0x18] sm:$0xff]
      %v8049 = vld [vmem:[%s8044 + $0x20] sm:$0xff]
      %v8050 = vld [vmem:[%s8044 + $0x28] sm:$0xff]
      %v8051 = vld [vmem:[%s8044 + $0x30] sm:$0xff]
      %v8052 = vld [vmem:[%s8044 + $0x38] sm:$0xff]
      %8061 = vrot.lane.b32.xlu0 %v8036, 126
      %v8062 = vpop.permute.xlu0 %8061
      %8063 = vrot.lane.b32.xlu0 %v8037, 126
      %v8064 = vpop.permute.xlu0 %8063
      %8065 = vrot.lane.b32.xlu0 %v8038, 126
      %v8066 = vpop.permute.xlu0 %8065
      %8067 = vrot.lane.b32.xlu0 %v8039, 126
      %v8068 = vpop.permute.xlu0 %8067
      %8069 = vrot.lane.b32.xlu0 %v8040, 126
      %v8070 = vpop.permute.xlu0 %8069
      %8071 = vrot.lane.b32.xlu0 %v8041, 126
      %v8072 = vpop.permute.xlu0 %8071
      %8073 = vrot.lane.b32.xlu0 %v8042, 126
      %v8074 = vpop.permute.xlu0 %8073
      %8075 = vrot.lane.b32.xlu0 %v8043, 126
      %v8076 = vpop.permute.xlu0 %8075
      %vm8085 = vcmask 523264
      %v8087 = vsel %vm8085, %v8045, 0
      %v8090 = vsel %vm8085, %v8046, 0
      %v8093 = vsel %vm8085, %v8047, 0
      %v8096 = vsel %vm8085, %v8048, 0
      %v8099 = vsel %vm8085, %v8049, 0
      %v8102 = vsel %vm8085, %v8050, 0
      %v8105 = vsel %vm8085, %v8051, 0
      %v8108 = vsel %vm8085, %v8052, 0
      %8110 = vmatpush.msra.mxu0 0.0
      %8111 = vmatpush.msra.mxu0 0.0
      %8112 = vmatpush.msra.mxu0 0.0
      %8113 = vmatpush.msra.mxu0 0.0
      %8114 = vmatpush.msra.mxu0 0.0
      %8115 = vmatpush.msra.mxu0 0.0
      %8116 = vmatpush.msra.mxu0 0.0
      %8117 = vmatpush.msra.mxu0 0.0
      %8118 = vmatpush.msra.mxu0 %v8076
      %8119 = vmatpush.msra.mxu0 %v8074
      %8120 = vmatpush.msra.mxu0 %v8072
      %8121 = vmatpush.msra.mxu0 %v8070
      %8122 = vmatpush.msra.mxu0 %v8068
      %8123 = vmatpush.msra.mxu0 %v8066
      %8124 = vmatpush.msra.mxu0 %v8064
      %8125 = vmatpush.msra.mxu0 %v8062
      %8126 = vmatmul.f32.gmra.mxu0 %v8087
      %v8127 = vpop.f32.mrf.mxu0
      %v8128 = vadd.f32 0.0, %v8127
      %8129 = vmatmul.f32.gmra.mxu0 %v8090
      %v8130 = vpop.f32.mrf.mxu0
      %v8131 = vadd.f32 0.0, %v8130
      %8132 = vmatmul.f32.gmra.mxu0 %v8093
      %v8133 = vpop.f32.mrf.mxu0
      %v8134 = vadd.f32 0.0, %v8133
      %8135 = vmatmul.f32.gmra.mxu0 %v8096
      %v8136 = vpop.f32.mrf.mxu0
      %v8137 = vadd.f32 0.0, %v8136
      %8138 = vmatmul.f32.gmra.mxu0 %v8099
      %v8139 = vpop.f32.mrf.mxu0
      %v8140 = vadd.f32 0.0, %v8139
      %8141 = vmatmul.f32.gmra.mxu0 %v8102
      %v8142 = vpop.f32.mrf.mxu0
      %v8143 = vadd.f32 0.0, %v8142
      %8144 = vmatmul.f32.gmra.mxu0 %v8105
      %v8145 = vpop.f32.mrf.mxu0
      %v8146 = vadd.f32 0.0, %v8145
      %8147 = vmatmul.f32.gmra.mxu0 %v8108
      %v8148 = vpop.f32.mrf.mxu0
      %v8149 = vadd.f32 0.0, %v8148
      %8150 = vdwg.mxu0
      %v8151 = vsel %vm791, %v8128, 0.0
      %8152 = vadd.xlane.f32.xlu0 %v8151
      %v8153 = vpop.xlane.xlu0 %8152
      %v8154 = vsel %vm791, %v8131, 0.0
      %8155 = vadd.xlane.f32.xlu0 %v8154
      %v8156 = vpop.xlane.xlu0 %8155
      %v8157 = vsel %vm791, %v8134, 0.0
      %8158 = vadd.xlane.f32.xlu0 %v8157
      %v8159 = vpop.xlane.xlu0 %8158
      %v8160 = vsel %vm791, %v8137, 0.0
      %8161 = vadd.xlane.f32.xlu0 %v8160
      %v8162 = vpop.xlane.xlu0 %8161
      %v8163 = vsel %vm791, %v8140, 0.0
      %8164 = vadd.xlane.f32.xlu0 %v8163
      %v8165 = vpop.xlane.xlu0 %8164
      %v8166 = vsel %vm791, %v8143, 0.0
      %8167 = vadd.xlane.f32.xlu0 %v8166
      %v8168 = vpop.xlane.xlu0 %8167
      %v8169 = vsel %vm791, %v8146, 0.0
      %8170 = vadd.xlane.f32.xlu0 %v8169
      %v8171 = vpop.xlane.xlu0 %8170
      %v8172 = vsel %vm791, %v8149, 0.0
      %8173 = vadd.xlane.f32.xlu0 %v8172
      %v8174 = vpop.xlane.xlu0 %8173
      %v8175 = vmul.f32 %v8153, %v7721
      %v8176 = vmul.f32 %v8156, %v7721
      %v8177 = vmul.f32 %v8159, %v7721
      %v8178 = vmul.f32 %v8162, %v7721
      %v8179 = vmul.f32 %v8165, %v7721
      %v8180 = vmul.f32 %v8168, %v7721
      %v8181 = vmul.f32 %v8171, %v7721
      %v8182 = vmul.f32 %v8174, %v7721
      %v8183 = vsub.f32 %v8128, %v8175
      %v8184 = vsub.f32 %v8131, %v8176
      %v8185 = vsub.f32 %v8134, %v8177
      %v8186 = vsub.f32 %v8137, %v8178
      %v8187 = vsub.f32 %v8140, %v8179
      %v8188 = vsub.f32 %v8143, %v8180
      %v8189 = vsub.f32 %v8146, %v8181
      %v8190 = vsub.f32 %v8149, %v8182
      %v8191 = vmul.f32 %v8183, %v8183
      %v8192 = vmul.f32 %v8184, %v8184
      %v8193 = vmul.f32 %v8185, %v8185
      %v8194 = vmul.f32 %v8186, %v8186
      %v8195 = vmul.f32 %v8187, %v8187
      %v8196 = vmul.f32 %v8188, %v8188
      %v8197 = vmul.f32 %v8189, %v8189
      %v8198 = vmul.f32 %v8190, %v8190
      %v8199 = vsel %vm791, %v8191, 0.0
      %8200 = vadd.xlane.f32.xlu0 %v8199
      %v8201 = vpop.xlane.xlu0 %8200
      %v8202 = vsel %vm791, %v8192, 0.0
      %8203 = vadd.xlane.f32.xlu0 %v8202
      %v8204 = vpop.xlane.xlu0 %8203
      %v8205 = vsel %vm791, %v8193, 0.0
      %8206 = vadd.xlane.f32.xlu0 %v8205
      %v8207 = vpop.xlane.xlu0 %8206
      %v8208 = vsel %vm791, %v8194, 0.0
      %8209 = vadd.xlane.f32.xlu0 %v8208
      %v8210 = vpop.xlane.xlu0 %8209
      %v8211 = vsel %vm791, %v8195, 0.0
      %8212 = vadd.xlane.f32.xlu0 %v8211
      %v8213 = vpop.xlane.xlu0 %8212
      %v8214 = vsel %vm791, %v8196, 0.0
      %8215 = vadd.xlane.f32.xlu0 %v8214
      %v8216 = vpop.xlane.xlu0 %8215
      %v8217 = vsel %vm791, %v8197, 0.0
      %8218 = vadd.xlane.f32.xlu0 %v8217
      %v8219 = vpop.xlane.xlu0 %8218
      %v8220 = vsel %vm791, %v8198, 0.0
      %8221 = vadd.xlane.f32.xlu0 %v8220
      %v8222 = vpop.xlane.xlu0 %8221
      %v8223 = vmul.f32 %v8201, %v7721
      %v8224 = vmul.f32 %v8204, %v7721
      %v8225 = vmul.f32 %v8207, %v7721
      %v8226 = vmul.f32 %v8210, %v7721
      %v8227 = vmul.f32 %v8213, %v7721
      %v8228 = vmul.f32 %v8216, %v7721
      %v8229 = vmul.f32 %v8219, %v7721
      %v8230 = vmul.f32 %v8222, %v7721
      %v8231 = vadd.f32 %v8223, 1e-05
      %v8232 = vadd.f32 %v8224, 1e-05
      %v8233 = vadd.f32 %v8225, 1e-05
      %v8234 = vadd.f32 %v8226, 1e-05
      %v8235 = vadd.f32 %v8227, 1e-05
      %v8236 = vadd.f32 %v8228, 1e-05
      %v8237 = vadd.f32 %v8229, 1e-05
      %v8238 = vadd.f32 %v8230, 1e-05
      %v8239 = vrsqrt.pop %v8231
      %v8240 = vmul.f32 %v8239, %v8231
      %v8241 = vmul.f32 %v8240, %v8239
      %v8242 = vmul.f32 0.5, %v8241
      %v8243 = vsub.f32 1.5, %v8242
      %v8244 = vmul.f32 %v8239, %v8243
      %vm8245 = vweird.f32 %v8231
      %vm8246 = vweird.f32 %v8239
      %vm8247 = vmor %vm8245, %vm8246
      %v8248 = vsel %vm8247, %v8239, %v8244
      %v8249 = vrsqrt.pop %v8232
      %v8250 = vmul.f32 %v8249, %v8232
      %v8251 = vmul.f32 %v8250, %v8249
      %v8252 = vmul.f32 0.5, %v8251
      %v8253 = vsub.f32 1.5, %v8252
      %v8254 = vmul.f32 %v8249, %v8253
      %vm8255 = vweird.f32 %v8232
      %vm8256 = vweird.f32 %v8249
      %vm8257 = vmor %vm8255, %vm8256
      %v8258 = vsel %vm8257, %v8249, %v8254
      %v8259 = vrsqrt.pop %v8233
      %v8260 = vmul.f32 %v8259, %v8233
      %v8261 = vmul.f32 %v8260, %v8259
      %v8262 = vmul.f32 0.5, %v8261
      %v8263 = vsub.f32 1.5, %v8262
      %v8264 = vmul.f32 %v8259, %v8263
      %vm8265 = vweird.f32 %v8233
      %vm8266 = vweird.f32 %v8259
      %vm8267 = vmor %vm8265, %vm8266
      %v8268 = vsel %vm8267, %v8259, %v8264
      %v8269 = vrsqrt.pop %v8234
      %v8270 = vmul.f32 %v8269, %v8234
      %v8271 = vmul.f32 %v8270, %v8269
      %v8272 = vmul.f32 0.5, %v8271
      %v8273 = vsub.f32 1.5, %v8272
      %v8274 = vmul.f32 %v8269, %v8273
      %vm8275 = vweird.f32 %v8234
      %vm8276 = vweird.f32 %v8269
      %vm8277 = vmor %vm8275, %vm8276
      %v8278 = vsel %vm8277, %v8269, %v8274
      %v8279 = vrsqrt.pop %v8235
      %v8280 = vmul.f32 %v8279, %v8235
      %v8281 = vmul.f32 %v8280, %v8279
      %v8282 = vmul.f32 0.5, %v8281
      %v8283 = vsub.f32 1.5, %v8282
      %v8284 = vmul.f32 %v8279, %v8283
      %vm8285 = vweird.f32 %v8235
      %vm8286 = vweird.f32 %v8279
      %vm8287 = vmor %vm8285, %vm8286
      %v8288 = vsel %vm8287, %v8279, %v8284
      %v8289 = vrsqrt.pop %v8236
      %v8290 = vmul.f32 %v8289, %v8236
      %v8291 = vmul.f32 %v8290, %v8289
      %v8292 = vmul.f32 0.5, %v8291
      %v8293 = vsub.f32 1.5, %v8292
      %v8294 = vmul.f32 %v8289, %v8293
      %vm8295 = vweird.f32 %v8236
      %vm8296 = vweird.f32 %v8289
      %vm8297 = vmor %vm8295, %vm8296
      %v8298 = vsel %vm8297, %v8289, %v8294
      %v8299 = vrsqrt.pop %v8237
      %v8300 = vmul.f32 %v8299, %v8237
      %v8301 = vmul.f32 %v8300, %v8299
      %v8302 = vmul.f32 0.5, %v8301
      %v8303 = vsub.f32 1.5, %v8302
      %v8304 = vmul.f32 %v8299, %v8303
      %vm8305 = vweird.f32 %v8237
      %vm8306 = vweird.f32 %v8299
      %vm8307 = vmor %vm8305, %vm8306
      %v8308 = vsel %vm8307, %v8299, %v8304
      %v8309 = vrsqrt.pop %v8238
      %v8310 = vmul.f32 %v8309, %v8238
      %v8311 = vmul.f32 %v8310, %v8309
      %v8312 = vmul.f32 0.5, %v8311
      %v8313 = vsub.f32 1.5, %v8312
      %v8314 = vmul.f32 %v8309, %v8313
      %vm8315 = vweird.f32 %v8238
      %vm8316 = vweird.f32 %v8309
      %vm8317 = vmor %vm8315, %vm8316
      %v8318 = vsel %vm8317, %v8309, %v8314
      %v8319 = vmul.f32 %v8183, %v8248
      %v8320 = vmul.f32 %v8184, %v8258
      %v8321 = vmul.f32 %v8185, %v8268
      %v8322 = vmul.f32 %v8186, %v8278
      %v8323 = vmul.f32 %v8187, %v8288
      %v8324 = vmul.f32 %v8188, %v8298
      %v8325 = vmul.f32 %v8189, %v8308
      %v8326 = vmul.f32 %v8190, %v8318
      %s8327 = scalar_lea.vmem %s2, 576
      %v8328 = vld [vmem:[%s8327] sm:$0xff]
      %v8329 = vld [vmem:[%s8327 + $0x8] sm:$0xff]
      %v8330 = vld [vmem:[%s8327 + $0x10] sm:$0xff]
      %v8331 = vld [vmem:[%s8327 + $0x18] sm:$0xff]
      %v8332 = vld [vmem:[%s8327 + $0x20] sm:$0xff]
      %v8333 = vld [vmem:[%s8327 + $0x28] sm:$0xff]
      %v8334 = vld [vmem:[%s8327 + $0x30] sm:$0xff]
      %v8335 = vld [vmem:[%s8327 + $0x38] sm:$0xff]
      %8337 = vset.pattern.permute.xlu0 0
      %8338 = vperm.xlu0 %8337, %v8328
      %v8339 = vpop.permute.xlu0 %8338
      %8342 = vset.pattern.permute.xlu0 0
      %8343 = vperm.xlu0 %8342, %v8329
      %v8344 = vpop.permute.xlu0 %8343
      %8347 = vset.pattern.permute.xlu0 0
      %8348 = vperm.xlu0 %8347, %v8330
      %v8349 = vpop.permute.xlu0 %8348
      %8352 = vset.pattern.permute.xlu0 0
      %8353 = vperm.xlu0 %8352, %v8331
      %v8354 = vpop.permute.xlu0 %8353
      %8357 = vset.pattern.permute.xlu0 0
      %8358 = vperm.xlu0 %8357, %v8332
      %v8359 = vpop.permute.xlu0 %8358
      %8362 = vset.pattern.permute.xlu0 0
      %8363 = vperm.xlu0 %8362, %v8333
      %v8364 = vpop.permute.xlu0 %8363
      %8367 = vset.pattern.permute.xlu0 0
      %8368 = vperm.xlu0 %8367, %v8334
      %v8369 = vpop.permute.xlu0 %8368
      %8372 = vset.pattern.permute.xlu0 0
      %8373 = vperm.xlu0 %8372, %v8335
      %v8374 = vpop.permute.xlu0 %8373
      %v8376 = vmul.f32 %v8319, %v8339
      %v8377 = vmul.f32 %v8320, %v8344
      %v8378 = vmul.f32 %v8321, %v8349
      %v8379 = vmul.f32 %v8322, %v8354
      %v8380 = vmul.f32 %v8323, %v8359
      %v8381 = vmul.f32 %v8324, %v8364
      %v8382 = vmul.f32 %v8325, %v8369
      %v8383 = vmul.f32 %v8326, %v8374
      %s8384 = scalar_lea.vmem %s3, 576
      %v8385 = vld [vmem:[%s8384] sm:$0xff]
      %v8386 = vld [vmem:[%s8384 + $0x8] sm:$0xff]
      %v8387 = vld [vmem:[%s8384 + $0x10] sm:$0xff]
      %v8388 = vld [vmem:[%s8384 + $0x18] sm:$0xff]
      %v8389 = vld [vmem:[%s8384 + $0x20] sm:$0xff]
      %v8390 = vld [vmem:[%s8384 + $0x28] sm:$0xff]
      %v8391 = vld [vmem:[%s8384 + $0x30] sm:$0xff]
      %v8392 = vld [vmem:[%s8384 + $0x38] sm:$0xff]
      %8394 = vset.pattern.permute.xlu0 0
      %8395 = vperm.xlu0 %8394, %v8385
      %v8396 = vpop.permute.xlu0 %8395
      %8399 = vset.pattern.permute.xlu0 0
      %8400 = vperm.xlu0 %8399, %v8386
      %v8401 = vpop.permute.xlu0 %8400
      %8404 = vset.pattern.permute.xlu0 0
      %8405 = vperm.xlu0 %8404, %v8387
      %v8406 = vpop.permute.xlu0 %8405
      %8409 = vset.pattern.permute.xlu0 0
      %8410 = vperm.xlu0 %8409, %v8388
      %v8411 = vpop.permute.xlu0 %8410
      %8414 = vset.pattern.permute.xlu0 0
      %8415 = vperm.xlu0 %8414, %v8389
      %v8416 = vpop.permute.xlu0 %8415
      %8419 = vset.pattern.permute.xlu0 0
      %8420 = vperm.xlu0 %8419, %v8390
      %v8421 = vpop.permute.xlu0 %8420
      %8424 = vset.pattern.permute.xlu0 0
      %8425 = vperm.xlu0 %8424, %v8391
      %v8426 = vpop.permute.xlu0 %8425
      %8429 = vset.pattern.permute.xlu0 0
      %8430 = vperm.xlu0 %8429, %v8392
      %v8431 = vpop.permute.xlu0 %8430
      %v8433 = vadd.f32 %v8376, %v8396
      %v8434 = vadd.f32 %v8377, %v8401
      %v8435 = vadd.f32 %v8378, %v8406
      %v8436 = vadd.f32 %v8379, %v8411
      %v8437 = vadd.f32 %v8380, %v8416
      %v8438 = vadd.f32 %v8381, %v8421
      %v8439 = vadd.f32 %v8382, %v8426
      %v8440 = vadd.f32 %v8383, %v8431
      %v8441 = vmax.f32 %v8433, 0.0
      %v8442 = vmax.f32 %v8434, 0.0
      %v8443 = vmax.f32 %v8435, 0.0
      %v8444 = vmax.f32 %v8436, 0.0
      %v8445 = vmax.f32 %v8437, 0.0
      %v8446 = vmax.f32 %v8438, 0.0
      %v8447 = vmax.f32 %v8439, 0.0
      %v8448 = vmax.f32 %v8440, 0.0
      %8449 = vst.msk [vmem:[%s440] sm:$0xff] %vm791, %v8441
      %8450 = vst.msk [vmem:[%s440 + $0x8] sm:$0xff] %vm791, %v8442
      %8451 = vst.msk [vmem:[%s440 + $0x10] sm:$0xff] %vm791, %v8443
      %8452 = vst.msk [vmem:[%s440 + $0x18] sm:$0xff] %vm791, %v8444
      %8453 = vst.msk [vmem:[%s440 + $0x20] sm:$0xff] %vm791, %v8445
      %8454 = vst.msk [vmem:[%s440 + $0x28] sm:$0xff] %vm791, %v8446
      %8455 = vst.msk [vmem:[%s440 + $0x30] sm:$0xff] %vm791, %v8447
      %8456 = vst.msk [vmem:[%s440 + $0x38] sm:$0xff] %vm791, %v8448
      %p8457 = scmp.lt.s32.totalorder %s24, 66
      %s8458 = scalar_select %p8457, %s24, 66
      %s8459 = smul.addr %s8458, 8
      %s8460 = smul.addr %s8459, 8
      %s8461 = scalar_lea.vmem %s13, %s8460
      // Predicated region
      $region73: #{contraction_forward.1} parent=71 // pred_check
        %p8462 = pneg %p320
      $region74: #{contraction_forward.1} parent=71 // pred_check_branch
        %8464 = sbr.rel (%p8462) target = $region76
      $region75: #{contraction_forward.1} parent=71 // pred_region
        _
      $region76: #{contraction_forward.1} parent=71 // pred_fallthru
        _
    $region72: #{contraction_forward.1} parent=5 // pred_fallthru
      _
    %p8465 = scmp.le.s32.totalorder 2, %s19
    // Predicated region
    $region77: #{contraction_forward.1} parent=5 // pred_check
      %p8466 = pneg %p8465
    $region78: #{contraction_forward.1} parent=5 // pred_check_branch
      %8468 = sbr.rel (%p8466) target = $region80
    $region79: #{contraction_forward.1} parent=5 // pred_region
      %s8469 = ssub.s32 %s19, 2
      // Predicated region
      $region81: #{contraction_forward.1} parent=79 // pred_check
        %p8470 = pneg %p326
      $region82: #{contraction_forward.1} parent=79 // pred_check_branch
        %8472 = sbr.rel (%p8470) target = $region84
      $region83: #{contraction_forward.1} parent=79 // pred_region
        %p8473 = scmp.lt.s32.totalorder %s25, 66
        %s8474 = scalar_select %p8473, %s25, 66
        %s8475 = smul.addr %s8474, 8
        %s8476 = smul.addr %s8475, 8
        %s8477 = scalar_lea.vmem %s13, %s8476
      $region84: #{contraction_forward.1} parent=79 // pred_fallthru
        _
    $region80: #{contraction_forward.1} parent=5 // pred_fallthru
      _
  $region6: #{contraction_forward.1} parent=0 // loop_footer
    %s23 = sadd.s32 1, %s19
  $region7: #{contraction_forward.1} parent=0 // loop_footer_branch
    %18 = sbr.rel target = $region3
  $region8: #{contraction_forward.1} parent=0 // loop_exit
    _

</llo_original>
